<compile_context>
chip_gen: v7x
topology: tpu7x:2x2x1
jax: 0.10.0
libtpu: 0.0.40
codegen_flags: <defaults>
</compile_context>

<pallas_src>
import functools
import math

import jax
import jax.numpy as jnp
from jax.experimental import pallas as pl
from jax.experimental.pallas import tpu as pltpu


# ----------------- fused conv + bias + maxpool(2x2) + relu kernel ------------
def _conv_pool_relu_kernel(x_ref, w_ref, b_ref, o_ref, *, k, H, Wo, Cout):
    """One image per grid step.

    x_ref : (1, Hp, Wp*Cin)   f32   padded activation, (h, (w, c)) layout
    w_ref : (k, Wp*Cin, N)    bf16  banded weight, N = 2*Wo*Cout ordered
                                    (w-parity, w_out, c_out)
    b_ref : (1, N)            f32   bias tiled to match the N ordering
    o_ref : (1, Ho, Wo*Cout)  f32   pooled + relu'd output, (h, (w, c)) layout
    """
    xflat = x_ref[0]                                        # (Hp, Wp*Cin) f32

    # Convolution: k shifted row-slabs x banded weights (bf16 MXU, f32 acc).
    acc = None
    for i in range(k):
        xi = xflat[i:i + H, :].astype(jnp.bfloat16)         # (H, Wp*Cin)
        part = jnp.dot(xi, w_ref[i], preferred_element_type=jnp.float32)
        acc = part if acc is None else acc + part
    y = acc + b_ref[...]                                    # (H, N) f32

    # W-direction 2x1 max-pool: even-w columns occupy the first N/2 lanes,
    # odd-w columns the second N/2 lanes (by construction of the weight).
    half = Wo * Cout
    yw = jnp.maximum(y[:, :half], y[:, half:])              # (H, Wo*Cout)

    # H-direction 2x1 max-pool via two 0/1 row-selection matmuls.
    Ho = o_ref.shape[1]
    r = jax.lax.broadcasted_iota(jnp.int32, (Ho, H), 0)
    c = jax.lax.broadcasted_iota(jnp.int32, (Ho, H), 1)
    sel_e = (c == 2 * r).astype(jnp.float32)
    sel_o = (c == 2 * r + 1).astype(jnp.float32)
    pooled = jnp.maximum(
        jnp.dot(sel_e, yw, preferred_element_type=jnp.float32),
        jnp.dot(sel_o, yw, preferred_element_type=jnp.float32))

    o_ref[0] = jnp.maximum(pooled, 0.0)                     # fused ReLU


def conv_pool_relu(x_flat, w_taps, b_tiled, *, k, H, Cout):
    """(B, Hp, Wp*Cin) f32 -> (B, H//2, (H//2)*Cout) f32 (conv->pool->relu)."""
    B, Hp, WpC = x_flat.shape
    _, WpC2, N = w_taps.shape
    assert WpC == WpC2 and Hp == H + 2 * (k // 2)
    Ho = H // 2
    Wo = H // 2                       # square feature maps throughout this net
    assert N == 2 * Wo * Cout

    kernel = functools.partial(_conv_pool_relu_kernel, k=k, H=H, Wo=Wo, Cout=Cout)
    flops = 2 * B * H * (k * WpC) * N
    bytes_accessed = x_flat.size * 4 + w_taps.size * 2 + B * Ho * Wo * Cout * 4

    return pl.pallas_call(
        kernel,
        grid=(B,),
        in_specs=[
            pl.BlockSpec((1, Hp, WpC), lambda b: (b, 0, 0)),   # per-image DMA
            pl.BlockSpec((k, WpC, N), lambda b: (0, 0, 0)),    # resident weight
            pl.BlockSpec((1, N), lambda b: (0, 0)),            # resident bias
        ],
        out_specs=pl.BlockSpec((1, Ho, Wo * Cout), lambda b: (b, 0, 0)),
        out_shape=jax.ShapeDtypeStruct((B, Ho, Wo * Cout), jnp.float32),
        compiler_params=pltpu.CompilerParams(
            dimension_semantics=("parallel",),        # megacore split on v7x
            vmem_limit_bytes=32 * 1024 * 1024,
        ),
        cost_estimate=pl.CostEstimate(
            flops=flops, transcendentals=0, bytes_accessed=bytes_accessed),
    )(x_flat, w_taps, b_tiled)


# --------------------- fused fc1 -> fc2 -> fc3 -> log_softmax ----------------
def _fc_head_kernel(x_ref, w1_ref, b1_ref, w2_ref, b2_ref, w3_ref, b3_ref, o_ref):
    x = x_ref[...].astype(jnp.bfloat16)
    h = jnp.dot(x, w1_ref[...], preferred_element_type=jnp.float32) + b1_ref[...]
    h = jnp.dot(h.astype(jnp.bfloat16), w2_ref[...],
                preferred_element_type=jnp.float32) + b2_ref[...]
    h = jnp.dot(h.astype(jnp.bfloat16), w3_ref[...],
                preferred_element_type=jnp.float32) + b3_ref[...]
    m = jnp.max(h, axis=-1, keepdims=True)
    s = h - m
    o_ref[...] = s - jnp.log(jnp.sum(jnp.exp(s), axis=-1, keepdims=True))


def fc_head(x, w1, b1, w2, b2, w3, b3):
    B = x.shape[0]
    # TODO(synk): for very large batches tile the row dim with a grid; the
    # whole head (weights ~100 KB + (B,288) activations) fits VMEM here.
    return pl.pallas_call(
        _fc_head_kernel,
        out_shape=jax.ShapeDtypeStruct((B, 10), jnp.float32),
        in_specs=[pl.BlockSpec(memory_space=pltpu.MemorySpace.VMEM)] * 7,
        out_specs=pl.BlockSpec(memory_space=pltpu.MemorySpace.VMEM),
        compiler_params=pltpu.CompilerParams(vmem_limit_bytes=32 * 1024 * 1024),
    )(x, w1, b1, w2, b2, w3, b3)


# ----------------------------- weight preparation ----------------------------
def _build_banded_weight(w_oihw, Wp, Wo):
    """(Cout,Cin,k,k) -> (k, Wp*Cin, 2*Wo*Cout) banded GEMM weight.

    Row (wp, c) of tap i, column (a, wo, o) holds wt[o, c, i, j] with
    j = wp - (2*wo + a) when 0 <= j < k, else 0, so that the kernel's k
    shifted-row matmuls produce conv output at (h, w=2*wo+a, o).
    """
    Cout, Cin, k, _ = w_oihw.shape
    i = jnp.arange(k).reshape(k, 1, 1, 1, 1, 1)
    wp = jnp.arange(Wp).reshape(1, Wp, 1, 1, 1, 1)
    c = jnp.arange(Cin).reshape(1, 1, Cin, 1, 1, 1)
    a = jnp.arange(2).reshape(1, 1, 1, 2, 1, 1)
    wo = jnp.arange(Wo).reshape(1, 1, 1, 1, Wo, 1)
    o = jnp.arange(Cout).reshape(1, 1, 1, 1, 1, Cout)
    j = wp - (2 * wo + a)
    valid = (j >= 0) & (j < k)
    vals = w_oihw[o, c, i, jnp.clip(j, 0, k - 1)]     # (k,Wp,Cin,2,Wo,Cout)
    banded = jnp.where(valid, vals, 0.0)
    return banded.reshape(k, Wp * Cin, 2 * Wo * Cout)


def _permute_fc1_columns(fc1_w):
    """Reorder fc1's 288 input columns from PyTorch (c,h,w) to our (h,w,c)."""
    h = jnp.arange(3).reshape(3, 1, 1)
    w = jnp.arange(3).reshape(1, 3, 1)
    c = jnp.arange(32).reshape(1, 1, 32)
    idx = (c * 9 + h * 3 + w).reshape(-1)
    return fc1_w[:, idx]


def prepare_params(p):
    """One-time layout prep: banded conv weights (bf16), tiled biases, FC mats."""
    def conv_pack(w, b, Wp, Wo):
        return (_build_banded_weight(w, Wp, Wo).astype(jnp.bfloat16),
                jnp.tile(b, 2 * Wo).reshape(1, -1).astype(jnp.float32))

    c1w, c1b = conv_pack(p["conv1_w"], p["conv1_b"], 32, 14)
    c2w, c2b = conv_pack(p["conv2_w"], p["conv2_b"], 16, 7)
    c3w, c3b = conv_pack(p["conv3_w"], p["conv3_b"], 9, 3)
    return {
        "c1_w": c1w, "c1_b": c1b,
        "c2_w": c2w, "c2_b": c2b,
        "c3_w": c3w, "c3_b": c3b,
        "fc1_w": _permute_fc1_columns(p["fc1_w"]).T.astype(jnp.bfloat16),
        "fc1_b": p["fc1_b"].reshape(1, -1).astype(jnp.float32),
        "fc2_w": p["fc2_w"].T.astype(jnp.bfloat16),
        "fc2_b": p["fc2_b"].reshape(1, -1).astype(jnp.float32),
        "fc3_w": p["fc3_w"].T.astype(jnp.bfloat16),
        "fc3_b": p["fc3_b"].reshape(1, -1).astype(jnp.float32),
    }


def init_params(key):
    """Deterministic init mirroring the PyTorch module's parameter shapes."""
    def uni(k, shape, fan_in):
        bound = 1.0 / math.sqrt(fan_in)
        return jax.random.uniform(k, shape, jnp.float32, -bound, bound)

    ks = jax.random.split(key, 12)
    return {
        "conv1_w": uni(ks[0], (32, 1, 5, 5), 1 * 5 * 5),
        "conv1_b": uni(ks[1], (32,), 1 * 5 * 5),
        "conv2_w": uni(ks[2], (32, 32, 3, 3), 32 * 3 * 3),
        "conv2_b": uni(ks[3], (32,), 32 * 3 * 3),
        "conv3_w": uni(ks[4], (32, 32, 3, 3), 32 * 3 * 3),
        "conv3_b": uni(ks[5], (32,), 32 * 3 * 3),
        "fc1_w": uni(ks[6], (128, 288), 288),
        "fc1_b": uni(ks[7], (128,), 288),
        "fc2_w": uni(ks[8], (64, 128), 128),
        "fc2_b": uni(ks[9], (64,), 128),
        "fc3_w": uni(ks[10], (10, 64), 64),
        "fc3_b": uni(ks[11], (10,), 64),
    }


# --------------------------------- forward -----------------------------------
def _pad_hwc(x_bhwc, pad):
    """(B,H,W,C) -> zero-pad spatial dims -> (B, H+2p, (W+2p)*C) slab."""
    B, H, W, C = x_bhwc.shape
    xp = jnp.pad(x_bhwc, ((0, 0), (pad, pad), (pad, pad), (0, 0)))
    return xp.reshape(B, H + 2 * pad, (W + 2 * pad) * C)


def cnn_mnist_forward(prepped, x_nchw):
    x = jnp.transpose(x_nchw.astype(jnp.float32), (0, 2, 3, 1))     # (B,28,28,1)
    B = x.shape[0]

    # conv1(k5,'same') -> maxpool2 -> relu       (one fused Pallas call)
    a = conv_pool_relu(_pad_hwc(x, 2), prepped["c1_w"], prepped["c1_b"],
                       k=5, H=28, Cout=32)                          # (B,14,448)

    # conv2(k3,'same') -> dropout2d -> maxpool2 -> relu
    # TODO(synk): Dropout2d(p=0.1) is identity in inference/eval mode; no-op.
    a = conv_pool_relu(_pad_hwc(a.reshape(B, 14, 14, 32), 1),
                       prepped["c2_w"], prepped["c2_b"],
                       k=3, H=14, Cout=32)                          # (B,7,224)

    # conv3(k3,'same') -> maxpool2 -> relu
    a = conv_pool_relu(_pad_hwc(a.reshape(B, 7, 7, 32), 1),
                       prepped["c3_w"], prepped["c3_b"],
                       k=3, H=7, Cout=32)                           # (B,3,96)

    # Flatten: conv output is (h, w, c)-ordered; fc1 columns were pre-permuted
    # so this matches PyTorch's NCHW x.view(-1, 3*3*32) exactly.
    feats = a.reshape(B, 288)

    # fc1 -> fc2 -> fc3 -> log_softmax, fused into a single Pallas call.
    return fc_head(feats, prepped["fc1_w"], prepped["fc1_b"],
                   prepped["fc2_w"], prepped["fc2_b"],
                   prepped["fc3_w"], prepped["fc3_b"])


# ------------------------- pure-JAX reference (validation) -------------------
def reference_forward(params, x_nchw):
    def conv(x, w, b):
        y = jax.lax.conv_general_dilated(
            x, w, window_strides=(1, 1), padding="SAME",
            dimension_numbers=("NCHW", "OIHW", "NCHW"))
        return y + b.reshape(1, -1, 1, 1)

    def pool_relu(x):
        y = jax.lax.reduce_window(x, -jnp.inf, jax.lax.max,
                                  (1, 1, 2, 2), (1, 1, 2, 2), "VALID")
        return jnp.maximum(y, 0.0)

    x = x_nchw.astype(jnp.float32)
    x = pool_relu(conv(x, params["conv1_w"], params["conv1_b"]))
    x = pool_relu(conv(x, params["conv2_w"], params["conv2_b"]))
    x = pool_relu(conv(x, params["conv3_w"], params["conv3_b"]))
    x = x.reshape(x.shape[0], -1)                       # NCHW flatten: (c,h,w)
    x = x @ params["fc1_w"].T + params["fc1_b"]
    x = x @ params["fc2_w"].T + params["fc2_b"]
    x = x @ params["fc3_w"].T + params["fc3_b"]
    return jax.nn.log_softmax(x, axis=1)


# ----------------------------------- main -------------------------------------
if __name__ == "__main__":
    key = jax.random.PRNGKey(0)
    k_param, k_x = jax.random.split(key)

    params = init_params(k_param)
    prepped = prepare_params(params)        # one-time weight layout prep

    # MNIST-shaped input (the fc head requires 28x28): batch=2, 1 channel.
    x = jax.random.normal(k_x, (2, 1, 28, 28), dtype=jnp.float32)

    logp = jax.block_until_ready(jax.jit(cnn_mnist_forward)(prepped, x))

    assert logp.shape == (2, 10)
    assert bool(jnp.all(jnp.isfinite(logp)))
    assert bool(jnp.allclose(jnp.sum(jnp.exp(logp), axis=1), 1.0, atol=1e-4))
    # Validate against the pure-JAX/XLA reference (bf16 MXU -> loose tolerance).
    ref = reference_forward(params, x)
    assert bool(jnp.allclose(logp, ref, atol=5e-2)), "mismatch vs reference"

    print("KERNEL_OK")
</pallas_src>

<mosaic_0001>
module attributes {stable_mosaic.version = 11 : i64} {
  func.func @_conv_pool_relu_kernel(%arg0: i32, %arg1: memref<1x32x32xf32, #tpu.memory_space<vmem>>, %arg2: memref<5x32x896xbf16, #tpu.memory_space<vmem>>, %arg3: memref<1x896xf32, #tpu.memory_space<vmem>>, %arg4: memref<1x14x448xf32, #tpu.memory_space<vmem>>) attributes {dimension_semantics = [#tpu.dimension_semantics<parallel>], iteration_bounds = array<i64: 2>, scalar_prefetch = 0 : i64, scratch_operands = 0 : i64, tpu.core_type = #tpu.core_type<tc>, window_params = [{transform_indices = @transform_0, window_bounds = array<i64: 1, 32, 32>}, {pipeline_mode = #tpu.pipeline_mode<synchronous>, transform_indices = @transform_1, window_bounds = array<i64: 5, 32, 896>}, {pipeline_mode = #tpu.pipeline_mode<synchronous>, transform_indices = @transform_2, window_bounds = array<i64: 1, 896>}, {transform_indices = @transform_3, window_bounds = array<i64: 1, 14, 448>}]} {
    %c0 = arith.constant 0 : index
    %c0_0 = arith.constant 0 : index
    %c0_1 = arith.constant 0 : index
    %0 = vector.load %arg1[%c0, %c0_0, %c0_1] : memref<1x32x32xf32, #tpu.memory_space<vmem>>, vector<1x32x32xf32>
    %1 = vector.shape_cast %0 : vector<1x32x32xf32> to vector<32x32xf32>
    %2 = vector.extract_strided_slice %1 {offsets = [0, 0], sizes = [28, 32], strides = [1, 1]} : vector<32x32xf32> to vector<28x32xf32>
    %3 = arith.truncf %2 : vector<28x32xf32> to vector<28x32xbf16>
    %c0_2 = arith.constant 0 : index
    %c0_3 = arith.constant 0 : index
    %c0_4 = arith.constant 0 : index
    %4 = vector.load %arg2[%c0_2, %c0_3, %c0_4] : memref<5x32x896xbf16, #tpu.memory_space<vmem>>, vector<1x32x896xbf16>
    %5 = vector.shape_cast %4 : vector<1x32x896xbf16> to vector<32x896xbf16>
    %cst = arith.constant dense<0.000000e+00> : vector<28x896xf32>
    %6 = tpu.matmul %3, %5, %cst {dimension_numbers = #tpu.dot_dimension_numbers<[1], [0], [0], [1], [0, 0, 1, 1], [], []>} : vector<28x32xbf16>, vector<32x896xbf16>, vector<28x896xf32> -> vector<28x896xf32>
    %7 = vector.extract_strided_slice %1 {offsets = [1, 0], sizes = [28, 32], strides = [1, 1]} : vector<32x32xf32> to vector<28x32xf32>
    %8 = arith.truncf %7 : vector<28x32xf32> to vector<28x32xbf16>
    %c1 = arith.constant 1 : index
    %c0_5 = arith.constant 0 : index
    %c0_6 = arith.constant 0 : index
    %9 = vector.load %arg2[%c1, %c0_5, %c0_6] : memref<5x32x896xbf16, #tpu.memory_space<vmem>>, vector<1x32x896xbf16>
    %10 = vector.shape_cast %9 : vector<1x32x896xbf16> to vector<32x896xbf16>
    %cst_7 = arith.constant dense<0.000000e+00> : vector<28x896xf32>
    %11 = tpu.matmul %8, %10, %cst_7 {dimension_numbers = #tpu.dot_dimension_numbers<[1], [0], [0], [1], [0, 0, 1, 1], [], []>} : vector<28x32xbf16>, vector<32x896xbf16>, vector<28x896xf32> -> vector<28x896xf32>
    %12 = arith.addf %6, %11 : vector<28x896xf32>
    %13 = vector.extract_strided_slice %1 {offsets = [2, 0], sizes = [28, 32], strides = [1, 1]} : vector<32x32xf32> to vector<28x32xf32>
    %14 = arith.truncf %13 : vector<28x32xf32> to vector<28x32xbf16>
    %c2 = arith.constant 2 : index
    %c0_8 = arith.constant 0 : index
    %c0_9 = arith.constant 0 : index
    %15 = vector.load %arg2[%c2, %c0_8, %c0_9] : memref<5x32x896xbf16, #tpu.memory_space<vmem>>, vector<1x32x896xbf16>
    %16 = vector.shape_cast %15 : vector<1x32x896xbf16> to vector<32x896xbf16>
    %cst_10 = arith.constant dense<0.000000e+00> : vector<28x896xf32>
    %17 = tpu.matmul %14, %16, %cst_10 {dimension_numbers = #tpu.dot_dimension_numbers<[1], [0], [0], [1], [0, 0, 1, 1], [], []>} : vector<28x32xbf16>, vector<32x896xbf16>, vector<28x896xf32> -> vector<28x896xf32>
    %18 = arith.addf %12, %17 : vector<28x896xf32>
    %19 = vector.extract_strided_slice %1 {offsets = [3, 0], sizes = [28, 32], strides = [1, 1]} : vector<32x32xf32> to vector<28x32xf32>
    %20 = arith.truncf %19 : vector<28x32xf32> to vector<28x32xbf16>
    %c3 = arith.constant 3 : index
    %c0_11 = arith.constant 0 : index
    %c0_12 = arith.constant 0 : index
    %21 = vector.load %arg2[%c3, %c0_11, %c0_12] : memref<5x32x896xbf16, #tpu.memory_space<vmem>>, vector<1x32x896xbf16>
    %22 = vector.shape_cast %21 : vector<1x32x896xbf16> to vector<32x896xbf16>
    %cst_13 = arith.constant dense<0.000000e+00> : vector<28x896xf32>
    %23 = tpu.matmul %20, %22, %cst_13 {dimension_numbers = #tpu.dot_dimension_numbers<[1], [0], [0], [1], [0, 0, 1, 1], [], []>} : vector<28x32xbf16>, vector<32x896xbf16>, vector<28x896xf32> -> vector<28x896xf32>
    %24 = arith.addf %18, %23 : vector<28x896xf32>
    %25 = vector.extract_strided_slice %1 {offsets = [4, 0], sizes = [28, 32], strides = [1, 1]} : vector<32x32xf32> to vector<28x32xf32>
    %26 = arith.truncf %25 : vector<28x32xf32> to vector<28x32xbf16>
    %c4 = arith.constant 4 : index
    %c0_14 = arith.constant 0 : index
    %c0_15 = arith.constant 0 : index
    %27 = vector.load %arg2[%c4, %c0_14, %c0_15] : memref<5x32x896xbf16, #tpu.memory_space<vmem>>, vector<1x32x896xbf16>
    %28 = vector.shape_cast %27 : vector<1x32x896xbf16> to vector<32x896xbf16>
    %cst_16 = arith.constant dense<0.000000e+00> : vector<28x896xf32>
    %29 = tpu.matmul %26, %28, %cst_16 {dimension_numbers = #tpu.dot_dimension_numbers<[1], [0], [0], [1], [0, 0, 1, 1], [], []>} : vector<28x32xbf16>, vector<32x896xbf16>, vector<28x896xf32> -> vector<28x896xf32>
    %30 = arith.addf %24, %29 : vector<28x896xf32>
    %c0_17 = arith.constant 0 : index
    %c0_18 = arith.constant 0 : index
    %31 = vector.load %arg3[%c0_17, %c0_18] : memref<1x896xf32, #tpu.memory_space<vmem>>, vector<1x896xf32>
    %32 = vector.broadcast %31 : vector<1x896xf32> to vector<28x896xf32>
    %33 = arith.addf %30, %32 : vector<28x896xf32>
    %34 = vector.extract_strided_slice %33 {offsets = [0, 0], sizes = [28, 448], strides = [1, 1]} : vector<28x896xf32> to vector<28x448xf32>
    %35 = vector.extract_strided_slice %33 {offsets = [0, 448], sizes = [28, 448], strides = [1, 1]} : vector<28x896xf32> to vector<28x448xf32>
    %36 = arith.maximumf %34, %35 : vector<28x448xf32>
    %37 = tpu.iota {dimensions = array<i32: 0>} : vector<14x28xi32>
    %38 = tpu.iota {dimensions = array<i32: 1>} : vector<14x28xi32>
    %c2_i32 = arith.constant 2 : i32
    %39 = vector.broadcast %c2_i32 : i32 to vector<14x28xi32>
    %40 = arith.muli %39, %37 : vector<14x28xi32>
    %41 = arith.cmpi eq, %38, %40 : vector<14x28xi32>
    %42 = arith.extui %41 : vector<14x28xi1> to vector<14x28xi32>
    %43 = arith.sitofp %42 : vector<14x28xi32> to vector<14x28xf32>
    %c2_i32_19 = arith.constant 2 : i32
    %44 = vector.broadcast %c2_i32_19 : i32 to vector<14x28xi32>
    %45 = arith.muli %44, %37 : vector<14x28xi32>
    %c1_i32 = arith.constant 1 : i32
    %46 = vector.broadcast %c1_i32 : i32 to vector<14x28xi32>
    %47 = arith.addi %45, %46 : vector<14x28xi32>
    %48 = arith.cmpi eq, %38, %47 : vector<14x28xi32>
    %49 = arith.extui %48 : vector<14x28xi1> to vector<14x28xi32>
    %50 = arith.sitofp %49 : vector<14x28xi32> to vector<14x28xf32>
    %cst_20 = arith.constant dense<0.000000e+00> : vector<14x448xf32>
    %51 = tpu.matmul %43, %36, %cst_20 {dimension_numbers = #tpu.dot_dimension_numbers<[1], [0], [0], [1], [0, 0, 1, 1], [], []>} : vector<14x28xf32>, vector<28x448xf32>, vector<14x448xf32> -> vector<14x448xf32>
    %cst_21 = arith.constant dense<0.000000e+00> : vector<14x448xf32>
    %52 = tpu.matmul %50, %36, %cst_21 {dimension_numbers = #tpu.dot_dimension_numbers<[1], [0], [0], [1], [0, 0, 1, 1], [], []>} : vector<14x28xf32>, vector<28x448xf32>, vector<14x448xf32> -> vector<14x448xf32>
    %53 = arith.maximumf %51, %52 : vector<14x448xf32>
    %cst_22 = arith.constant 0.000000e+00 : f32
    %54 = vector.broadcast %cst_22 : f32 to vector<14x448xf32>
    %55 = arith.maximumf %53, %54 : vector<14x448xf32>
    %c0_23 = arith.constant 0 : index
    %c0_24 = arith.constant 0 : index
    %c0_25 = arith.constant 0 : index
    %56 = vector.load %arg4[%c0_23, %c0_24, %c0_25] : memref<1x14x448xf32, #tpu.memory_space<vmem>>, vector<1x14x448xf32>
    %57 = vector.shape_cast %56 : vector<1x14x448xf32> to vector<14x448xf32>
    %58 = vector.shape_cast %55 : vector<14x448xf32> to vector<1x14x448xf32>
    tpu.vector_store %arg4[%c0_23, %c0_24, %c0_25], %58 {strides = array<i32>} : memref<1x14x448xf32, #tpu.memory_space<vmem>>, vector<1x14x448xf32>,
    return
  }
  func.func @transform_0(%arg0: i32) -> (i32, i32, i32) {
    %c0_i32 = arith.constant 0 : i32
    %c0_i32_0 = arith.constant 0 : i32
    %c0_i32_1 = arith.constant 0 : i32
    return %arg0, %c0_i32, %c0_i32_0 : i32, i32, i32
  }
  func.func @transform_1(%arg0: i32) -> (i32, i32, i32) {
    %c0_i32 = arith.constant 0 : i32
    %c0_i32_0 = arith.constant 0 : i32
    %c0_i32_1 = arith.constant 0 : i32
    %c0_i32_2 = arith.constant 0 : i32
    return %c0_i32, %c0_i32_0, %c0_i32_1 : i32, i32, i32
  }
  func.func @transform_2(%arg0: i32) -> (i32, i32) {
    %c0_i32 = arith.constant 0 : i32
    %c0_i32_0 = arith.constant 0 : i32
    %c0_i32_1 = arith.constant 0 : i32
    return %c0_i32, %c0_i32_0 : i32, i32
  }
  func.func @transform_3(%arg0: i32) -> (i32, i32, i32) {
    %c0_i32 = arith.constant 0 : i32
    %c0_i32_0 = arith.constant 0 : i32
    %c0_i32_1 = arith.constant 0 : i32
    return %arg0, %c0_i32, %c0_i32_0 : i32, i32, i32
  }
}

module attributes {stable_mosaic.version = 11 : i64} {
  func.func @_conv_pool_relu_kernel(%arg0: i32, %arg1: memref<1x16x512xf32, #tpu.memory_space<vmem>>, %arg2: memref<3x512x448xbf16, #tpu.memory_space<vmem>>, %arg3: memref<1x448xf32, #tpu.memory_space<vmem>>, %arg4: memref<1x7x224xf32, #tpu.memory_space<vmem>>) attributes {dimension_semantics = [#tpu.dimension_semantics<parallel>], iteration_bounds = array<i64: 2>, scalar_prefetch = 0 : i64, scratch_operands = 0 : i64, tpu.core_type = #tpu.core_type<tc>, window_params = [{transform_indices = @transform_0, window_bounds = array<i64: 1, 16, 512>}, {pipeline_mode = #tpu.pipeline_mode<synchronous>, transform_indices = @transform_1, window_bounds = array<i64: 3, 512, 448>}, {pipeline_mode = #tpu.pipeline_mode<synchronous>, transform_indices = @transform_2, window_bounds = array<i64: 1, 448>}, {transform_indices = @transform_3, window_bounds = array<i64: 1, 7, 224>}]} {
    %c0 = arith.constant 0 : index
    %c0_0 = arith.constant 0 : index
    %c0_1 = arith.constant 0 : index
    %0 = vector.load %arg1[%c0, %c0_0, %c0_1] : memref<1x16x512xf32, #tpu.memory_space<vmem>>, vector<1x16x512xf32>
    %1 = vector.shape_cast %0 : vector<1x16x512xf32> to vector<16x512xf32>
    %2 = vector.extract_strided_slice %1 {offsets = [0, 0], sizes = [14, 512], strides = [1, 1]} : vector<16x512xf32> to vector<14x512xf32>
    %3 = arith.truncf %2 : vector<14x512xf32> to vector<14x512xbf16>
    %c0_2 = arith.constant 0 : index
    %c0_3 = arith.constant 0 : index
    %c0_4 = arith.constant 0 : index
    %4 = vector.load %arg2[%c0_2, %c0_3, %c0_4] : memref<3x512x448xbf16, #tpu.memory_space<vmem>>, vector<1x512x448xbf16>
    %5 = vector.shape_cast %4 : vector<1x512x448xbf16> to vector<512x448xbf16>
    %cst = arith.constant dense<0.000000e+00> : vector<14x448xf32>
    %6 = tpu.matmul %3, %5, %cst {dimension_numbers = #tpu.dot_dimension_numbers<[1], [0], [0], [1], [0, 0, 1, 1], [], []>} : vector<14x512xbf16>, vector<512x448xbf16>, vector<14x448xf32> -> vector<14x448xf32>
    %7 = vector.extract_strided_slice %1 {offsets = [1, 0], sizes = [14, 512], strides = [1, 1]} : vector<16x512xf32> to vector<14x512xf32>
    %8 = arith.truncf %7 : vector<14x512xf32> to vector<14x512xbf16>
    %c1 = arith.constant 1 : index
    %c0_5 = arith.constant 0 : index
    %c0_6 = arith.constant 0 : index
    %9 = vector.load %arg2[%c1, %c0_5, %c0_6] : memref<3x512x448xbf16, #tpu.memory_space<vmem>>, vector<1x512x448xbf16>
    %10 = vector.shape_cast %9 : vector<1x512x448xbf16> to vector<512x448xbf16>
    %cst_7 = arith.constant dense<0.000000e+00> : vector<14x448xf32>
    %11 = tpu.matmul %8, %10, %cst_7 {dimension_numbers = #tpu.dot_dimension_numbers<[1], [0], [0], [1], [0, 0, 1, 1], [], []>} : vector<14x512xbf16>, vector<512x448xbf16>, vector<14x448xf32> -> vector<14x448xf32>
    %12 = arith.addf %6, %11 : vector<14x448xf32>
    %13 = vector.extract_strided_slice %1 {offsets = [2, 0], sizes = [14, 512], strides = [1, 1]} : vector<16x512xf32> to vector<14x512xf32>
    %14 = arith.truncf %13 : vector<14x512xf32> to vector<14x512xbf16>
    %c2 = arith.constant 2 : index
    %c0_8 = arith.constant 0 : index
    %c0_9 = arith.constant 0 : index
    %15 = vector.load %arg2[%c2, %c0_8, %c0_9] : memref<3x512x448xbf16, #tpu.memory_space<vmem>>, vector<1x512x448xbf16>
    %16 = vector.shape_cast %15 : vector<1x512x448xbf16> to vector<512x448xbf16>
    %cst_10 = arith.constant dense<0.000000e+00> : vector<14x448xf32>
    %17 = tpu.matmul %14, %16, %cst_10 {dimension_numbers = #tpu.dot_dimension_numbers<[1], [0], [0], [1], [0, 0, 1, 1], [], []>} : vector<14x512xbf16>, vector<512x448xbf16>, vector<14x448xf32> -> vector<14x448xf32>
    %18 = arith.addf %12, %17 : vector<14x448xf32>
    %c0_11 = arith.constant 0 : index
    %c0_12 = arith.constant 0 : index
    %19 = vector.load %arg3[%c0_11, %c0_12] : memref<1x448xf32, #tpu.memory_space<vmem>>, vector<1x448xf32>
    %20 = vector.broadcast %19 : vector<1x448xf32> to vector<14x448xf32>
    %21 = arith.addf %18, %20 : vector<14x448xf32>
    %22 = vector.extract_strided_slice %21 {offsets = [0, 0], sizes = [14, 224], strides = [1, 1]} : vector<14x448xf32> to vector<14x224xf32>
    %23 = vector.extract_strided_slice %21 {offsets = [0, 224], sizes = [14, 224], strides = [1, 1]} : vector<14x448xf32> to vector<14x224xf32>
    %24 = arith.maximumf %22, %23 : vector<14x224xf32>
    %25 = tpu.iota {dimensions = array<i32: 0>} : vector<7x14xi32>
    %26 = tpu.iota {dimensions = array<i32: 1>} : vector<7x14xi32>
    %c2_i32 = arith.constant 2 : i32
    %27 = vector.broadcast %c2_i32 : i32 to vector<7x14xi32>
    %28 = arith.muli %27, %25 : vector<7x14xi32>
    %29 = arith.cmpi eq, %26, %28 : vector<7x14xi32>
    %30 = arith.extui %29 : vector<7x14xi1> to vector<7x14xi32>
    %31 = arith.sitofp %30 : vector<7x14xi32> to vector<7x14xf32>
    %c2_i32_13 = arith.constant 2 : i32
    %32 = vector.broadcast %c2_i32_13 : i32 to vector<7x14xi32>
    %33 = arith.muli %32, %25 : vector<7x14xi32>
    %c1_i32 = arith.constant 1 : i32
    %34 = vector.broadcast %c1_i32 : i32 to vector<7x14xi32>
    %35 = arith.addi %33, %34 : vector<7x14xi32>
    %36 = arith.cmpi eq, %26, %35 : vector<7x14xi32>
    %37 = arith.extui %36 : vector<7x14xi1> to vector<7x14xi32>
    %38 = arith.sitofp %37 : vector<7x14xi32> to vector<7x14xf32>
    %cst_14 = arith.constant dense<0.000000e+00> : vector<7x224xf32>
    %39 = tpu.matmul %31, %24, %cst_14 {dimension_numbers = #tpu.dot_dimension_numbers<[1], [0], [0], [1], [0, 0, 1, 1], [], []>} : vector<7x14xf32>, vector<14x224xf32>, vector<7x224xf32> -> vector<7x224xf32>
    %cst_15 = arith.constant dense<0.000000e+00> : vector<7x224xf32>
    %40 = tpu.matmul %38, %24, %cst_15 {dimension_numbers = #tpu.dot_dimension_numbers<[1], [0], [0], [1], [0, 0, 1, 1], [], []>} : vector<7x14xf32>, vector<14x224xf32>, vector<7x224xf32> -> vector<7x224xf32>
    %41 = arith.maximumf %39, %40 : vector<7x224xf32>
    %cst_16 = arith.constant 0.000000e+00 : f32
    %42 = vector.broadcast %cst_16 : f32 to vector<7x224xf32>
    %43 = arith.maximumf %41, %42 : vector<7x224xf32>
    %c0_17 = arith.constant 0 : index
    %c0_18 = arith.constant 0 : index
    %c0_19 = arith.constant 0 : index
    %44 = vector.load %arg4[%c0_17, %c0_18, %c0_19] : memref<1x7x224xf32, #tpu.memory_space<vmem>>, vector<1x7x224xf32>
    %45 = vector.shape_cast %44 : vector<1x7x224xf32> to vector<7x224xf32>
    %46 = vector.shape_cast %43 : vector<7x224xf32> to vector<1x7x224xf32>
    tpu.vector_store %arg4[%c0_17, %c0_18, %c0_19], %46 {strides = array<i32>} : memref<1x7x224xf32, #tpu.memory_space<vmem>>, vector<1x7x224xf32>,
    return
  }
  func.func @transform_0(%arg0: i32) -> (i32, i32, i32) {
    %c0_i32 = arith.constant 0 : i32
    %c0_i32_0 = arith.constant 0 : i32
    %c0_i32_1 = arith.constant 0 : i32
    return %arg0, %c0_i32, %c0_i32_0 : i32, i32, i32
  }
  func.func @transform_1(%arg0: i32) -> (i32, i32, i32) {
    %c0_i32 = arith.constant 0 : i32
    %c0_i32_0 = arith.constant 0 : i32
    %c0_i32_1 = arith.constant 0 : i32
    %c0_i32_2 = arith.constant 0 : i32
    return %c0_i32, %c0_i32_0, %c0_i32_1 : i32, i32, i32
  }
  func.func @transform_2(%arg0: i32) -> (i32, i32) {
    %c0_i32 = arith.constant 0 : i32
    %c0_i32_0 = arith.constant 0 : i32
    %c0_i32_1 = arith.constant 0 : i32
    return %c0_i32, %c0_i32_0 : i32, i32
  }
  func.func @transform_3(%arg0: i32) -> (i32, i32, i32) {
    %c0_i32 = arith.constant 0 : i32
    %c0_i32_0 = arith.constant 0 : i32
    %c0_i32_1 = arith.constant 0 : i32
    return %arg0, %c0_i32, %c0_i32_0 : i32, i32, i32
  }
}

module attributes {stable_mosaic.version = 11 : i64} {
  func.func @_conv_pool_relu_kernel(%arg0: i32, %arg1: memref<1x9x288xf32, #tpu.memory_space<vmem>>, %arg2: memref<3x288x192xbf16, #tpu.memory_space<vmem>>, %arg3: memref<1x192xf32, #tpu.memory_space<vmem>>, %arg4: memref<1x3x96xf32, #tpu.memory_space<vmem>>) attributes {dimension_semantics = [#tpu.dimension_semantics<parallel>], iteration_bounds = array<i64: 2>, scalar_prefetch = 0 : i64, scratch_operands = 0 : i64, tpu.core_type = #tpu.core_type<tc>, window_params = [{transform_indices = @transform_0, window_bounds = array<i64: 1, 9, 288>}, {pipeline_mode = #tpu.pipeline_mode<synchronous>, transform_indices = @transform_1, window_bounds = array<i64: 3, 288, 192>}, {pipeline_mode = #tpu.pipeline_mode<synchronous>, transform_indices = @transform_2, window_bounds = array<i64: 1, 192>}, {transform_indices = @transform_3, window_bounds = array<i64: 1, 3, 96>}]} {
    %c0 = arith.constant 0 : index
    %c0_0 = arith.constant 0 : index
    %c0_1 = arith.constant 0 : index
    %0 = vector.load %arg1[%c0, %c0_0, %c0_1] : memref<1x9x288xf32, #tpu.memory_space<vmem>>, vector<1x9x288xf32>
    %1 = vector.shape_cast %0 : vector<1x9x288xf32> to vector<9x288xf32>
    %2 = vector.extract_strided_slice %1 {offsets = [0, 0], sizes = [7, 288], strides = [1, 1]} : vector<9x288xf32> to vector<7x288xf32>
    %3 = arith.truncf %2 : vector<7x288xf32> to vector<7x288xbf16>
    %c0_2 = arith.constant 0 : index
    %c0_3 = arith.constant 0 : index
    %c0_4 = arith.constant 0 : index
    %4 = vector.load %arg2[%c0_2, %c0_3, %c0_4] : memref<3x288x192xbf16, #tpu.memory_space<vmem>>, vector<1x288x192xbf16>
    %5 = vector.shape_cast %4 : vector<1x288x192xbf16> to vector<288x192xbf16>
    %cst = arith.constant dense<0.000000e+00> : vector<7x192xf32>
    %6 = tpu.matmul %3, %5, %cst {dimension_numbers = #tpu.dot_dimension_numbers<[1], [0], [0], [1], [0, 0, 1, 1], [], []>} : vector<7x288xbf16>, vector<288x192xbf16>, vector<7x192xf32> -> vector<7x192xf32>
    %7 = vector.extract_strided_slice %1 {offsets = [1, 0], sizes = [7, 288], strides = [1, 1]} : vector<9x288xf32> to vector<7x288xf32>
    %8 = arith.truncf %7 : vector<7x288xf32> to vector<7x288xbf16>
    %c1 = arith.constant 1 : index
    %c0_5 = arith.constant 0 : index
    %c0_6 = arith.constant 0 : index
    %9 = vector.load %arg2[%c1, %c0_5, %c0_6] : memref<3x288x192xbf16, #tpu.memory_space<vmem>>, vector<1x288x192xbf16>
    %10 = vector.shape_cast %9 : vector<1x288x192xbf16> to vector<288x192xbf16>
    %cst_7 = arith.constant dense<0.000000e+00> : vector<7x192xf32>
    %11 = tpu.matmul %8, %10, %cst_7 {dimension_numbers = #tpu.dot_dimension_numbers<[1], [0], [0], [1], [0, 0, 1, 1], [], []>} : vector<7x288xbf16>, vector<288x192xbf16>, vector<7x192xf32> -> vector<7x192xf32>
    %12 = arith.addf %6, %11 : vector<7x192xf32>
    %13 = vector.extract_strided_slice %1 {offsets = [2, 0], sizes = [7, 288], strides = [1, 1]} : vector<9x288xf32> to vector<7x288xf32>
    %14 = arith.truncf %13 : vector<7x288xf32> to vector<7x288xbf16>
    %c2 = arith.constant 2 : index
    %c0_8 = arith.constant 0 : index
    %c0_9 = arith.constant 0 : index
    %15 = vector.load %arg2[%c2, %c0_8, %c0_9] : memref<3x288x192xbf16, #tpu.memory_space<vmem>>, vector<1x288x192xbf16>
    %16 = vector.shape_cast %15 : vector<1x288x192xbf16> to vector<288x192xbf16>
    %cst_10 = arith.constant dense<0.000000e+00> : vector<7x192xf32>
    %17 = tpu.matmul %14, %16, %cst_10 {dimension_numbers = #tpu.dot_dimension_numbers<[1], [0], [0], [1], [0, 0, 1, 1], [], []>} : vector<7x288xbf16>, vector<288x192xbf16>, vector<7x192xf32> -> vector<7x192xf32>
    %18 = arith.addf %12, %17 : vector<7x192xf32>
    %c0_11 = arith.constant 0 : index
    %c0_12 = arith.constant 0 : index
    %19 = vector.load %arg3[%c0_11, %c0_12] : memref<1x192xf32, #tpu.memory_space<vmem>>, vector<1x192xf32>
    %20 = vector.broadcast %19 : vector<1x192xf32> to vector<7x192xf32>
    %21 = arith.addf %18, %20 : vector<7x192xf32>
    %22 = vector.extract_strided_slice %21 {offsets = [0, 0], sizes = [7, 96], strides = [1, 1]} : vector<7x192xf32> to vector<7x96xf32>
    %23 = vector.extract_strided_slice %21 {offsets = [0, 96], sizes = [7, 96], strides = [1, 1]} : vector<7x192xf32> to vector<7x96xf32>
    %24 = arith.maximumf %22, %23 : vector<7x96xf32>
    %25 = tpu.iota {dimensions = array<i32: 0>} : vector<3x7xi32>
    %26 = tpu.iota {dimensions = array<i32: 1>} : vector<3x7xi32>
    %c2_i32 = arith.constant 2 : i32
    %27 = vector.broadcast %c2_i32 : i32 to vector<3x7xi32>
    %28 = arith.muli %27, %25 : vector<3x7xi32>
    %29 = arith.cmpi eq, %26, %28 : vector<3x7xi32>
    %30 = arith.extui %29 : vector<3x7xi1> to vector<3x7xi32>
    %31 = arith.sitofp %30 : vector<3x7xi32> to vector<3x7xf32>
    %c2_i32_13 = arith.constant 2 : i32
    %32 = vector.broadcast %c2_i32_13 : i32 to vector<3x7xi32>
    %33 = arith.muli %32, %25 : vector<3x7xi32>
    %c1_i32 = arith.constant 1 : i32
    %34 = vector.broadcast %c1_i32 : i32 to vector<3x7xi32>
    %35 = arith.addi %33, %34 : vector<3x7xi32>
    %36 = arith.cmpi eq, %26, %35 : vector<3x7xi32>
    %37 = arith.extui %36 : vector<3x7xi1> to vector<3x7xi32>
    %38 = arith.sitofp %37 : vector<3x7xi32> to vector<3x7xf32>
    %cst_14 = arith.constant dense<0.000000e+00> : vector<3x96xf32>
    %39 = tpu.matmul %31, %24, %cst_14 {dimension_numbers = #tpu.dot_dimension_numbers<[1], [0], [0], [1], [0, 0, 1, 1], [], []>} : vector<3x7xf32>, vector<7x96xf32>, vector<3x96xf32> -> vector<3x96xf32>
    %cst_15 = arith.constant dense<0.000000e+00> : vector<3x96xf32>
    %40 = tpu.matmul %38, %24, %cst_15 {dimension_numbers = #tpu.dot_dimension_numbers<[1], [0], [0], [1], [0, 0, 1, 1], [], []>} : vector<3x7xf32>, vector<7x96xf32>, vector<3x96xf32> -> vector<3x96xf32>
    %41 = arith.maximumf %39, %40 : vector<3x96xf32>
    %cst_16 = arith.constant 0.000000e+00 : f32
    %42 = vector.broadcast %cst_16 : f32 to vector<3x96xf32>
    %43 = arith.maximumf %41, %42 : vector<3x96xf32>
    %c0_17 = arith.constant 0 : index
    %c0_18 = arith.constant 0 : index
    %c0_19 = arith.constant 0 : index
    %44 = vector.load %arg4[%c0_17, %c0_18, %c0_19] : memref<1x3x96xf32, #tpu.memory_space<vmem>>, vector<1x3x96xf32>
    %45 = vector.shape_cast %44 : vector<1x3x96xf32> to vector<3x96xf32>
    %46 = vector.shape_cast %43 : vector<3x96xf32> to vector<1x3x96xf32>
    tpu.vector_store %arg4[%c0_17, %c0_18, %c0_19], %46 {strides = array<i32>} : memref<1x3x96xf32, #tpu.memory_space<vmem>>, vector<1x3x96xf32>,
    return
  }
  func.func @transform_0(%arg0: i32) -> (i32, i32, i32) {
    %c0_i32 = arith.constant 0 : i32
    %c0_i32_0 = arith.constant 0 : i32
    %c0_i32_1 = arith.constant 0 : i32
    return %arg0, %c0_i32, %c0_i32_0 : i32, i32, i32
  }
  func.func @transform_1(%arg0: i32) -> (i32, i32, i32) {
    %c0_i32 = arith.constant 0 : i32
    %c0_i32_0 = arith.constant 0 : i32
    %c0_i32_1 = arith.constant 0 : i32
    %c0_i32_2 = arith.constant 0 : i32
    return %c0_i32, %c0_i32_0, %c0_i32_1 : i32, i32, i32
  }
  func.func @transform_2(%arg0: i32) -> (i32, i32) {
    %c0_i32 = arith.constant 0 : i32
    %c0_i32_0 = arith.constant 0 : i32
    %c0_i32_1 = arith.constant 0 : i32
    return %c0_i32, %c0_i32_0 : i32, i32
  }
  func.func @transform_3(%arg0: i32) -> (i32, i32, i32) {
    %c0_i32 = arith.constant 0 : i32
    %c0_i32_0 = arith.constant 0 : i32
    %c0_i32_1 = arith.constant 0 : i32
    return %arg0, %c0_i32, %c0_i32_0 : i32, i32, i32
  }
}

module attributes {stable_mosaic.version = 11 : i64} {
  func.func @_fc_head_kernel(%arg0: memref<2x288xf32, #tpu.memory_space<vmem>>, %arg1: memref<288x128xbf16, #tpu.memory_space<vmem>>, %arg2: memref<1x128xf32, #tpu.memory_space<vmem>>, %arg3: memref<128x64xbf16, #tpu.memory_space<vmem>>, %arg4: memref<1x64xf32, #tpu.memory_space<vmem>>, %arg5: memref<64x10xbf16, #tpu.memory_space<vmem>>, %arg6: memref<1x10xf32, #tpu.memory_space<vmem>>, %arg7: memref<2x10xf32, #tpu.memory_space<vmem>>) attributes {dimension_semantics = [], scalar_prefetch = 0 : i64, scratch_operands = 0 : i64, tpu.core_type = #tpu.core_type<tc>} {
    %c0 = arith.constant 0 : index
    %c0_0 = arith.constant 0 : index
    %0 = vector.load %arg0[%c0, %c0_0] : memref<2x288xf32, #tpu.memory_space<vmem>>, vector<2x288xf32>
    %1 = arith.truncf %0 : vector<2x288xf32> to vector<2x288xbf16>
    %c0_1 = arith.constant 0 : index
    %c0_2 = arith.constant 0 : index
    %2 = vector.load %arg1[%c0_1, %c0_2] : memref<288x128xbf16, #tpu.memory_space<vmem>>, vector<288x128xbf16>
    %cst = arith.constant dense<0.000000e+00> : vector<2x128xf32>
    %3 = tpu.matmul %1, %2, %cst {dimension_numbers = #tpu.dot_dimension_numbers<[1], [0], [0], [1], [0, 0, 1, 1], [], []>} : vector<2x288xbf16>, vector<288x128xbf16>, vector<2x128xf32> -> vector<2x128xf32>
    %c0_3 = arith.constant 0 : index
    %c0_4 = arith.constant 0 : index
    %4 = vector.load %arg2[%c0_3, %c0_4] : memref<1x128xf32, #tpu.memory_space<vmem>>, vector<1x128xf32>
    %5 = vector.broadcast %4 : vector<1x128xf32> to vector<2x128xf32>
    %6 = arith.addf %3, %5 : vector<2x128xf32>
    %7 = arith.truncf %6 : vector<2x128xf32> to vector<2x128xbf16>
    %c0_5 = arith.constant 0 : index
    %c0_6 = arith.constant 0 : index
    %8 = vector.load %arg3[%c0_5, %c0_6] : memref<128x64xbf16, #tpu.memory_space<vmem>>, vector<128x64xbf16>
    %cst_7 = arith.constant dense<0.000000e+00> : vector<2x64xf32>
    %9 = tpu.matmul %7, %8, %cst_7 {dimension_numbers = #tpu.dot_dimension_numbers<[1], [0], [0], [1], [0, 0, 1, 1], [], []>} : vector<2x128xbf16>, vector<128x64xbf16>, vector<2x64xf32> -> vector<2x64xf32>
    %c0_8 = arith.constant 0 : index
    %c0_9 = arith.constant 0 : index
    %10 = vector.load %arg4[%c0_8, %c0_9] : memref<1x64xf32, #tpu.memory_space<vmem>>, vector<1x64xf32>
    %11 = vector.broadcast %10 : vector<1x64xf32> to vector<2x64xf32>
    %12 = arith.addf %9, %11 : vector<2x64xf32>
    %13 = arith.truncf %12 : vector<2x64xf32> to vector<2x64xbf16>
    %c0_10 = arith.constant 0 : index
    %c0_11 = arith.constant 0 : index
    %14 = vector.load %arg5[%c0_10, %c0_11] : memref<64x10xbf16, #tpu.memory_space<vmem>>, vector<64x10xbf16>
    %cst_12 = arith.constant dense<0.000000e+00> : vector<2x10xf32>
    %15 = tpu.matmul %13, %14, %cst_12 {dimension_numbers = #tpu.dot_dimension_numbers<[1], [0], [0], [1], [0, 0, 1, 1], [], []>} : vector<2x64xbf16>, vector<64x10xbf16>, vector<2x10xf32> -> vector<2x10xf32>
    %c0_13 = arith.constant 0 : index
    %c0_14 = arith.constant 0 : index
    %16 = vector.load %arg6[%c0_13, %c0_14] : memref<1x10xf32, #tpu.memory_space<vmem>>, vector<1x10xf32>
    %17 = vector.broadcast %16 : vector<1x10xf32> to vector<2x10xf32>
    %18 = arith.addf %15, %17 : vector<2x10xf32>
    %cst_15 = arith.constant dense<0xFF800000> : vector<2xf32>
    %19 = vector.multi_reduction <maximumf>, %18, %cst_15 [1] : vector<2x10xf32> to vector<2xf32>
    %20 = vector.shape_cast %19 : vector<2xf32> to vector<2x1xf32>
    %21 = vector.broadcast %20 : vector<2x1xf32> to vector<2x10xf32>
    %22 = arith.subf %18, %21 : vector<2x10xf32>
    %23 = math.exp %22 : vector<2x10xf32>
    %cst_16 = arith.constant dense<0.000000e+00> : vector<2xf32>
    %24 = vector.multi_reduction <add>, %23, %cst_16 [1] : vector<2x10xf32> to vector<2xf32>
    %25 = vector.shape_cast %24 : vector<2xf32> to vector<2x1xf32>
    %26 = math.log %25 : vector<2x1xf32>
    %27 = vector.broadcast %26 : vector<2x1xf32> to vector<2x10xf32>
    %28 = arith.subf %22, %27 : vector<2x10xf32>
    %c0_17 = arith.constant 0 : index
    %c0_18 = arith.constant 0 : index
    %29 = vector.load %arg7[%c0_17, %c0_18] : memref<2x10xf32, #tpu.memory_space<vmem>>, vector<2x10xf32>
    tpu.vector_store %arg7[%c0_17, %c0_18], %28 {strides = array<i32>} : memref<2x10xf32, #tpu.memory_space<vmem>>, vector<2x10xf32>,
    return
  }
}

</mosaic_0001>

<llo_original>
// kernel: cnn_mnist_forward.4
$region0: #{cnn_mnist_forward.4}
  #allocation0 [shape = 'u32[]', space=smem, size = 0x4, offset = 0x4, fixed_abs, tag = 'smem constant byte address 0x4 - core index']
  #allocation1 [shape = 'u32[144,128]{1,0:T(1,128)}', space=vmem, size = 0x12000, scoped, tag = 'internal scratch']
  %s0 = inlined_call_operand.vmem [shape: f32[2,32,32], index: 0, kind: input, shape index: {}]
  %s1 = inlined_call_operand.hbm [shape: bf16[5,32,896], index: 1, kind: input, shape index: {}]
  %s2 = inlined_call_operand.hbm [shape: f32[1,896], index: 2, kind: input, shape index: {}]
  %s3 = inlined_call_operand.vmem [shape: f32[2,14,448], index: 3, kind: output, shape index: {}]
  %s4 = sld [smem:[#allocation0]]
  $region53: #{cnn_mnist_forward.4} parent=0
    _
  %s6 = ssub.s32 1, %s4
  %s7 = scalar_select 0, %s6, %s4
  $region1: #{cnn_mnist_forward.4} parent=0
    #allocation2 [shape = 'u8[286720]{0}', space=vmem, size = 0x46000, scoped, tag = 'input window, operand 1, single buffered']
    #allocation3 [shape = 's32[2]{0}', space=sflag, size = 0x8, scoped, tag = 'scoped memory for cnn_mnist_forward.4']
    #allocation4 [shape = 'u8[3584]{0}', space=vmem, size = 0x1000, scoped, tag = 'input window, operand 2, single buffered']
    #allocation5 [shape = 's32[1]{0}', space=sflag, size = 0x4, scoped, tag = 'scoped memory for cnn_mnist_forward.4']
    %8 = vsyncpa [#allocation3], 0
    %9 = vsyncpa [#allocation5], 0
    loop: start=0, step=1, limit=4
    $region2: #{cnn_mnist_forward.4} parent=1 // loop_pre_header
      _
    $region3: #{cnn_mnist_forward.4} parent=1 // loop_header
      %s11 = sphi 0, %s15
      %p12 = scmp.ge.s32.totalorder %s11, 4
      %s21 = sphi 0, %s23
      %s24 = sphi 0, %s21
      %s25 = sphi 0, %s24
      %s41 = sphi 0, %s25
      %s45 = sphi 0, %s45
      %s47 = sphi 0, %s45
      %s48 = sphi 0, %s47
      %s62 = sphi 0, %s48
      %s66 = sphi 0, %s66
      %s68 = sphi 0, %s66
      %s69 = sphi 0, %s68
      %s83 = sphi 0, %s69
      %s89 = sphi 0, %s91
      %s92 = sphi 0, %s89
      %s93 = sphi 0, %s92
      %s109 = sphi 0, %s93
    $region4: #{cnn_mnist_forward.4} parent=1 // loop_header_branch
      %14 = sbr.rel (%p12) target = $region8
    $region5: #{cnn_mnist_forward.4} parent=1 // loop_body
      %s16 = ssub.s32 %s11, 1
      %s17 = ssub.s32 %s11, 2
      %s18 = sadd.s32 %s11, 1
      %s19 = ssub.s32 %s11, %s18
      %p20 = scmp.eq.s32.totalorder %s19, 0
      %s22 = sadd.s32 %s21, 1
      %s23 = scalar_select %p20, %s21, %s22
      %p26 = pneg %p20
      %p27 = scmp.eq.s32.totalorder %s11, 1
      %p28 = por %p26, %p27
      %p29 = scmp.ne.s32.totalorder %s21, %s24
      %p30 = scmp.eq.s32.totalorder %s11, 0
      %p31 = por %p29, %p30
      %p32 = scmp.ne.s32.totalorder %s21, %s24
      %p33 = scmp.eq.s32.totalorder %s16, 1
      %p34 = por %p32, %p33
      %p35 = scmp.ne.s32.totalorder %s24, %s25
      %p36 = scmp.eq.s32.totalorder %s16, 0
      %p37 = por %p35, %p36
      %p38 = scmp.ne.s32.totalorder %s24, %s25
      %p39 = scmp.eq.s32.totalorder %s17, 1
      %p40 = por %p38, %p39
      %p42 = scmp.ne.s32.totalorder %s25, %s41
      %p43 = scmp.eq.s32.totalorder %s17, 0
      %p44 = por %p42, %p43
      %s46 = sadd.s32 %s45, 1
      %p49 = scmp.eq.s32.totalorder %s11, 1
      %p50 = scmp.ne.s32.totalorder %s45, %s47
      %p51 = scmp.eq.s32.totalorder %s11, 0
      %p52 = por %p50, %p51
      %p53 = scmp.ne.s32.totalorder %s45, %s47
      %p54 = scmp.eq.s32.totalorder %s16, 1
      %p55 = por %p53, %p54
      %p56 = scmp.ne.s32.totalorder %s47, %s48
      %p57 = scmp.eq.s32.totalorder %s16, 0
      %p58 = por %p56, %p57
      %p59 = scmp.ne.s32.totalorder %s47, %s48
      %p60 = scmp.eq.s32.totalorder %s17, 1
      %p61 = por %p59, %p60
      %p63 = scmp.ne.s32.totalorder %s48, %s62
      %p64 = scmp.eq.s32.totalorder %s17, 0
      %p65 = por %p63, %p64
      %s67 = sadd.s32 %s66, 1
      %p70 = scmp.eq.s32.totalorder %s11, 1
      %p71 = scmp.ne.s32.totalorder %s66, %s68
      %p72 = scmp.eq.s32.totalorder %s11, 0
      %p73 = por %p71, %p72
      %p74 = scmp.ne.s32.totalorder %s66, %s68
      %p75 = scmp.eq.s32.totalorder %s16, 1
      %p76 = por %p74, %p75
      %p77 = scmp.ne.s32.totalorder %s68, %s69
      %p78 = scmp.eq.s32.totalorder %s16, 0
      %p79 = por %p77, %p78
      %p80 = scmp.ne.s32.totalorder %s68, %s69
      %p81 = scmp.eq.s32.totalorder %s17, 1
      %p82 = por %p80, %p81
      %p84 = scmp.ne.s32.totalorder %s69, %s83
      %p85 = scmp.eq.s32.totalorder %s17, 0
      %p86 = por %p84, %p85
      %s87 = ssub.s32 %s11, %s18
      %p88 = scmp.eq.s32.totalorder %s87, 0
      %s90 = sadd.s32 %s89, 1
      %s91 = scalar_select %p88, %s89, %s90
      %p94 = pneg %p88
      %p95 = scmp.eq.s32.totalorder %s11, 1
      %p96 = por %p94, %p95
      %p97 = scmp.ne.s32.totalorder %s89, %s92
      %p98 = scmp.eq.s32.totalorder %s11, 0
      %p99 = por %p97, %p98
      %p100 = scmp.ne.s32.totalorder %s89, %s92
      %p101 = scmp.eq.s32.totalorder %s16, 1
      %p102 = por %p100, %p101
      %p103 = scmp.ne.s32.totalorder %s92, %s93
      %p104 = scmp.eq.s32.totalorder %s16, 0
      %p105 = por %p103, %p104
      %p106 = scmp.ne.s32.totalorder %s92, %s93
      %p107 = scmp.eq.s32.totalorder %s17, 1
      %p108 = por %p106, %p107
      %p110 = scmp.ne.s32.totalorder %s93, %s109
      %p111 = scmp.eq.s32.totalorder %s17, 0
      %p112 = por %p110, %p111
      %p113 = scmp.le.s32.totalorder 1, %s11
      %p114 = scmp.lt.s32.totalorder %s11, 3
      %p115 = pnand %p113, %p114
      %p116 = pneg %p115
      // Predicated region
      $region9: #{cnn_mnist_forward.4} parent=5 // pred_check
        _
      $region10: #{cnn_mnist_forward.4} parent=5 // pred_check_branch
        %118 = sbr.rel (%p115) target = $region12
      $region11: #{cnn_mnist_forward.4} parent=5 // pred_region
        %s119 = ssub.s32 %s11, 1
        // Predicated region
        $region13: #{cnn_mnist_forward.4} parent=11 // pred_check
          %p120 = pneg %p58
        $region14: #{cnn_mnist_forward.4} parent=11 // pred_check_branch
          %122 = sbr.rel (%p120) target = $region16
        $region15: #{cnn_mnist_forward.4} parent=11 // pred_region
          %s124 = ssub.s32 8960, 8960
          %125 = vsyncadd [#allocation3], %s124
          %s126 = sshll.u32 [#allocation2], 4
          %s127 = int_to_ptr.vmem [resolvable:$true] %s126
          %132 = dma.hbm_to_vmem [thread:$0]  %s1, 8960, %s127, [#allocation3], 448, 448, 28
        $region16: #{cnn_mnist_forward.4} parent=11 // pred_fallthru
          _
        // Predicated region
        $region17: #{cnn_mnist_forward.4} parent=11 // pred_check
          %p133 = pneg %p79
        $region18: #{cnn_mnist_forward.4} parent=11 // pred_check_branch
          %135 = sbr.rel (%p133) target = $region20
        $region19: #{cnn_mnist_forward.4} parent=11 // pred_region
          %s137 = ssub.s32 112, 112
          %138 = vsyncadd [#allocation5], %s137
          %s140 = sshll.u32 [#allocation4], 4
          %s141 = int_to_ptr.vmem [resolvable:$true] %s140
          %143 = dma.hbm_to_vmem [thread:$0]  %s2, 112, %s141, [#allocation5]
        $region20: #{cnn_mnist_forward.4} parent=11 // pred_fallthru
          _
      $region12: #{cnn_mnist_forward.4} parent=5 // pred_fallthru
        _
      %p144 = scmp.lt.s32.totalorder %s11, 2
      // Predicated region
      $region21: #{cnn_mnist_forward.4} parent=5 // pred_check
        %p145 = pneg %p144
      $region22: #{cnn_mnist_forward.4} parent=5 // pred_check_branch
        %147 = sbr.rel (%p145) target = $region24
      $region23: #{cnn_mnist_forward.4} parent=5 // pred_region
        // Predicated region
        $region25: #{cnn_mnist_forward.4} parent=23 // pred_check
          %p148 = pneg %p31
        $region26: #{cnn_mnist_forward.4} parent=23 // pred_check_branch
          %150 = sbr.rel (%p148) target = $region28
        $region27: #{cnn_mnist_forward.4} parent=23 // pred_region
          %p151 = scmp.lt.s32.totalorder %s11, 1
          %s152 = scalar_select %p151, %s11, 1
          %s153 = smul.addr %s152, 4
          %s154 = smul.addr %s153, 8
          %s155 = scalar_lea.vmem %s0, %s154
        $region28: #{cnn_mnist_forward.4} parent=23 // pred_fallthru
          _
      $region24: #{cnn_mnist_forward.4} parent=5 // pred_fallthru
        _
      %p156 = scmp.le.s32.totalorder 1, %s11
      %p157 = scmp.lt.s32.totalorder %s11, 3
      %p158 = pnand %p156, %p157
      %p159 = pneg %p158
      // Predicated region
      $region29: #{cnn_mnist_forward.4} parent=5 // pred_check
        _
      $region30: #{cnn_mnist_forward.4} parent=5 // pred_check_branch
        %161 = sbr.rel (%p158) target = $region32
      $region31: #{cnn_mnist_forward.4} parent=5 // pred_region
        %s162 = ssub.s32 %s11, 1
        // Predicated region
        $region33: #{cnn_mnist_forward.4} parent=31 // pred_check
          %p163 = pneg %p58
        $region34: #{cnn_mnist_forward.4} parent=31 // pred_check_branch
          %165 = sbr.rel (%p163) target = $region36
        $region35: #{cnn_mnist_forward.4} parent=31 // pred_region
          %166 = dma.done [#allocation3], 8960
        $region36: #{cnn_mnist_forward.4} parent=31 // pred_fallthru
          _
        // Predicated region
        $region37: #{cnn_mnist_forward.4} parent=31 // pred_check
          %p167 = pneg %p79
        $region38: #{cnn_mnist_forward.4} parent=31 // pred_check_branch
          %169 = sbr.rel (%p167) target = $region40
        $region39: #{cnn_mnist_forward.4} parent=31 // pred_region
          %170 = dma.done [#allocation5], 112
        $region40: #{cnn_mnist_forward.4} parent=31 // pred_fallthru
          _
        %p171 = scmp.lt.s32.totalorder %s16, 1
        %s172 = scalar_select %p171, %s16, 1
        %s173 = smul.addr %s172, 4
        %s174 = smul.addr %s173, 8
        %s175 = scalar_lea.vmem %s0, %s174
        %p176 = pneg %p37
        %p177 = pneg %p34
        %p178 = pneg %p58
        %p179 = pneg %p55
        %p180 = pneg %p79
        %p181 = pneg %p76
        %p182 = pneg %p105
        %p183 = pneg %p102
        %p184 = scmp.lt.s32.totalorder %s16, 1
        %s185 = scalar_select %p184, %s16, 1
        %s186 = smul.addr %s185, 8
        %s187 = smul.addr %s186, 8
        %s188 = scalar_lea.vmem %s3, %s187
        %p189 = scmp.lt.s32.totalorder %s16, 1
        %s190 = scalar_select %p189, %s16, 1
        %s191 = smul.addr %s190, 4
        %s192 = smul.addr %s191, 8
        %s193 = scalar_lea.vmem %s0, %s192
        %p194 = scmp.lt.s32.totalorder %s16, 1
        %s195 = scalar_select %p194, %s16, 1
        %s196 = smul.addr %s195, 8
        %s197 = smul.addr %s196, 8
        %s198 = scalar_lea.vmem %s3, %s197
        %v200 = vld [vmem:[%s193] sm:$0xff]
        %v201 = vld [vmem:[%s193 + $0x8] sm:$0xff]
        %v202 = vld [vmem:[%s193 + $0x10] sm:$0xff]
        %v203 = vld [vmem:[%s193 + $0x18] sm:$0xff]
        %v204 = vpack.c.bf16 %v201, %v200
        %v205 = vpack.c.bf16 %v203, %v202
        %v206 = vld [vmem:[#allocation2] sm:$0xff]
        %v207 = vld [vmem:[#allocation2 + $0x8] sm:$0xff]
        %v208 = vld [vmem:[#allocation2 + $0x10] sm:$0xff]
        %v209 = vld [vmem:[#allocation2 + $0x18] sm:$0xf]
        %v210 = vld [vmem:[#allocation2 + $0x1c] sm:$0xff]
        %v211 = vld [vmem:[#allocation2 + $0x24] sm:$0xff]
        %v212 = vld [vmem:[#allocation2 + $0x2c] sm:$0xff]
        %v213 = vld [vmem:[#allocation2 + $0x34] sm:$0xf]
        %v214 = vld [vmem:[#allocation2 + $0x38] sm:$0xff]
        %v215 = vld [vmem:[#allocation2 + $0x40] sm:$0xff]
        %v216 = vld [vmem:[#allocation2 + $0x48] sm:$0xff]
        %v217 = vld [vmem:[#allocation2 + $0x50] sm:$0xf]
        %v218 = vld [vmem:[#allocation2 + $0x54] sm:$0xff]
        %v219 = vld [vmem:[#allocation2 + $0x5c] sm:$0xff]
        %v220 = vld [vmem:[#allocation2 + $0x64] sm:$0xff]
        %v221 = vld [vmem:[#allocation2 + $0x6c] sm:$0xf]
        %s222 = scalar_lea.vmem [#allocation2], 112
        %v223 = vld [vmem:[%s222] sm:$0xff]
        %v224 = vld [vmem:[%s222 + $0x8] sm:$0xff]
        %v225 = vld [vmem:[%s222 + $0x10] sm:$0xff]
        %v226 = vld [vmem:[%s222 + $0x18] sm:$0xf]
        %v227 = vld [vmem:[%s222 + $0x1c] sm:$0xff]
        %v228 = vld [vmem:[%s222 + $0x24] sm:$0xff]
        %v229 = vld [vmem:[%s222 + $0x2c] sm:$0xff]
        %v230 = vld [vmem:[%s222 + $0x34] sm:$0xf]
        %v231 = vld [vmem:[%s222 + $0x38] sm:$0xff]
        %v232 = vld [vmem:[%s222 + $0x40] sm:$0xff]
        %v233 = vld [vmem:[%s222 + $0x48] sm:$0xff]
        %v234 = vld [vmem:[%s222 + $0x50] sm:$0xf]
        %v235 = vld [vmem:[%s222 + $0x54] sm:$0xff]
        %v236 = vld [vmem:[%s222 + $0x5c] sm:$0xff]
        %v237 = vld [vmem:[%s222 + $0x64] sm:$0xff]
        %v238 = vld [vmem:[%s222 + $0x6c] sm:$0xf]
        %vm239 = vsmask.f32 7424
        %v241 = vshrl.u32 %v204, 16
        %v243 = vshll.u32 %v204, 16
        %v245 = vrot.slane %v243, 1
        %v246 = vor.u32 %v241, %v245
        %v248 = vshll.u32 %v205, 16
        %v250 = vrot.slane %v248, 1
        %v251 = vsel %vm239, %v246, %v250
        %v252 = vshrl.u32 %v205, 16
        %v254 = vor.u32 %v252, %v250
        %v271 = vunpack.c.l.b16 %v223
        %v272 = vunpack.c.h.b16 %v223
        %v273 = vunpack.c.l.b16 %v224
        %v274 = vunpack.c.h.b16 %v224
        %v275 = vunpack.c.l.b16 %v225
        %v276 = vunpack.c.h.b16 %v225
        %v277 = vunpack.c.l.b16 %v226
        %v278 = vunpack.c.l.b16 %v227
        %v279 = vunpack.c.h.b16 %v227
        %v280 = vunpack.c.l.b16 %v228
        %v281 = vunpack.c.h.b16 %v228
        %v282 = vunpack.c.l.b16 %v229
        %v283 = vunpack.c.h.b16 %v229
        %v284 = vunpack.c.l.b16 %v230
        %v285 = vunpack.c.l.b16 %v231
        %v286 = vunpack.c.h.b16 %v231
        %v287 = vunpack.c.l.b16 %v232
        %v288 = vunpack.c.h.b16 %v232
        %v289 = vunpack.c.l.b16 %v233
        %v290 = vunpack.c.h.b16 %v233
        %v291 = vunpack.c.l.b16 %v234
        %v292 = vunpack.c.l.b16 %v235
        %v293 = vunpack.c.h.b16 %v235
        %v294 = vunpack.c.l.b16 %v236
        %v295 = vunpack.c.h.b16 %v236
        %v296 = vunpack.c.l.b16 %v237
        %v297 = vunpack.c.h.b16 %v237
        %v298 = vunpack.c.l.b16 %v238
        %v299 = vpack.c.b16 %v278, %v271
        %v300 = vpack.c.b16 %v279, %v272
        %v301 = vpack.c.b16 %v280, %v273
        %v302 = vpack.c.b16 %v281, %v274
        %v303 = vpack.c.b16 %v282, %v275
        %v304 = vpack.c.b16 %v283, %v276
        %v305 = vpack.c.b16 %v284, %v277
        %v306 = vpack.c.b16 %v292, %v285
        %v307 = vpack.c.b16 %v293, %v286
        %v308 = vpack.c.b16 %v294, %v287
        %v309 = vpack.c.b16 %v295, %v288
        %v310 = vpack.c.b16 %v296, %v289
        %v311 = vpack.c.b16 %v297, %v290
        %v312 = vpack.c.b16 %v298, %v291
        %vm327 = vcmask 261120
        %v329 = vsel %vm327, %v251, 0
        %v332 = vsel %vm327, %v254, 0
        %334 = vmatprep.subr.bf16.mxu0 %v300
        %335 = vmatpush1.bf16.msra.mxu0 %v299
        %336 = vmatprep.subr.bf16.mxu0 %v307
        %337 = vmatpush1.bf16.msra.mxu0 %v306
        %338 = vmatprep.subr.bf16.mxu0 0
        %339 = vmatpush1.bf16.msra.mxu0 0
        %340 = vmatprep.subr.bf16.mxu0 0
        %341 = vmatpush1.bf16.msra.mxu0 0
        %342 = vmatprep.subr.bf16.mxu0 0
        %343 = vmatpush1.bf16.msra.mxu0 0
        %344 = vmatprep.subr.bf16.mxu0 0
        %345 = vmatpush1.bf16.msra.mxu0 0
        %346 = vmatprep.subr.bf16.mxu0 0
        %347 = vmatpush1.bf16.msra.mxu0 0
        %348 = vmatprep.subr.bf16.mxu0 0
        %349 = vmatpush1.bf16.msra.mxu0 0
        %350 = vmatprep.subr.bf16.mxu0 0
        %351 = vmatpush1.bf16.msra.mxu0 0
        %352 = vmatprep.subr.bf16.mxu0 0
        %353 = vmatpush1.bf16.msra.mxu0 0
        %354 = vmatprep.subr.bf16.mxu0 0
        %355 = vmatpush1.bf16.msra.mxu0 0
        %356 = vmatprep.subr.bf16.mxu0 0
        %357 = vmatpush1.bf16.msra.mxu0 0
        %358 = vmatprep.subr.bf16.mxu0 0
        %359 = vmatpush1.bf16.msra.mxu0 0
        %360 = vmatprep.subr.bf16.mxu0 0
        %361 = vmatpush1.bf16.msra.mxu0 0
        %362 = vmatprep.subr.bf16.mxu0 0
        %363 = vmatpush1.bf16.msra.mxu0 0
        %364 = vmatprep.subr.bf16.mxu0 0
        %365 = vmatpush1.bf16.msra.mxu0 0
        %366 = vmatprep.mubr.bf16.mxu0 0
        %367 = vmatmul.mubr.bf16.gmra.mrb[0].mxu0 %v329
        %v368 = vpop.f32.mrb[0].mxu0
        %v369 = vadd.f32 0.0, %v368
        %v370 = vpop.f32.mrb[0].mxu0
        %v371 = vadd.f32 0.0, %v370
        %v372 = vpop.f32.mrb[0].mxu0
        %v373 = vadd.f32 0.0, %v372
        %v374 = vpop.f32.mrb[0].mxu0
        %v375 = vadd.f32 0.0, %v374
        %376 = vmatprep.mubr.bf16.mxu0 0
        %377 = vmatmul.mubr.bf16.gmra.mrb[0].mxu0 %v332
        %v378 = vpop.f32.mrb[0].mxu0
        %v379 = vadd.f32 0.0, %v378
        %v380 = vpop.f32.mrb[0].mxu0
        %v381 = vadd.f32 0.0, %v380
        %v382 = vpop.f32.mrb[0].mxu0
        %v383 = vadd.f32 0.0, %v382
        %v384 = vpop.f32.mrb[0].mxu0
        %v385 = vadd.f32 0.0, %v384
        %386 = vdwg.mxu0
        %387 = vmatprep.subr.bf16.mxu0 %v302
        %388 = vmatpush1.bf16.msra.mxu0 %v301
        %389 = vmatprep.subr.bf16.mxu0 %v309
        %390 = vmatpush1.bf16.msra.mxu0 %v308
        %391 = vmatprep.subr.bf16.mxu0 0
        %392 = vmatpush1.bf16.msra.mxu0 0
        %393 = vmatprep.subr.bf16.mxu0 0
        %394 = vmatpush1.bf16.msra.mxu0 0
        %395 = vmatprep.subr.bf16.mxu0 0
        %396 = vmatpush1.bf16.msra.mxu0 0
        %397 = vmatprep.subr.bf16.mxu0 0
        %398 = vmatpush1.bf16.msra.mxu0 0
        %399 = vmatprep.subr.bf16.mxu0 0
        %400 = vmatpush1.bf16.msra.mxu0 0
        %401 = vmatprep.subr.bf16.mxu0 0
        %402 = vmatpush1.bf16.msra.mxu0 0
        %403 = vmatprep.subr.bf16.mxu0 0
        %404 = vmatpush1.bf16.msra.mxu0 0
        %405 = vmatprep.subr.bf16.mxu0 0
        %406 = vmatpush1.bf16.msra.mxu0 0
        %407 = vmatprep.subr.bf16.mxu0 0
        %408 = vmatpush1.bf16.msra.mxu0 0
        %409 = vmatprep.subr.bf16.mxu0 0
        %410 = vmatpush1.bf16.msra.mxu0 0
        %411 = vmatprep.subr.bf16.mxu0 0
        %412 = vmatpush1.bf16.msra.mxu0 0
        %413 = vmatprep.subr.bf16.mxu0 0
        %414 = vmatpush1.bf16.msra.mxu0 0
        %415 = vmatprep.subr.bf16.mxu0 0
        %416 = vmatpush1.bf16.msra.mxu0 0
        %417 = vmatprep.subr.bf16.mxu0 0
        %418 = vmatpush1.bf16.msra.mxu0 0
        %419 = vmatprep.mubr.bf16.mxu0 0
        %420 = vmatmul.mubr.bf16.gmra.mrb[0].mxu0 %v329
        %v421 = vpop.f32.mrb[0].mxu0
        %v422 = vadd.f32 0.0, %v421
        %v423 = vpop.f32.mrb[0].mxu0
        %v424 = vadd.f32 0.0, %v423
        %v425 = vpop.f32.mrb[0].mxu0
        %v426 = vadd.f32 0.0, %v425
        %v427 = vpop.f32.mrb[0].mxu0
        %v428 = vadd.f32 0.0, %v427
        %429 = vmatprep.mubr.bf16.mxu0 0
        %430 = vmatmul.mubr.bf16.gmra.mrb[0].mxu0 %v332
        %v431 = vpop.f32.mrb[0].mxu0
        %v432 = vadd.f32 0.0, %v431
        %v433 = vpop.f32.mrb[0].mxu0
        %v434 = vadd.f32 0.0, %v433
        %v435 = vpop.f32.mrb[0].mxu0
        %v436 = vadd.f32 0.0, %v435
        %v437 = vpop.f32.mrb[0].mxu0
        %v438 = vadd.f32 0.0, %v437
        %439 = vdwg.mxu0
        %440 = vmatprep.subr.bf16.mxu0 %v304
        %441 = vmatpush1.bf16.msra.mxu0 %v303
        %442 = vmatprep.subr.bf16.mxu0 %v311
        %443 = vmatpush1.bf16.msra.mxu0 %v310
        %444 = vmatprep.subr.bf16.mxu0 0
        %445 = vmatpush1.bf16.msra.mxu0 0
        %446 = vmatprep.subr.bf16.mxu0 0
        %447 = vmatpush1.bf16.msra.mxu0 0
        %448 = vmatprep.subr.bf16.mxu0 0
        %449 = vmatpush1.bf16.msra.mxu0 0
        %450 = vmatprep.subr.bf16.mxu0 0
        %451 = vmatpush1.bf16.msra.mxu0 0
        %452 = vmatprep.subr.bf16.mxu0 0
        %453 = vmatpush1.bf16.msra.mxu0 0
        %454 = vmatprep.subr.bf16.mxu0 0
        %455 = vmatpush1.bf16.msra.mxu0 0
        %456 = vmatprep.subr.bf16.mxu0 0
        %457 = vmatpush1.bf16.msra.mxu0 0
        %458 = vmatprep.subr.bf16.mxu0 0
        %459 = vmatpush1.bf16.msra.mxu0 0
        %460 = vmatprep.subr.bf16.mxu0 0
        %461 = vmatpush1.bf16.msra.mxu0 0
        %462 = vmatprep.subr.bf16.mxu0 0
        %463 = vmatpush1.bf16.msra.mxu0 0
        %464 = vmatprep.subr.bf16.mxu0 0
        %465 = vmatpush1.bf16.msra.mxu0 0
        %466 = vmatprep.subr.bf16.mxu0 0
        %467 = vmatpush1.bf16.msra.mxu0 0
        %468 = vmatprep.subr.bf16.mxu0 0
        %469 = vmatpush1.bf16.msra.mxu0 0
        %470 = vmatprep.subr.bf16.mxu0 0
        %471 = vmatpush1.bf16.msra.mxu0 0
        %472 = vmatprep.mubr.bf16.mxu0 0
        %473 = vmatmul.mubr.bf16.gmra.mrb[0].mxu0 %v329
        %v474 = vpop.f32.mrb[0].mxu0
        %v475 = vadd.f32 0.0, %v474
        %v476 = vpop.f32.mrb[0].mxu0
        %v477 = vadd.f32 0.0, %v476
        %v478 = vpop.f32.mrb[0].mxu0
        %v479 = vadd.f32 0.0, %v478
        %v480 = vpop.f32.mrb[0].mxu0
        %v481 = vadd.f32 0.0, %v480
        %482 = vmatprep.mubr.bf16.mxu0 0
        %483 = vmatmul.mubr.bf16.gmra.mrb[0].mxu0 %v332
        %v484 = vpop.f32.mrb[0].mxu0
        %v485 = vadd.f32 0.0, %v484
        %v486 = vpop.f32.mrb[0].mxu0
        %v487 = vadd.f32 0.0, %v486
        %v488 = vpop.f32.mrb[0].mxu0
        %v489 = vadd.f32 0.0, %v488
        %v490 = vpop.f32.mrb[0].mxu0
        %v491 = vadd.f32 0.0, %v490
        %492 = vdwg.mxu0
        %493 = vmatprep.subr.bf16.mxu0 0
        %494 = vmatpush1.bf16.msra.mxu0 %v305
        %495 = vmatprep.subr.bf16.mxu0 0
        %496 = vmatpush1.bf16.msra.mxu0 %v312
        %497 = vmatprep.subr.bf16.mxu0 0
        %498 = vmatpush1.bf16.msra.mxu0 0
        %499 = vmatprep.subr.bf16.mxu0 0
        %500 = vmatpush1.bf16.msra.mxu0 0
        %501 = vmatprep.subr.bf16.mxu0 0
        %502 = vmatpush1.bf16.msra.mxu0 0
        %503 = vmatprep.subr.bf16.mxu0 0
        %504 = vmatpush1.bf16.msra.mxu0 0
        %505 = vmatprep.subr.bf16.mxu0 0
        %506 = vmatpush1.bf16.msra.mxu0 0
        %507 = vmatprep.subr.bf16.mxu0 0
        %508 = vmatpush1.bf16.msra.mxu0 0
        %509 = vmatprep.subr.bf16.mxu0 0
        %510 = vmatpush1.bf16.msra.mxu0 0
        %511 = vmatprep.subr.bf16.mxu0 0
        %512 = vmatpush1.bf16.msra.mxu0 0
        %513 = vmatprep.subr.bf16.mxu0 0
        %514 = vmatpush1.bf16.msra.mxu0 0
        %515 = vmatprep.subr.bf16.mxu0 0
        %516 = vmatpush1.bf16.msra.mxu0 0
        %517 = vmatprep.subr.bf16.mxu0 0
        %518 = vmatpush1.bf16.msra.mxu0 0
        %519 = vmatprep.subr.bf16.mxu0 0
        %520 = vmatpush1.bf16.msra.mxu0 0
        %521 = vmatprep.subr.bf16.mxu0 0
        %522 = vmatpush1.bf16.msra.mxu0 0
        %523 = vmatprep.subr.bf16.mxu0 0
        %524 = vmatpush1.bf16.msra.mxu0 0
        %525 = vmatprep.mubr.bf16.mxu0 0
        %526 = vmatmul.mubr.bf16.gmra.mrb[0].mxu0 %v329
        %v527 = vpop.f32.mrb[0].mxu0
        %v528 = vadd.f32 0.0, %v527
        %v529 = vpop.f32.mrb[0].mxu0
        %v530 = vpop.f32.mrb[0].mxu0
        %v531 = vadd.f32 0.0, %v530
        %v532 = vpop.f32.mrb[0].mxu0
        %533 = vmatprep.mubr.bf16.mxu0 0
        %534 = vmatmul.mubr.bf16.gmra.mrb[0].mxu0 %v332
        %v535 = vpop.f32.mrb[0].mxu0
        %v536 = vadd.f32 0.0, %v535
        %v537 = vpop.f32.mrb[0].mxu0
        %v538 = vpop.f32.mrb[0].mxu0
        %v539 = vadd.f32 0.0, %v538
        %v540 = vpop.f32.mrb[0].mxu0
        %541 = vdwg.mxu0
        %v558 = vunpack.c.l.b16 %v206
        %v559 = vunpack.c.h.b16 %v206
        %v560 = vunpack.c.l.b16 %v207
        %v561 = vunpack.c.h.b16 %v207
        %v562 = vunpack.c.l.b16 %v208
        %v563 = vunpack.c.h.b16 %v208
        %v564 = vunpack.c.l.b16 %v209
        %v565 = vunpack.c.l.b16 %v210
        %v566 = vunpack.c.h.b16 %v210
        %v567 = vunpack.c.l.b16 %v211
        %v568 = vunpack.c.h.b16 %v211
        %v569 = vunpack.c.l.b16 %v212
        %v570 = vunpack.c.h.b16 %v212
        %v571 = vunpack.c.l.b16 %v213
        %v572 = vunpack.c.l.b16 %v214
        %v573 = vunpack.c.h.b16 %v214
        %v574 = vunpack.c.l.b16 %v215
        %v575 = vunpack.c.h.b16 %v215
        %v576 = vunpack.c.l.b16 %v216
        %v577 = vunpack.c.h.b16 %v216
        %v578 = vunpack.c.l.b16 %v217
        %v579 = vunpack.c.l.b16 %v218
        %v580 = vunpack.c.h.b16 %v218
        %v581 = vunpack.c.l.b16 %v219
        %v582 = vunpack.c.h.b16 %v219
        %v583 = vunpack.c.l.b16 %v220
        %v584 = vunpack.c.h.b16 %v220
        %v585 = vunpack.c.l.b16 %v221
        %v586 = vpack.c.b16 %v565, %v558
        %v587 = vpack.c.b16 %v566, %v559
        %v588 = vpack.c.b16 %v567, %v560
        %v589 = vpack.c.b16 %v568, %v561
        %v590 = vpack.c.b16 %v569, %v562
        %v591 = vpack.c.b16 %v570, %v563
        %v592 = vpack.c.b16 %v571, %v564
        %v593 = vpack.c.b16 %v579, %v572
        %v594 = vpack.c.b16 %v580, %v573
        %v595 = vpack.c.b16 %v581, %v574
        %v596 = vpack.c.b16 %v582, %v575
        %v597 = vpack.c.b16 %v583, %v576
        %v598 = vpack.c.b16 %v584, %v577
        %v599 = vpack.c.b16 %v585, %v578
        %v614 = vsel %vm327, %v204, 0
        %v616 = vsel %vm327, %v205, 0
        %618 = vmatprep.subr.bf16.mxu0 %v587
        %619 = vmatpush1.bf16.msra.mxu0 %v586
        %620 = vmatprep.subr.bf16.mxu0 %v594
        %621 = vmatpush1.bf16.msra.mxu0 %v593
        %622 = vmatprep.subr.bf16.mxu0 0
        %623 = vmatpush1.bf16.msra.mxu0 0
        %624 = vmatprep.subr.bf16.mxu0 0
        %625 = vmatpush1.bf16.msra.mxu0 0
        %626 = vmatprep.subr.bf16.mxu0 0
        %627 = vmatpush1.bf16.msra.mxu0 0
        %628 = vmatprep.subr.bf16.mxu0 0
        %629 = vmatpush1.bf16.msra.mxu0 0
        %630 = vmatprep.subr.bf16.mxu0 0
        %631 = vmatpush1.bf16.msra.mxu0 0
        %632 = vmatprep.subr.bf16.mxu0 0
        %633 = vmatpush1.bf16.msra.mxu0 0
        %634 = vmatprep.subr.bf16.mxu0 0
        %635 = vmatpush1.bf16.msra.mxu0 0
        %636 = vmatprep.subr.bf16.mxu0 0
        %637 = vmatpush1.bf16.msra.mxu0 0
        %638 = vmatprep.subr.bf16.mxu0 0
        %639 = vmatpush1.bf16.msra.mxu0 0
        %640 = vmatprep.subr.bf16.mxu0 0
        %641 = vmatpush1.bf16.msra.mxu0 0
        %642 = vmatprep.subr.bf16.mxu0 0
        %643 = vmatpush1.bf16.msra.mxu0 0
        %644 = vmatprep.subr.bf16.mxu0 0
        %645 = vmatpush1.bf16.msra.mxu0 0
        %646 = vmatprep.subr.bf16.mxu0 0
        %647 = vmatpush1.bf16.msra.mxu0 0
        %648 = vmatprep.subr.bf16.mxu0 0
        %649 = vmatpush1.bf16.msra.mxu0 0
        %650 = vmatprep.mubr.bf16.mxu0 0
        %651 = vmatmul.mubr.bf16.gmra.mrb[0].mxu0 %v614
        %v652 = vpop.f32.mrb[0].mxu0
        %v653 = vadd.f32 %v369, %v652
        %v654 = vpop.f32.mrb[0].mxu0
        %v655 = vadd.f32 %v371, %v654
        %v656 = vpop.f32.mrb[0].mxu0
        %v657 = vadd.f32 %v373, %v656
        %v658 = vpop.f32.mrb[0].mxu0
        %v659 = vadd.f32 %v375, %v658
        %660 = vmatprep.mubr.bf16.mxu0 0
        %661 = vmatmul.mubr.bf16.gmra.mrb[0].mxu0 %v616
        %v662 = vpop.f32.mrb[0].mxu0
        %v663 = vadd.f32 %v379, %v662
        %v664 = vpop.f32.mrb[0].mxu0
        %v665 = vadd.f32 %v381, %v664
        %v666 = vpop.f32.mrb[0].mxu0
        %v667 = vadd.f32 %v383, %v666
        %v668 = vpop.f32.mrb[0].mxu0
        %v669 = vadd.f32 %v385, %v668
        %670 = vdwg.mxu0
        %671 = vmatprep.subr.bf16.mxu0 %v589
        %672 = vmatpush1.bf16.msra.mxu0 %v588
        %673 = vmatprep.subr.bf16.mxu0 %v596
        %674 = vmatpush1.bf16.msra.mxu0 %v595
        %675 = vmatprep.subr.bf16.mxu0 0
        %676 = vmatpush1.bf16.msra.mxu0 0
        %677 = vmatprep.subr.bf16.mxu0 0
        %678 = vmatpush1.bf16.msra.mxu0 0
        %679 = vmatprep.subr.bf16.mxu0 0
        %680 = vmatpush1.bf16.msra.mxu0 0
        %681 = vmatprep.subr.bf16.mxu0 0
        %682 = vmatpush1.bf16.msra.mxu0 0
        %683 = vmatprep.subr.bf16.mxu0 0
        %684 = vmatpush1.bf16.msra.mxu0 0
        %685 = vmatprep.subr.bf16.mxu0 0
        %686 = vmatpush1.bf16.msra.mxu0 0
        %687 = vmatprep.subr.bf16.mxu0 0
        %688 = vmatpush1.bf16.msra.mxu0 0
        %689 = vmatprep.subr.bf16.mxu0 0
        %690 = vmatpush1.bf16.msra.mxu0 0
        %691 = vmatprep.subr.bf16.mxu0 0
        %692 = vmatpush1.bf16.msra.mxu0 0
        %693 = vmatprep.subr.bf16.mxu0 0
        %694 = vmatpush1.bf16.msra.mxu0 0
        %695 = vmatprep.subr.bf16.mxu0 0
        %696 = vmatpush1.bf16.msra.mxu0 0
        %697 = vmatprep.subr.bf16.mxu0 0
        %698 = vmatpush1.bf16.msra.mxu0 0
        %699 = vmatprep.subr.bf16.mxu0 0
        %700 = vmatpush1.bf16.msra.mxu0 0
        %701 = vmatprep.subr.bf16.mxu0 0
        %702 = vmatpush1.bf16.msra.mxu0 0
        %703 = vmatprep.mubr.bf16.mxu0 0
        %704 = vmatmul.mubr.bf16.gmra.mrb[0].mxu0 %v614
        %v705 = vpop.f32.mrb[0].mxu0
        %v706 = vadd.f32 %v422, %v705
        %v707 = vpop.f32.mrb[0].mxu0
        %v708 = vadd.f32 %v424, %v707
        %v709 = vpop.f32.mrb[0].mxu0
        %v710 = vadd.f32 %v426, %v709
        %v711 = vpop.f32.mrb[0].mxu0
        %v712 = vadd.f32 %v428, %v711
        %713 = vmatprep.mubr.bf16.mxu0 0
        %714 = vmatmul.mubr.bf16.gmra.mrb[0].mxu0 %v616
        %v715 = vpop.f32.mrb[0].mxu0
        %v716 = vadd.f32 %v432, %v715
        %v717 = vpop.f32.mrb[0].mxu0
        %v718 = vadd.f32 %v434, %v717
        %v719 = vpop.f32.mrb[0].mxu0
        %v720 = vadd.f32 %v436, %v719
        %v721 = vpop.f32.mrb[0].mxu0
        %v722 = vadd.f32 %v438, %v721
        %723 = vdwg.mxu0
        %724 = vmatprep.subr.bf16.mxu0 %v591
        %725 = vmatpush1.bf16.msra.mxu0 %v590
        %726 = vmatprep.subr.bf16.mxu0 %v598
        %727 = vmatpush1.bf16.msra.mxu0 %v597
        %728 = vmatprep.subr.bf16.mxu0 0
        %729 = vmatpush1.bf16.msra.mxu0 0
        %730 = vmatprep.subr.bf16.mxu0 0
        %731 = vmatpush1.bf16.msra.mxu0 0
        %732 = vmatprep.subr.bf16.mxu0 0
        %733 = vmatpush1.bf16.msra.mxu0 0
        %734 = vmatprep.subr.bf16.mxu0 0
        %735 = vmatpush1.bf16.msra.mxu0 0
        %736 = vmatprep.subr.bf16.mxu0 0
        %737 = vmatpush1.bf16.msra.mxu0 0
        %738 = vmatprep.subr.bf16.mxu0 0
        %739 = vmatpush1.bf16.msra.mxu0 0
        %740 = vmatprep.subr.bf16.mxu0 0
        %741 = vmatpush1.bf16.msra.mxu0 0
        %742 = vmatprep.subr.bf16.mxu0 0
        %743 = vmatpush1.bf16.msra.mxu0 0
        %744 = vmatprep.subr.bf16.mxu0 0
        %745 = vmatpush1.bf16.msra.mxu0 0
        %746 = vmatprep.subr.bf16.mxu0 0
        %747 = vmatpush1.bf16.msra.mxu0 0
        %748 = vmatprep.subr.bf16.mxu0 0
        %749 = vmatpush1.bf16.msra.mxu0 0
        %750 = vmatprep.subr.bf16.mxu0 0
        %751 = vmatpush1.bf16.msra.mxu0 0
        %752 = vmatprep.subr.bf16.mxu0 0
        %753 = vmatpush1.bf16.msra.mxu0 0
        %754 = vmatprep.subr.bf16.mxu0 0
        %755 = vmatpush1.bf16.msra.mxu0 0
        %756 = vmatprep.mubr.bf16.mxu0 0
        %757 = vmatmul.mubr.bf16.gmra.mrb[0].mxu0 %v614
        %v758 = vpop.f32.mrb[0].mxu0
        %v759 = vadd.f32 %v475, %v758
        %v760 = vpop.f32.mrb[0].mxu0
        %v761 = vadd.f32 %v477, %v760
        %v762 = vpop.f32.mrb[0].mxu0
        %v763 = vadd.f32 %v479, %v762
        %v764 = vpop.f32.mrb[0].mxu0
        %v765 = vadd.f32 %v481, %v764
        %766 = vmatprep.mubr.bf16.mxu0 0
        %767 = vmatmul.mubr.bf16.gmra.mrb[0].mxu0 %v616
        %v768 = vpop.f32.mrb[0].mxu0
        %v769 = vadd.f32 %v485, %v768
        %v770 = vpop.f32.mrb[0].mxu0
        %v771 = vadd.f32 %v487, %v770
        %v772 = vpop.f32.mrb[0].mxu0
        %v773 = vadd.f32 %v489, %v772
        %v774 = vpop.f32.mrb[0].mxu0
        %v775 = vadd.f32 %v491, %v774
        %776 = vdwg.mxu0
        %777 = vmatprep.subr.bf16.mxu0 0
        %778 = vmatpush1.bf16.msra.mxu0 %v592
        %779 = vmatprep.subr.bf16.mxu0 0
        %780 = vmatpush1.bf16.msra.mxu0 %v599
        %781 = vmatprep.subr.bf16.mxu0 0
        %782 = vmatpush1.bf16.msra.mxu0 0
        %783 = vmatprep.subr.bf16.mxu0 0
        %784 = vmatpush1.bf16.msra.mxu0 0
        %785 = vmatprep.subr.bf16.mxu0 0
        %786 = vmatpush1.bf16.msra.mxu0 0
        %787 = vmatprep.subr.bf16.mxu0 0
        %788 = vmatpush1.bf16.msra.mxu0 0
        %789 = vmatprep.subr.bf16.mxu0 0
        %790 = vmatpush1.bf16.msra.mxu0 0
        %791 = vmatprep.subr.bf16.mxu0 0
        %792 = vmatpush1.bf16.msra.mxu0 0
        %793 = vmatprep.subr.bf16.mxu0 0
        %794 = vmatpush1.bf16.msra.mxu0 0
        %795 = vmatprep.subr.bf16.mxu0 0
        %796 = vmatpush1.bf16.msra.mxu0 0
        %797 = vmatprep.subr.bf16.mxu0 0
        %798 = vmatpush1.bf16.msra.mxu0 0
        %799 = vmatprep.subr.bf16.mxu0 0
        %800 = vmatpush1.bf16.msra.mxu0 0
        %801 = vmatprep.subr.bf16.mxu0 0
        %802 = vmatpush1.bf16.msra.mxu0 0
        %803 = vmatprep.subr.bf16.mxu0 0
        %804 = vmatpush1.bf16.msra.mxu0 0
        %805 = vmatprep.subr.bf16.mxu0 0
        %806 = vmatpush1.bf16.msra.mxu0 0
        %807 = vmatprep.subr.bf16.mxu0 0
        %808 = vmatpush1.bf16.msra.mxu0 0
        %809 = vmatprep.mubr.bf16.mxu0 0
        %810 = vmatmul.mubr.bf16.gmra.mrb[0].mxu0 %v614
        %v811 = vpop.f32.mrb[0].mxu0
        %v812 = vadd.f32 %v528, %v811
        %v813 = vpop.f32.mrb[0].mxu0
        %v814 = vpop.f32.mrb[0].mxu0
        %v815 = vadd.f32 %v531, %v814
        %v816 = vpop.f32.mrb[0].mxu0
        %817 = vmatprep.mubr.bf16.mxu0 0
        %818 = vmatmul.mubr.bf16.gmra.mrb[0].mxu0 %v616
        %v819 = vpop.f32.mrb[0].mxu0
        %v820 = vadd.f32 %v536, %v819
        %v821 = vpop.f32.mrb[0].mxu0
        %v822 = vpop.f32.mrb[0].mxu0
        %v823 = vadd.f32 %v539, %v822
        %v824 = vpop.f32.mrb[0].mxu0
        %825 = vdwg.mxu0
        %s826 = scalar_lea.vmem [#allocation2], 224
        %v827 = vld [vmem:[%s826] sm:$0xff]
        %v828 = vld [vmem:[%s826 + $0x8] sm:$0xff]
        %v829 = vld [vmem:[%s826 + $0x10] sm:$0xff]
        %v830 = vld [vmem:[%s826 + $0x18] sm:$0xf]
        %v831 = vld [vmem:[%s826 + $0x1c] sm:$0xff]
        %v832 = vld [vmem:[%s826 + $0x24] sm:$0xff]
        %v833 = vld [vmem:[%s826 + $0x2c] sm:$0xff]
        %v834 = vld [vmem:[%s826 + $0x34] sm:$0xf]
        %v835 = vld [vmem:[%s826 + $0x38] sm:$0xff]
        %v836 = vld [vmem:[%s826 + $0x40] sm:$0xff]
        %v837 = vld [vmem:[%s826 + $0x48] sm:$0xff]
        %v838 = vld [vmem:[%s826 + $0x50] sm:$0xf]
        %v839 = vld [vmem:[%s826 + $0x54] sm:$0xff]
        %v840 = vld [vmem:[%s826 + $0x5c] sm:$0xff]
        %v841 = vld [vmem:[%s826 + $0x64] sm:$0xff]
        %v842 = vld [vmem:[%s826 + $0x6c] sm:$0xf]
        %vm845 = vcmask 1046528
        %v846 = vrot.slane %v204, 1
        %v847 = vrot.slane %v205, 1
        %v848 = vsel %vm845, %v846, %v847
        %v865 = vunpack.c.l.b16 %v827
        %v866 = vunpack.c.h.b16 %v827
        %v867 = vunpack.c.l.b16 %v828
        %v868 = vunpack.c.h.b16 %v828
        %v869 = vunpack.c.l.b16 %v829
        %v870 = vunpack.c.h.b16 %v829
        %v871 = vunpack.c.l.b16 %v830
        %v872 = vunpack.c.l.b16 %v831
        %v873 = vunpack.c.h.b16 %v831
        %v874 = vunpack.c.l.b16 %v832
        %v875 = vunpack.c.h.b16 %v832
        %v876 = vunpack.c.l.b16 %v833
        %v877 = vunpack.c.h.b16 %v833
        %v878 = vunpack.c.l.b16 %v834
        %v879 = vunpack.c.l.b16 %v835
        %v880 = vunpack.c.h.b16 %v835
        %v881 = vunpack.c.l.b16 %v836
        %v882 = vunpack.c.h.b16 %v836
        %v883 = vunpack.c.l.b16 %v837
        %v884 = vunpack.c.h.b16 %v837
        %v885 = vunpack.c.l.b16 %v838
        %v886 = vunpack.c.l.b16 %v839
        %v887 = vunpack.c.h.b16 %v839
        %v888 = vunpack.c.l.b16 %v840
        %v889 = vunpack.c.h.b16 %v840
        %v890 = vunpack.c.l.b16 %v841
        %v891 = vunpack.c.h.b16 %v841
        %v892 = vunpack.c.l.b16 %v842
        %v893 = vpack.c.b16 %v872, %v865
        %v894 = vpack.c.b16 %v873, %v866
        %v895 = vpack.c.b16 %v874, %v867
        %v896 = vpack.c.b16 %v875, %v868
        %v897 = vpack.c.b16 %v876, %v869
        %v898 = vpack.c.b16 %v877, %v870
        %v899 = vpack.c.b16 %v878, %v871
        %v900 = vpack.c.b16 %v886, %v879
        %v901 = vpack.c.b16 %v887, %v880
        %v902 = vpack.c.b16 %v888, %v881
        %v903 = vpack.c.b16 %v889, %v882
        %v904 = vpack.c.b16 %v890, %v883
        %v905 = vpack.c.b16 %v891, %v884
        %v906 = vpack.c.b16 %v892, %v885
        %v922 = vsel %vm327, %v848, 0
        %v925 = vsel %vm327, %v847, 0
        %927 = vmatprep.subr.bf16.mxu0 %v894
        %928 = vmatpush1.bf16.msra.mxu0 %v893
        %929 = vmatprep.subr.bf16.mxu0 %v901
        %930 = vmatpush1.bf16.msra.mxu0 %v900
        %931 = vmatprep.subr.bf16.mxu0 0
        %932 = vmatpush1.bf16.msra.mxu0 0
        %933 = vmatprep.subr.bf16.mxu0 0
        %934 = vmatpush1.bf16.msra.mxu0 0
        %935 = vmatprep.subr.bf16.mxu0 0
        %936 = vmatpush1.bf16.msra.mxu0 0
        %937 = vmatprep.subr.bf16.mxu0 0
        %938 = vmatpush1.bf16.msra.mxu0 0
        %939 = vmatprep.subr.bf16.mxu0 0
        %940 = vmatpush1.bf16.msra.mxu0 0
        %941 = vmatprep.subr.bf16.mxu0 0
        %942 = vmatpush1.bf16.msra.mxu0 0
        %943 = vmatprep.subr.bf16.mxu0 0
        %944 = vmatpush1.bf16.msra.mxu0 0
        %945 = vmatprep.subr.bf16.mxu0 0
        %946 = vmatpush1.bf16.msra.mxu0 0
        %947 = vmatprep.subr.bf16.mxu0 0
        %948 = vmatpush1.bf16.msra.mxu0 0
        %949 = vmatprep.subr.bf16.mxu0 0
        %950 = vmatpush1.bf16.msra.mxu0 0
        %951 = vmatprep.subr.bf16.mxu0 0
        %952 = vmatpush1.bf16.msra.mxu0 0
        %953 = vmatprep.subr.bf16.mxu0 0
        %954 = vmatpush1.bf16.msra.mxu0 0
        %955 = vmatprep.subr.bf16.mxu0 0
        %956 = vmatpush1.bf16.msra.mxu0 0
        %957 = vmatprep.subr.bf16.mxu0 0
        %958 = vmatpush1.bf16.msra.mxu0 0
        %959 = vmatprep.mubr.bf16.mxu0 0
        %960 = vmatmul.mubr.bf16.gmra.mrb[0].mxu0 %v922
        %v961 = vpop.f32.mrb[0].mxu0
        %v962 = vadd.f32 0.0, %v961
        %v963 = vpop.f32.mrb[0].mxu0
        %v964 = vadd.f32 0.0, %v963
        %v965 = vpop.f32.mrb[0].mxu0
        %v966 = vadd.f32 0.0, %v965
        %v967 = vpop.f32.mrb[0].mxu0
        %v968 = vadd.f32 0.0, %v967
        %969 = vmatprep.mubr.bf16.mxu0 0
        %970 = vmatmul.mubr.bf16.gmra.mrb[0].mxu0 %v925
        %v971 = vpop.f32.mrb[0].mxu0
        %v972 = vadd.f32 0.0, %v971
        %v973 = vpop.f32.mrb[0].mxu0
        %v974 = vadd.f32 0.0, %v973
        %v975 = vpop.f32.mrb[0].mxu0
        %v976 = vadd.f32 0.0, %v975
        %v977 = vpop.f32.mrb[0].mxu0
        %v978 = vadd.f32 0.0, %v977
        %979 = vdwg.mxu0
        %980 = vmatprep.subr.bf16.mxu0 %v896
        %981 = vmatpush1.bf16.msra.mxu0 %v895
        %982 = vmatprep.subr.bf16.mxu0 %v903
        %983 = vmatpush1.bf16.msra.mxu0 %v902
        %984 = vmatprep.subr.bf16.mxu0 0
        %985 = vmatpush1.bf16.msra.mxu0 0
        %986 = vmatprep.subr.bf16.mxu0 0
        %987 = vmatpush1.bf16.msra.mxu0 0
        %988 = vmatprep.subr.bf16.mxu0 0
        %989 = vmatpush1.bf16.msra.mxu0 0
        %990 = vmatprep.subr.bf16.mxu0 0
        %991 = vmatpush1.bf16.msra.mxu0 0
        %992 = vmatprep.subr.bf16.mxu0 0
        %993 = vmatpush1.bf16.msra.mxu0 0
        %994 = vmatprep.subr.bf16.mxu0 0
        %995 = vmatpush1.bf16.msra.mxu0 0
        %996 = vmatprep.subr.bf16.mxu0 0
        %997 = vmatpush1.bf16.msra.mxu0 0
        %998 = vmatprep.subr.bf16.mxu0 0
        %999 = vmatpush1.bf16.msra.mxu0 0
        %1000 = vmatprep.subr.bf16.mxu0 0
        %1001 = vmatpush1.bf16.msra.mxu0 0
        %1002 = vmatprep.subr.bf16.mxu0 0
        %1003 = vmatpush1.bf16.msra.mxu0 0
        %1004 = vmatprep.subr.bf16.mxu0 0
        %1005 = vmatpush1.bf16.msra.mxu0 0
        %1006 = vmatprep.subr.bf16.mxu0 0
        %1007 = vmatpush1.bf16.msra.mxu0 0
        %1008 = vmatprep.subr.bf16.mxu0 0
        %1009 = vmatpush1.bf16.msra.mxu0 0
        %1010 = vmatprep.subr.bf16.mxu0 0
        %1011 = vmatpush1.bf16.msra.mxu0 0
        %1012 = vmatprep.mubr.bf16.mxu0 0
        %1013 = vmatmul.mubr.bf16.gmra.mrb[0].mxu0 %v922
        %v1014 = vpop.f32.mrb[0].mxu0
        %v1015 = vadd.f32 0.0, %v1014
        %v1016 = vpop.f32.mrb[0].mxu0
        %v1017 = vadd.f32 0.0, %v1016
        %v1018 = vpop.f32.mrb[0].mxu0
        %v1019 = vadd.f32 0.0, %v1018
        %v1020 = vpop.f32.mrb[0].mxu0
        %v1021 = vadd.f32 0.0, %v1020
        %1022 = vmatprep.mubr.bf16.mxu0 0
        %1023 = vmatmul.mubr.bf16.gmra.mrb[0].mxu0 %v925
        %v1024 = vpop.f32.mrb[0].mxu0
        %v1025 = vadd.f32 0.0, %v1024
        %v1026 = vpop.f32.mrb[0].mxu0
        %v1027 = vadd.f32 0.0, %v1026
        %v1028 = vpop.f32.mrb[0].mxu0
        %v1029 = vadd.f32 0.0, %v1028
        %v1030 = vpop.f32.mrb[0].mxu0
        %v1031 = vadd.f32 0.0, %v1030
        %1032 = vdwg.mxu0
        %1033 = vmatprep.subr.bf16.mxu0 %v898
        %1034 = vmatpush1.bf16.msra.mxu0 %v897
        %1035 = vmatprep.subr.bf16.mxu0 %v905
        %1036 = vmatpush1.bf16.msra.mxu0 %v904
        %1037 = vmatprep.subr.bf16.mxu0 0
        %1038 = vmatpush1.bf16.msra.mxu0 0
        %1039 = vmatprep.subr.bf16.mxu0 0
        %1040 = vmatpush1.bf16.msra.mxu0 0
        %1041 = vmatprep.subr.bf16.mxu0 0
        %1042 = vmatpush1.bf16.msra.mxu0 0
        %1043 = vmatprep.subr.bf16.mxu0 0
        %1044 = vmatpush1.bf16.msra.mxu0 0
        %1045 = vmatprep.subr.bf16.mxu0 0
        %1046 = vmatpush1.bf16.msra.mxu0 0
        %1047 = vmatprep.subr.bf16.mxu0 0
        %1048 = vmatpush1.bf16.msra.mxu0 0
        %1049 = vmatprep.subr.bf16.mxu0 0
        %1050 = vmatpush1.bf16.msra.mxu0 0
        %1051 = vmatprep.subr.bf16.mxu0 0
        %1052 = vmatpush1.bf16.msra.mxu0 0
        %1053 = vmatprep.subr.bf16.mxu0 0
        %1054 = vmatpush1.bf16.msra.mxu0 0
        %1055 = vmatprep.subr.bf16.mxu0 0
        %1056 = vmatpush1.bf16.msra.mxu0 0
        %1057 = vmatprep.subr.bf16.mxu0 0
        %1058 = vmatpush1.bf16.msra.mxu0 0
        %1059 = vmatprep.subr.bf16.mxu0 0
        %1060 = vmatpush1.bf16.msra.mxu0 0
        %1061 = vmatprep.subr.bf16.mxu0 0
        %1062 = vmatpush1.bf16.msra.mxu0 0
        %1063 = vmatprep.subr.bf16.mxu0 0
        %1064 = vmatpush1.bf16.msra.mxu0 0
        %1065 = vmatprep.mubr.bf16.mxu0 0
        %1066 = vmatmul.mubr.bf16.gmra.mrb[0].mxu0 %v922
        %v1067 = vpop.f32.mrb[0].mxu0
        %v1068 = vadd.f32 0.0, %v1067
        %v1069 = vpop.f32.mrb[0].mxu0
        %v1070 = vadd.f32 0.0, %v1069
        %v1071 = vpop.f32.mrb[0].mxu0
        %v1072 = vadd.f32 0.0, %v1071
        %v1073 = vpop.f32.mrb[0].mxu0
        %v1074 = vadd.f32 0.0, %v1073
        %1075 = vmatprep.mubr.bf16.mxu0 0
        %1076 = vmatmul.mubr.bf16.gmra.mrb[0].mxu0 %v925
        %v1077 = vpop.f32.mrb[0].mxu0
        %v1078 = vadd.f32 0.0, %v1077
        %v1079 = vpop.f32.mrb[0].mxu0
        %v1080 = vadd.f32 0.0, %v1079
        %v1081 = vpop.f32.mrb[0].mxu0
        %v1082 = vadd.f32 0.0, %v1081
        %v1083 = vpop.f32.mrb[0].mxu0
        %v1084 = vadd.f32 0.0, %v1083
        %1085 = vdwg.mxu0
        %1086 = vmatprep.subr.bf16.mxu0 0
        %1087 = vmatpush1.bf16.msra.mxu0 %v899
        %1088 = vmatprep.subr.bf16.mxu0 0
        %1089 = vmatpush1.bf16.msra.mxu0 %v906
        %1090 = vmatprep.subr.bf16.mxu0 0
        %1091 = vmatpush1.bf16.msra.mxu0 0
        %1092 = vmatprep.subr.bf16.mxu0 0
        %1093 = vmatpush1.bf16.msra.mxu0 0
        %1094 = vmatprep.subr.bf16.mxu0 0
        %1095 = vmatpush1.bf16.msra.mxu0 0
        %1096 = vmatprep.subr.bf16.mxu0 0
        %1097 = vmatpush1.bf16.msra.mxu0 0
        %1098 = vmatprep.subr.bf16.mxu0 0
        %1099 = vmatpush1.bf16.msra.mxu0 0
        %1100 = vmatprep.subr.bf16.mxu0 0
        %1101 = vmatpush1.bf16.msra.mxu0 0
        %1102 = vmatprep.subr.bf16.mxu0 0
        %1103 = vmatpush1.bf16.msra.mxu0 0
        %1104 = vmatprep.subr.bf16.mxu0 0
        %1105 = vmatpush1.bf16.msra.mxu0 0
        %1106 = vmatprep.subr.bf16.mxu0 0
        %1107 = vmatpush1.bf16.msra.mxu0 0
        %1108 = vmatprep.subr.bf16.mxu0 0
        %1109 = vmatpush1.bf16.msra.mxu0 0
        %1110 = vmatprep.subr.bf16.mxu0 0
        %1111 = vmatpush1.bf16.msra.mxu0 0
        %1112 = vmatprep.subr.bf16.mxu0 0
        %1113 = vmatpush1.bf16.msra.mxu0 0
        %1114 = vmatprep.subr.bf16.mxu0 0
        %1115 = vmatpush1.bf16.msra.mxu0 0
        %1116 = vmatprep.subr.bf16.mxu0 0
        %1117 = vmatpush1.bf16.msra.mxu0 0
        %1118 = vmatprep.mubr.bf16.mxu0 0
        %1119 = vmatmul.mubr.bf16.gmra.mrb[0].mxu0 %v922
        %v1120 = vpop.f32.mrb[0].mxu0
        %v1121 = vadd.f32 0.0, %v1120
        %v1122 = vpop.f32.mrb[0].mxu0
        %v1123 = vpop.f32.mrb[0].mxu0
        %v1124 = vadd.f32 0.0, %v1123
        %v1125 = vpop.f32.mrb[0].mxu0
        %1126 = vmatprep.mubr.bf16.mxu0 0
        %1127 = vmatmul.mubr.bf16.gmra.mrb[0].mxu0 %v925
        %v1128 = vpop.f32.mrb[0].mxu0
        %v1129 = vadd.f32 0.0, %v1128
        %v1130 = vpop.f32.mrb[0].mxu0
        %v1131 = vpop.f32.mrb[0].mxu0
        %v1132 = vadd.f32 0.0, %v1131
        %v1133 = vpop.f32.mrb[0].mxu0
        %1134 = vdwg.mxu0
        %v1135 = vadd.f32 %v653, %v962
        %v1136 = vadd.f32 %v655, %v964
        %v1137 = vadd.f32 %v706, %v1015
        %v1138 = vadd.f32 %v708, %v1017
        %v1139 = vadd.f32 %v759, %v1068
        %v1140 = vadd.f32 %v761, %v1070
        %v1141 = vadd.f32 %v812, %v1121
        %v1142 = vadd.f32 %v657, %v966
        %v1143 = vadd.f32 %v659, %v968
        %v1144 = vadd.f32 %v710, %v1019
        %v1145 = vadd.f32 %v712, %v1021
        %v1146 = vadd.f32 %v763, %v1072
        %v1147 = vadd.f32 %v765, %v1074
        %v1148 = vadd.f32 %v815, %v1124
        %v1149 = vadd.f32 %v663, %v972
        %v1150 = vadd.f32 %v665, %v974
        %v1151 = vadd.f32 %v716, %v1025
        %v1152 = vadd.f32 %v718, %v1027
        %v1153 = vadd.f32 %v769, %v1078
        %v1154 = vadd.f32 %v771, %v1080
        %v1155 = vadd.f32 %v820, %v1129
        %v1156 = vadd.f32 %v667, %v976
        %v1157 = vadd.f32 %v669, %v978
        %v1158 = vadd.f32 %v720, %v1029
        %v1159 = vadd.f32 %v722, %v1031
        %v1160 = vadd.f32 %v773, %v1082
        %v1161 = vadd.f32 %v775, %v1084
        %v1162 = vadd.f32 %v823, %v1132
        %s1163 = scalar_lea.vmem [#allocation2], 336
        %v1164 = vld [vmem:[%s1163] sm:$0xff]
        %v1165 = vld [vmem:[%s1163 + $0x8] sm:$0xff]
        %v1166 = vld [vmem:[%s1163 + $0x10] sm:$0xff]
        %v1167 = vld [vmem:[%s1163 + $0x18] sm:$0xf]
        %v1168 = vld [vmem:[%s1163 + $0x1c] sm:$0xff]
        %v1169 = vld [vmem:[%s1163 + $0x24] sm:$0xff]
        %v1170 = vld [vmem:[%s1163 + $0x2c] sm:$0xff]
        %v1171 = vld [vmem:[%s1163 + $0x34] sm:$0xf]
        %v1172 = vld [vmem:[%s1163 + $0x38] sm:$0xff]
        %v1173 = vld [vmem:[%s1163 + $0x40] sm:$0xff]
        %v1174 = vld [vmem:[%s1163 + $0x48] sm:$0xff]
        %v1175 = vld [vmem:[%s1163 + $0x50] sm:$0xf]
        %v1176 = vld [vmem:[%s1163 + $0x54] sm:$0xff]
        %v1177 = vld [vmem:[%s1163 + $0x5c] sm:$0xff]
        %v1178 = vld [vmem:[%s1163 + $0x64] sm:$0xff]
        %v1179 = vld [vmem:[%s1163 + $0x6c] sm:$0xf]
        %vm1180 = vsmask.f32 6400
        %v1181 = vrot.slane %v241, 1
        %v1182 = vrot.slane %v243, 2
        %v1183 = vor.u32 %v1181, %v1182
        %v1184 = vrot.slane %v252, 1
        %v1185 = vrot.slane %v248, 2
        %v1186 = vor.u32 %v1184, %v1185
        %v1187 = vsel %vm1180, %v1183, %v1186
        %v1204 = vunpack.c.l.b16 %v1164
        %v1205 = vunpack.c.h.b16 %v1164
        %v1206 = vunpack.c.l.b16 %v1165
        %v1207 = vunpack.c.h.b16 %v1165
        %v1208 = vunpack.c.l.b16 %v1166
        %v1209 = vunpack.c.h.b16 %v1166
        %v1210 = vunpack.c.l.b16 %v1167
        %v1211 = vunpack.c.l.b16 %v1168
        %v1212 = vunpack.c.h.b16 %v1168
        %v1213 = vunpack.c.l.b16 %v1169
        %v1214 = vunpack.c.h.b16 %v1169
        %v1215 = vunpack.c.l.b16 %v1170
        %v1216 = vunpack.c.h.b16 %v1170
        %v1217 = vunpack.c.l.b16 %v1171
        %v1218 = vunpack.c.l.b16 %v1172
        %v1219 = vunpack.c.h.b16 %v1172
        %v1220 = vunpack.c.l.b16 %v1173
        %v1221 = vunpack.c.h.b16 %v1173
        %v1222 = vunpack.c.l.b16 %v1174
        %v1223 = vunpack.c.h.b16 %v1174
        %v1224 = vunpack.c.l.b16 %v1175
        %v1225 = vunpack.c.l.b16 %v1176
        %v1226 = vunpack.c.h.b16 %v1176
        %v1227 = vunpack.c.l.b16 %v1177
        %v1228 = vunpack.c.h.b16 %v1177
        %v1229 = vunpack.c.l.b16 %v1178
        %v1230 = vunpack.c.h.b16 %v1178
        %v1231 = vunpack.c.l.b16 %v1179
        %v1232 = vpack.c.b16 %v1211, %v1204
        %v1233 = vpack.c.b16 %v1212, %v1205
        %v1234 = vpack.c.b16 %v1213, %v1206
        %v1235 = vpack.c.b16 %v1214, %v1207
        %v1236 = vpack.c.b16 %v1215, %v1208
        %v1237 = vpack.c.b16 %v1216, %v1209
        %v1238 = vpack.c.b16 %v1217, %v1210
        %v1239 = vpack.c.b16 %v1225, %v1218
        %v1240 = vpack.c.b16 %v1226, %v1219
        %v1241 = vpack.c.b16 %v1227, %v1220
        %v1242 = vpack.c.b16 %v1228, %v1221
        %v1243 = vpack.c.b16 %v1229, %v1222
        %v1244 = vpack.c.b16 %v1230, %v1223
        %v1245 = vpack.c.b16 %v1231, %v1224
        %v1261 = vsel %vm327, %v1187, 0
        %v1264 = vsel %vm327, %v1186, 0
        %1266 = vmatprep.subr.bf16.mxu0 %v1233
        %1267 = vmatpush1.bf16.msra.mxu0 %v1232
        %1268 = vmatprep.subr.bf16.mxu0 %v1240
        %1269 = vmatpush1.bf16.msra.mxu0 %v1239
        %1270 = vmatprep.subr.bf16.mxu0 0
        %1271 = vmatpush1.bf16.msra.mxu0 0
        %1272 = vmatprep.subr.bf16.mxu0 0
        %1273 = vmatpush1.bf16.msra.mxu0 0
        %1274 = vmatprep.subr.bf16.mxu0 0
        %1275 = vmatpush1.bf16.msra.mxu0 0
        %1276 = vmatprep.subr.bf16.mxu0 0
        %1277 = vmatpush1.bf16.msra.mxu0 0
        %1278 = vmatprep.subr.bf16.mxu0 0
        %1279 = vmatpush1.bf16.msra.mxu0 0
        %1280 = vmatprep.subr.bf16.mxu0 0
        %1281 = vmatpush1.bf16.msra.mxu0 0
        %1282 = vmatprep.subr.bf16.mxu0 0
        %1283 = vmatpush1.bf16.msra.mxu0 0
        %1284 = vmatprep.subr.bf16.mxu0 0
        %1285 = vmatpush1.bf16.msra.mxu0 0
        %1286 = vmatprep.subr.bf16.mxu0 0
        %1287 = vmatpush1.bf16.msra.mxu0 0
        %1288 = vmatprep.subr.bf16.mxu0 0
        %1289 = vmatpush1.bf16.msra.mxu0 0
        %1290 = vmatprep.subr.bf16.mxu0 0
        %1291 = vmatpush1.bf16.msra.mxu0 0
        %1292 = vmatprep.subr.bf16.mxu0 0
        %1293 = vmatpush1.bf16.msra.mxu0 0
        %1294 = vmatprep.subr.bf16.mxu0 0
        %1295 = vmatpush1.bf16.msra.mxu0 0
        %1296 = vmatprep.subr.bf16.mxu0 0
        %1297 = vmatpush1.bf16.msra.mxu0 0
        %1298 = vmatprep.mubr.bf16.mxu0 0
        %1299 = vmatmul.mubr.bf16.gmra.mrb[0].mxu0 %v1261
        %v1300 = vpop.f32.mrb[0].mxu0
        %v1301 = vadd.f32 0.0, %v1300
        %v1302 = vpop.f32.mrb[0].mxu0
        %v1303 = vadd.f32 0.0, %v1302
        %v1304 = vpop.f32.mrb[0].mxu0
        %v1305 = vadd.f32 0.0, %v1304
        %v1306 = vpop.f32.mrb[0].mxu0
        %v1307 = vadd.f32 0.0, %v1306
        %1308 = vmatprep.mubr.bf16.mxu0 0
        %1309 = vmatmul.mubr.bf16.gmra.mrb[0].mxu0 %v1264
        %v1310 = vpop.f32.mrb[0].mxu0
        %v1311 = vadd.f32 0.0, %v1310
        %v1312 = vpop.f32.mrb[0].mxu0
        %v1313 = vadd.f32 0.0, %v1312
        %v1314 = vpop.f32.mrb[0].mxu0
        %v1315 = vadd.f32 0.0, %v1314
        %v1316 = vpop.f32.mrb[0].mxu0
        %v1317 = vadd.f32 0.0, %v1316
        %1318 = vdwg.mxu0
        %1319 = vmatprep.subr.bf16.mxu0 %v1235
        %1320 = vmatpush1.bf16.msra.mxu0 %v1234
        %1321 = vmatprep.subr.bf16.mxu0 %v1242
        %1322 = vmatpush1.bf16.msra.mxu0 %v1241
        %1323 = vmatprep.subr.bf16.mxu0 0
        %1324 = vmatpush1.bf16.msra.mxu0 0
        %1325 = vmatprep.subr.bf16.mxu0 0
        %1326 = vmatpush1.bf16.msra.mxu0 0
        %1327 = vmatprep.subr.bf16.mxu0 0
        %1328 = vmatpush1.bf16.msra.mxu0 0
        %1329 = vmatprep.subr.bf16.mxu0 0
        %1330 = vmatpush1.bf16.msra.mxu0 0
        %1331 = vmatprep.subr.bf16.mxu0 0
        %1332 = vmatpush1.bf16.msra.mxu0 0
        %1333 = vmatprep.subr.bf16.mxu0 0
        %1334 = vmatpush1.bf16.msra.mxu0 0
        %1335 = vmatprep.subr.bf16.mxu0 0
        %1336 = vmatpush1.bf16.msra.mxu0 0
        %1337 = vmatprep.subr.bf16.mxu0 0
        %1338 = vmatpush1.bf16.msra.mxu0 0
        %1339 = vmatprep.subr.bf16.mxu0 0
        %1340 = vmatpush1.bf16.msra.mxu0 0
        %1341 = vmatprep.subr.bf16.mxu0 0
        %1342 = vmatpush1.bf16.msra.mxu0 0
        %1343 = vmatprep.subr.bf16.mxu0 0
        %1344 = vmatpush1.bf16.msra.mxu0 0
        %1345 = vmatprep.subr.bf16.mxu0 0
        %1346 = vmatpush1.bf16.msra.mxu0 0
        %1347 = vmatprep.subr.bf16.mxu0 0
        %1348 = vmatpush1.bf16.msra.mxu0 0
        %1349 = vmatprep.subr.bf16.mxu0 0
        %1350 = vmatpush1.bf16.msra.mxu0 0
        %1351 = vmatprep.mubr.bf16.mxu0 0
        %1352 = vmatmul.mubr.bf16.gmra.mrb[0].mxu0 %v1261
        %v1353 = vpop.f32.mrb[0].mxu0
        %v1354 = vadd.f32 0.0, %v1353
        %v1355 = vpop.f32.mrb[0].mxu0
        %v1356 = vadd.f32 0.0, %v1355
        %v1357 = vpop.f32.mrb[0].mxu0
        %v1358 = vadd.f32 0.0, %v1357
        %v1359 = vpop.f32.mrb[0].mxu0
        %v1360 = vadd.f32 0.0, %v1359
        %1361 = vmatprep.mubr.bf16.mxu0 0
        %1362 = vmatmul.mubr.bf16.gmra.mrb[0].mxu0 %v1264
        %v1363 = vpop.f32.mrb[0].mxu0
        %v1364 = vadd.f32 0.0, %v1363
        %v1365 = vpop.f32.mrb[0].mxu0
        %v1366 = vadd.f32 0.0, %v1365
        %v1367 = vpop.f32.mrb[0].mxu0
        %v1368 = vadd.f32 0.0, %v1367
        %v1369 = vpop.f32.mrb[0].mxu0
        %v1370 = vadd.f32 0.0, %v1369
        %1371 = vdwg.mxu0
        %1372 = vmatprep.subr.bf16.mxu0 %v1237
        %1373 = vmatpush1.bf16.msra.mxu0 %v1236
        %1374 = vmatprep.subr.bf16.mxu0 %v1244
        %1375 = vmatpush1.bf16.msra.mxu0 %v1243
        %1376 = vmatprep.subr.bf16.mxu0 0
        %1377 = vmatpush1.bf16.msra.mxu0 0
        %1378 = vmatprep.subr.bf16.mxu0 0
        %1379 = vmatpush1.bf16.msra.mxu0 0
        %1380 = vmatprep.subr.bf16.mxu0 0
        %1381 = vmatpush1.bf16.msra.mxu0 0
        %1382 = vmatprep.subr.bf16.mxu0 0
        %1383 = vmatpush1.bf16.msra.mxu0 0
        %1384 = vmatprep.subr.bf16.mxu0 0
        %1385 = vmatpush1.bf16.msra.mxu0 0
        %1386 = vmatprep.subr.bf16.mxu0 0
        %1387 = vmatpush1.bf16.msra.mxu0 0
        %1388 = vmatprep.subr.bf16.mxu0 0
        %1389 = vmatpush1.bf16.msra.mxu0 0
        %1390 = vmatprep.subr.bf16.mxu0 0
        %1391 = vmatpush1.bf16.msra.mxu0 0
        %1392 = vmatprep.subr.bf16.mxu0 0
        %1393 = vmatpush1.bf16.msra.mxu0 0
        %1394 = vmatprep.subr.bf16.mxu0 0
        %1395 = vmatpush1.bf16.msra.mxu0 0
        %1396 = vmatprep.subr.bf16.mxu0 0
        %1397 = vmatpush1.bf16.msra.mxu0 0
        %1398 = vmatprep.subr.bf16.mxu0 0
        %1399 = vmatpush1.bf16.msra.mxu0 0
        %1400 = vmatprep.subr.bf16.mxu0 0
        %1401 = vmatpush1.bf16.msra.mxu0 0
        %1402 = vmatprep.subr.bf16.mxu0 0
        %1403 = vmatpush1.bf16.msra.mxu0 0
        %1404 = vmatprep.mubr.bf16.mxu0 0
        %1405 = vmatmul.mubr.bf16.gmra.mrb[0].mxu0 %v1261
        %v1406 = vpop.f32.mrb[0].mxu0
        %v1407 = vadd.f32 0.0, %v1406
        %v1408 = vpop.f32.mrb[0].mxu0
        %v1409 = vadd.f32 0.0, %v1408
        %v1410 = vpop.f32.mrb[0].mxu0
        %v1411 = vadd.f32 0.0, %v1410
        %v1412 = vpop.f32.mrb[0].mxu0
        %v1413 = vadd.f32 0.0, %v1412
        %1414 = vmatprep.mubr.bf16.mxu0 0
        %1415 = vmatmul.mubr.bf16.gmra.mrb[0].mxu0 %v1264
        %v1416 = vpop.f32.mrb[0].mxu0
        %v1417 = vadd.f32 0.0, %v1416
        %v1418 = vpop.f32.mrb[0].mxu0
        %v1419 = vadd.f32 0.0, %v1418
        %v1420 = vpop.f32.mrb[0].mxu0
        %v1421 = vadd.f32 0.0, %v1420
        %v1422 = vpop.f32.mrb[0].mxu0
        %v1423 = vadd.f32 0.0, %v1422
        %1424 = vdwg.mxu0
        %1425 = vmatprep.subr.bf16.mxu0 0
        %1426 = vmatpush1.bf16.msra.mxu0 %v1238
        %1427 = vmatprep.subr.bf16.mxu0 0
        %1428 = vmatpush1.bf16.msra.mxu0 %v1245
        %1429 = vmatprep.subr.bf16.mxu0 0
        %1430 = vmatpush1.bf16.msra.mxu0 0
        %1431 = vmatprep.subr.bf16.mxu0 0
        %1432 = vmatpush1.bf16.msra.mxu0 0
        %1433 = vmatprep.subr.bf16.mxu0 0
        %1434 = vmatpush1.bf16.msra.mxu0 0
        %1435 = vmatprep.subr.bf16.mxu0 0
        %1436 = vmatpush1.bf16.msra.mxu0 0
        %1437 = vmatprep.subr.bf16.mxu0 0
        %1438 = vmatpush1.bf16.msra.mxu0 0
        %1439 = vmatprep.subr.bf16.mxu0 0
        %1440 = vmatpush1.bf16.msra.mxu0 0
        %1441 = vmatprep.subr.bf16.mxu0 0
        %1442 = vmatpush1.bf16.msra.mxu0 0
        %1443 = vmatprep.subr.bf16.mxu0 0
        %1444 = vmatpush1.bf16.msra.mxu0 0
        %1445 = vmatprep.subr.bf16.mxu0 0
        %1446 = vmatpush1.bf16.msra.mxu0 0
        %1447 = vmatprep.subr.bf16.mxu0 0
        %1448 = vmatpush1.bf16.msra.mxu0 0
        %1449 = vmatprep.subr.bf16.mxu0 0
        %1450 = vmatpush1.bf16.msra.mxu0 0
        %1451 = vmatprep.subr.bf16.mxu0 0
        %1452 = vmatpush1.bf16.msra.mxu0 0
        %1453 = vmatprep.subr.bf16.mxu0 0
        %1454 = vmatpush1.bf16.msra.mxu0 0
        %1455 = vmatprep.subr.bf16.mxu0 0
        %1456 = vmatpush1.bf16.msra.mxu0 0
        %1457 = vmatprep.mubr.bf16.mxu0 0
        %1458 = vmatmul.mubr.bf16.gmra.mrb[0].mxu0 %v1261
        %v1459 = vpop.f32.mrb[0].mxu0
        %v1460 = vadd.f32 0.0, %v1459
        %v1461 = vpop.f32.mrb[0].mxu0
        %v1462 = vpop.f32.mrb[0].mxu0
        %v1463 = vadd.f32 0.0, %v1462
        %v1464 = vpop.f32.mrb[0].mxu0
        %1465 = vmatprep.mubr.bf16.mxu0 0
        %1466 = vmatmul.mubr.bf16.gmra.mrb[0].mxu0 %v1264
        %v1467 = vpop.f32.mrb[0].mxu0
        %v1468 = vadd.f32 0.0, %v1467
        %v1469 = vpop.f32.mrb[0].mxu0
        %v1470 = vpop.f32.mrb[0].mxu0
        %v1471 = vadd.f32 0.0, %v1470
        %v1472 = vpop.f32.mrb[0].mxu0
        %1473 = vdwg.mxu0
        %v1474 = vadd.f32 %v1135, %v1301
        %v1475 = vadd.f32 %v1136, %v1303
        %v1476 = vadd.f32 %v1137, %v1354
        %v1477 = vadd.f32 %v1138, %v1356
        %v1478 = vadd.f32 %v1139, %v1407
        %v1479 = vadd.f32 %v1140, %v1409
        %v1480 = vadd.f32 %v1141, %v1460
        %v1481 = vadd.f32 %v1142, %v1305
        %v1482 = vadd.f32 %v1143, %v1307
        %v1483 = vadd.f32 %v1144, %v1358
        %v1484 = vadd.f32 %v1145, %v1360
        %v1485 = vadd.f32 %v1146, %v1411
        %v1486 = vadd.f32 %v1147, %v1413
        %v1487 = vadd.f32 %v1148, %v1463
        %v1488 = vadd.f32 %v1149, %v1311
        %v1489 = vadd.f32 %v1150, %v1313
        %v1490 = vadd.f32 %v1151, %v1364
        %v1491 = vadd.f32 %v1152, %v1366
        %v1492 = vadd.f32 %v1153, %v1417
        %v1493 = vadd.f32 %v1154, %v1419
        %v1494 = vadd.f32 %v1155, %v1468
        %v1495 = vadd.f32 %v1156, %v1315
        %v1496 = vadd.f32 %v1157, %v1317
        %v1497 = vadd.f32 %v1158, %v1368
        %v1498 = vadd.f32 %v1159, %v1370
        %v1499 = vadd.f32 %v1160, %v1421
        %v1500 = vadd.f32 %v1161, %v1423
        %v1501 = vadd.f32 %v1162, %v1471
        %s1502 = scalar_lea.vmem [#allocation2], 448
        %v1503 = vld [vmem:[%s1502] sm:$0xff]
        %v1504 = vld [vmem:[%s1502 + $0x8] sm:$0xff]
        %v1505 = vld [vmem:[%s1502 + $0x10] sm:$0xff]
        %v1506 = vld [vmem:[%s1502 + $0x18] sm:$0xf]
        %v1507 = vld [vmem:[%s1502 + $0x1c] sm:$0xff]
        %v1508 = vld [vmem:[%s1502 + $0x24] sm:$0xff]
        %v1509 = vld [vmem:[%s1502 + $0x2c] sm:$0xff]
        %v1510 = vld [vmem:[%s1502 + $0x34] sm:$0xf]
        %v1511 = vld [vmem:[%s1502 + $0x38] sm:$0xff]
        %v1512 = vld [vmem:[%s1502 + $0x40] sm:$0xff]
        %v1513 = vld [vmem:[%s1502 + $0x48] sm:$0xff]
        %v1514 = vld [vmem:[%s1502 + $0x50] sm:$0xf]
        %v1515 = vld [vmem:[%s1502 + $0x54] sm:$0xff]
        %v1516 = vld [vmem:[%s1502 + $0x5c] sm:$0xff]
        %v1517 = vld [vmem:[%s1502 + $0x64] sm:$0xff]
        %v1518 = vld [vmem:[%s1502 + $0x6c] sm:$0xf]
        %vm1519 = vcmask 1045504
        %v1520 = vrot.slane %v204, 2
        %v1521 = vrot.slane %v205, 2
        %v1522 = vsel %vm1519, %v1520, %v1521
        %v1539 = vunpack.c.l.b16 %v1503
        %v1540 = vunpack.c.h.b16 %v1503
        %v1541 = vunpack.c.l.b16 %v1504
        %v1542 = vunpack.c.h.b16 %v1504
        %v1543 = vunpack.c.l.b16 %v1505
        %v1544 = vunpack.c.h.b16 %v1505
        %v1545 = vunpack.c.l.b16 %v1506
        %v1546 = vunpack.c.l.b16 %v1507
        %v1547 = vunpack.c.h.b16 %v1507
        %v1548 = vunpack.c.l.b16 %v1508
        %v1549 = vunpack.c.h.b16 %v1508
        %v1550 = vunpack.c.l.b16 %v1509
        %v1551 = vunpack.c.h.b16 %v1509
        %v1552 = vunpack.c.l.b16 %v1510
        %v1553 = vunpack.c.l.b16 %v1511
        %v1554 = vunpack.c.h.b16 %v1511
        %v1555 = vunpack.c.l.b16 %v1512
        %v1556 = vunpack.c.h.b16 %v1512
        %v1557 = vunpack.c.l.b16 %v1513
        %v1558 = vunpack.c.h.b16 %v1513
        %v1559 = vunpack.c.l.b16 %v1514
        %v1560 = vunpack.c.l.b16 %v1515
        %v1561 = vunpack.c.h.b16 %v1515
        %v1562 = vunpack.c.l.b16 %v1516
        %v1563 = vunpack.c.h.b16 %v1516
        %v1564 = vunpack.c.l.b16 %v1517
        %v1565 = vunpack.c.h.b16 %v1517
        %v1566 = vunpack.c.l.b16 %v1518
        %v1567 = vpack.c.b16 %v1546, %v1539
        %v1568 = vpack.c.b16 %v1547, %v1540
        %v1569 = vpack.c.b16 %v1548, %v1541
        %v1570 = vpack.c.b16 %v1549, %v1542
        %v1571 = vpack.c.b16 %v1550, %v1543
        %v1572 = vpack.c.b16 %v1551, %v1544
        %v1573 = vpack.c.b16 %v1552, %v1545
        %v1574 = vpack.c.b16 %v1560, %v1553
        %v1575 = vpack.c.b16 %v1561, %v1554
        %v1576 = vpack.c.b16 %v1562, %v1555
        %v1577 = vpack.c.b16 %v1563, %v1556
        %v1578 = vpack.c.b16 %v1564, %v1557
        %v1579 = vpack.c.b16 %v1565, %v1558
        %v1580 = vpack.c.b16 %v1566, %v1559
        %v1596 = vsel %vm327, %v1522, 0
        %v1599 = vsel %vm327, %v1521, 0
        %1601 = vmatprep.subr.bf16.mxu0 %v1568
        %1602 = vmatpush1.bf16.msra.mxu0 %v1567
        %1603 = vmatprep.subr.bf16.mxu0 %v1575
        %1604 = vmatpush1.bf16.msra.mxu0 %v1574
        %1605 = vmatprep.subr.bf16.mxu0 0
        %1606 = vmatpush1.bf16.msra.mxu0 0
        %1607 = vmatprep.subr.bf16.mxu0 0
        %1608 = vmatpush1.bf16.msra.mxu0 0
        %1609 = vmatprep.subr.bf16.mxu0 0
        %1610 = vmatpush1.bf16.msra.mxu0 0
        %1611 = vmatprep.subr.bf16.mxu0 0
        %1612 = vmatpush1.bf16.msra.mxu0 0
        %1613 = vmatprep.subr.bf16.mxu0 0
        %1614 = vmatpush1.bf16.msra.mxu0 0
        %1615 = vmatprep.subr.bf16.mxu0 0
        %1616 = vmatpush1.bf16.msra.mxu0 0
        %1617 = vmatprep.subr.bf16.mxu0 0
        %1618 = vmatpush1.bf16.msra.mxu0 0
        %1619 = vmatprep.subr.bf16.mxu0 0
        %1620 = vmatpush1.bf16.msra.mxu0 0
        %1621 = vmatprep.subr.bf16.mxu0 0
        %1622 = vmatpush1.bf16.msra.mxu0 0
        %1623 = vmatprep.subr.bf16.mxu0 0
        %1624 = vmatpush1.bf16.msra.mxu0 0
        %1625 = vmatprep.subr.bf16.mxu0 0
        %1626 = vmatpush1.bf16.msra.mxu0 0
        %1627 = vmatprep.subr.bf16.mxu0 0
        %1628 = vmatpush1.bf16.msra.mxu0 0
        %1629 = vmatprep.subr.bf16.mxu0 0
        %1630 = vmatpush1.bf16.msra.mxu0 0
        %1631 = vmatprep.subr.bf16.mxu0 0
        %1632 = vmatpush1.bf16.msra.mxu0 0
        %1633 = vmatprep.mubr.bf16.mxu0 0
        %1634 = vmatmul.mubr.bf16.gmra.mrb[0].mxu0 %v1596
        %v1635 = vpop.f32.mrb[0].mxu0
        %v1636 = vadd.f32 0.0, %v1635
        %v1637 = vpop.f32.mrb[0].mxu0
        %v1638 = vadd.f32 0.0, %v1637
        %v1639 = vpop.f32.mrb[0].mxu0
        %v1640 = vadd.f32 0.0, %v1639
        %v1641 = vpop.f32.mrb[0].mxu0
        %v1642 = vadd.f32 0.0, %v1641
        %1643 = vmatprep.mubr.bf16.mxu0 0
        %1644 = vmatmul.mubr.bf16.gmra.mrb[0].mxu0 %v1599
        %v1645 = vpop.f32.mrb[0].mxu0
        %v1646 = vadd.f32 0.0, %v1645
        %v1647 = vpop.f32.mrb[0].mxu0
        %v1648 = vadd.f32 0.0, %v1647
        %v1649 = vpop.f32.mrb[0].mxu0
        %v1650 = vadd.f32 0.0, %v1649
        %v1651 = vpop.f32.mrb[0].mxu0
        %v1652 = vadd.f32 0.0, %v1651
        %1653 = vdwg.mxu0
        %1654 = vmatprep.subr.bf16.mxu0 %v1570
        %1655 = vmatpush1.bf16.msra.mxu0 %v1569
        %1656 = vmatprep.subr.bf16.mxu0 %v1577
        %1657 = vmatpush1.bf16.msra.mxu0 %v1576
        %1658 = vmatprep.subr.bf16.mxu0 0
        %1659 = vmatpush1.bf16.msra.mxu0 0
        %1660 = vmatprep.subr.bf16.mxu0 0
        %1661 = vmatpush1.bf16.msra.mxu0 0
        %1662 = vmatprep.subr.bf16.mxu0 0
        %1663 = vmatpush1.bf16.msra.mxu0 0
        %1664 = vmatprep.subr.bf16.mxu0 0
        %1665 = vmatpush1.bf16.msra.mxu0 0
        %1666 = vmatprep.subr.bf16.mxu0 0
        %1667 = vmatpush1.bf16.msra.mxu0 0
        %1668 = vmatprep.subr.bf16.mxu0 0
        %1669 = vmatpush1.bf16.msra.mxu0 0
        %1670 = vmatprep.subr.bf16.mxu0 0
        %1671 = vmatpush1.bf16.msra.mxu0 0
        %1672 = vmatprep.subr.bf16.mxu0 0
        %1673 = vmatpush1.bf16.msra.mxu0 0
        %1674 = vmatprep.subr.bf16.mxu0 0
        %1675 = vmatpush1.bf16.msra.mxu0 0
        %1676 = vmatprep.subr.bf16.mxu0 0
        %1677 = vmatpush1.bf16.msra.mxu0 0
        %1678 = vmatprep.subr.bf16.mxu0 0
        %1679 = vmatpush1.bf16.msra.mxu0 0
        %1680 = vmatprep.subr.bf16.mxu0 0
        %1681 = vmatpush1.bf16.msra.mxu0 0
        %1682 = vmatprep.subr.bf16.mxu0 0
        %1683 = vmatpush1.bf16.msra.mxu0 0
        %1684 = vmatprep.subr.bf16.mxu0 0
        %1685 = vmatpush1.bf16.msra.mxu0 0
        %1686 = vmatprep.mubr.bf16.mxu0 0
        %1687 = vmatmul.mubr.bf16.gmra.mrb[0].mxu0 %v1596
        %v1688 = vpop.f32.mrb[0].mxu0
        %v1689 = vadd.f32 0.0, %v1688
        %v1690 = vpop.f32.mrb[0].mxu0
        %v1691 = vadd.f32 0.0, %v1690
        %v1692 = vpop.f32.mrb[0].mxu0
        %v1693 = vadd.f32 0.0, %v1692
        %v1694 = vpop.f32.mrb[0].mxu0
        %v1695 = vadd.f32 0.0, %v1694
        %1696 = vmatprep.mubr.bf16.mxu0 0
        %1697 = vmatmul.mubr.bf16.gmra.mrb[0].mxu0 %v1599
        %v1698 = vpop.f32.mrb[0].mxu0
        %v1699 = vadd.f32 0.0, %v1698
        %v1700 = vpop.f32.mrb[0].mxu0
        %v1701 = vadd.f32 0.0, %v1700
        %v1702 = vpop.f32.mrb[0].mxu0
        %v1703 = vadd.f32 0.0, %v1702
        %v1704 = vpop.f32.mrb[0].mxu0
        %v1705 = vadd.f32 0.0, %v1704
        %1706 = vdwg.mxu0
        %1707 = vmatprep.subr.bf16.mxu0 %v1572
        %1708 = vmatpush1.bf16.msra.mxu0 %v1571
        %1709 = vmatprep.subr.bf16.mxu0 %v1579
        %1710 = vmatpush1.bf16.msra.mxu0 %v1578
        %1711 = vmatprep.subr.bf16.mxu0 0
        %1712 = vmatpush1.bf16.msra.mxu0 0
        %1713 = vmatprep.subr.bf16.mxu0 0
        %1714 = vmatpush1.bf16.msra.mxu0 0
        %1715 = vmatprep.subr.bf16.mxu0 0
        %1716 = vmatpush1.bf16.msra.mxu0 0
        %1717 = vmatprep.subr.bf16.mxu0 0
        %1718 = vmatpush1.bf16.msra.mxu0 0
        %1719 = vmatprep.subr.bf16.mxu0 0
        %1720 = vmatpush1.bf16.msra.mxu0 0
        %1721 = vmatprep.subr.bf16.mxu0 0
        %1722 = vmatpush1.bf16.msra.mxu0 0
        %1723 = vmatprep.subr.bf16.mxu0 0
        %1724 = vmatpush1.bf16.msra.mxu0 0
        %1725 = vmatprep.subr.bf16.mxu0 0
        %1726 = vmatpush1.bf16.msra.mxu0 0
        %1727 = vmatprep.subr.bf16.mxu0 0
        %1728 = vmatpush1.bf16.msra.mxu0 0
        %1729 = vmatprep.subr.bf16.mxu0 0
        %1730 = vmatpush1.bf16.msra.mxu0 0
        %1731 = vmatprep.subr.bf16.mxu0 0
        %1732 = vmatpush1.bf16.msra.mxu0 0
        %1733 = vmatprep.subr.bf16.mxu0 0
        %1734 = vmatpush1.bf16.msra.mxu0 0
        %1735 = vmatprep.subr.bf16.mxu0 0
        %1736 = vmatpush1.bf16.msra.mxu0 0
        %1737 = vmatprep.subr.bf16.mxu0 0
        %1738 = vmatpush1.bf16.msra.mxu0 0
        %1739 = vmatprep.mubr.bf16.mxu0 0
        %1740 = vmatmul.mubr.bf16.gmra.mrb[0].mxu0 %v1596
        %v1741 = vpop.f32.mrb[0].mxu0
        %v1742 = vadd.f32 0.0, %v1741
        %v1743 = vpop.f32.mrb[0].mxu0
        %v1744 = vadd.f32 0.0, %v1743
        %v1745 = vpop.f32.mrb[0].mxu0
        %v1746 = vadd.f32 0.0, %v1745
        %v1747 = vpop.f32.mrb[0].mxu0
        %v1748 = vadd.f32 0.0, %v1747
        %1749 = vmatprep.mubr.bf16.mxu0 0
        %1750 = vmatmul.mubr.bf16.gmra.mrb[0].mxu0 %v1599
        %v1751 = vpop.f32.mrb[0].mxu0
        %v1752 = vadd.f32 0.0, %v1751
        %v1753 = vpop.f32.mrb[0].mxu0
        %v1754 = vadd.f32 0.0, %v1753
        %v1755 = vpop.f32.mrb[0].mxu0
        %v1756 = vadd.f32 0.0, %v1755
        %v1757 = vpop.f32.mrb[0].mxu0
        %v1758 = vadd.f32 0.0, %v1757
        %1759 = vdwg.mxu0
        %1760 = vmatprep.subr.bf16.mxu0 0
        %1761 = vmatpush1.bf16.msra.mxu0 %v1573
        %1762 = vmatprep.subr.bf16.mxu0 0
        %1763 = vmatpush1.bf16.msra.mxu0 %v1580
        %1764 = vmatprep.subr.bf16.mxu0 0
        %1765 = vmatpush1.bf16.msra.mxu0 0
        %1766 = vmatprep.subr.bf16.mxu0 0
        %1767 = vmatpush1.bf16.msra.mxu0 0
        %1768 = vmatprep.subr.bf16.mxu0 0
        %1769 = vmatpush1.bf16.msra.mxu0 0
        %1770 = vmatprep.subr.bf16.mxu0 0
        %1771 = vmatpush1.bf16.msra.mxu0 0
        %1772 = vmatprep.subr.bf16.mxu0 0
        %1773 = vmatpush1.bf16.msra.mxu0 0
        %1774 = vmatprep.subr.bf16.mxu0 0
        %1775 = vmatpush1.bf16.msra.mxu0 0
        %1776 = vmatprep.subr.bf16.mxu0 0
        %1777 = vmatpush1.bf16.msra.mxu0 0
        %1778 = vmatprep.subr.bf16.mxu0 0
        %1779 = vmatpush1.bf16.msra.mxu0 0
        %1780 = vmatprep.subr.bf16.mxu0 0
        %1781 = vmatpush1.bf16.msra.mxu0 0
        %1782 = vmatprep.subr.bf16.mxu0 0
        %1783 = vmatpush1.bf16.msra.mxu0 0
        %1784 = vmatprep.subr.bf16.mxu0 0
        %1785 = vmatpush1.bf16.msra.mxu0 0
        %1786 = vmatprep.subr.bf16.mxu0 0
        %1787 = vmatpush1.bf16.msra.mxu0 0
        %1788 = vmatprep.subr.bf16.mxu0 0
        %1789 = vmatpush1.bf16.msra.mxu0 0
        %1790 = vmatprep.subr.bf16.mxu0 0
        %1791 = vmatpush1.bf16.msra.mxu0 0
        %1792 = vmatprep.mubr.bf16.mxu0 0
        %1793 = vmatmul.mubr.bf16.gmra.mrb[0].mxu0 %v1596
        %v1794 = vpop.f32.mrb[0].mxu0
        %v1795 = vadd.f32 0.0, %v1794
        %v1796 = vpop.f32.mrb[0].mxu0
        %v1797 = vpop.f32.mrb[0].mxu0
        %v1798 = vadd.f32 0.0, %v1797
        %v1799 = vpop.f32.mrb[0].mxu0
        %1800 = vmatprep.mubr.bf16.mxu0 0
        %1801 = vmatmul.mubr.bf16.gmra.mrb[0].mxu0 %v1599
        %v1802 = vpop.f32.mrb[0].mxu0
        %v1803 = vadd.f32 0.0, %v1802
        %v1804 = vpop.f32.mrb[0].mxu0
        %v1805 = vpop.f32.mrb[0].mxu0
        %v1806 = vadd.f32 0.0, %v1805
        %v1807 = vpop.f32.mrb[0].mxu0
        %1808 = vdwg.mxu0
        %v1809 = vadd.f32 %v1474, %v1636
        %v1810 = vadd.f32 %v1475, %v1638
        %v1811 = vadd.f32 %v1476, %v1689
        %v1812 = vadd.f32 %v1477, %v1691
        %v1813 = vadd.f32 %v1478, %v1742
        %v1814 = vadd.f32 %v1479, %v1744
        %v1815 = vadd.f32 %v1480, %v1795
        %v1816 = vadd.f32 %v1481, %v1640
        %v1817 = vadd.f32 %v1482, %v1642
        %v1818 = vadd.f32 %v1483, %v1693
        %v1819 = vadd.f32 %v1484, %v1695
        %v1820 = vadd.f32 %v1485, %v1746
        %v1821 = vadd.f32 %v1486, %v1748
        %v1822 = vadd.f32 %v1487, %v1798
        %v1823 = vadd.f32 %v1488, %v1646
        %v1824 = vadd.f32 %v1489, %v1648
        %v1825 = vadd.f32 %v1490, %v1699
        %v1826 = vadd.f32 %v1491, %v1701
        %v1827 = vadd.f32 %v1492, %v1752
        %v1828 = vadd.f32 %v1493, %v1754
        %v1829 = vadd.f32 %v1494, %v1803
        %v1830 = vadd.f32 %v1495, %v1650
        %v1831 = vadd.f32 %v1496, %v1652
        %v1832 = vadd.f32 %v1497, %v1703
        %v1833 = vadd.f32 %v1498, %v1705
        %v1834 = vadd.f32 %v1499, %v1756
        %v1835 = vadd.f32 %v1500, %v1758
        %v1836 = vadd.f32 %v1501, %v1806
        %v1837 = vld [vmem:[#allocation4] sm:$0xff]
        %v1839 = vlaneseq
        %v1840 = vshrl.u32 %v1839, 7
        %v1841 = vsub.s32 0, %v1840
        %v1842 = vrot.slane %v1837, %v1841
        %v1843 = vlaneseq
        %v1844 = vshrl.u32 %v1843, 7
        %v1845 = vsub.s32 1, %v1844
        %v1846 = vrot.slane %v1837, %v1845
        %v1847 = vlaneseq
        %v1848 = vshrl.u32 %v1847, 7
        %v1849 = vsub.s32 2, %v1848
        %v1850 = vrot.slane %v1837, %v1849
        %v1851 = vlaneseq
        %v1852 = vshrl.u32 %v1851, 7
        %v1853 = vsub.s32 3, %v1852
        %v1854 = vrot.slane %v1837, %v1853
        %v1855 = vlaneseq
        %v1856 = vshrl.u32 %v1855, 7
        %v1857 = vsub.s32 4, %v1856
        %v1858 = vrot.slane %v1837, %v1857
        %v1859 = vlaneseq
        %v1860 = vshrl.u32 %v1859, 7
        %v1861 = vsub.s32 5, %v1860
        %v1862 = vrot.slane %v1837, %v1861
        %v1863 = vlaneseq
        %v1864 = vshrl.u32 %v1863, 7
        %v1865 = vsub.s32 6, %v1864
        %v1866 = vrot.slane %v1837, %v1865
        %v1874 = vadd.f32 %v1809, %v1842
        %v1875 = vadd.f32 %v1810, %v1846
        %v1876 = vadd.f32 %v1811, %v1850
        %v1877 = vadd.f32 %v1812, %v1854
        %v1878 = vadd.f32 %v1813, %v1858
        %v1879 = vadd.f32 %v1814, %v1862
        %v1880 = vadd.f32 %v1815, %v1866
        %v1881 = vadd.f32 %v1816, %v1842
        %v1882 = vadd.f32 %v1817, %v1846
        %v1883 = vadd.f32 %v1818, %v1850
        %v1884 = vadd.f32 %v1819, %v1854
        %v1885 = vadd.f32 %v1820, %v1858
        %v1886 = vadd.f32 %v1821, %v1862
        %v1887 = vadd.f32 %v1822, %v1866
        %v1888 = vadd.f32 %v1823, %v1842
        %v1889 = vadd.f32 %v1824, %v1846
        %v1890 = vadd.f32 %v1825, %v1850
        %v1891 = vadd.f32 %v1826, %v1854
        %v1892 = vadd.f32 %v1827, %v1858
        %v1893 = vadd.f32 %v1828, %v1862
        %v1894 = vadd.f32 %v1829, %v1866
        %v1895 = vadd.f32 %v1830, %v1842
        %v1896 = vadd.f32 %v1831, %v1846
        %v1897 = vadd.f32 %v1832, %v1850
        %v1898 = vadd.f32 %v1833, %v1854
        %v1899 = vadd.f32 %v1834, %v1858
        %v1900 = vadd.f32 %v1835, %v1862
        %v1901 = vadd.f32 %v1836, %v1866
        %1918 = vrot.lane.b32.xlu0 %v1877, 64
        %v1919 = vpop.permute.xlu0 %1918
        %1920 = vrot.lane.b32.xlu0 %v1878, 64
        %v1921 = vpop.permute.xlu0 %1920
        %1922 = vrot.lane.b32.xlu0 %v1879, 64
        %v1923 = vpop.permute.xlu0 %1922
        %1924 = vrot.lane.b32.xlu0 %v1880, 64
        %v1925 = vpop.permute.xlu0 %1924
        %1926 = vrot.lane.b32.xlu0 %v1884, 64
        %v1927 = vpop.permute.xlu0 %1926
        %1928 = vrot.lane.b32.xlu0 %v1885, 64
        %v1929 = vpop.permute.xlu0 %1928
        %1930 = vrot.lane.b32.xlu0 %v1886, 64
        %v1931 = vpop.permute.xlu0 %1930
        %1932 = vrot.lane.b32.xlu0 %v1887, 64
        %v1933 = vpop.permute.xlu0 %1932
        %1934 = vrot.lane.b32.xlu0 %v1891, 64
        %v1935 = vpop.permute.xlu0 %1934
        %1936 = vrot.lane.b32.xlu0 %v1892, 64
        %v1937 = vpop.permute.xlu0 %1936
        %1938 = vrot.lane.b32.xlu0 %v1893, 64
        %v1939 = vpop.permute.xlu0 %1938
        %1940 = vrot.lane.b32.xlu0 %v1894, 64
        %v1941 = vpop.permute.xlu0 %1940
        %1942 = vrot.lane.b32.xlu0 %v1898, 64
        %v1943 = vpop.permute.xlu0 %1942
        %1944 = vrot.lane.b32.xlu0 %v1899, 64
        %v1945 = vpop.permute.xlu0 %1944
        %1946 = vrot.lane.b32.xlu0 %v1900, 64
        %v1947 = vpop.permute.xlu0 %1946
        %1948 = vrot.lane.b32.xlu0 %v1901, 64
        %v1949 = vpop.permute.xlu0 %1948
        %vm1950 = vcmask 523264
        %v1951 = vsel %vm1950, %v1919, %v1921
        %v1952 = vsel %vm1950, %v1921, %v1923
        %v1953 = vsel %vm1950, %v1923, %v1925
        %v1954 = vsel %vm1950, %v1927, %v1929
        %v1955 = vsel %vm1950, %v1929, %v1931
        %v1956 = vsel %vm1950, %v1931, %v1933
        %v1957 = vsel %vm1950, %v1935, %v1937
        %v1958 = vsel %vm1950, %v1937, %v1939
        %v1959 = vsel %vm1950, %v1939, %v1941
        %v1960 = vsel %vm1950, %v1943, %v1945
        %v1961 = vsel %vm1950, %v1945, %v1947
        %v1962 = vsel %vm1950, %v1947, %v1949
        %v1979 = vmax.f32 %v1874, %v1951
        %v1980 = vmax.f32 %v1875, %v1952
        %v1981 = vmax.f32 %v1876, %v1953
        %v1982 = vmax.f32 %v1877, %v1925
        %v1983 = vmax.f32 %v1881, %v1954
        %v1984 = vmax.f32 %v1882, %v1955
        %v1985 = vmax.f32 %v1883, %v1956
        %v1986 = vmax.f32 %v1884, %v1933
        %v1987 = vmax.f32 %v1888, %v1957
        %v1988 = vmax.f32 %v1889, %v1958
        %v1989 = vmax.f32 %v1890, %v1959
        %v1990 = vmax.f32 %v1891, %v1941
        %v1991 = vmax.f32 %v1895, %v1960
        %v1992 = vmax.f32 %v1896, %v1961
        %v1993 = vmax.f32 %v1897, %v1962
        %v1994 = vmax.f32 %v1898, %v1949
        %v1995 = vlaneseq
        %v1996 = vshrl.u32 %v1995, 7
        %v1997 = vadd.s32 %v1996, 8
        %v1998 = vlaneseq
        %v1999 = vand.u32 %v1998, 127
        %v2000 = vmul.u32 %v1996, 2
        %v2001 = vmul.u32 %v1997, 2
        %vm2002 = vcmp.eq.s32.totalorder %v1999, %v2000
        %vm2003 = vcmp.eq.s32.totalorder %v1999, %v2001
        %v2004 = vsel %vm2002, 1, 0
        %v2005 = vsel %vm2003, 1, 0
        %v2006 = vcvt.s32.f32 %v2004
        %v2007 = vcvt.s32.f32 %v2005
        %v2008 = vadd.s32 %v2000, 1
        %v2009 = vadd.s32 %v2001, 1
        %vm2010 = vcmp.eq.s32.totalorder %v1999, %v2008
        %vm2011 = vcmp.eq.s32.totalorder %v1999, %v2009
        %v2012 = vsel %vm2010, 1, 0
        %v2013 = vsel %vm2011, 1, 0
        %v2014 = vcvt.s32.f32 %v2012
        %v2015 = vcvt.s32.f32 %v2013
        %vm2016 = vcmask 228352
        %v2018 = vsel %vm2016, %v2006, 0
        %v2021 = vsel %vm2016, %v2007, 0
        %vm2023 = vcmask 1043456
        %v2025 = vsel %vm2023, %v1991, 0
        %v2028 = vsel %vm2023, %v1992, 0
        %v2031 = vsel %vm2023, %v1993, 0
        %v2034 = vsel %vm2023, %v1994, 0
        %2036 = vmatprep.subr.mxu0 %v1980
        %2037 = vmatpush1.msra.mxu0 %v1979
        %2038 = vmatprep.subr.mxu0 %v1984
        %2039 = vmatpush1.msra.mxu0 %v1983
        %2040 = vmatprep.subr.mxu0 %v1988
        %2041 = vmatpush1.msra.mxu0 %v1987
        %2042 = vmatprep.subr.mxu0 %v2028
        %2043 = vmatpush1.msra.mxu0 %v2025
        %2044 = vmatprep.subr.mxu0 0.0
        %2045 = vmatpush1.msra.mxu0 0.0
        %2046 = vmatprep.subr.mxu0 0.0
        %2047 = vmatpush1.msra.mxu0 0.0
        %2048 = vmatprep.subr.mxu0 0.0
        %2049 = vmatpush1.msra.mxu0 0.0
        %2050 = vmatprep.subr.mxu0 0.0
        %2051 = vmatpush1.msra.mxu0 0.0
        %2052 = vmatprep.subr.mxu0 0.0
        %2053 = vmatpush1.msra.mxu0 0.0
        %2054 = vmatprep.subr.mxu0 0.0
        %2055 = vmatpush1.msra.mxu0 0.0
        %2056 = vmatprep.subr.mxu0 0.0
        %2057 = vmatpush1.msra.mxu0 0.0
        %2058 = vmatprep.subr.mxu0 0.0
        %2059 = vmatpush1.msra.mxu0 0.0
        %2060 = vmatprep.subr.mxu0 0.0
        %2061 = vmatpush1.msra.mxu0 0.0
        %2062 = vmatprep.subr.mxu0 0.0
        %2063 = vmatpush1.msra.mxu0 0.0
        %2064 = vmatprep.subr.mxu0 0.0
        %2065 = vmatpush1.msra.mxu0 0.0
        %2066 = vmatprep.subr.mxu0 0.0
        %2067 = vmatpush1.msra.mxu0 0.0
        %2068 = vmatprep.subr.mxu0 0.0
        %2069 = vmatpush1.msra.mxu0 0.0
        %2070 = vmatprep.subr.mxu0 0.0
        %2071 = vmatpush1.msra.mxu0 0.0
        %2072 = vmatprep.subr.mxu0 0.0
        %2073 = vmatpush1.msra.mxu0 0.0
        %2074 = vmatprep.subr.mxu0 0.0
        %2075 = vmatpush1.msra.mxu0 0.0
        %2076 = vmatprep.subr.mxu0 0.0
        %2077 = vmatpush1.msra.mxu0 0.0
        %2078 = vmatprep.subr.mxu0 0.0
        %2079 = vmatpush1.msra.mxu0 0.0
        %2080 = vmatprep.subr.mxu0 0.0
        %2081 = vmatpush1.msra.mxu0 0.0
        %2082 = vmatprep.subr.mxu0 0.0
        %2083 = vmatpush1.msra.mxu0 0.0
        %2084 = vmatprep.subr.mxu0 0.0
        %2085 = vmatpush1.msra.mxu0 0.0
        %2086 = vmatprep.subr.mxu0 0.0
        %2087 = vmatpush1.msra.mxu0 0.0
        %2088 = vmatprep.subr.mxu0 0.0
        %2089 = vmatpush1.msra.mxu0 0.0
        %2090 = vmatprep.subr.mxu0 0.0
        %2091 = vmatpush1.msra.mxu0 0.0
        %2092 = vmatprep.subr.mxu0 0.0
        %2093 = vmatpush1.msra.mxu0 0.0
        %2094 = vmatprep.subr.mxu0 0.0
        %2095 = vmatpush1.msra.mxu0 0.0
        %2096 = vmatprep.subr.mxu0 0.0
        %2097 = vmatpush1.msra.mxu0 0.0
        %2098 = vmatprep.subr.mxu0 0.0
        %2099 = vmatpush1.msra.mxu0 0.0
        %2100 = vmatprep.mubr.f32.mxu0 0.0
        %2101 = vmatmul.mubr.f32.gmra.mrb[0].mxu0 %v2018
        %v2102 = vpop.f32.mrb[0].mxu0
        %v2103 = vadd.f32 0.0, %v2102
        %v2104 = vpop.f32.mrb[0].mxu0
        %v2105 = vadd.f32 0.0, %v2104
        %2106 = vmatprep.mubr.f32.mxu0 0.0
        %2107 = vmatmul.mubr.f32.gmra.mrb[0].mxu0 %v2021
        %v2108 = vpop.f32.mrb[0].mxu0
        %v2109 = vadd.f32 0.0, %v2108
        %v2110 = vpop.f32.mrb[0].mxu0
        %v2111 = vadd.f32 0.0, %v2110
        %2112 = vdwg.mxu0
        %2113 = vmatprep.subr.mxu0 %v1982
        %2114 = vmatpush1.msra.mxu0 %v1981
        %2115 = vmatprep.subr.mxu0 %v1986
        %2116 = vmatpush1.msra.mxu0 %v1985
        %2117 = vmatprep.subr.mxu0 %v1990
        %2118 = vmatpush1.msra.mxu0 %v1989
        %2119 = vmatprep.subr.mxu0 %v2034
        %2120 = vmatpush1.msra.mxu0 %v2031
        %2121 = vmatprep.subr.mxu0 0.0
        %2122 = vmatpush1.msra.mxu0 0.0
        %2123 = vmatprep.subr.mxu0 0.0
        %2124 = vmatpush1.msra.mxu0 0.0
        %2125 = vmatprep.subr.mxu0 0.0
        %2126 = vmatpush1.msra.mxu0 0.0
        %2127 = vmatprep.subr.mxu0 0.0
        %2128 = vmatpush1.msra.mxu0 0.0
        %2129 = vmatprep.subr.mxu0 0.0
        %2130 = vmatpush1.msra.mxu0 0.0
        %2131 = vmatprep.subr.mxu0 0.0
        %2132 = vmatpush1.msra.mxu0 0.0
        %2133 = vmatprep.subr.mxu0 0.0
        %2134 = vmatpush1.msra.mxu0 0.0
        %2135 = vmatprep.subr.mxu0 0.0
        %2136 = vmatpush1.msra.mxu0 0.0
        %2137 = vmatprep.subr.mxu0 0.0
        %2138 = vmatpush1.msra.mxu0 0.0
        %2139 = vmatprep.subr.mxu0 0.0
        %2140 = vmatpush1.msra.mxu0 0.0
        %2141 = vmatprep.subr.mxu0 0.0
        %2142 = vmatpush1.msra.mxu0 0.0
        %2143 = vmatprep.subr.mxu0 0.0
        %2144 = vmatpush1.msra.mxu0 0.0
        %2145 = vmatprep.subr.mxu0 0.0
        %2146 = vmatpush1.msra.mxu0 0.0
        %2147 = vmatprep.subr.mxu0 0.0
        %2148 = vmatpush1.msra.mxu0 0.0
        %2149 = vmatprep.subr.mxu0 0.0
        %2150 = vmatpush1.msra.mxu0 0.0
        %2151 = vmatprep.subr.mxu0 0.0
        %2152 = vmatpush1.msra.mxu0 0.0
        %2153 = vmatprep.subr.mxu0 0.0
        %2154 = vmatpush1.msra.mxu0 0.0
        %2155 = vmatprep.subr.mxu0 0.0
        %2156 = vmatpush1.msra.mxu0 0.0
        %2157 = vmatprep.subr.mxu0 0.0
        %2158 = vmatpush1.msra.mxu0 0.0
        %2159 = vmatprep.subr.mxu0 0.0
        %2160 = vmatpush1.msra.mxu0 0.0
        %2161 = vmatprep.subr.mxu0 0.0
        %2162 = vmatpush1.msra.mxu0 0.0
        %2163 = vmatprep.subr.mxu0 0.0
        %2164 = vmatpush1.msra.mxu0 0.0
        %2165 = vmatprep.subr.mxu0 0.0
        %2166 = vmatpush1.msra.mxu0 0.0
        %2167 = vmatprep.subr.mxu0 0.0
        %2168 = vmatpush1.msra.mxu0 0.0
        %2169 = vmatprep.subr.mxu0 0.0
        %2170 = vmatpush1.msra.mxu0 0.0
        %2171 = vmatprep.subr.mxu0 0.0
        %2172 = vmatpush1.msra.mxu0 0.0
        %2173 = vmatprep.subr.mxu0 0.0
        %2174 = vmatpush1.msra.mxu0 0.0
        %2175 = vmatprep.subr.mxu0 0.0
        %2176 = vmatpush1.msra.mxu0 0.0
        %2177 = vmatprep.mubr.f32.mxu0 0.0
        %2178 = vmatmul.mubr.f32.gmra.mrb[0].mxu0 %v2018
        %v2179 = vpop.f32.mrb[0].mxu0
        %v2180 = vadd.f32 0.0, %v2179
        %v2181 = vpop.f32.mrb[0].mxu0
        %v2182 = vadd.f32 0.0, %v2181
        %2183 = vmatprep.mubr.f32.mxu0 0.0
        %2184 = vmatmul.mubr.f32.gmra.mrb[0].mxu0 %v2021
        %v2185 = vpop.f32.mrb[0].mxu0
        %v2186 = vadd.f32 0.0, %v2185
        %v2187 = vpop.f32.mrb[0].mxu0
        %v2188 = vadd.f32 0.0, %v2187
        %2189 = vdwg.mxu0
        %v2191 = vsel %vm2016, %v2014, 0
        %v2194 = vsel %vm2016, %v2015, 0
        %2196 = vmatprep.subr.mxu0 %v1980
        %2197 = vmatpush1.msra.mxu0 %v1979
        %2198 = vmatprep.subr.mxu0 %v1984
        %2199 = vmatpush1.msra.mxu0 %v1983
        %2200 = vmatprep.subr.mxu0 %v1988
        %2201 = vmatpush1.msra.mxu0 %v1987
        %2202 = vmatprep.subr.mxu0 %v2028
        %2203 = vmatpush1.msra.mxu0 %v2025
        %2204 = vmatprep.subr.mxu0 0.0
        %2205 = vmatpush1.msra.mxu0 0.0
        %2206 = vmatprep.subr.mxu0 0.0
        %2207 = vmatpush1.msra.mxu0 0.0
        %2208 = vmatprep.subr.mxu0 0.0
        %2209 = vmatpush1.msra.mxu0 0.0
        %2210 = vmatprep.subr.mxu0 0.0
        %2211 = vmatpush1.msra.mxu0 0.0
        %2212 = vmatprep.subr.mxu0 0.0
        %2213 = vmatpush1.msra.mxu0 0.0
        %2214 = vmatprep.subr.mxu0 0.0
        %2215 = vmatpush1.msra.mxu0 0.0
        %2216 = vmatprep.subr.mxu0 0.0
        %2217 = vmatpush1.msra.mxu0 0.0
        %2218 = vmatprep.subr.mxu0 0.0
        %2219 = vmatpush1.msra.mxu0 0.0
        %2220 = vmatprep.subr.mxu0 0.0
        %2221 = vmatpush1.msra.mxu0 0.0
        %2222 = vmatprep.subr.mxu0 0.0
        %2223 = vmatpush1.msra.mxu0 0.0
        %2224 = vmatprep.subr.mxu0 0.0
        %2225 = vmatpush1.msra.mxu0 0.0
        %2226 = vmatprep.subr.mxu0 0.0
        %2227 = vmatpush1.msra.mxu0 0.0
        %2228 = vmatprep.subr.mxu0 0.0
        %2229 = vmatpush1.msra.mxu0 0.0
        %2230 = vmatprep.subr.mxu0 0.0
        %2231 = vmatpush1.msra.mxu0 0.0
        %2232 = vmatprep.subr.mxu0 0.0
        %2233 = vmatpush1.msra.mxu0 0.0
        %2234 = vmatprep.subr.mxu0 0.0
        %2235 = vmatpush1.msra.mxu0 0.0
        %2236 = vmatprep.subr.mxu0 0.0
        %2237 = vmatpush1.msra.mxu0 0.0
        %2238 = vmatprep.subr.mxu0 0.0
        %2239 = vmatpush1.msra.mxu0 0.0
        %2240 = vmatprep.subr.mxu0 0.0
        %2241 = vmatpush1.msra.mxu0 0.0
        %2242 = vmatprep.subr.mxu0 0.0
        %2243 = vmatpush1.msra.mxu0 0.0
        %2244 = vmatprep.subr.mxu0 0.0
        %2245 = vmatpush1.msra.mxu0 0.0
        %2246 = vmatprep.subr.mxu0 0.0
        %2247 = vmatpush1.msra.mxu0 0.0
        %2248 = vmatprep.subr.mxu0 0.0
        %2249 = vmatpush1.msra.mxu0 0.0
        %2250 = vmatprep.subr.mxu0 0.0
        %2251 = vmatpush1.msra.mxu0 0.0
        %2252 = vmatprep.subr.mxu0 0.0
        %2253 = vmatpush1.msra.mxu0 0.0
        %2254 = vmatprep.subr.mxu0 0.0
        %2255 = vmatpush1.msra.mxu0 0.0
        %2256 = vmatprep.subr.mxu0 0.0
        %2257 = vmatpush1.msra.mxu0 0.0
        %2258 = vmatprep.subr.mxu0 0.0
        %2259 = vmatpush1.msra.mxu0 0.0
        %2260 = vmatprep.mubr.f32.mxu0 0.0
        %2261 = vmatmul.mubr.f32.gmra.mrb[0].mxu0 %v2191
        %v2262 = vpop.f32.mrb[0].mxu0
        %v2263 = vadd.f32 0.0, %v2262
        %v2264 = vpop.f32.mrb[0].mxu0
        %v2265 = vadd.f32 0.0, %v2264
        %2266 = vmatprep.mubr.f32.mxu0 0.0
        %2267 = vmatmul.mubr.f32.gmra.mrb[0].mxu0 %v2194
        %v2268 = vpop.f32.mrb[0].mxu0
        %v2269 = vadd.f32 0.0, %v2268
        %v2270 = vpop.f32.mrb[0].mxu0
        %v2271 = vadd.f32 0.0, %v2270
        %2272 = vdwg.mxu0
        %2273 = vmatprep.subr.mxu0 %v1982
        %2274 = vmatpush1.msra.mxu0 %v1981
        %2275 = vmatprep.subr.mxu0 %v1986
        %2276 = vmatpush1.msra.mxu0 %v1985
        %2277 = vmatprep.subr.mxu0 %v1990
        %2278 = vmatpush1.msra.mxu0 %v1989
        %2279 = vmatprep.subr.mxu0 %v2034
        %2280 = vmatpush1.msra.mxu0 %v2031
        %2281 = vmatprep.subr.mxu0 0.0
        %2282 = vmatpush1.msra.mxu0 0.0
        %2283 = vmatprep.subr.mxu0 0.0
        %2284 = vmatpush1.msra.mxu0 0.0
        %2285 = vmatprep.subr.mxu0 0.0
        %2286 = vmatpush1.msra.mxu0 0.0
        %2287 = vmatprep.subr.mxu0 0.0
        %2288 = vmatpush1.msra.mxu0 0.0
        %2289 = vmatprep.subr.mxu0 0.0
        %2290 = vmatpush1.msra.mxu0 0.0
        %2291 = vmatprep.subr.mxu0 0.0
        %2292 = vmatpush1.msra.mxu0 0.0
        %2293 = vmatprep.subr.mxu0 0.0
        %2294 = vmatpush1.msra.mxu0 0.0
        %2295 = vmatprep.subr.mxu0 0.0
        %2296 = vmatpush1.msra.mxu0 0.0
        %2297 = vmatprep.subr.mxu0 0.0
        %2298 = vmatpush1.msra.mxu0 0.0
        %2299 = vmatprep.subr.mxu0 0.0
        %2300 = vmatpush1.msra.mxu0 0.0
        %2301 = vmatprep.subr.mxu0 0.0
        %2302 = vmatpush1.msra.mxu0 0.0
        %2303 = vmatprep.subr.mxu0 0.0
        %2304 = vmatpush1.msra.mxu0 0.0
        %2305 = vmatprep.subr.mxu0 0.0
        %2306 = vmatpush1.msra.mxu0 0.0
        %2307 = vmatprep.subr.mxu0 0.0
        %2308 = vmatpush1.msra.mxu0 0.0
        %2309 = vmatprep.subr.mxu0 0.0
        %2310 = vmatpush1.msra.mxu0 0.0
        %2311 = vmatprep.subr.mxu0 0.0
        %2312 = vmatpush1.msra.mxu0 0.0
        %2313 = vmatprep.subr.mxu0 0.0
        %2314 = vmatpush1.msra.mxu0 0.0
        %2315 = vmatprep.subr.mxu0 0.0
        %2316 = vmatpush1.msra.mxu0 0.0
        %2317 = vmatprep.subr.mxu0 0.0
        %2318 = vmatpush1.msra.mxu0 0.0
        %2319 = vmatprep.subr.mxu0 0.0
        %2320 = vmatpush1.msra.mxu0 0.0
        %2321 = vmatprep.subr.mxu0 0.0
        %2322 = vmatpush1.msra.mxu0 0.0
        %2323 = vmatprep.subr.mxu0 0.0
        %2324 = vmatpush1.msra.mxu0 0.0
        %2325 = vmatprep.subr.mxu0 0.0
        %2326 = vmatpush1.msra.mxu0 0.0
        %2327 = vmatprep.subr.mxu0 0.0
        %2328 = vmatpush1.msra.mxu0 0.0
        %2329 = vmatprep.subr.mxu0 0.0
        %2330 = vmatpush1.msra.mxu0 0.0
        %2331 = vmatprep.subr.mxu0 0.0
        %2332 = vmatpush1.msra.mxu0 0.0
        %2333 = vmatprep.subr.mxu0 0.0
        %2334 = vmatpush1.msra.mxu0 0.0
        %2335 = vmatprep.subr.mxu0 0.0
        %2336 = vmatpush1.msra.mxu0 0.0
        %2337 = vmatprep.mubr.f32.mxu0 0.0
        %2338 = vmatmul.mubr.f32.gmra.mrb[0].mxu0 %v2191
        %v2339 = vpop.f32.mrb[0].mxu0
        %v2340 = vadd.f32 0.0, %v2339
        %v2341 = vpop.f32.mrb[0].mxu0
        %v2342 = vadd.f32 0.0, %v2341
        %2343 = vmatprep.mubr.f32.mxu0 0.0
        %2344 = vmatmul.mubr.f32.gmra.mrb[0].mxu0 %v2194
        %v2345 = vpop.f32.mrb[0].mxu0
        %v2346 = vadd.f32 0.0, %v2345
        %v2347 = vpop.f32.mrb[0].mxu0
        %v2348 = vadd.f32 0.0, %v2347
        %2349 = vdwg.mxu0
        %v2350 = vmax.f32 %v2103, %v2263
        %v2351 = vmax.f32 %v2105, %v2265
        %v2352 = vmax.f32 %v2180, %v2340
        %v2353 = vmax.f32 %v2182, %v2342
        %v2354 = vmax.f32 %v2109, %v2269
        %v2355 = vmax.f32 %v2111, %v2271
        %v2356 = vmax.f32 %v2186, %v2346
        %v2357 = vmax.f32 %v2188, %v2348
        %v2358 = vmax.f32 %v2350, 0.0
        %v2359 = vmax.f32 %v2351, 0.0
        %v2360 = vmax.f32 %v2352, 0.0
        %v2361 = vmax.f32 %v2353, 0.0
        %v2362 = vmax.f32 %v2354, 0.0
        %v2363 = vmax.f32 %v2355, 0.0
        %v2364 = vmax.f32 %v2356, 0.0
        %v2365 = vmax.f32 %v2357, 0.0
        %2366 = vst [vmem:[%s198] sm:$0xff] %v2358
        %2367 = vst [vmem:[%s198 + $0x8] sm:$0xff] %v2359
        %2368 = vst [vmem:[%s198 + $0x10] sm:$0xff] %v2360
        %2369 = vst.msk [vmem:[%s198 + $0x18] sm:$0xff] %vm1950, %v2361
        %2370 = vst [vmem:[%s198 + $0x20] sm:$0x3f] %v2362
        %2371 = vst [vmem:[%s198 + $0x28] sm:$0x3f] %v2363
        %2372 = vst [vmem:[%s198 + $0x30] sm:$0x3f] %v2364
        %vm2373 = vcmask 521216
        %2374 = vst.msk [vmem:[%s198 + $0x38] sm:$0x3f] %vm2373, %v2365
        %p2375 = scmp.lt.s32.totalorder %s16, 1
        %s2376 = scalar_select %p2375, %s16, 1
        %s2377 = smul.addr %s2376, 8
        %s2378 = smul.addr %s2377, 8
        %s2379 = scalar_lea.vmem %s3, %s2378
        // Predicated region
        $region41: #{cnn_mnist_forward.4} parent=31 // pred_check
          %p2380 = pneg %p102
        $region42: #{cnn_mnist_forward.4} parent=31 // pred_check_branch
          %2382 = sbr.rel (%p2380) target = $region44
        $region43: #{cnn_mnist_forward.4} parent=31 // pred_region
          _
        $region44: #{cnn_mnist_forward.4} parent=31 // pred_fallthru
          _
      $region32: #{cnn_mnist_forward.4} parent=5 // pred_fallthru
        _
      %p2383 = scmp.le.s32.totalorder 2, %s11
      // Predicated region
      $region45: #{cnn_mnist_forward.4} parent=5 // pred_check
        %p2384 = pneg %p2383
      $region46: #{cnn_mnist_forward.4} parent=5 // pred_check_branch
        %2386 = sbr.rel (%p2384) target = $region48
      $region47: #{cnn_mnist_forward.4} parent=5 // pred_region
        %s2387 = ssub.s32 %s11, 2
        // Predicated region
        $region49: #{cnn_mnist_forward.4} parent=47 // pred_check
          %p2388 = pneg %p108
        $region50: #{cnn_mnist_forward.4} parent=47 // pred_check_branch
          %2390 = sbr.rel (%p2388) target = $region52
        $region51: #{cnn_mnist_forward.4} parent=47 // pred_region
          %p2391 = scmp.lt.s32.totalorder %s17, 1
          %s2392 = scalar_select %p2391, %s17, 1
          %s2393 = smul.addr %s2392, 8
          %s2394 = smul.addr %s2393, 8
          %s2395 = scalar_lea.vmem %s3, %s2394
        $region52: #{cnn_mnist_forward.4} parent=47 // pred_fallthru
          _
      $region48: #{cnn_mnist_forward.4} parent=5 // pred_fallthru
        _
    $region6: #{cnn_mnist_forward.4} parent=1 // loop_footer
      %s15 = sadd.s32 1, %s11
    $region7: #{cnn_mnist_forward.4} parent=1 // loop_footer_branch
      %10 = sbr.rel target = $region3
    $region8: #{cnn_mnist_forward.4} parent=1 // loop_exit
      _
    %2396 = vsyncpa [#allocation3], 1
    %s2397 = scalar_lea.sflag [#allocation3], 1
    %2398 = vsyncpa %s2397, 1
    %2399 = vsyncpa [#allocation5], 1

// kernel: cnn_mnist_forward.7
$region0: #{cnn_mnist_forward.7}
  #allocation0 [shape = 'u32[]', space=smem, size = 0x4, offset = 0x4, fixed_abs, tag = 'smem constant byte address 0x4 - core index']
  #allocation1 [shape = 'u32[144,128]{1,0:T(1,128)}', space=vmem, size = 0x12000, scoped, tag = 'internal scratch']
  %s0 = inlined_call_operand.vmem [shape: f32[2,288], index: 0, kind: input, shape index: {}]
  %s1 = inlined_call_operand.vmem [shape: bf16[288,128], index: 1, kind: input, shape index: {}]
  %s2 = inlined_call_operand.vmem [shape: f32[1,128], index: 2, kind: input, shape index: {}]
  %s3 = inlined_call_operand.vmem [shape: bf16[128,64], index: 3, kind: input, shape index: {}]
  %s4 = inlined_call_operand.vmem [shape: f32[1,64], index: 4, kind: input, shape index: {}]
  %s5 = inlined_call_operand.vmem [shape: bf16[64,10], index: 5, kind: input, shape index: {}]
  %s6 = inlined_call_operand.vmem [shape: f32[1,10], index: 6, kind: input, shape index: {}]
  %s7 = inlined_call_operand.hbm [shape: f32[2,10], index: 7, kind: output, shape index: {}]
  %s8 = sld [smem:[#allocation0]]
  $region38: #{cnn_mnist_forward.7} parent=0
    _
  %s10 = ssub.s32 1, %s8
  %s11 = scalar_select 0, %s10, %s8
  $region1: #{cnn_mnist_forward.7} parent=0
    #allocation2 [shape = 'u8[1024]{0}', space=vmem, size = 0x400, scoped, tag = 'output window, operand 0, single buffered']
    #allocation3 [shape = 's32[1]{0}', space=sflag, size = 0x4, scoped, tag = 'scoped memory for cnn_mnist_forward.7']
    %12 = vsyncpa [#allocation3], 0
    // Predicated region
    $region2: #{cnn_mnist_forward.7} parent=1 // pred_check
      _
    $region3: #{cnn_mnist_forward.7} parent=1 // pred_check_branch
      %14 = sbr.rel (0) target = $region5
    $region4: #{cnn_mnist_forward.7} parent=1 // pred_region
      _
    $region5: #{cnn_mnist_forward.7} parent=1 // pred_fallthru
      _
    // Predicated region
    $region6: #{cnn_mnist_forward.7} parent=1 // pred_check
      _
    $region7: #{cnn_mnist_forward.7} parent=1 // pred_check_branch
      %16 = sbr.rel (0) target = $region9
    $region8: #{cnn_mnist_forward.7} parent=1 // pred_region
      _
    $region9: #{cnn_mnist_forward.7} parent=1 // pred_fallthru
      _
    // Predicated region
    $region10: #{cnn_mnist_forward.7} parent=1 // pred_check
      _
    $region11: #{cnn_mnist_forward.7} parent=1 // pred_check_branch
      %18 = sbr.rel (0) target = $region13
    $region12: #{cnn_mnist_forward.7} parent=1 // pred_region
      _
    $region13: #{cnn_mnist_forward.7} parent=1 // pred_fallthru
      _
    // Predicated region
    $region14: #{cnn_mnist_forward.7} parent=1 // pred_check
      _
    $region15: #{cnn_mnist_forward.7} parent=1 // pred_check_branch
      %20 = sbr.rel (0) target = $region17
    $region16: #{cnn_mnist_forward.7} parent=1 // pred_region
      _
    $region17: #{cnn_mnist_forward.7} parent=1 // pred_fallthru
      _
    // Predicated region
    $region18: #{cnn_mnist_forward.7} parent=1 // pred_check
      _
    $region19: #{cnn_mnist_forward.7} parent=1 // pred_check_branch
      %22 = sbr.rel (0) target = $region21
    $region20: #{cnn_mnist_forward.7} parent=1 // pred_region
      _
    $region21: #{cnn_mnist_forward.7} parent=1 // pred_fallthru
      _
    // Predicated region
    $region22: #{cnn_mnist_forward.7} parent=1 // pred_check
      _
    $region23: #{cnn_mnist_forward.7} parent=1 // pred_check_branch
      %24 = sbr.rel (0) target = $region25
    $region24: #{cnn_mnist_forward.7} parent=1 // pred_region
      _
    $region25: #{cnn_mnist_forward.7} parent=1 // pred_fallthru
      _
    // Predicated region
    $region26: #{cnn_mnist_forward.7} parent=1 // pred_check
      _
    $region27: #{cnn_mnist_forward.7} parent=1 // pred_check_branch
      %26 = sbr.rel (0) target = $region29
    $region28: #{cnn_mnist_forward.7} parent=1 // pred_region
      _
    $region29: #{cnn_mnist_forward.7} parent=1 // pred_fallthru
      _
    %v28 = vld [vmem:[%s0] sm:$0x3f]
    %v30 = vcombine.high %v28, %v28
    %v32 = vunpack.c.l.s4 1983009808
    %v33 = vunpack.c.0.s8 %v32
    %v34 = vlaneseq
    %v35 = vshrl.u32 %v34, 7
    %v36 = vsub.s32 %v33, %v35
    %v37 = vrot.slane %v28, %v36
    %v39 = vunpack.c.l.s4 1983009808
    %v40 = vunpack.c.0.s8 %v39
    %v41 = vlaneseq
    %v42 = vshrl.u32 %v41, 7
    %v43 = vsub.s32 %v40, %v42
    %v44 = vrot.slane %v30, %v43
    %v45 = vcombine.high %v37, %v37
    %v49 = vpack.c.bf16 %v37, %v37
    %v50 = vpack.c.bf16 %v45, %v45
    %v51 = vpack.c.bf16 %v44, %v44
    %v52 = vld [vmem:[%s1] sm:$0xf]
    %v53 = vld [vmem:[%s1 + $0x4] sm:$0xf]
    %v54 = vld [vmem:[%s1 + $0x8] sm:$0xf]
    %v55 = vld [vmem:[%s1 + $0xc] sm:$0xf]
    %v56 = vld [vmem:[%s1 + $0x10] sm:$0xf]
    %v57 = vld [vmem:[%s1 + $0x14] sm:$0xf]
    %v58 = vld [vmem:[%s1 + $0x18] sm:$0xf]
    %v59 = vld [vmem:[%s1 + $0x1c] sm:$0xf]
    %v60 = vld [vmem:[%s1 + $0x20] sm:$0xf]
    %v61 = vld [vmem:[%s1 + $0x24] sm:$0xf]
    %v62 = vld [vmem:[%s1 + $0x28] sm:$0xf]
    %v63 = vld [vmem:[%s1 + $0x2c] sm:$0xf]
    %v64 = vld [vmem:[%s1 + $0x30] sm:$0xf]
    %v65 = vld [vmem:[%s1 + $0x34] sm:$0xf]
    %v66 = vld [vmem:[%s1 + $0x38] sm:$0xf]
    %v67 = vld [vmem:[%s1 + $0x3c] sm:$0xf]
    %v68 = vld [vmem:[%s1 + $0x40] sm:$0xf]
    %v69 = vld [vmem:[%s1 + $0x44] sm:$0xf]
    %v70 = vld [vmem:[%s1 + $0x48] sm:$0xf]
    %v71 = vld [vmem:[%s1 + $0x4c] sm:$0xf]
    %v72 = vld [vmem:[%s1 + $0x50] sm:$0xf]
    %v73 = vld [vmem:[%s1 + $0x54] sm:$0xf]
    %v74 = vld [vmem:[%s1 + $0x58] sm:$0xf]
    %v75 = vld [vmem:[%s1 + $0x5c] sm:$0xf]
    %v76 = vld [vmem:[%s1 + $0x60] sm:$0xf]
    %v77 = vld [vmem:[%s1 + $0x64] sm:$0xf]
    %v78 = vld [vmem:[%s1 + $0x68] sm:$0xf]
    %v79 = vld [vmem:[%s1 + $0x6c] sm:$0xf]
    %v80 = vld [vmem:[%s1 + $0x70] sm:$0xf]
    %v81 = vld [vmem:[%s1 + $0x74] sm:$0xf]
    %v82 = vld [vmem:[%s1 + $0x78] sm:$0xf]
    %v83 = vld [vmem:[%s1 + $0x7c] sm:$0xf]
    %v84 = vld [vmem:[%s1 + $0x80] sm:$0xf]
    %v85 = vld [vmem:[%s1 + $0x84] sm:$0xf]
    %v86 = vld [vmem:[%s1 + $0x88] sm:$0xf]
    %v87 = vld [vmem:[%s1 + $0x8c] sm:$0xf]
    %v88 = vld [vmem:[%s2] sm:$0x1]
    %v90 = vlaneseq
    %v91 = vshrl.u32 %v90, 7
    %v92 = vsub.s32 0, %v91
    %v93 = vrot.slane %v88, %v92
    %v131 = vunpack.c.l.b16 %v52
    %v132 = vunpack.c.l.b16 %v53
    %v133 = vunpack.c.l.b16 %v54
    %v134 = vunpack.c.l.b16 %v55
    %v135 = vunpack.c.l.b16 %v56
    %v136 = vunpack.c.l.b16 %v57
    %v137 = vunpack.c.l.b16 %v58
    %v138 = vunpack.c.l.b16 %v59
    %v139 = vunpack.c.l.b16 %v60
    %v140 = vunpack.c.l.b16 %v61
    %v141 = vunpack.c.l.b16 %v62
    %v142 = vunpack.c.l.b16 %v63
    %v143 = vunpack.c.l.b16 %v64
    %v144 = vunpack.c.l.b16 %v65
    %v145 = vunpack.c.l.b16 %v66
    %v146 = vunpack.c.l.b16 %v67
    %v147 = vunpack.c.l.b16 %v68
    %v148 = vunpack.c.l.b16 %v69
    %v149 = vunpack.c.l.b16 %v70
    %v150 = vunpack.c.l.b16 %v71
    %v151 = vunpack.c.l.b16 %v72
    %v152 = vunpack.c.l.b16 %v73
    %v153 = vunpack.c.l.b16 %v74
    %v154 = vunpack.c.l.b16 %v75
    %v155 = vunpack.c.l.b16 %v76
    %v156 = vunpack.c.l.b16 %v77
    %v157 = vunpack.c.l.b16 %v78
    %v158 = vunpack.c.l.b16 %v79
    %v159 = vunpack.c.l.b16 %v80
    %v160 = vunpack.c.l.b16 %v81
    %v161 = vunpack.c.l.b16 %v82
    %v162 = vunpack.c.l.b16 %v83
    %v163 = vunpack.c.l.b16 %v84
    %v164 = vunpack.c.l.b16 %v85
    %v165 = vunpack.c.l.b16 %v86
    %v166 = vunpack.c.l.b16 %v87
    %v167 = vpack.c.b16 %v132, %v131
    %v168 = vpack.c.b16 %v134, %v133
    %v169 = vpack.c.b16 %v136, %v135
    %v170 = vpack.c.b16 %v138, %v137
    %v171 = vpack.c.b16 %v140, %v139
    %v172 = vpack.c.b16 %v142, %v141
    %v173 = vpack.c.b16 %v144, %v143
    %v174 = vpack.c.b16 %v146, %v145
    %v175 = vpack.c.b16 %v148, %v147
    %v176 = vpack.c.b16 %v150, %v149
    %v177 = vpack.c.b16 %v152, %v151
    %v178 = vpack.c.b16 %v154, %v153
    %v179 = vpack.c.b16 %v156, %v155
    %v180 = vpack.c.b16 %v158, %v157
    %v181 = vpack.c.b16 %v160, %v159
    %v182 = vpack.c.b16 %v162, %v161
    %v183 = vpack.c.b16 %v164, %v163
    %v184 = vpack.c.b16 %v166, %v165
    %vm203 = vcmask 261120
    %v205 = vsel %vm203, %v51, 0
    %207 = vmatprep.subr.bf16.mxu0 0
    %208 = vmatpush1.bf16.msra.mxu0 %v167
    %209 = vmatprep.subr.bf16.mxu0 0
    %210 = vmatpush1.bf16.msra.mxu0 %v168
    %211 = vmatprep.subr.bf16.mxu0 0
    %212 = vmatpush1.bf16.msra.mxu0 %v169
    %213 = vmatprep.subr.bf16.mxu0 0
    %214 = vmatpush1.bf16.msra.mxu0 %v170
    %215 = vmatprep.subr.bf16.mxu0 0
    %216 = vmatpush1.bf16.msra.mxu0 %v171
    %217 = vmatprep.subr.bf16.mxu0 0
    %218 = vmatpush1.bf16.msra.mxu0 %v172
    %219 = vmatprep.subr.bf16.mxu0 0
    %220 = vmatpush1.bf16.msra.mxu0 %v173
    %221 = vmatprep.subr.bf16.mxu0 0
    %222 = vmatpush1.bf16.msra.mxu0 %v174
    %223 = vmatprep.subr.bf16.mxu0 0
    %224 = vmatpush1.bf16.msra.mxu0 %v175
    %225 = vmatprep.subr.bf16.mxu0 0
    %226 = vmatpush1.bf16.msra.mxu0 %v176
    %227 = vmatprep.subr.bf16.mxu0 0
    %228 = vmatpush1.bf16.msra.mxu0 %v177
    %229 = vmatprep.subr.bf16.mxu0 0
    %230 = vmatpush1.bf16.msra.mxu0 %v178
    %231 = vmatprep.subr.bf16.mxu0 0
    %232 = vmatpush1.bf16.msra.mxu0 %v179
    %233 = vmatprep.subr.bf16.mxu0 0
    %234 = vmatpush1.bf16.msra.mxu0 %v180
    %235 = vmatprep.subr.bf16.mxu0 0
    %236 = vmatpush1.bf16.msra.mxu0 %v181
    %237 = vmatprep.subr.bf16.mxu0 0
    %238 = vmatpush1.bf16.msra.mxu0 %v182
    %239 = vmatprep.mubr.bf16.mxu0 %v50
    %240 = vmatmul.mubr.bf16.gmra.mrb[0].mxu0 %v49
    %v241 = vpop.f32.mrb[0].mxu0
    %v242 = vadd.f32 %v93, %v241
    %v243 = vpop.f32.mrb[0].mxu0
    %v244 = vpop.f32.mrb[0].mxu0
    %v245 = vpop.f32.mrb[0].mxu0
    %246 = vdwg.mxu0
    %247 = vmatprep.subr.bf16.mxu0 0
    %248 = vmatpush1.bf16.msra.mxu0 %v183
    %249 = vmatprep.subr.bf16.mxu0 0
    %250 = vmatpush1.bf16.msra.mxu0 %v184
    %251 = vmatprep.subr.bf16.mxu0 0
    %252 = vmatpush1.bf16.msra.mxu0 0
    %253 = vmatprep.subr.bf16.mxu0 0
    %254 = vmatpush1.bf16.msra.mxu0 0
    %255 = vmatprep.subr.bf16.mxu0 0
    %256 = vmatpush1.bf16.msra.mxu0 0
    %257 = vmatprep.subr.bf16.mxu0 0
    %258 = vmatpush1.bf16.msra.mxu0 0
    %259 = vmatprep.subr.bf16.mxu0 0
    %260 = vmatpush1.bf16.msra.mxu0 0
    %261 = vmatprep.subr.bf16.mxu0 0
    %262 = vmatpush1.bf16.msra.mxu0 0
    %263 = vmatprep.subr.bf16.mxu0 0
    %264 = vmatpush1.bf16.msra.mxu0 0
    %265 = vmatprep.subr.bf16.mxu0 0
    %266 = vmatpush1.bf16.msra.mxu0 0
    %267 = vmatprep.subr.bf16.mxu0 0
    %268 = vmatpush1.bf16.msra.mxu0 0
    %269 = vmatprep.subr.bf16.mxu0 0
    %270 = vmatpush1.bf16.msra.mxu0 0
    %271 = vmatprep.subr.bf16.mxu0 0
    %272 = vmatpush1.bf16.msra.mxu0 0
    %273 = vmatprep.subr.bf16.mxu0 0
    %274 = vmatpush1.bf16.msra.mxu0 0
    %275 = vmatprep.subr.bf16.mxu0 0
    %276 = vmatpush1.bf16.msra.mxu0 0
    %277 = vmatprep.subr.bf16.mxu0 0
    %278 = vmatpush1.bf16.msra.mxu0 0
    %279 = vmatprep.mubr.bf16.mxu0 0
    %280 = vmatmul.mubr.bf16.gmra.mrb[0].mxu0 %v205
    %v281 = vpop.f32.mrb[0].mxu0
    %v282 = vadd.f32 %v242, %v281
    %v283 = vpop.f32.mrb[0].mxu0
    %v284 = vpop.f32.mrb[0].mxu0
    %v285 = vpop.f32.mrb[0].mxu0
    %286 = vdwg.mxu0
    %v287 = vpack.c.bf16 %v282, %v282
    %v288 = vld [vmem:[%s3] sm:$0xf]
    %v289 = vld [vmem:[%s3 + $0x4] sm:$0xf]
    %v290 = vld [vmem:[%s3 + $0x8] sm:$0xf]
    %v291 = vld [vmem:[%s3 + $0xc] sm:$0xf]
    %v292 = vld [vmem:[%s3 + $0x10] sm:$0xf]
    %v293 = vld [vmem:[%s3 + $0x14] sm:$0xf]
    %v294 = vld [vmem:[%s3 + $0x18] sm:$0xf]
    %v295 = vld [vmem:[%s3 + $0x1c] sm:$0xf]
    %v296 = vld [vmem:[%s3 + $0x20] sm:$0xf]
    %v297 = vld [vmem:[%s3 + $0x24] sm:$0xf]
    %v298 = vld [vmem:[%s3 + $0x28] sm:$0xf]
    %v299 = vld [vmem:[%s3 + $0x2c] sm:$0xf]
    %v300 = vld [vmem:[%s3 + $0x30] sm:$0xf]
    %v301 = vld [vmem:[%s3 + $0x34] sm:$0xf]
    %v302 = vld [vmem:[%s3 + $0x38] sm:$0xf]
    %v303 = vld [vmem:[%s3 + $0x3c] sm:$0xf]
    %v304 = vld [vmem:[%s4] sm:$0x1]
    %v306 = vlaneseq
    %v307 = vshrl.u32 %v306, 7
    %v308 = vsub.s32 0, %v307
    %v309 = vrot.slane %v304, %v308
    %v327 = vunpack.c.l.b16 %v288
    %v328 = vunpack.c.l.b16 %v289
    %v329 = vunpack.c.l.b16 %v290
    %v330 = vunpack.c.l.b16 %v291
    %v331 = vunpack.c.l.b16 %v292
    %v332 = vunpack.c.l.b16 %v293
    %v333 = vunpack.c.l.b16 %v294
    %v334 = vunpack.c.l.b16 %v295
    %v335 = vunpack.c.l.b16 %v296
    %v336 = vunpack.c.l.b16 %v297
    %v337 = vunpack.c.l.b16 %v298
    %v338 = vunpack.c.l.b16 %v299
    %v339 = vunpack.c.l.b16 %v300
    %v340 = vunpack.c.l.b16 %v301
    %v341 = vunpack.c.l.b16 %v302
    %v342 = vunpack.c.l.b16 %v303
    %v343 = vpack.c.b16 %v328, %v327
    %v344 = vpack.c.b16 %v330, %v329
    %v345 = vpack.c.b16 %v332, %v331
    %v346 = vpack.c.b16 %v334, %v333
    %v347 = vpack.c.b16 %v336, %v335
    %v348 = vpack.c.b16 %v338, %v337
    %v349 = vpack.c.b16 %v340, %v339
    %v350 = vpack.c.b16 %v342, %v341
    %359 = vmatprep.subr.bf16.mxu0 0
    %360 = vmatpush1.bf16.msra.mxu0 %v343
    %361 = vmatprep.subr.bf16.mxu0 0
    %362 = vmatpush1.bf16.msra.mxu0 %v344
    %363 = vmatprep.subr.bf16.mxu0 0
    %364 = vmatpush1.bf16.msra.mxu0 %v345
    %365 = vmatprep.subr.bf16.mxu0 0
    %366 = vmatpush1.bf16.msra.mxu0 %v346
    %367 = vmatprep.subr.bf16.mxu0 0
    %368 = vmatpush1.bf16.msra.mxu0 %v347
    %369 = vmatprep.subr.bf16.mxu0 0
    %370 = vmatpush1.bf16.msra.mxu0 %v348
    %371 = vmatprep.subr.bf16.mxu0 0
    %372 = vmatpush1.bf16.msra.mxu0 %v349
    %373 = vmatprep.subr.bf16.mxu0 0
    %374 = vmatpush1.bf16.msra.mxu0 %v350
    %375 = vmatprep.subr.bf16.mxu0 0
    %376 = vmatpush1.bf16.msra.mxu0 0
    %377 = vmatprep.subr.bf16.mxu0 0
    %378 = vmatpush1.bf16.msra.mxu0 0
    %379 = vmatprep.subr.bf16.mxu0 0
    %380 = vmatpush1.bf16.msra.mxu0 0
    %381 = vmatprep.subr.bf16.mxu0 0
    %382 = vmatpush1.bf16.msra.mxu0 0
    %383 = vmatprep.subr.bf16.mxu0 0
    %384 = vmatpush1.bf16.msra.mxu0 0
    %385 = vmatprep.subr.bf16.mxu0 0
    %386 = vmatpush1.bf16.msra.mxu0 0
    %387 = vmatprep.subr.bf16.mxu0 0
    %388 = vmatpush1.bf16.msra.mxu0 0
    %389 = vmatprep.subr.bf16.mxu0 0
    %390 = vmatpush1.bf16.msra.mxu0 0
    %391 = vmatprep.mubr.bf16.mxu0 0
    %392 = vmatmul.mubr.bf16.gmra.mrb[0].mxu0 %v287
    %v393 = vpop.f32.mrb[0].mxu0
    %v394 = vadd.f32 %v309, %v393
    %v395 = vpop.f32.mrb[0].mxu0
    %v396 = vpop.f32.mrb[0].mxu0
    %v397 = vpop.f32.mrb[0].mxu0
    %398 = vdwg.mxu0
    %v399 = vpack.c.bf16 %v394, %v394
    %v400 = vld [vmem:[%s5] sm:$0xf]
    %v401 = vld [vmem:[%s5 + $0x4] sm:$0xf]
    %v402 = vld [vmem:[%s5 + $0x8] sm:$0xf]
    %v403 = vld [vmem:[%s5 + $0xc] sm:$0xf]
    %v404 = vld [vmem:[%s5 + $0x10] sm:$0xf]
    %v405 = vld [vmem:[%s5 + $0x14] sm:$0xf]
    %v406 = vld [vmem:[%s5 + $0x18] sm:$0xf]
    %v407 = vld [vmem:[%s5 + $0x1c] sm:$0xf]
    %v408 = vld [vmem:[%s6] sm:$0x1]
    %v410 = vlaneseq
    %v411 = vshrl.u32 %v410, 7
    %v412 = vsub.s32 0, %v411
    %v413 = vrot.slane %v408, %v412
    %v423 = vunpack.c.l.b16 %v400
    %v424 = vunpack.c.l.b16 %v401
    %v425 = vunpack.c.l.b16 %v402
    %v426 = vunpack.c.l.b16 %v403
    %v427 = vunpack.c.l.b16 %v404
    %v428 = vunpack.c.l.b16 %v405
    %v429 = vunpack.c.l.b16 %v406
    %v430 = vunpack.c.l.b16 %v407
    %v431 = vpack.c.b16 %v424, %v423
    %v432 = vpack.c.b16 %v426, %v425
    %v433 = vpack.c.b16 %v428, %v427
    %v434 = vpack.c.b16 %v430, %v429
    %vm439 = vcmask 523264
    %v441 = vsel %vm439, %v399, 0
    %443 = vmatprep.subr.bf16.mxu0 0
    %444 = vmatpush1.bf16.msra.mxu0 %v431
    %445 = vmatprep.subr.bf16.mxu0 0
    %446 = vmatpush1.bf16.msra.mxu0 %v432
    %447 = vmatprep.subr.bf16.mxu0 0
    %448 = vmatpush1.bf16.msra.mxu0 %v433
    %449 = vmatprep.subr.bf16.mxu0 0
    %450 = vmatpush1.bf16.msra.mxu0 %v434
    %451 = vmatprep.subr.bf16.mxu0 0
    %452 = vmatpush1.bf16.msra.mxu0 0
    %453 = vmatprep.subr.bf16.mxu0 0
    %454 = vmatpush1.bf16.msra.mxu0 0
    %455 = vmatprep.subr.bf16.mxu0 0
    %456 = vmatpush1.bf16.msra.mxu0 0
    %457 = vmatprep.subr.bf16.mxu0 0
    %458 = vmatpush1.bf16.msra.mxu0 0
    %459 = vmatprep.subr.bf16.mxu0 0
    %460 = vmatpush1.bf16.msra.mxu0 0
    %461 = vmatprep.subr.bf16.mxu0 0
    %462 = vmatpush1.bf16.msra.mxu0 0
    %463 = vmatprep.subr.bf16.mxu0 0
    %464 = vmatpush1.bf16.msra.mxu0 0
    %465 = vmatprep.subr.bf16.mxu0 0
    %466 = vmatpush1.bf16.msra.mxu0 0
    %467 = vmatprep.subr.bf16.mxu0 0
    %468 = vmatpush1.bf16.msra.mxu0 0
    %469 = vmatprep.subr.bf16.mxu0 0
    %470 = vmatpush1.bf16.msra.mxu0 0
    %471 = vmatprep.subr.bf16.mxu0 0
    %472 = vmatpush1.bf16.msra.mxu0 0
    %473 = vmatprep.subr.bf16.mxu0 0
    %474 = vmatpush1.bf16.msra.mxu0 0
    %475 = vmatprep.mubr.bf16.mxu0 0
    %476 = vmatmul.mubr.bf16.gmra.mrb[0].mxu0 %v441
    %v477 = vpop.f32.mrb[0].mxu0
    %v478 = vadd.f32 %v413, %v477
    %v479 = vpop.f32.mrb[0].mxu0
    %v480 = vpop.f32.mrb[0].mxu0
    %v481 = vpop.f32.mrb[0].mxu0
    %482 = vdwg.mxu0
    %vm483 = vcmask 74752
    %v484 = vsel %vm483, %v478, -inf
    %485 = vmax.xlane.f32.xlu0 %v484
    %v486 = vpop.xlane.xlu0 %485
    %v487 = vsub.f32 %v478, %v486
    %v488 = vmul.f32 %v487, 1.442695
    %v489 = vpow.pop %v488
    %v490 = vsel %vm483, %v489, 0.0
    %491 = vadd.xlane.f32.xlu0 %v490
    %v492 = vpop.xlane.xlu0 %491
    %v493 = vlog2.pop %v492
    %v494 = vmul.f32 %v493, 0.6931472
    %v495 = vsub.f32 %v487, %v494
    %496 = vst.msk [vmem:[#allocation2] sm:$0x3] %vm483, %v495
    // Predicated region
    $region30: #{cnn_mnist_forward.7} parent=1 // pred_check
      _
    $region31: #{cnn_mnist_forward.7} parent=1 // pred_check_branch
      %498 = sbr.rel (0) target = $region33
    $region32: #{cnn_mnist_forward.7} parent=1 // pred_region
      %s500 = ssub.s32 32, 32
      %501 = vsyncadd [#allocation3], %s500
      %s503 = sshll.u32 [#allocation2], 4
      %s504 = int_to_ptr.vmem [resolvable:$true] %s503
      %506 = dma.vmem_to_hbm [thread:$0]  %s504, 32, %s7, [#allocation3]
    $region33: #{cnn_mnist_forward.7} parent=1 // pred_fallthru
      _
    // Predicated region
    $region34: #{cnn_mnist_forward.7} parent=1 // pred_check
      _
    $region35: #{cnn_mnist_forward.7} parent=1 // pred_check_branch
      %508 = sbr.rel (0) target = $region37
    $region36: #{cnn_mnist_forward.7} parent=1 // pred_region
      %509 = dma.done [#allocation3], 32
    $region37: #{cnn_mnist_forward.7} parent=1 // pred_fallthru
      _
    %510 = vsyncpa [#allocation3], 1

// kernel: cnn_mnist_forward.6
$region0: #{cnn_mnist_forward.6}
  #allocation0 [shape = 'u32[]', space=smem, size = 0x4, offset = 0x4, fixed_abs, tag = 'smem constant byte address 0x4 - core index']
  #allocation1 [shape = 'u32[144,128]{1,0:T(1,128)}', space=vmem, size = 0x12000, scoped, tag = 'internal scratch']
  %s0 = inlined_call_operand.vmem [shape: f32[2,9,288], index: 0, kind: input, shape index: {}]
  %s1 = inlined_call_operand.vmem [shape: bf16[3,288,192], index: 1, kind: input, shape index: {}]
  %s2 = inlined_call_operand.vmem [shape: f32[1,192], index: 2, kind: input, shape index: {}]
  %s3 = inlined_call_operand.vmem [shape: f32[2,3,96], index: 3, kind: output, shape index: {}]
  %s4 = sld [smem:[#allocation0]]
  $region45: #{cnn_mnist_forward.6} parent=0
    _
  %s6 = ssub.s32 1, %s4
  %s7 = scalar_select 0, %s6, %s4
  loop: start=0, step=1, limit=4
  $region2: #{cnn_mnist_forward.6} parent=0 // loop_pre_header
    _
  $region3: #{cnn_mnist_forward.6} parent=0 // loop_header
    %s9 = sphi 0, %s13
    %p10 = scmp.ge.s32.totalorder %s9, 4
    %s19 = sphi 0, %s21
    %s22 = sphi 0, %s19
    %s23 = sphi 0, %s22
    %s39 = sphi 0, %s23
    %s43 = sphi 0, %s43
    %s45 = sphi 0, %s43
    %s46 = sphi 0, %s45
    %s60 = sphi 0, %s46
    %s64 = sphi 0, %s64
    %s66 = sphi 0, %s64
    %s67 = sphi 0, %s66
    %s81 = sphi 0, %s67
    %s87 = sphi 0, %s89
    %s90 = sphi 0, %s87
    %s91 = sphi 0, %s90
    %s107 = sphi 0, %s91
  $region4: #{cnn_mnist_forward.6} parent=0 // loop_header_branch
    %12 = sbr.rel (%p10) target = $region8
  $region5: #{cnn_mnist_forward.6} parent=0 // loop_body
    %s14 = ssub.s32 %s9, 1
    %s15 = ssub.s32 %s9, 2
    %s16 = sadd.s32 %s9, 1
    %s17 = ssub.s32 %s9, %s16
    %p18 = scmp.eq.s32.totalorder %s17, 0
    %s20 = sadd.s32 %s19, 1
    %s21 = scalar_select %p18, %s19, %s20
    %p24 = pneg %p18
    %p25 = scmp.eq.s32.totalorder %s9, 1
    %p26 = por %p24, %p25
    %p27 = scmp.ne.s32.totalorder %s19, %s22
    %p28 = scmp.eq.s32.totalorder %s9, 0
    %p29 = por %p27, %p28
    %p30 = scmp.ne.s32.totalorder %s19, %s22
    %p31 = scmp.eq.s32.totalorder %s14, 1
    %p32 = por %p30, %p31
    %p33 = scmp.ne.s32.totalorder %s22, %s23
    %p34 = scmp.eq.s32.totalorder %s14, 0
    %p35 = por %p33, %p34
    %p36 = scmp.ne.s32.totalorder %s22, %s23
    %p37 = scmp.eq.s32.totalorder %s15, 1
    %p38 = por %p36, %p37
    %p40 = scmp.ne.s32.totalorder %s23, %s39
    %p41 = scmp.eq.s32.totalorder %s15, 0
    %p42 = por %p40, %p41
    %s44 = sadd.s32 %s43, 1
    %p47 = scmp.eq.s32.totalorder %s9, 1
    %p48 = scmp.ne.s32.totalorder %s43, %s45
    %p49 = scmp.eq.s32.totalorder %s9, 0
    %p50 = por %p48, %p49
    %p51 = scmp.ne.s32.totalorder %s43, %s45
    %p52 = scmp.eq.s32.totalorder %s14, 1
    %p53 = por %p51, %p52
    %p54 = scmp.ne.s32.totalorder %s45, %s46
    %p55 = scmp.eq.s32.totalorder %s14, 0
    %p56 = por %p54, %p55
    %p57 = scmp.ne.s32.totalorder %s45, %s46
    %p58 = scmp.eq.s32.totalorder %s15, 1
    %p59 = por %p57, %p58
    %p61 = scmp.ne.s32.totalorder %s46, %s60
    %p62 = scmp.eq.s32.totalorder %s15, 0
    %p63 = por %p61, %p62
    %s65 = sadd.s32 %s64, 1
    %p68 = scmp.eq.s32.totalorder %s9, 1
    %p69 = scmp.ne.s32.totalorder %s64, %s66
    %p70 = scmp.eq.s32.totalorder %s9, 0
    %p71 = por %p69, %p70
    %p72 = scmp.ne.s32.totalorder %s64, %s66
    %p73 = scmp.eq.s32.totalorder %s14, 1
    %p74 = por %p72, %p73
    %p75 = scmp.ne.s32.totalorder %s66, %s67
    %p76 = scmp.eq.s32.totalorder %s14, 0
    %p77 = por %p75, %p76
    %p78 = scmp.ne.s32.totalorder %s66, %s67
    %p79 = scmp.eq.s32.totalorder %s15, 1
    %p80 = por %p78, %p79
    %p82 = scmp.ne.s32.totalorder %s67, %s81
    %p83 = scmp.eq.s32.totalorder %s15, 0
    %p84 = por %p82, %p83
    %s85 = ssub.s32 %s9, %s16
    %p86 = scmp.eq.s32.totalorder %s85, 0
    %s88 = sadd.s32 %s87, 1
    %s89 = scalar_select %p86, %s87, %s88
    %p92 = pneg %p86
    %p93 = scmp.eq.s32.totalorder %s9, 1
    %p94 = por %p92, %p93
    %p95 = scmp.ne.s32.totalorder %s87, %s90
    %p96 = scmp.eq.s32.totalorder %s9, 0
    %p97 = por %p95, %p96
    %p98 = scmp.ne.s32.totalorder %s87, %s90
    %p99 = scmp.eq.s32.totalorder %s14, 1
    %p100 = por %p98, %p99
    %p101 = scmp.ne.s32.totalorder %s90, %s91
    %p102 = scmp.eq.s32.totalorder %s14, 0
    %p103 = por %p101, %p102
    %p104 = scmp.ne.s32.totalorder %s90, %s91
    %p105 = scmp.eq.s32.totalorder %s15, 1
    %p106 = por %p104, %p105
    %p108 = scmp.ne.s32.totalorder %s91, %s107
    %p109 = scmp.eq.s32.totalorder %s15, 0
    %p110 = por %p108, %p109
    %p111 = scmp.le.s32.totalorder 1, %s9
    %p112 = scmp.lt.s32.totalorder %s9, 3
    %p113 = pnand %p111, %p112
    %p114 = pneg %p113
    // Predicated region
    $region9: #{cnn_mnist_forward.6} parent=5 // pred_check
      _
    $region10: #{cnn_mnist_forward.6} parent=5 // pred_check_branch
      %116 = sbr.rel (%p113) target = $region12
    $region11: #{cnn_mnist_forward.6} parent=5 // pred_region
      %s117 = ssub.s32 %s9, 1
      // Predicated region
      $region13: #{cnn_mnist_forward.6} parent=11 // pred_check
        %p118 = pneg %p56
      $region14: #{cnn_mnist_forward.6} parent=11 // pred_check_branch
        %120 = sbr.rel (%p118) target = $region16
      $region15: #{cnn_mnist_forward.6} parent=11 // pred_region
        _
      $region16: #{cnn_mnist_forward.6} parent=11 // pred_fallthru
        _
      // Predicated region
      $region17: #{cnn_mnist_forward.6} parent=11 // pred_check
        %p121 = pneg %p77
      $region18: #{cnn_mnist_forward.6} parent=11 // pred_check_branch
        %123 = sbr.rel (%p121) target = $region20
      $region19: #{cnn_mnist_forward.6} parent=11 // pred_region
        _
      $region20: #{cnn_mnist_forward.6} parent=11 // pred_fallthru
        _
    $region12: #{cnn_mnist_forward.6} parent=5 // pred_fallthru
      _
    %p124 = scmp.lt.s32.totalorder %s9, 2
    // Predicated region
    $region21: #{cnn_mnist_forward.6} parent=5 // pred_check
      %p125 = pneg %p124
    $region22: #{cnn_mnist_forward.6} parent=5 // pred_check_branch
      %127 = sbr.rel (%p125) target = $region24
    $region23: #{cnn_mnist_forward.6} parent=5 // pred_region
      // Predicated region
      $region25: #{cnn_mnist_forward.6} parent=23 // pred_check
        %p128 = pneg %p29
      $region26: #{cnn_mnist_forward.6} parent=23 // pred_check_branch
        %130 = sbr.rel (%p128) target = $region28
      $region27: #{cnn_mnist_forward.6} parent=23 // pred_region
        %p131 = scmp.lt.s32.totalorder %s9, 1
        %s132 = scalar_select %p131, %s9, 1
        %s133 = smul.addr %s132, 6
        %s134 = smul.addr %s133, 8
        %s135 = scalar_lea.vmem %s0, %s134
      $region28: #{cnn_mnist_forward.6} parent=23 // pred_fallthru
        _
    $region24: #{cnn_mnist_forward.6} parent=5 // pred_fallthru
      _
    %p136 = scmp.le.s32.totalorder 1, %s9
    %p137 = scmp.lt.s32.totalorder %s9, 3
    %p138 = pnand %p136, %p137
    %p139 = pneg %p138
    // Predicated region
    $region29: #{cnn_mnist_forward.6} parent=5 // pred_check
      _
    $region30: #{cnn_mnist_forward.6} parent=5 // pred_check_branch
      %141 = sbr.rel (%p138) target = $region32
    $region31: #{cnn_mnist_forward.6} parent=5 // pred_region
      %s142 = ssub.s32 %s9, 1
      %p143 = scmp.lt.s32.totalorder %s14, 1
      %s144 = scalar_select %p143, %s14, 1
      %s145 = smul.addr %s144, 6
      %s146 = smul.addr %s145, 8
      %s147 = scalar_lea.vmem %s0, %s146
      %p148 = pneg %p35
      %p149 = pneg %p32
      %p150 = pneg %p56
      %p151 = pneg %p53
      %p152 = pneg %p77
      %p153 = pneg %p74
      %p154 = pneg %p103
      %p155 = pneg %p100
      %p156 = scmp.lt.s32.totalorder %s14, 1
      %s157 = scalar_select %p156, %s14, 1
      %s158 = smul.addr %s157, 4
      %s159 = scalar_lea.vmem %s3, %s158
      %p160 = scmp.lt.s32.totalorder %s14, 1
      %s161 = scalar_select %p160, %s14, 1
      %s162 = smul.addr %s161, 6
      %s163 = smul.addr %s162, 8
      %s164 = scalar_lea.vmem %s0, %s163
      %p165 = scmp.lt.s32.totalorder %s14, 1
      %s166 = scalar_select %p165, %s14, 1
      %s167 = smul.addr %s166, 4
      %s168 = scalar_lea.vmem %s3, %s167
      %v170 = vld [vmem:[%s164] sm:$0xff]
      %v171 = vld [vmem:[%s164 + $0x8] sm:$0xff]
      %v172 = vld [vmem:[%s164 + $0x10] sm:$0xff]
      %v173 = vld [vmem:[%s164 + $0x18] sm:$0x1]
      %v174 = vld [vmem:[%s164 + $0x20] sm:$0x1]
      %v175 = vld [vmem:[%s164 + $0x28] sm:$0x1]
      %v176 = vpack.c.bf16 %v170, %v170
      %v177 = vpack.c.bf16 %v171, %v171
      %v178 = vpack.c.bf16 %v172, %v172
      %v179 = vld [vmem:[%s1] sm:$0xff]
      %v180 = vld [vmem:[%s1 + $0x8] sm:$0xff]
      %v181 = vld [vmem:[%s1 + $0x10] sm:$0xff]
      %v182 = vld [vmem:[%s1 + $0x18] sm:$0xff]
      %v183 = vld [vmem:[%s1 + $0x20] sm:$0xff]
      %v184 = vld [vmem:[%s1 + $0x28] sm:$0xff]
      %v185 = vld [vmem:[%s1 + $0x30] sm:$0xff]
      %v186 = vld [vmem:[%s1 + $0x38] sm:$0xff]
      %v187 = vld [vmem:[%s1 + $0x40] sm:$0xff]
      %v188 = vld [vmem:[%s1 + $0x48] sm:$0xff]
      %v189 = vld [vmem:[%s1 + $0x50] sm:$0xff]
      %v190 = vld [vmem:[%s1 + $0x58] sm:$0xff]
      %v191 = vld [vmem:[%s1 + $0x60] sm:$0xff]
      %v192 = vld [vmem:[%s1 + $0x68] sm:$0xff]
      %v193 = vld [vmem:[%s1 + $0x70] sm:$0xff]
      %v194 = vld [vmem:[%s1 + $0x78] sm:$0xff]
      %v195 = vld [vmem:[%s1 + $0x80] sm:$0xff]
      %v196 = vld [vmem:[%s1 + $0x88] sm:$0xff]
      %v197 = vld [vmem:[%s1 + $0x90] sm:$0xff]
      %v198 = vld [vmem:[%s1 + $0x98] sm:$0xff]
      %v199 = vld [vmem:[%s1 + $0xa0] sm:$0xff]
      %v200 = vld [vmem:[%s1 + $0xa8] sm:$0xff]
      %v201 = vld [vmem:[%s1 + $0xb0] sm:$0xff]
      %v202 = vld [vmem:[%s1 + $0xb8] sm:$0xff]
      %v203 = vld [vmem:[%s1 + $0xc0] sm:$0xff]
      %v204 = vld [vmem:[%s1 + $0xc8] sm:$0xff]
      %v205 = vld [vmem:[%s1 + $0xd0] sm:$0xff]
      %v206 = vld [vmem:[%s1 + $0xd8] sm:$0xff]
      %v207 = vld [vmem:[%s1 + $0xe0] sm:$0xff]
      %v208 = vld [vmem:[%s1 + $0xe8] sm:$0xff]
      %v209 = vld [vmem:[%s1 + $0xf0] sm:$0xff]
      %v210 = vld [vmem:[%s1 + $0xf8] sm:$0xff]
      %v211 = vld [vmem:[%s1 + $0x100] sm:$0xff]
      %v212 = vld [vmem:[%s1 + $0x108] sm:$0xff]
      %v213 = vld [vmem:[%s1 + $0x110] sm:$0xff]
      %v214 = vld [vmem:[%s1 + $0x118] sm:$0xff]
      %s215 = scalar_lea.vmem %s1, 288
      %v216 = vld [vmem:[%s215] sm:$0xff]
      %v217 = vld [vmem:[%s215 + $0x8] sm:$0xff]
      %v218 = vld [vmem:[%s215 + $0x10] sm:$0xff]
      %v219 = vld [vmem:[%s215 + $0x18] sm:$0xff]
      %v220 = vld [vmem:[%s215 + $0x20] sm:$0xff]
      %v221 = vld [vmem:[%s215 + $0x28] sm:$0xff]
      %v222 = vld [vmem:[%s215 + $0x30] sm:$0xff]
      %v223 = vld [vmem:[%s215 + $0x38] sm:$0xff]
      %v224 = vld [vmem:[%s215 + $0x40] sm:$0xff]
      %v225 = vld [vmem:[%s215 + $0x48] sm:$0xff]
      %v226 = vld [vmem:[%s215 + $0x50] sm:$0xff]
      %v227 = vld [vmem:[%s215 + $0x58] sm:$0xff]
      %v228 = vld [vmem:[%s215 + $0x60] sm:$0xff]
      %v229 = vld [vmem:[%s215 + $0x68] sm:$0xff]
      %v230 = vld [vmem:[%s215 + $0x70] sm:$0xff]
      %v231 = vld [vmem:[%s215 + $0x78] sm:$0xff]
      %v232 = vld [vmem:[%s215 + $0x80] sm:$0xff]
      %v233 = vld [vmem:[%s215 + $0x88] sm:$0xff]
      %v234 = vld [vmem:[%s215 + $0x90] sm:$0xff]
      %v235 = vld [vmem:[%s215 + $0x98] sm:$0xff]
      %v236 = vld [vmem:[%s215 + $0xa0] sm:$0xff]
      %v237 = vld [vmem:[%s215 + $0xa8] sm:$0xff]
      %v238 = vld [vmem:[%s215 + $0xb0] sm:$0xff]
      %v239 = vld [vmem:[%s215 + $0xb8] sm:$0xff]
      %v240 = vld [vmem:[%s215 + $0xc0] sm:$0xff]
      %v241 = vld [vmem:[%s215 + $0xc8] sm:$0xff]
      %v242 = vld [vmem:[%s215 + $0xd0] sm:$0xff]
      %v243 = vld [vmem:[%s215 + $0xd8] sm:$0xff]
      %v244 = vld [vmem:[%s215 + $0xe0] sm:$0xff]
      %v245 = vld [vmem:[%s215 + $0xe8] sm:$0xff]
      %v246 = vld [vmem:[%s215 + $0xf0] sm:$0xff]
      %v247 = vld [vmem:[%s215 + $0xf8] sm:$0xff]
      %v248 = vld [vmem:[%s215 + $0x100] sm:$0xff]
      %v249 = vld [vmem:[%s215 + $0x108] sm:$0xff]
      %v250 = vld [vmem:[%s215 + $0x110] sm:$0xff]
      %v251 = vld [vmem:[%s215 + $0x118] sm:$0xff]
      %v253 = vshrl.u32 %v176, 16
      %v255 = vshll.u32 %v176, 16
      %v257 = vrot.slane %v255, 1
      %v258 = vor.u32 %v253, %v257
      %v260 = vshrl.u32 %v177, 16
      %v262 = vshll.u32 %v177, 16
      %v264 = vrot.slane %v262, 1
      %v265 = vor.u32 %v260, %v264
      %v267 = vshrl.u32 %v178, 16
      %v269 = vshll.u32 %v178, 16
      %v271 = vrot.slane %v269, 1
      %v272 = vor.u32 %v267, %v271
      %v311 = vunpack.c.l.b16 %v216
      %v312 = vunpack.c.h.b16 %v216
      %v313 = vunpack.c.l.b16 %v217
      %v314 = vunpack.c.h.b16 %v217
      %v315 = vunpack.c.l.b16 %v218
      %v316 = vunpack.c.h.b16 %v218
      %v317 = vunpack.c.l.b16 %v219
      %v318 = vunpack.c.h.b16 %v219
      %v319 = vunpack.c.l.b16 %v220
      %v320 = vunpack.c.h.b16 %v220
      %v321 = vunpack.c.l.b16 %v221
      %v322 = vunpack.c.h.b16 %v221
      %v323 = vunpack.c.l.b16 %v222
      %v324 = vunpack.c.h.b16 %v222
      %v325 = vunpack.c.l.b16 %v223
      %v326 = vunpack.c.h.b16 %v223
      %v327 = vunpack.c.l.b16 %v224
      %v328 = vunpack.c.h.b16 %v224
      %v329 = vunpack.c.l.b16 %v225
      %v330 = vunpack.c.h.b16 %v225
      %v331 = vunpack.c.l.b16 %v226
      %v332 = vunpack.c.h.b16 %v226
      %v333 = vunpack.c.l.b16 %v227
      %v334 = vunpack.c.h.b16 %v227
      %v335 = vunpack.c.l.b16 %v228
      %v336 = vunpack.c.h.b16 %v228
      %v337 = vunpack.c.l.b16 %v229
      %v338 = vunpack.c.h.b16 %v229
      %v339 = vunpack.c.l.b16 %v230
      %v340 = vunpack.c.h.b16 %v230
      %v341 = vunpack.c.l.b16 %v231
      %v342 = vunpack.c.h.b16 %v231
      %v343 = vunpack.c.l.b16 %v232
      %v344 = vunpack.c.h.b16 %v232
      %v345 = vunpack.c.l.b16 %v233
      %v346 = vunpack.c.h.b16 %v233
      %v347 = vunpack.c.l.b16 %v234
      %v348 = vunpack.c.h.b16 %v234
      %v349 = vunpack.c.l.b16 %v235
      %v350 = vunpack.c.h.b16 %v235
      %v351 = vunpack.c.l.b16 %v236
      %v352 = vunpack.c.h.b16 %v236
      %v353 = vunpack.c.l.b16 %v237
      %v354 = vunpack.c.h.b16 %v237
      %v355 = vunpack.c.l.b16 %v238
      %v356 = vunpack.c.h.b16 %v238
      %v357 = vunpack.c.l.b16 %v239
      %v358 = vunpack.c.h.b16 %v239
      %v359 = vunpack.c.l.b16 %v240
      %v360 = vunpack.c.h.b16 %v240
      %v361 = vunpack.c.l.b16 %v241
      %v362 = vunpack.c.h.b16 %v241
      %v363 = vunpack.c.l.b16 %v242
      %v364 = vunpack.c.h.b16 %v242
      %v365 = vunpack.c.l.b16 %v243
      %v366 = vunpack.c.h.b16 %v243
      %v367 = vunpack.c.l.b16 %v244
      %v368 = vunpack.c.h.b16 %v244
      %v369 = vunpack.c.l.b16 %v245
      %v370 = vunpack.c.h.b16 %v245
      %v371 = vunpack.c.l.b16 %v246
      %v372 = vunpack.c.h.b16 %v246
      %v373 = vunpack.c.l.b16 %v247
      %v374 = vunpack.c.h.b16 %v247
      %v375 = vunpack.c.l.b16 %v248
      %v376 = vunpack.c.h.b16 %v248
      %v377 = vunpack.c.l.b16 %v249
      %v378 = vunpack.c.h.b16 %v249
      %v379 = vunpack.c.l.b16 %v250
      %v380 = vunpack.c.h.b16 %v250
      %v381 = vunpack.c.l.b16 %v251
      %v382 = vunpack.c.h.b16 %v251
      %v383 = vpack.c.b16 %v313, %v311
      %v384 = vpack.c.b16 %v314, %v312
      %v385 = vpack.c.b16 %v317, %v315
      %v386 = vpack.c.b16 %v318, %v316
      %v387 = vpack.c.b16 %v321, %v319
      %v388 = vpack.c.b16 %v322, %v320
      %v389 = vpack.c.b16 %v325, %v323
      %v390 = vpack.c.b16 %v326, %v324
      %v391 = vpack.c.b16 %v329, %v327
      %v392 = vpack.c.b16 %v330, %v328
      %v393 = vpack.c.b16 %v333, %v331
      %v394 = vpack.c.b16 %v334, %v332
      %v395 = vpack.c.b16 %v337, %v335
      %v396 = vpack.c.b16 %v338, %v336
      %v397 = vpack.c.b16 %v341, %v339
      %v398 = vpack.c.b16 %v342, %v340
      %v399 = vpack.c.b16 %v345, %v343
      %v400 = vpack.c.b16 %v346, %v344
      %v401 = vpack.c.b16 %v349, %v347
      %v402 = vpack.c.b16 %v350, %v348
      %v403 = vpack.c.b16 %v353, %v351
      %v404 = vpack.c.b16 %v354, %v352
      %v405 = vpack.c.b16 %v357, %v355
      %v406 = vpack.c.b16 %v358, %v356
      %v407 = vpack.c.b16 %v361, %v359
      %v408 = vpack.c.b16 %v362, %v360
      %v409 = vpack.c.b16 %v365, %v363
      %v410 = vpack.c.b16 %v366, %v364
      %v411 = vpack.c.b16 %v369, %v367
      %v412 = vpack.c.b16 %v370, %v368
      %v413 = vpack.c.b16 %v373, %v371
      %v414 = vpack.c.b16 %v374, %v372
      %v415 = vpack.c.b16 %v377, %v375
      %v416 = vpack.c.b16 %v378, %v376
      %v417 = vpack.c.b16 %v381, %v379
      %v418 = vpack.c.b16 %v382, %v380
      %vm455 = vcmask 261120
      %v457 = vsel %vm455, %v272, 0
      %459 = vmatprep.subr.bf16.mxu0 %v384
      %460 = vmatpush1.bf16.msra.mxu0 %v383
      %461 = vmatprep.subr.bf16.mxu0 %v386
      %462 = vmatpush1.bf16.msra.mxu0 %v385
      %463 = vmatprep.subr.bf16.mxu0 %v388
      %464 = vmatpush1.bf16.msra.mxu0 %v387
      %465 = vmatprep.subr.bf16.mxu0 %v390
      %466 = vmatpush1.bf16.msra.mxu0 %v389
      %467 = vmatprep.subr.bf16.mxu0 %v392
      %468 = vmatpush1.bf16.msra.mxu0 %v391
      %469 = vmatprep.subr.bf16.mxu0 %v394
      %470 = vmatpush1.bf16.msra.mxu0 %v393
      %471 = vmatprep.subr.bf16.mxu0 %v396
      %472 = vmatpush1.bf16.msra.mxu0 %v395
      %473 = vmatprep.subr.bf16.mxu0 %v398
      %474 = vmatpush1.bf16.msra.mxu0 %v397
      %475 = vmatprep.subr.bf16.mxu0 %v400
      %476 = vmatpush1.bf16.msra.mxu0 %v399
      %477 = vmatprep.subr.bf16.mxu0 %v402
      %478 = vmatpush1.bf16.msra.mxu0 %v401
      %479 = vmatprep.subr.bf16.mxu0 %v404
      %480 = vmatpush1.bf16.msra.mxu0 %v403
      %481 = vmatprep.subr.bf16.mxu0 %v406
      %482 = vmatpush1.bf16.msra.mxu0 %v405
      %483 = vmatprep.subr.bf16.mxu0 %v408
      %484 = vmatpush1.bf16.msra.mxu0 %v407
      %485 = vmatprep.subr.bf16.mxu0 %v410
      %486 = vmatpush1.bf16.msra.mxu0 %v409
      %487 = vmatprep.subr.bf16.mxu0 %v412
      %488 = vmatpush1.bf16.msra.mxu0 %v411
      %489 = vmatprep.subr.bf16.mxu0 %v414
      %490 = vmatpush1.bf16.msra.mxu0 %v413
      %491 = vmatprep.mubr.bf16.mxu0 %v265
      %492 = vmatmul.mubr.bf16.gmra.mrb[0].mxu0 %v258
      %v493 = vpop.f32.mrb[0].mxu0
      %v494 = vadd.f32 0.0, %v493
      %v495 = vpop.f32.mrb[0].mxu0
      %v496 = vadd.f32 0.0, %v495
      %v497 = vpop.f32.mrb[0].mxu0
      %v498 = vpop.f32.mrb[0].mxu0
      %499 = vdwg.mxu0
      %500 = vmatprep.subr.bf16.mxu0 %v416
      %501 = vmatpush1.bf16.msra.mxu0 %v415
      %502 = vmatprep.subr.bf16.mxu0 %v418
      %503 = vmatpush1.bf16.msra.mxu0 %v417
      %504 = vmatprep.subr.bf16.mxu0 0
      %505 = vmatpush1.bf16.msra.mxu0 0
      %506 = vmatprep.subr.bf16.mxu0 0
      %507 = vmatpush1.bf16.msra.mxu0 0
      %508 = vmatprep.subr.bf16.mxu0 0
      %509 = vmatpush1.bf16.msra.mxu0 0
      %510 = vmatprep.subr.bf16.mxu0 0
      %511 = vmatpush1.bf16.msra.mxu0 0
      %512 = vmatprep.subr.bf16.mxu0 0
      %513 = vmatpush1.bf16.msra.mxu0 0
      %514 = vmatprep.subr.bf16.mxu0 0
      %515 = vmatpush1.bf16.msra.mxu0 0
      %516 = vmatprep.subr.bf16.mxu0 0
      %517 = vmatpush1.bf16.msra.mxu0 0
      %518 = vmatprep.subr.bf16.mxu0 0
      %519 = vmatpush1.bf16.msra.mxu0 0
      %520 = vmatprep.subr.bf16.mxu0 0
      %521 = vmatpush1.bf16.msra.mxu0 0
      %522 = vmatprep.subr.bf16.mxu0 0
      %523 = vmatpush1.bf16.msra.mxu0 0
      %524 = vmatprep.subr.bf16.mxu0 0
      %525 = vmatpush1.bf16.msra.mxu0 0
      %526 = vmatprep.subr.bf16.mxu0 0
      %527 = vmatpush1.bf16.msra.mxu0 0
      %528 = vmatprep.subr.bf16.mxu0 0
      %529 = vmatpush1.bf16.msra.mxu0 0
      %530 = vmatprep.subr.bf16.mxu0 0
      %531 = vmatpush1.bf16.msra.mxu0 0
      %532 = vmatprep.mubr.bf16.mxu0 0
      %533 = vmatmul.mubr.bf16.gmra.mrb[0].mxu0 %v457
      %v534 = vpop.f32.mrb[0].mxu0
      %v535 = vadd.f32 %v494, %v534
      %v536 = vpop.f32.mrb[0].mxu0
      %v537 = vadd.f32 %v496, %v536
      %v538 = vpop.f32.mrb[0].mxu0
      %v539 = vpop.f32.mrb[0].mxu0
      %540 = vdwg.mxu0
      %v577 = vunpack.c.l.b16 %v179
      %v578 = vunpack.c.h.b16 %v179
      %v579 = vunpack.c.l.b16 %v180
      %v580 = vunpack.c.h.b16 %v180
      %v581 = vunpack.c.l.b16 %v181
      %v582 = vunpack.c.h.b16 %v181
      %v583 = vunpack.c.l.b16 %v182
      %v584 = vunpack.c.h.b16 %v182
      %v585 = vunpack.c.l.b16 %v183
      %v586 = vunpack.c.h.b16 %v183
      %v587 = vunpack.c.l.b16 %v184
      %v588 = vunpack.c.h.b16 %v184
      %v589 = vunpack.c.l.b16 %v185
      %v590 = vunpack.c.h.b16 %v185
      %v591 = vunpack.c.l.b16 %v186
      %v592 = vunpack.c.h.b16 %v186
      %v593 = vunpack.c.l.b16 %v187
      %v594 = vunpack.c.h.b16 %v187
      %v595 = vunpack.c.l.b16 %v188
      %v596 = vunpack.c.h.b16 %v188
      %v597 = vunpack.c.l.b16 %v189
      %v598 = vunpack.c.h.b16 %v189
      %v599 = vunpack.c.l.b16 %v190
      %v600 = vunpack.c.h.b16 %v190
      %v601 = vunpack.c.l.b16 %v191
      %v602 = vunpack.c.h.b16 %v191
      %v603 = vunpack.c.l.b16 %v192
      %v604 = vunpack.c.h.b16 %v192
      %v605 = vunpack.c.l.b16 %v193
      %v606 = vunpack.c.h.b16 %v193
      %v607 = vunpack.c.l.b16 %v194
      %v608 = vunpack.c.h.b16 %v194
      %v609 = vunpack.c.l.b16 %v195
      %v610 = vunpack.c.h.b16 %v195
      %v611 = vunpack.c.l.b16 %v196
      %v612 = vunpack.c.h.b16 %v196
      %v613 = vunpack.c.l.b16 %v197
      %v614 = vunpack.c.h.b16 %v197
      %v615 = vunpack.c.l.b16 %v198
      %v616 = vunpack.c.h.b16 %v198
      %v617 = vunpack.c.l.b16 %v199
      %v618 = vunpack.c.h.b16 %v199
      %v619 = vunpack.c.l.b16 %v200
      %v620 = vunpack.c.h.b16 %v200
      %v621 = vunpack.c.l.b16 %v201
      %v622 = vunpack.c.h.b16 %v201
      %v623 = vunpack.c.l.b16 %v202
      %v624 = vunpack.c.h.b16 %v202
      %v625 = vunpack.c.l.b16 %v203
      %v626 = vunpack.c.h.b16 %v203
      %v627 = vunpack.c.l.b16 %v204
      %v628 = vunpack.c.h.b16 %v204
      %v629 = vunpack.c.l.b16 %v205
      %v630 = vunpack.c.h.b16 %v205
      %v631 = vunpack.c.l.b16 %v206
      %v632 = vunpack.c.h.b16 %v206
      %v633 = vunpack.c.l.b16 %v207
      %v634 = vunpack.c.h.b16 %v207
      %v635 = vunpack.c.l.b16 %v208
      %v636 = vunpack.c.h.b16 %v208
      %v637 = vunpack.c.l.b16 %v209
      %v638 = vunpack.c.h.b16 %v209
      %v639 = vunpack.c.l.b16 %v210
      %v640 = vunpack.c.h.b16 %v210
      %v641 = vunpack.c.l.b16 %v211
      %v642 = vunpack.c.h.b16 %v211
      %v643 = vunpack.c.l.b16 %v212
      %v644 = vunpack.c.h.b16 %v212
      %v645 = vunpack.c.l.b16 %v213
      %v646 = vunpack.c.h.b16 %v213
      %v647 = vunpack.c.l.b16 %v214
      %v648 = vunpack.c.h.b16 %v214
      %v649 = vpack.c.b16 %v579, %v577
      %v650 = vpack.c.b16 %v580, %v578
      %v651 = vpack.c.b16 %v583, %v581
      %v652 = vpack.c.b16 %v584, %v582
      %v653 = vpack.c.b16 %v587, %v585
      %v654 = vpack.c.b16 %v588, %v586
      %v655 = vpack.c.b16 %v591, %v589
      %v656 = vpack.c.b16 %v592, %v590
      %v657 = vpack.c.b16 %v595, %v593
      %v658 = vpack.c.b16 %v596, %v594
      %v659 = vpack.c.b16 %v599, %v597
      %v660 = vpack.c.b16 %v600, %v598
      %v661 = vpack.c.b16 %v603, %v601
      %v662 = vpack.c.b16 %v604, %v602
      %v663 = vpack.c.b16 %v607, %v605
      %v664 = vpack.c.b16 %v608, %v606
      %v665 = vpack.c.b16 %v611, %v609
      %v666 = vpack.c.b16 %v612, %v610
      %v667 = vpack.c.b16 %v615, %v613
      %v668 = vpack.c.b16 %v616, %v614
      %v669 = vpack.c.b16 %v619, %v617
      %v670 = vpack.c.b16 %v620, %v618
      %v671 = vpack.c.b16 %v623, %v621
      %v672 = vpack.c.b16 %v624, %v622
      %v673 = vpack.c.b16 %v627, %v625
      %v674 = vpack.c.b16 %v628, %v626
      %v675 = vpack.c.b16 %v631, %v629
      %v676 = vpack.c.b16 %v632, %v630
      %v677 = vpack.c.b16 %v635, %v633
      %v678 = vpack.c.b16 %v636, %v634
      %v679 = vpack.c.b16 %v639, %v637
      %v680 = vpack.c.b16 %v640, %v638
      %v681 = vpack.c.b16 %v643, %v641
      %v682 = vpack.c.b16 %v644, %v642
      %v683 = vpack.c.b16 %v647, %v645
      %v684 = vpack.c.b16 %v648, %v646
      %v721 = vsel %vm455, %v178, 0
      %723 = vmatprep.subr.bf16.mxu0 %v650
      %724 = vmatpush1.bf16.msra.mxu0 %v649
      %725 = vmatprep.subr.bf16.mxu0 %v652
      %726 = vmatpush1.bf16.msra.mxu0 %v651
      %727 = vmatprep.subr.bf16.mxu0 %v654
      %728 = vmatpush1.bf16.msra.mxu0 %v653
      %729 = vmatprep.subr.bf16.mxu0 %v656
      %730 = vmatpush1.bf16.msra.mxu0 %v655
      %731 = vmatprep.subr.bf16.mxu0 %v658
      %732 = vmatpush1.bf16.msra.mxu0 %v657
      %733 = vmatprep.subr.bf16.mxu0 %v660
      %734 = vmatpush1.bf16.msra.mxu0 %v659
      %735 = vmatprep.subr.bf16.mxu0 %v662
      %736 = vmatpush1.bf16.msra.mxu0 %v661
      %737 = vmatprep.subr.bf16.mxu0 %v664
      %738 = vmatpush1.bf16.msra.mxu0 %v663
      %739 = vmatprep.subr.bf16.mxu0 %v666
      %740 = vmatpush1.bf16.msra.mxu0 %v665
      %741 = vmatprep.subr.bf16.mxu0 %v668
      %742 = vmatpush1.bf16.msra.mxu0 %v667
      %743 = vmatprep.subr.bf16.mxu0 %v670
      %744 = vmatpush1.bf16.msra.mxu0 %v669
      %745 = vmatprep.subr.bf16.mxu0 %v672
      %746 = vmatpush1.bf16.msra.mxu0 %v671
      %747 = vmatprep.subr.bf16.mxu0 %v674
      %748 = vmatpush1.bf16.msra.mxu0 %v673
      %749 = vmatprep.subr.bf16.mxu0 %v676
      %750 = vmatpush1.bf16.msra.mxu0 %v675
      %751 = vmatprep.subr.bf16.mxu0 %v678
      %752 = vmatpush1.bf16.msra.mxu0 %v677
      %753 = vmatprep.subr.bf16.mxu0 %v680
      %754 = vmatpush1.bf16.msra.mxu0 %v679
      %755 = vmatprep.mubr.bf16.mxu0 %v177
      %756 = vmatmul.mubr.bf16.gmra.mrb[0].mxu0 %v176
      %v757 = vpop.f32.mrb[0].mxu0
      %v758 = vadd.f32 %v535, %v757
      %v759 = vpop.f32.mrb[0].mxu0
      %v760 = vadd.f32 %v537, %v759
      %v761 = vpop.f32.mrb[0].mxu0
      %v762 = vpop.f32.mrb[0].mxu0
      %763 = vdwg.mxu0
      %764 = vmatprep.subr.bf16.mxu0 %v682
      %765 = vmatpush1.bf16.msra.mxu0 %v681
      %766 = vmatprep.subr.bf16.mxu0 %v684
      %767 = vmatpush1.bf16.msra.mxu0 %v683
      %768 = vmatprep.subr.bf16.mxu0 0
      %769 = vmatpush1.bf16.msra.mxu0 0
      %770 = vmatprep.subr.bf16.mxu0 0
      %771 = vmatpush1.bf16.msra.mxu0 0
      %772 = vmatprep.subr.bf16.mxu0 0
      %773 = vmatpush1.bf16.msra.mxu0 0
      %774 = vmatprep.subr.bf16.mxu0 0
      %775 = vmatpush1.bf16.msra.mxu0 0
      %776 = vmatprep.subr.bf16.mxu0 0
      %777 = vmatpush1.bf16.msra.mxu0 0
      %778 = vmatprep.subr.bf16.mxu0 0
      %779 = vmatpush1.bf16.msra.mxu0 0
      %780 = vmatprep.subr.bf16.mxu0 0
      %781 = vmatpush1.bf16.msra.mxu0 0
      %782 = vmatprep.subr.bf16.mxu0 0
      %783 = vmatpush1.bf16.msra.mxu0 0
      %784 = vmatprep.subr.bf16.mxu0 0
      %785 = vmatpush1.bf16.msra.mxu0 0
      %786 = vmatprep.subr.bf16.mxu0 0
      %787 = vmatpush1.bf16.msra.mxu0 0
      %788 = vmatprep.subr.bf16.mxu0 0
      %789 = vmatpush1.bf16.msra.mxu0 0
      %790 = vmatprep.subr.bf16.mxu0 0
      %791 = vmatpush1.bf16.msra.mxu0 0
      %792 = vmatprep.subr.bf16.mxu0 0
      %793 = vmatpush1.bf16.msra.mxu0 0
      %794 = vmatprep.subr.bf16.mxu0 0
      %795 = vmatpush1.bf16.msra.mxu0 0
      %796 = vmatprep.mubr.bf16.mxu0 0
      %797 = vmatmul.mubr.bf16.gmra.mrb[0].mxu0 %v721
      %v798 = vpop.f32.mrb[0].mxu0
      %v799 = vadd.f32 %v758, %v798
      %v800 = vpop.f32.mrb[0].mxu0
      %v801 = vadd.f32 %v760, %v800
      %v802 = vpop.f32.mrb[0].mxu0
      %v803 = vpop.f32.mrb[0].mxu0
      %804 = vdwg.mxu0
      %v805 = vpack.c.bf16 %v173, %v170
      %v806 = vpack.c.bf16 %v174, %v171
      %v807 = vpack.c.bf16 %v175, %v172
      %s808 = scalar_lea.vmem %s1, 576
      %v809 = vld [vmem:[%s808] sm:$0xff]
      %v810 = vld [vmem:[%s808 + $0x8] sm:$0xff]
      %v811 = vld [vmem:[%s808 + $0x10] sm:$0xff]
      %v812 = vld [vmem:[%s808 + $0x18] sm:$0xff]
      %v813 = vld [vmem:[%s808 + $0x20] sm:$0xff]
      %v814 = vld [vmem:[%s808 + $0x28] sm:$0xff]
      %v815 = vld [vmem:[%s808 + $0x30] sm:$0xff]
      %v816 = vld [vmem:[%s808 + $0x38] sm:$0xff]
      %v817 = vld [vmem:[%s808 + $0x40] sm:$0xff]
      %v818 = vld [vmem:[%s808 + $0x48] sm:$0xff]
      %v819 = vld [vmem:[%s808 + $0x50] sm:$0xff]
      %v820 = vld [vmem:[%s808 + $0x58] sm:$0xff]
      %v821 = vld [vmem:[%s808 + $0x60] sm:$0xff]
      %v822 = vld [vmem:[%s808 + $0x68] sm:$0xff]
      %v823 = vld [vmem:[%s808 + $0x70] sm:$0xff]
      %v824 = vld [vmem:[%s808 + $0x78] sm:$0xff]
      %v825 = vld [vmem:[%s808 + $0x80] sm:$0xff]
      %v826 = vld [vmem:[%s808 + $0x88] sm:$0xff]
      %v827 = vld [vmem:[%s808 + $0x90] sm:$0xff]
      %v828 = vld [vmem:[%s808 + $0x98] sm:$0xff]
      %v829 = vld [vmem:[%s808 + $0xa0] sm:$0xff]
      %v830 = vld [vmem:[%s808 + $0xa8] sm:$0xff]
      %v831 = vld [vmem:[%s808 + $0xb0] sm:$0xff]
      %v832 = vld [vmem:[%s808 + $0xb8] sm:$0xff]
      %v833 = vld [vmem:[%s808 + $0xc0] sm:$0xff]
      %v834 = vld [vmem:[%s808 + $0xc8] sm:$0xff]
      %v835 = vld [vmem:[%s808 + $0xd0] sm:$0xff]
      %v836 = vld [vmem:[%s808 + $0xd8] sm:$0xff]
      %v837 = vld [vmem:[%s808 + $0xe0] sm:$0xff]
      %v838 = vld [vmem:[%s808 + $0xe8] sm:$0xff]
      %v839 = vld [vmem:[%s808 + $0xf0] sm:$0xff]
      %v840 = vld [vmem:[%s808 + $0xf8] sm:$0xff]
      %v841 = vld [vmem:[%s808 + $0x100] sm:$0xff]
      %v842 = vld [vmem:[%s808 + $0x108] sm:$0xff]
      %v843 = vld [vmem:[%s808 + $0x110] sm:$0xff]
      %v844 = vld [vmem:[%s808 + $0x118] sm:$0xff]
      %v848 = vrot.slane %v805, 1
      %v849 = vrot.slane %v806, 1
      %v850 = vrot.slane %v807, 1
      %v889 = vunpack.c.l.b16 %v809
      %v890 = vunpack.c.h.b16 %v809
      %v891 = vunpack.c.l.b16 %v810
      %v892 = vunpack.c.h.b16 %v810
      %v893 = vunpack.c.l.b16 %v811
      %v894 = vunpack.c.h.b16 %v811
      %v895 = vunpack.c.l.b16 %v812
      %v896 = vunpack.c.h.b16 %v812
      %v897 = vunpack.c.l.b16 %v813
      %v898 = vunpack.c.h.b16 %v813
      %v899 = vunpack.c.l.b16 %v814
      %v900 = vunpack.c.h.b16 %v814
      %v901 = vunpack.c.l.b16 %v815
      %v902 = vunpack.c.h.b16 %v815
      %v903 = vunpack.c.l.b16 %v816
      %v904 = vunpack.c.h.b16 %v816
      %v905 = vunpack.c.l.b16 %v817
      %v906 = vunpack.c.h.b16 %v817
      %v907 = vunpack.c.l.b16 %v818
      %v908 = vunpack.c.h.b16 %v818
      %v909 = vunpack.c.l.b16 %v819
      %v910 = vunpack.c.h.b16 %v819
      %v911 = vunpack.c.l.b16 %v820
      %v912 = vunpack.c.h.b16 %v820
      %v913 = vunpack.c.l.b16 %v821
      %v914 = vunpack.c.h.b16 %v821
      %v915 = vunpack.c.l.b16 %v822
      %v916 = vunpack.c.h.b16 %v822
      %v917 = vunpack.c.l.b16 %v823
      %v918 = vunpack.c.h.b16 %v823
      %v919 = vunpack.c.l.b16 %v824
      %v920 = vunpack.c.h.b16 %v824
      %v921 = vunpack.c.l.b16 %v825
      %v922 = vunpack.c.h.b16 %v825
      %v923 = vunpack.c.l.b16 %v826
      %v924 = vunpack.c.h.b16 %v826
      %v925 = vunpack.c.l.b16 %v827
      %v926 = vunpack.c.h.b16 %v827
      %v927 = vunpack.c.l.b16 %v828
      %v928 = vunpack.c.h.b16 %v828
      %v929 = vunpack.c.l.b16 %v829
      %v930 = vunpack.c.h.b16 %v829
      %v931 = vunpack.c.l.b16 %v830
      %v932 = vunpack.c.h.b16 %v830
      %v933 = vunpack.c.l.b16 %v831
      %v934 = vunpack.c.h.b16 %v831
      %v935 = vunpack.c.l.b16 %v832
      %v936 = vunpack.c.h.b16 %v832
      %v937 = vunpack.c.l.b16 %v833
      %v938 = vunpack.c.h.b16 %v833
      %v939 = vunpack.c.l.b16 %v834
      %v940 = vunpack.c.h.b16 %v834
      %v941 = vunpack.c.l.b16 %v835
      %v942 = vunpack.c.h.b16 %v835
      %v943 = vunpack.c.l.b16 %v836
      %v944 = vunpack.c.h.b16 %v836
      %v945 = vunpack.c.l.b16 %v837
      %v946 = vunpack.c.h.b16 %v837
      %v947 = vunpack.c.l.b16 %v838
      %v948 = vunpack.c.h.b16 %v838
      %v949 = vunpack.c.l.b16 %v839
      %v950 = vunpack.c.h.b16 %v839
      %v951 = vunpack.c.l.b16 %v840
      %v952 = vunpack.c.h.b16 %v840
      %v953 = vunpack.c.l.b16 %v841
      %v954 = vunpack.c.h.b16 %v841
      %v955 = vunpack.c.l.b16 %v842
      %v956 = vunpack.c.h.b16 %v842
      %v957 = vunpack.c.l.b16 %v843
      %v958 = vunpack.c.h.b16 %v843
      %v959 = vunpack.c.l.b16 %v844
      %v960 = vunpack.c.h.b16 %v844
      %v961 = vpack.c.b16 %v891, %v889
      %v962 = vpack.c.b16 %v892, %v890
      %v963 = vpack.c.b16 %v895, %v893
      %v964 = vpack.c.b16 %v896, %v894
      %v965 = vpack.c.b16 %v899, %v897
      %v966 = vpack.c.b16 %v900, %v898
      %v967 = vpack.c.b16 %v903, %v901
      %v968 = vpack.c.b16 %v904, %v902
      %v969 = vpack.c.b16 %v907, %v905
      %v970 = vpack.c.b16 %v908, %v906
      %v971 = vpack.c.b16 %v911, %v909
      %v972 = vpack.c.b16 %v912, %v910
      %v973 = vpack.c.b16 %v915, %v913
      %v974 = vpack.c.b16 %v916, %v914
      %v975 = vpack.c.b16 %v919, %v917
      %v976 = vpack.c.b16 %v920, %v918
      %v977 = vpack.c.b16 %v923, %v921
      %v978 = vpack.c.b16 %v924, %v922
      %v979 = vpack.c.b16 %v927, %v925
      %v980 = vpack.c.b16 %v928, %v926
      %v981 = vpack.c.b16 %v931, %v929
      %v982 = vpack.c.b16 %v932, %v930
      %v983 = vpack.c.b16 %v935, %v933
      %v984 = vpack.c.b16 %v936, %v934
      %v985 = vpack.c.b16 %v939, %v937
      %v986 = vpack.c.b16 %v940, %v938
      %v987 = vpack.c.b16 %v943, %v941
      %v988 = vpack.c.b16 %v944, %v942
      %v989 = vpack.c.b16 %v947, %v945
      %v990 = vpack.c.b16 %v948, %v946
      %v991 = vpack.c.b16 %v951, %v949
      %v992 = vpack.c.b16 %v952, %v950
      %v993 = vpack.c.b16 %v955, %v953
      %v994 = vpack.c.b16 %v956, %v954
      %v995 = vpack.c.b16 %v959, %v957
      %v996 = vpack.c.b16 %v960, %v958
      %v1034 = vsel %vm455, %v850, 0
      %1036 = vmatprep.subr.bf16.mxu0 %v962
      %1037 = vmatpush1.bf16.msra.mxu0 %v961
      %1038 = vmatprep.subr.bf16.mxu0 %v964
      %1039 = vmatpush1.bf16.msra.mxu0 %v963
      %1040 = vmatprep.subr.bf16.mxu0 %v966
      %1041 = vmatpush1.bf16.msra.mxu0 %v965
      %1042 = vmatprep.subr.bf16.mxu0 %v968
      %1043 = vmatpush1.bf16.msra.mxu0 %v967
      %1044 = vmatprep.subr.bf16.mxu0 %v970
      %1045 = vmatpush1.bf16.msra.mxu0 %v969
      %1046 = vmatprep.subr.bf16.mxu0 %v972
      %1047 = vmatpush1.bf16.msra.mxu0 %v971
      %1048 = vmatprep.subr.bf16.mxu0 %v974
      %1049 = vmatpush1.bf16.msra.mxu0 %v973
      %1050 = vmatprep.subr.bf16.mxu0 %v976
      %1051 = vmatpush1.bf16.msra.mxu0 %v975
      %1052 = vmatprep.subr.bf16.mxu0 %v978
      %1053 = vmatpush1.bf16.msra.mxu0 %v977
      %1054 = vmatprep.subr.bf16.mxu0 %v980
      %1055 = vmatpush1.bf16.msra.mxu0 %v979
      %1056 = vmatprep.subr.bf16.mxu0 %v982
      %1057 = vmatpush1.bf16.msra.mxu0 %v981
      %1058 = vmatprep.subr.bf16.mxu0 %v984
      %1059 = vmatpush1.bf16.msra.mxu0 %v983
      %1060 = vmatprep.subr.bf16.mxu0 %v986
      %1061 = vmatpush1.bf16.msra.mxu0 %v985
      %1062 = vmatprep.subr.bf16.mxu0 %v988
      %1063 = vmatpush1.bf16.msra.mxu0 %v987
      %1064 = vmatprep.subr.bf16.mxu0 %v990
      %1065 = vmatpush1.bf16.msra.mxu0 %v989
      %1066 = vmatprep.subr.bf16.mxu0 %v992
      %1067 = vmatpush1.bf16.msra.mxu0 %v991
      %1068 = vmatprep.mubr.bf16.mxu0 %v849
      %1069 = vmatmul.mubr.bf16.gmra.mrb[0].mxu0 %v848
      %v1070 = vpop.f32.mrb[0].mxu0
      %v1071 = vadd.f32 0.0, %v1070
      %v1072 = vpop.f32.mrb[0].mxu0
      %v1073 = vadd.f32 0.0, %v1072
      %v1074 = vpop.f32.mrb[0].mxu0
      %v1075 = vpop.f32.mrb[0].mxu0
      %1076 = vdwg.mxu0
      %1077 = vmatprep.subr.bf16.mxu0 %v994
      %1078 = vmatpush1.bf16.msra.mxu0 %v993
      %1079 = vmatprep.subr.bf16.mxu0 %v996
      %1080 = vmatpush1.bf16.msra.mxu0 %v995
      %1081 = vmatprep.subr.bf16.mxu0 0
      %1082 = vmatpush1.bf16.msra.mxu0 0
      %1083 = vmatprep.subr.bf16.mxu0 0
      %1084 = vmatpush1.bf16.msra.mxu0 0
      %1085 = vmatprep.subr.bf16.mxu0 0
      %1086 = vmatpush1.bf16.msra.mxu0 0
      %1087 = vmatprep.subr.bf16.mxu0 0
      %1088 = vmatpush1.bf16.msra.mxu0 0
      %1089 = vmatprep.subr.bf16.mxu0 0
      %1090 = vmatpush1.bf16.msra.mxu0 0
      %1091 = vmatprep.subr.bf16.mxu0 0
      %1092 = vmatpush1.bf16.msra.mxu0 0
      %1093 = vmatprep.subr.bf16.mxu0 0
      %1094 = vmatpush1.bf16.msra.mxu0 0
      %1095 = vmatprep.subr.bf16.mxu0 0
      %1096 = vmatpush1.bf16.msra.mxu0 0
      %1097 = vmatprep.subr.bf16.mxu0 0
      %1098 = vmatpush1.bf16.msra.mxu0 0
      %1099 = vmatprep.subr.bf16.mxu0 0
      %1100 = vmatpush1.bf16.msra.mxu0 0
      %1101 = vmatprep.subr.bf16.mxu0 0
      %1102 = vmatpush1.bf16.msra.mxu0 0
      %1103 = vmatprep.subr.bf16.mxu0 0
      %1104 = vmatpush1.bf16.msra.mxu0 0
      %1105 = vmatprep.subr.bf16.mxu0 0
      %1106 = vmatpush1.bf16.msra.mxu0 0
      %1107 = vmatprep.subr.bf16.mxu0 0
      %1108 = vmatpush1.bf16.msra.mxu0 0
      %1109 = vmatprep.mubr.bf16.mxu0 0
      %1110 = vmatmul.mubr.bf16.gmra.mrb[0].mxu0 %v1034
      %v1111 = vpop.f32.mrb[0].mxu0
      %v1112 = vadd.f32 %v1071, %v1111
      %v1113 = vpop.f32.mrb[0].mxu0
      %v1114 = vadd.f32 %v1073, %v1113
      %v1115 = vpop.f32.mrb[0].mxu0
      %v1116 = vpop.f32.mrb[0].mxu0
      %1117 = vdwg.mxu0
      %v1118 = vadd.f32 %v799, %v1112
      %v1119 = vadd.f32 %v801, %v1114
      %v1120 = vld [vmem:[%s2] sm:$0x3]
      %v1122 = vlaneseq
      %v1123 = vshrl.u32 %v1122, 7
      %v1124 = vsub.s32 0, %v1123
      %v1125 = vrot.slane %v1120, %v1124
      %v1126 = vlaneseq
      %v1127 = vshrl.u32 %v1126, 7
      %v1128 = vsub.s32 1, %v1127
      %v1129 = vrot.slane %v1120, %v1128
      %v1132 = vadd.f32 %v1118, %v1125
      %v1133 = vadd.f32 %v1119, %v1129
      %1136 = vrot.lane.b32.xlu0 %v1132, 32
      %v1137 = vpop.permute.xlu0 %1136
      %1138 = vrot.lane.b32.xlu0 %v1133, 32
      %v1139 = vpop.permute.xlu0 %1138
      %v1140 = vsel %vm455, %v1137, %v1139
      %v1142 = vmax.f32 %v1132, %v1140
      %v1143 = vlaneseq
      %v1144 = vshrl.u32 %v1143, 7
      %v1145 = vlaneseq
      %v1146 = vand.u32 %v1145, 127
      %v1147 = vmul.u32 %v1144, 2
      %vm1148 = vcmp.eq.s32.totalorder %v1146, %v1147
      %v1149 = vsel %vm1148, 1, 0
      %v1150 = vcvt.s32.f32 %v1149
      %v1151 = vadd.s32 %v1147, 1
      %vm1152 = vcmp.eq.s32.totalorder %v1146, %v1151
      %v1153 = vsel %vm1152, 1, 0
      %v1154 = vcvt.s32.f32 %v1153
      %vm1155 = vcmask 56320
      %v1157 = vsel %vm1155, %v1150, 0
      %vm1159 = vcmask 1046528
      %v1161 = vsel %vm1159, %v1142, 0
      %1163 = vmatprep.subr.mxu0 0.0
      %1164 = vmatpush1.msra.mxu0 %v1161
      %1165 = vmatprep.subr.mxu0 0.0
      %1166 = vmatpush1.msra.mxu0 0.0
      %1167 = vmatprep.subr.mxu0 0.0
      %1168 = vmatpush1.msra.mxu0 0.0
      %1169 = vmatprep.subr.mxu0 0.0
      %1170 = vmatpush1.msra.mxu0 0.0
      %1171 = vmatprep.subr.mxu0 0.0
      %1172 = vmatpush1.msra.mxu0 0.0
      %1173 = vmatprep.subr.mxu0 0.0
      %1174 = vmatpush1.msra.mxu0 0.0
      %1175 = vmatprep.subr.mxu0 0.0
      %1176 = vmatpush1.msra.mxu0 0.0
      %1177 = vmatprep.subr.mxu0 0.0
      %1178 = vmatpush1.msra.mxu0 0.0
      %1179 = vmatprep.subr.mxu0 0.0
      %1180 = vmatpush1.msra.mxu0 0.0
      %1181 = vmatprep.subr.mxu0 0.0
      %1182 = vmatpush1.msra.mxu0 0.0
      %1183 = vmatprep.subr.mxu0 0.0
      %1184 = vmatpush1.msra.mxu0 0.0
      %1185 = vmatprep.subr.mxu0 0.0
      %1186 = vmatpush1.msra.mxu0 0.0
      %1187 = vmatprep.subr.mxu0 0.0
      %1188 = vmatpush1.msra.mxu0 0.0
      %1189 = vmatprep.subr.mxu0 0.0
      %1190 = vmatpush1.msra.mxu0 0.0
      %1191 = vmatprep.subr.mxu0 0.0
      %1192 = vmatpush1.msra.mxu0 0.0
      %1193 = vmatprep.subr.mxu0 0.0
      %1194 = vmatpush1.msra.mxu0 0.0
      %1195 = vmatprep.subr.mxu0 0.0
      %1196 = vmatpush1.msra.mxu0 0.0
      %1197 = vmatprep.subr.mxu0 0.0
      %1198 = vmatpush1.msra.mxu0 0.0
      %1199 = vmatprep.subr.mxu0 0.0
      %1200 = vmatpush1.msra.mxu0 0.0
      %1201 = vmatprep.subr.mxu0 0.0
      %1202 = vmatpush1.msra.mxu0 0.0
      %1203 = vmatprep.subr.mxu0 0.0
      %1204 = vmatpush1.msra.mxu0 0.0
      %1205 = vmatprep.subr.mxu0 0.0
      %1206 = vmatpush1.msra.mxu0 0.0
      %1207 = vmatprep.subr.mxu0 0.0
      %1208 = vmatpush1.msra.mxu0 0.0
      %1209 = vmatprep.subr.mxu0 0.0
      %1210 = vmatpush1.msra.mxu0 0.0
      %1211 = vmatprep.subr.mxu0 0.0
      %1212 = vmatpush1.msra.mxu0 0.0
      %1213 = vmatprep.subr.mxu0 0.0
      %1214 = vmatpush1.msra.mxu0 0.0
      %1215 = vmatprep.subr.mxu0 0.0
      %1216 = vmatpush1.msra.mxu0 0.0
      %1217 = vmatprep.subr.mxu0 0.0
      %1218 = vmatpush1.msra.mxu0 0.0
      %1219 = vmatprep.subr.mxu0 0.0
      %1220 = vmatpush1.msra.mxu0 0.0
      %1221 = vmatprep.subr.mxu0 0.0
      %1222 = vmatpush1.msra.mxu0 0.0
      %1223 = vmatprep.subr.mxu0 0.0
      %1224 = vmatpush1.msra.mxu0 0.0
      %1225 = vmatprep.subr.mxu0 0.0
      %1226 = vmatpush1.msra.mxu0 0.0
      %1227 = vmatprep.mubr.f32.mxu0 0.0
      %1228 = vmatmul.mubr.f32.gmra.mrb[0].mxu0 %v1157
      %v1229 = vpop.f32.mrb[0].mxu0
      %v1230 = vadd.f32 0.0, %v1229
      %v1231 = vpop.f32.mrb[0].mxu0
      %1232 = vdwg.mxu0
      %v1234 = vsel %vm1155, %v1154, 0
      %1236 = vmatprep.subr.mxu0 0.0
      %1237 = vmatpush1.msra.mxu0 %v1161
      %1238 = vmatprep.subr.mxu0 0.0
      %1239 = vmatpush1.msra.mxu0 0.0
      %1240 = vmatprep.subr.mxu0 0.0
      %1241 = vmatpush1.msra.mxu0 0.0
      %1242 = vmatprep.subr.mxu0 0.0
      %1243 = vmatpush1.msra.mxu0 0.0
      %1244 = vmatprep.subr.mxu0 0.0
      %1245 = vmatpush1.msra.mxu0 0.0
      %1246 = vmatprep.subr.mxu0 0.0
      %1247 = vmatpush1.msra.mxu0 0.0
      %1248 = vmatprep.subr.mxu0 0.0
      %1249 = vmatpush1.msra.mxu0 0.0
      %1250 = vmatprep.subr.mxu0 0.0
      %1251 = vmatpush1.msra.mxu0 0.0
      %1252 = vmatprep.subr.mxu0 0.0
      %1253 = vmatpush1.msra.mxu0 0.0
      %1254 = vmatprep.subr.mxu0 0.0
      %1255 = vmatpush1.msra.mxu0 0.0
      %1256 = vmatprep.subr.mxu0 0.0
      %1257 = vmatpush1.msra.mxu0 0.0
      %1258 = vmatprep.subr.mxu0 0.0
      %1259 = vmatpush1.msra.mxu0 0.0
      %1260 = vmatprep.subr.mxu0 0.0
      %1261 = vmatpush1.msra.mxu0 0.0
      %1262 = vmatprep.subr.mxu0 0.0
      %1263 = vmatpush1.msra.mxu0 0.0
      %1264 = vmatprep.subr.mxu0 0.0
      %1265 = vmatpush1.msra.mxu0 0.0
      %1266 = vmatprep.subr.mxu0 0.0
      %1267 = vmatpush1.msra.mxu0 0.0
      %1268 = vmatprep.subr.mxu0 0.0
      %1269 = vmatpush1.msra.mxu0 0.0
      %1270 = vmatprep.subr.mxu0 0.0
      %1271 = vmatpush1.msra.mxu0 0.0
      %1272 = vmatprep.subr.mxu0 0.0
      %1273 = vmatpush1.msra.mxu0 0.0
      %1274 = vmatprep.subr.mxu0 0.0
      %1275 = vmatpush1.msra.mxu0 0.0
      %1276 = vmatprep.subr.mxu0 0.0
      %1277 = vmatpush1.msra.mxu0 0.0
      %1278 = vmatprep.subr.mxu0 0.0
      %1279 = vmatpush1.msra.mxu0 0.0
      %1280 = vmatprep.subr.mxu0 0.0
      %1281 = vmatpush1.msra.mxu0 0.0
      %1282 = vmatprep.subr.mxu0 0.0
      %1283 = vmatpush1.msra.mxu0 0.0
      %1284 = vmatprep.subr.mxu0 0.0
      %1285 = vmatpush1.msra.mxu0 0.0
      %1286 = vmatprep.subr.mxu0 0.0
      %1287 = vmatpush1.msra.mxu0 0.0
      %1288 = vmatprep.subr.mxu0 0.0
      %1289 = vmatpush1.msra.mxu0 0.0
      %1290 = vmatprep.subr.mxu0 0.0
      %1291 = vmatpush1.msra.mxu0 0.0
      %1292 = vmatprep.subr.mxu0 0.0
      %1293 = vmatpush1.msra.mxu0 0.0
      %1294 = vmatprep.subr.mxu0 0.0
      %1295 = vmatpush1.msra.mxu0 0.0
      %1296 = vmatprep.subr.mxu0 0.0
      %1297 = vmatpush1.msra.mxu0 0.0
      %1298 = vmatprep.subr.mxu0 0.0
      %1299 = vmatpush1.msra.mxu0 0.0
      %1300 = vmatprep.mubr.f32.mxu0 0.0
      %1301 = vmatmul.mubr.f32.gmra.mrb[0].mxu0 %v1234
      %v1302 = vpop.f32.mrb[0].mxu0
      %v1303 = vadd.f32 0.0, %v1302
      %v1304 = vpop.f32.mrb[0].mxu0
      %1305 = vdwg.mxu0
      %v1306 = vmax.f32 %v1230, %v1303
      %v1307 = vmax.f32 %v1306, 0.0
      %vm1308 = vcmask 780288
      %1309 = vst.msk [vmem:[%s168] sm:$0x7] %vm1308, %v1307
      %p1310 = scmp.lt.s32.totalorder %s14, 1
      %s1311 = scalar_select %p1310, %s14, 1
      %s1312 = smul.addr %s1311, 4
      %s1313 = scalar_lea.vmem %s3, %s1312
      // Predicated region
      $region33: #{cnn_mnist_forward.6} parent=31 // pred_check
        %p1314 = pneg %p100
      $region34: #{cnn_mnist_forward.6} parent=31 // pred_check_branch
        %1316 = sbr.rel (%p1314) target = $region36
      $region35: #{cnn_mnist_forward.6} parent=31 // pred_region
        _
      $region36: #{cnn_mnist_forward.6} parent=31 // pred_fallthru
        _
    $region32: #{cnn_mnist_forward.6} parent=5 // pred_fallthru
      _
    %p1317 = scmp.le.s32.totalorder 2, %s9
    // Predicated region
    $region37: #{cnn_mnist_forward.6} parent=5 // pred_check
      %p1318 = pneg %p1317
    $region38: #{cnn_mnist_forward.6} parent=5 // pred_check_branch
      %1320 = sbr.rel (%p1318) target = $region40
    $region39: #{cnn_mnist_forward.6} parent=5 // pred_region
      %s1321 = ssub.s32 %s9, 2
      // Predicated region
      $region41: #{cnn_mnist_forward.6} parent=39 // pred_check
        %p1322 = pneg %p106
      $region42: #{cnn_mnist_forward.6} parent=39 // pred_check_branch
        %1324 = sbr.rel (%p1322) target = $region44
      $region43: #{cnn_mnist_forward.6} parent=39 // pred_region
        %p1325 = scmp.lt.s32.totalorder %s15, 1
        %s1326 = scalar_select %p1325, %s15, 1
        %s1327 = smul.addr %s1326, 4
        %s1328 = scalar_lea.vmem %s3, %s1327
      $region44: #{cnn_mnist_forward.6} parent=39 // pred_fallthru
        _
    $region40: #{cnn_mnist_forward.6} parent=5 // pred_fallthru
      _
  $region6: #{cnn_mnist_forward.6} parent=0 // loop_footer
    %s13 = sadd.s32 1, %s9
  $region7: #{cnn_mnist_forward.6} parent=0 // loop_footer_branch
    %8 = sbr.rel target = $region3
  $region8: #{cnn_mnist_forward.6} parent=0 // loop_exit
    _

// kernel: cnn_mnist_forward.5
$region0: #{cnn_mnist_forward.5}
  #allocation0 [shape = 'u32[]', space=smem, size = 0x4, offset = 0x4, fixed_abs, tag = 'smem constant byte address 0x4 - core index']
  #allocation1 [shape = 'u32[144,128]{1,0:T(1,128)}', space=vmem, size = 0x12000, scoped, tag = 'internal scratch']
  %s0 = inlined_call_operand.vmem [shape: f32[2,16,512], index: 0, kind: input, shape index: {}]
  %s1 = inlined_call_operand.vmem [shape: bf16[3,512,448], index: 1, kind: input, shape index: {}]
  %s2 = inlined_call_operand.vmem [shape: f32[1,448], index: 2, kind: input, shape index: {}]
  %s3 = inlined_call_operand.vmem [shape: f32[2,7,224], index: 3, kind: output, shape index: {}]
  %s4 = sld [smem:[#allocation0]]
  $region45: #{cnn_mnist_forward.5} parent=0
    _
  %s6 = ssub.s32 1, %s4
  %s7 = scalar_select 0, %s6, %s4
  loop: start=0, step=1, limit=4
  $region2: #{cnn_mnist_forward.5} parent=0 // loop_pre_header
    _
  $region3: #{cnn_mnist_forward.5} parent=0 // loop_header
    %s9 = sphi 0, %s13
    %p10 = scmp.ge.s32.totalorder %s9, 4
    %s19 = sphi 0, %s21
    %s22 = sphi 0, %s19
    %s23 = sphi 0, %s22
    %s39 = sphi 0, %s23
    %s43 = sphi 0, %s43
    %s45 = sphi 0, %s43
    %s46 = sphi 0, %s45
    %s60 = sphi 0, %s46
    %s64 = sphi 0, %s64
    %s66 = sphi 0, %s64
    %s67 = sphi 0, %s66
    %s81 = sphi 0, %s67
    %s87 = sphi 0, %s89
    %s90 = sphi 0, %s87
    %s91 = sphi 0, %s90
    %s107 = sphi 0, %s91
  $region4: #{cnn_mnist_forward.5} parent=0 // loop_header_branch
    %12 = sbr.rel (%p10) target = $region8
  $region5: #{cnn_mnist_forward.5} parent=0 // loop_body
    %s14 = ssub.s32 %s9, 1
    %s15 = ssub.s32 %s9, 2
    %s16 = sadd.s32 %s9, 1
    %s17 = ssub.s32 %s9, %s16
    %p18 = scmp.eq.s32.totalorder %s17, 0
    %s20 = sadd.s32 %s19, 1
    %s21 = scalar_select %p18, %s19, %s20
    %p24 = pneg %p18
    %p25 = scmp.eq.s32.totalorder %s9, 1
    %p26 = por %p24, %p25
    %p27 = scmp.ne.s32.totalorder %s19, %s22
    %p28 = scmp.eq.s32.totalorder %s9, 0
    %p29 = por %p27, %p28
    %p30 = scmp.ne.s32.totalorder %s19, %s22
    %p31 = scmp.eq.s32.totalorder %s14, 1
    %p32 = por %p30, %p31
    %p33 = scmp.ne.s32.totalorder %s22, %s23
    %p34 = scmp.eq.s32.totalorder %s14, 0
    %p35 = por %p33, %p34
    %p36 = scmp.ne.s32.totalorder %s22, %s23
    %p37 = scmp.eq.s32.totalorder %s15, 1
    %p38 = por %p36, %p37
    %p40 = scmp.ne.s32.totalorder %s23, %s39
    %p41 = scmp.eq.s32.totalorder %s15, 0
    %p42 = por %p40, %p41
    %s44 = sadd.s32 %s43, 1
    %p47 = scmp.eq.s32.totalorder %s9, 1
    %p48 = scmp.ne.s32.totalorder %s43, %s45
    %p49 = scmp.eq.s32.totalorder %s9, 0
    %p50 = por %p48, %p49
    %p51 = scmp.ne.s32.totalorder %s43, %s45
    %p52 = scmp.eq.s32.totalorder %s14, 1
    %p53 = por %p51, %p52
    %p54 = scmp.ne.s32.totalorder %s45, %s46
    %p55 = scmp.eq.s32.totalorder %s14, 0
    %p56 = por %p54, %p55
    %p57 = scmp.ne.s32.totalorder %s45, %s46
    %p58 = scmp.eq.s32.totalorder %s15, 1
    %p59 = por %p57, %p58
    %p61 = scmp.ne.s32.totalorder %s46, %s60
    %p62 = scmp.eq.s32.totalorder %s15, 0
    %p63 = por %p61, %p62
    %s65 = sadd.s32 %s64, 1
    %p68 = scmp.eq.s32.totalorder %s9, 1
    %p69 = scmp.ne.s32.totalorder %s64, %s66
    %p70 = scmp.eq.s32.totalorder %s9, 0
    %p71 = por %p69, %p70
    %p72 = scmp.ne.s32.totalorder %s64, %s66
    %p73 = scmp.eq.s32.totalorder %s14, 1
    %p74 = por %p72, %p73
    %p75 = scmp.ne.s32.totalorder %s66, %s67
    %p76 = scmp.eq.s32.totalorder %s14, 0
    %p77 = por %p75, %p76
    %p78 = scmp.ne.s32.totalorder %s66, %s67
    %p79 = scmp.eq.s32.totalorder %s15, 1
    %p80 = por %p78, %p79
    %p82 = scmp.ne.s32.totalorder %s67, %s81
    %p83 = scmp.eq.s32.totalorder %s15, 0
    %p84 = por %p82, %p83
    %s85 = ssub.s32 %s9, %s16
    %p86 = scmp.eq.s32.totalorder %s85, 0
    %s88 = sadd.s32 %s87, 1
    %s89 = scalar_select %p86, %s87, %s88
    %p92 = pneg %p86
    %p93 = scmp.eq.s32.totalorder %s9, 1
    %p94 = por %p92, %p93
    %p95 = scmp.ne.s32.totalorder %s87, %s90
    %p96 = scmp.eq.s32.totalorder %s9, 0
    %p97 = por %p95, %p96
    %p98 = scmp.ne.s32.totalorder %s87, %s90
    %p99 = scmp.eq.s32.totalorder %s14, 1
    %p100 = por %p98, %p99
    %p101 = scmp.ne.s32.totalorder %s90, %s91
    %p102 = scmp.eq.s32.totalorder %s14, 0
    %p103 = por %p101, %p102
    %p104 = scmp.ne.s32.totalorder %s90, %s91
    %p105 = scmp.eq.s32.totalorder %s15, 1
    %p106 = por %p104, %p105
    %p108 = scmp.ne.s32.totalorder %s91, %s107
    %p109 = scmp.eq.s32.totalorder %s15, 0
    %p110 = por %p108, %p109
    %p111 = scmp.le.s32.totalorder 1, %s9
    %p112 = scmp.lt.s32.totalorder %s9, 3
    %p113 = pnand %p111, %p112
    %p114 = pneg %p113
    // Predicated region
    $region9: #{cnn_mnist_forward.5} parent=5 // pred_check
      _
    $region10: #{cnn_mnist_forward.5} parent=5 // pred_check_branch
      %116 = sbr.rel (%p113) target = $region12
    $region11: #{cnn_mnist_forward.5} parent=5 // pred_region
      %s117 = ssub.s32 %s9, 1
      // Predicated region
      $region13: #{cnn_mnist_forward.5} parent=11 // pred_check
        %p118 = pneg %p56
      $region14: #{cnn_mnist_forward.5} parent=11 // pred_check_branch
        %120 = sbr.rel (%p118) target = $region16
      $region15: #{cnn_mnist_forward.5} parent=11 // pred_region
        _
      $region16: #{cnn_mnist_forward.5} parent=11 // pred_fallthru
        _
      // Predicated region
      $region17: #{cnn_mnist_forward.5} parent=11 // pred_check
        %p121 = pneg %p77
      $region18: #{cnn_mnist_forward.5} parent=11 // pred_check_branch
        %123 = sbr.rel (%p121) target = $region20
      $region19: #{cnn_mnist_forward.5} parent=11 // pred_region
        _
      $region20: #{cnn_mnist_forward.5} parent=11 // pred_fallthru
        _
    $region12: #{cnn_mnist_forward.5} parent=5 // pred_fallthru
      _
    %p124 = scmp.lt.s32.totalorder %s9, 2
    // Predicated region
    $region21: #{cnn_mnist_forward.5} parent=5 // pred_check
      %p125 = pneg %p124
    $region22: #{cnn_mnist_forward.5} parent=5 // pred_check_branch
      %127 = sbr.rel (%p125) target = $region24
    $region23: #{cnn_mnist_forward.5} parent=5 // pred_region
      // Predicated region
      $region25: #{cnn_mnist_forward.5} parent=23 // pred_check
        %p128 = pneg %p29
      $region26: #{cnn_mnist_forward.5} parent=23 // pred_check_branch
        %130 = sbr.rel (%p128) target = $region28
      $region27: #{cnn_mnist_forward.5} parent=23 // pred_region
        %p131 = scmp.lt.s32.totalorder %s9, 1
        %s132 = scalar_select %p131, %s9, 1
        %s133 = smul.addr %s132, 8
        %s134 = smul.addr %s133, 8
        %s135 = scalar_lea.vmem %s0, %s134
      $region28: #{cnn_mnist_forward.5} parent=23 // pred_fallthru
        _
    $region24: #{cnn_mnist_forward.5} parent=5 // pred_fallthru
      _
    %p136 = scmp.le.s32.totalorder 1, %s9
    %p137 = scmp.lt.s32.totalorder %s9, 3
    %p138 = pnand %p136, %p137
    %p139 = pneg %p138
    // Predicated region
    $region29: #{cnn_mnist_forward.5} parent=5 // pred_check
      _
    $region30: #{cnn_mnist_forward.5} parent=5 // pred_check_branch
      %141 = sbr.rel (%p138) target = $region32
    $region31: #{cnn_mnist_forward.5} parent=5 // pred_region
      %s142 = ssub.s32 %s9, 1
      %p143 = scmp.lt.s32.totalorder %s14, 1
      %s144 = scalar_select %p143, %s14, 1
      %s145 = smul.addr %s144, 8
      %s146 = smul.addr %s145, 8
      %s147 = scalar_lea.vmem %s0, %s146
      %p148 = pneg %p35
      %p149 = pneg %p32
      %p150 = pneg %p56
      %p151 = pneg %p53
      %p152 = pneg %p77
      %p153 = pneg %p74
      %p154 = pneg %p103
      %p155 = pneg %p100
      %p156 = scmp.lt.s32.totalorder %s14, 1
      %s157 = scalar_select %p156, %s14, 1
      %s158 = smul.addr %s157, 2
      %s159 = smul.addr %s158, 8
      %s160 = scalar_lea.vmem %s3, %s159
      %p161 = scmp.lt.s32.totalorder %s14, 1
      %s162 = scalar_select %p161, %s14, 1
      %s163 = smul.addr %s162, 8
      %s164 = smul.addr %s163, 8
      %s165 = scalar_lea.vmem %s0, %s164
      %p166 = scmp.lt.s32.totalorder %s14, 1
      %s167 = scalar_select %p166, %s14, 1
      %s168 = smul.addr %s167, 2
      %s169 = smul.addr %s168, 8
      %s170 = scalar_lea.vmem %s3, %s169
      %v171 = vld [vmem:[%s165] sm:$0xff]
      %v172 = vld [vmem:[%s165 + $0x8] sm:$0xff]
      %v173 = vld [vmem:[%s165 + $0x10] sm:$0xff]
      %v174 = vld [vmem:[%s165 + $0x18] sm:$0xff]
      %v175 = vld [vmem:[%s165 + $0x20] sm:$0xff]
      %v176 = vld [vmem:[%s165 + $0x28] sm:$0xff]
      %v177 = vld [vmem:[%s165 + $0x30] sm:$0xff]
      %v178 = vld [vmem:[%s165 + $0x38] sm:$0xff]
      %v179 = vpack.c.bf16 %v175, %v171
      %v180 = vpack.c.bf16 %v176, %v172
      %v181 = vpack.c.bf16 %v177, %v173
      %v182 = vpack.c.bf16 %v178, %v174
      %v183 = vld [vmem:[%s1] sm:$0xff]
      %v184 = vld [vmem:[%s1 + $0x8] sm:$0xff]
      %v185 = vld [vmem:[%s1 + $0x10] sm:$0xff]
      %v186 = vld [vmem:[%s1 + $0x18] sm:$0xff]
      %v187 = vld [vmem:[%s1 + $0x20] sm:$0xff]
      %v188 = vld [vmem:[%s1 + $0x28] sm:$0xff]
      %v189 = vld [vmem:[%s1 + $0x30] sm:$0xff]
      %v190 = vld [vmem:[%s1 + $0x38] sm:$0xff]
      %v191 = vld [vmem:[%s1 + $0x40] sm:$0xff]
      %v192 = vld [vmem:[%s1 + $0x48] sm:$0xff]
      %v193 = vld [vmem:[%s1 + $0x50] sm:$0xff]
      %v194 = vld [vmem:[%s1 + $0x58] sm:$0xff]
      %v195 = vld [vmem:[%s1 + $0x60] sm:$0xff]
      %v196 = vld [vmem:[%s1 + $0x68] sm:$0xff]
      %v197 = vld [vmem:[%s1 + $0x70] sm:$0xff]
      %v198 = vld [vmem:[%s1 + $0x78] sm:$0xff]
      %v199 = vld [vmem:[%s1 + $0x80] sm:$0xff]
      %v200 = vld [vmem:[%s1 + $0x88] sm:$0xff]
      %v201 = vld [vmem:[%s1 + $0x90] sm:$0xff]
      %v202 = vld [vmem:[%s1 + $0x98] sm:$0xff]
      %v203 = vld [vmem:[%s1 + $0xa0] sm:$0xff]
      %v204 = vld [vmem:[%s1 + $0xa8] sm:$0xff]
      %v205 = vld [vmem:[%s1 + $0xb0] sm:$0xff]
      %v206 = vld [vmem:[%s1 + $0xb8] sm:$0xff]
      %v207 = vld [vmem:[%s1 + $0xc0] sm:$0xff]
      %v208 = vld [vmem:[%s1 + $0xc8] sm:$0xff]
      %v209 = vld [vmem:[%s1 + $0xd0] sm:$0xff]
      %v210 = vld [vmem:[%s1 + $0xd8] sm:$0xff]
      %v211 = vld [vmem:[%s1 + $0xe0] sm:$0xff]
      %v212 = vld [vmem:[%s1 + $0xe8] sm:$0xff]
      %v213 = vld [vmem:[%s1 + $0xf0] sm:$0xff]
      %v214 = vld [vmem:[%s1 + $0xf8] sm:$0xff]
      %v215 = vld [vmem:[%s1 + $0x100] sm:$0xff]
      %v216 = vld [vmem:[%s1 + $0x108] sm:$0xff]
      %v217 = vld [vmem:[%s1 + $0x110] sm:$0xff]
      %v218 = vld [vmem:[%s1 + $0x118] sm:$0xff]
      %v219 = vld [vmem:[%s1 + $0x120] sm:$0xff]
      %v220 = vld [vmem:[%s1 + $0x128] sm:$0xff]
      %v221 = vld [vmem:[%s1 + $0x130] sm:$0xff]
      %v222 = vld [vmem:[%s1 + $0x138] sm:$0xff]
      %v223 = vld [vmem:[%s1 + $0x140] sm:$0xff]
      %v224 = vld [vmem:[%s1 + $0x148] sm:$0xff]
      %v225 = vld [vmem:[%s1 + $0x150] sm:$0xff]
      %v226 = vld [vmem:[%s1 + $0x158] sm:$0xff]
      %v227 = vld [vmem:[%s1 + $0x160] sm:$0xff]
      %v228 = vld [vmem:[%s1 + $0x168] sm:$0xff]
      %v229 = vld [vmem:[%s1 + $0x170] sm:$0xff]
      %v230 = vld [vmem:[%s1 + $0x178] sm:$0xff]
      %v231 = vld [vmem:[%s1 + $0x180] sm:$0xff]
      %v232 = vld [vmem:[%s1 + $0x188] sm:$0xff]
      %v233 = vld [vmem:[%s1 + $0x190] sm:$0xff]
      %v234 = vld [vmem:[%s1 + $0x198] sm:$0xff]
      %v235 = vld [vmem:[%s1 + $0x1a0] sm:$0xff]
      %v236 = vld [vmem:[%s1 + $0x1a8] sm:$0xff]
      %v237 = vld [vmem:[%s1 + $0x1b0] sm:$0xff]
      %v238 = vld [vmem:[%s1 + $0x1b8] sm:$0xff]
      %v239 = vld [vmem:[%s1 + $0x1c0] sm:$0xff]
      %v240 = vld [vmem:[%s1 + $0x1c8] sm:$0xff]
      %v241 = vld [vmem:[%s1 + $0x1d0] sm:$0xff]
      %v242 = vld [vmem:[%s1 + $0x1d8] sm:$0xff]
      %v243 = vld [vmem:[%s1 + $0x1e0] sm:$0xff]
      %v244 = vld [vmem:[%s1 + $0x1e8] sm:$0xff]
      %v245 = vld [vmem:[%s1 + $0x1f0] sm:$0xff]
      %v246 = vld [vmem:[%s1 + $0x1f8] sm:$0xff]
      %v247 = vld [vmem:[%s1 + $0x200] sm:$0xff]
      %v248 = vld [vmem:[%s1 + $0x208] sm:$0xff]
      %v249 = vld [vmem:[%s1 + $0x210] sm:$0xff]
      %v250 = vld [vmem:[%s1 + $0x218] sm:$0xff]
      %v251 = vld [vmem:[%s1 + $0x220] sm:$0xff]
      %v252 = vld [vmem:[%s1 + $0x228] sm:$0xff]
      %v253 = vld [vmem:[%s1 + $0x230] sm:$0xff]
      %v254 = vld [vmem:[%s1 + $0x238] sm:$0xff]
      %v255 = vld [vmem:[%s1 + $0x240] sm:$0xff]
      %v256 = vld [vmem:[%s1 + $0x248] sm:$0xff]
      %v257 = vld [vmem:[%s1 + $0x250] sm:$0xff]
      %v258 = vld [vmem:[%s1 + $0x258] sm:$0xff]
      %v259 = vld [vmem:[%s1 + $0x260] sm:$0xff]
      %v260 = vld [vmem:[%s1 + $0x268] sm:$0xff]
      %v261 = vld [vmem:[%s1 + $0x270] sm:$0xff]
      %v262 = vld [vmem:[%s1 + $0x278] sm:$0xff]
      %v263 = vld [vmem:[%s1 + $0x280] sm:$0xff]
      %v264 = vld [vmem:[%s1 + $0x288] sm:$0xff]
      %v265 = vld [vmem:[%s1 + $0x290] sm:$0xff]
      %v266 = vld [vmem:[%s1 + $0x298] sm:$0xff]
      %v267 = vld [vmem:[%s1 + $0x2a0] sm:$0xff]
      %v268 = vld [vmem:[%s1 + $0x2a8] sm:$0xff]
      %v269 = vld [vmem:[%s1 + $0x2b0] sm:$0xff]
      %v270 = vld [vmem:[%s1 + $0x2b8] sm:$0xff]
      %v271 = vld [vmem:[%s1 + $0x2c0] sm:$0xff]
      %v272 = vld [vmem:[%s1 + $0x2c8] sm:$0xff]
      %v273 = vld [vmem:[%s1 + $0x2d0] sm:$0xff]
      %v274 = vld [vmem:[%s1 + $0x2d8] sm:$0xff]
      %v275 = vld [vmem:[%s1 + $0x2e0] sm:$0xff]
      %v276 = vld [vmem:[%s1 + $0x2e8] sm:$0xff]
      %v277 = vld [vmem:[%s1 + $0x2f0] sm:$0xff]
      %v278 = vld [vmem:[%s1 + $0x2f8] sm:$0xff]
      %v279 = vld [vmem:[%s1 + $0x300] sm:$0xff]
      %v280 = vld [vmem:[%s1 + $0x308] sm:$0xff]
      %v281 = vld [vmem:[%s1 + $0x310] sm:$0xff]
      %v282 = vld [vmem:[%s1 + $0x318] sm:$0xff]
      %v283 = vld [vmem:[%s1 + $0x320] sm:$0xff]
      %v284 = vld [vmem:[%s1 + $0x328] sm:$0xff]
      %v285 = vld [vmem:[%s1 + $0x330] sm:$0xff]
      %v286 = vld [vmem:[%s1 + $0x338] sm:$0xff]
      %v287 = vld [vmem:[%s1 + $0x340] sm:$0xff]
      %v288 = vld [vmem:[%s1 + $0x348] sm:$0xff]
      %v289 = vld [vmem:[%s1 + $0x350] sm:$0xff]
      %v290 = vld [vmem:[%s1 + $0x358] sm:$0xff]
      %v291 = vld [vmem:[%s1 + $0x360] sm:$0xff]
      %v292 = vld [vmem:[%s1 + $0x368] sm:$0xff]
      %v293 = vld [vmem:[%s1 + $0x370] sm:$0xff]
      %v294 = vld [vmem:[%s1 + $0x378] sm:$0xff]
      %v295 = vld [vmem:[%s1 + $0x380] sm:$0xff]
      %v296 = vld [vmem:[%s1 + $0x388] sm:$0xff]
      %v297 = vld [vmem:[%s1 + $0x390] sm:$0xff]
      %v298 = vld [vmem:[%s1 + $0x398] sm:$0xff]
      %v299 = vld [vmem:[%s1 + $0x3a0] sm:$0xff]
      %v300 = vld [vmem:[%s1 + $0x3a8] sm:$0xff]
      %v301 = vld [vmem:[%s1 + $0x3b0] sm:$0xff]
      %v302 = vld [vmem:[%s1 + $0x3b8] sm:$0xff]
      %v303 = vld [vmem:[%s1 + $0x3c0] sm:$0xff]
      %v304 = vld [vmem:[%s1 + $0x3c8] sm:$0xff]
      %v305 = vld [vmem:[%s1 + $0x3d0] sm:$0xff]
      %v306 = vld [vmem:[%s1 + $0x3d8] sm:$0xff]
      %v307 = vld [vmem:[%s1 + $0x3e0] sm:$0xff]
      %v308 = vld [vmem:[%s1 + $0x3e8] sm:$0xff]
      %v309 = vld [vmem:[%s1 + $0x3f0] sm:$0xff]
      %v310 = vld [vmem:[%s1 + $0x3f8] sm:$0xff]
      %s311 = scalar_lea.vmem %s1, 1024
      %v312 = vld [vmem:[%s311] sm:$0xff]
      %v313 = vld [vmem:[%s311 + $0x8] sm:$0xff]
      %v314 = vld [vmem:[%s311 + $0x10] sm:$0xff]
      %v315 = vld [vmem:[%s311 + $0x18] sm:$0xff]
      %v316 = vld [vmem:[%s311 + $0x20] sm:$0xff]
      %v317 = vld [vmem:[%s311 + $0x28] sm:$0xff]
      %v318 = vld [vmem:[%s311 + $0x30] sm:$0xff]
      %v319 = vld [vmem:[%s311 + $0x38] sm:$0xff]
      %v320 = vld [vmem:[%s311 + $0x40] sm:$0xff]
      %v321 = vld [vmem:[%s311 + $0x48] sm:$0xff]
      %v322 = vld [vmem:[%s311 + $0x50] sm:$0xff]
      %v323 = vld [vmem:[%s311 + $0x58] sm:$0xff]
      %v324 = vld [vmem:[%s311 + $0x60] sm:$0xff]
      %v325 = vld [vmem:[%s311 + $0x68] sm:$0xff]
      %v326 = vld [vmem:[%s311 + $0x70] sm:$0xff]
      %v327 = vld [vmem:[%s311 + $0x78] sm:$0xff]
      %v328 = vld [vmem:[%s311 + $0x80] sm:$0xff]
      %v329 = vld [vmem:[%s311 + $0x88] sm:$0xff]
      %v330 = vld [vmem:[%s311 + $0x90] sm:$0xff]
      %v331 = vld [vmem:[%s311 + $0x98] sm:$0xff]
      %v332 = vld [vmem:[%s311 + $0xa0] sm:$0xff]
      %v333 = vld [vmem:[%s311 + $0xa8] sm:$0xff]
      %v334 = vld [vmem:[%s311 + $0xb0] sm:$0xff]
      %v335 = vld [vmem:[%s311 + $0xb8] sm:$0xff]
      %v336 = vld [vmem:[%s311 + $0xc0] sm:$0xff]
      %v337 = vld [vmem:[%s311 + $0xc8] sm:$0xff]
      %v338 = vld [vmem:[%s311 + $0xd0] sm:$0xff]
      %v339 = vld [vmem:[%s311 + $0xd8] sm:$0xff]
      %v340 = vld [vmem:[%s311 + $0xe0] sm:$0xff]
      %v341 = vld [vmem:[%s311 + $0xe8] sm:$0xff]
      %v342 = vld [vmem:[%s311 + $0xf0] sm:$0xff]
      %v343 = vld [vmem:[%s311 + $0xf8] sm:$0xff]
      %v344 = vld [vmem:[%s311 + $0x100] sm:$0xff]
      %v345 = vld [vmem:[%s311 + $0x108] sm:$0xff]
      %v346 = vld [vmem:[%s311 + $0x110] sm:$0xff]
      %v347 = vld [vmem:[%s311 + $0x118] sm:$0xff]
      %v348 = vld [vmem:[%s311 + $0x120] sm:$0xff]
      %v349 = vld [vmem:[%s311 + $0x128] sm:$0xff]
      %v350 = vld [vmem:[%s311 + $0x130] sm:$0xff]
      %v351 = vld [vmem:[%s311 + $0x138] sm:$0xff]
      %v352 = vld [vmem:[%s311 + $0x140] sm:$0xff]
      %v353 = vld [vmem:[%s311 + $0x148] sm:$0xff]
      %v354 = vld [vmem:[%s311 + $0x150] sm:$0xff]
      %v355 = vld [vmem:[%s311 + $0x158] sm:$0xff]
      %v356 = vld [vmem:[%s311 + $0x160] sm:$0xff]
      %v357 = vld [vmem:[%s311 + $0x168] sm:$0xff]
      %v358 = vld [vmem:[%s311 + $0x170] sm:$0xff]
      %v359 = vld [vmem:[%s311 + $0x178] sm:$0xff]
      %v360 = vld [vmem:[%s311 + $0x180] sm:$0xff]
      %v361 = vld [vmem:[%s311 + $0x188] sm:$0xff]
      %v362 = vld [vmem:[%s311 + $0x190] sm:$0xff]
      %v363 = vld [vmem:[%s311 + $0x198] sm:$0xff]
      %v364 = vld [vmem:[%s311 + $0x1a0] sm:$0xff]
      %v365 = vld [vmem:[%s311 + $0x1a8] sm:$0xff]
      %v366 = vld [vmem:[%s311 + $0x1b0] sm:$0xff]
      %v367 = vld [vmem:[%s311 + $0x1b8] sm:$0xff]
      %v368 = vld [vmem:[%s311 + $0x1c0] sm:$0xff]
      %v369 = vld [vmem:[%s311 + $0x1c8] sm:$0xff]
      %v370 = vld [vmem:[%s311 + $0x1d0] sm:$0xff]
      %v371 = vld [vmem:[%s311 + $0x1d8] sm:$0xff]
      %v372 = vld [vmem:[%s311 + $0x1e0] sm:$0xff]
      %v373 = vld [vmem:[%s311 + $0x1e8] sm:$0xff]
      %v374 = vld [vmem:[%s311 + $0x1f0] sm:$0xff]
      %v375 = vld [vmem:[%s311 + $0x1f8] sm:$0xff]
      %v376 = vld [vmem:[%s311 + $0x200] sm:$0xff]
      %v377 = vld [vmem:[%s311 + $0x208] sm:$0xff]
      %v378 = vld [vmem:[%s311 + $0x210] sm:$0xff]
      %v379 = vld [vmem:[%s311 + $0x218] sm:$0xff]
      %v380 = vld [vmem:[%s311 + $0x220] sm:$0xff]
      %v381 = vld [vmem:[%s311 + $0x228] sm:$0xff]
      %v382 = vld [vmem:[%s311 + $0x230] sm:$0xff]
      %v383 = vld [vmem:[%s311 + $0x238] sm:$0xff]
      %v384 = vld [vmem:[%s311 + $0x240] sm:$0xff]
      %v385 = vld [vmem:[%s311 + $0x248] sm:$0xff]
      %v386 = vld [vmem:[%s311 + $0x250] sm:$0xff]
      %v387 = vld [vmem:[%s311 + $0x258] sm:$0xff]
      %v388 = vld [vmem:[%s311 + $0x260] sm:$0xff]
      %v389 = vld [vmem:[%s311 + $0x268] sm:$0xff]
      %v390 = vld [vmem:[%s311 + $0x270] sm:$0xff]
      %v391 = vld [vmem:[%s311 + $0x278] sm:$0xff]
      %v392 = vld [vmem:[%s311 + $0x280] sm:$0xff]
      %v393 = vld [vmem:[%s311 + $0x288] sm:$0xff]
      %v394 = vld [vmem:[%s311 + $0x290] sm:$0xff]
      %v395 = vld [vmem:[%s311 + $0x298] sm:$0xff]
      %v396 = vld [vmem:[%s311 + $0x2a0] sm:$0xff]
      %v397 = vld [vmem:[%s311 + $0x2a8] sm:$0xff]
      %v398 = vld [vmem:[%s311 + $0x2b0] sm:$0xff]
      %v399 = vld [vmem:[%s311 + $0x2b8] sm:$0xff]
      %v400 = vld [vmem:[%s311 + $0x2c0] sm:$0xff]
      %v401 = vld [vmem:[%s311 + $0x2c8] sm:$0xff]
      %v402 = vld [vmem:[%s311 + $0x2d0] sm:$0xff]
      %v403 = vld [vmem:[%s311 + $0x2d8] sm:$0xff]
      %v404 = vld [vmem:[%s311 + $0x2e0] sm:$0xff]
      %v405 = vld [vmem:[%s311 + $0x2e8] sm:$0xff]
      %v406 = vld [vmem:[%s311 + $0x2f0] sm:$0xff]
      %v407 = vld [vmem:[%s311 + $0x2f8] sm:$0xff]
      %v408 = vld [vmem:[%s311 + $0x300] sm:$0xff]
      %v409 = vld [vmem:[%s311 + $0x308] sm:$0xff]
      %v410 = vld [vmem:[%s311 + $0x310] sm:$0xff]
      %v411 = vld [vmem:[%s311 + $0x318] sm:$0xff]
      %v412 = vld [vmem:[%s311 + $0x320] sm:$0xff]
      %v413 = vld [vmem:[%s311 + $0x328] sm:$0xff]
      %v414 = vld [vmem:[%s311 + $0x330] sm:$0xff]
      %v415 = vld [vmem:[%s311 + $0x338] sm:$0xff]
      %v416 = vld [vmem:[%s311 + $0x340] sm:$0xff]
      %v417 = vld [vmem:[%s311 + $0x348] sm:$0xff]
      %v418 = vld [vmem:[%s311 + $0x350] sm:$0xff]
      %v419 = vld [vmem:[%s311 + $0x358] sm:$0xff]
      %v420 = vld [vmem:[%s311 + $0x360] sm:$0xff]
      %v421 = vld [vmem:[%s311 + $0x368] sm:$0xff]
      %v422 = vld [vmem:[%s311 + $0x370] sm:$0xff]
      %v423 = vld [vmem:[%s311 + $0x378] sm:$0xff]
      %v424 = vld [vmem:[%s311 + $0x380] sm:$0xff]
      %v425 = vld [vmem:[%s311 + $0x388] sm:$0xff]
      %v426 = vld [vmem:[%s311 + $0x390] sm:$0xff]
      %v427 = vld [vmem:[%s311 + $0x398] sm:$0xff]
      %v428 = vld [vmem:[%s311 + $0x3a0] sm:$0xff]
      %v429 = vld [vmem:[%s311 + $0x3a8] sm:$0xff]
      %v430 = vld [vmem:[%s311 + $0x3b0] sm:$0xff]
      %v431 = vld [vmem:[%s311 + $0x3b8] sm:$0xff]
      %v432 = vld [vmem:[%s311 + $0x3c0] sm:$0xff]
      %v433 = vld [vmem:[%s311 + $0x3c8] sm:$0xff]
      %v434 = vld [vmem:[%s311 + $0x3d0] sm:$0xff]
      %v435 = vld [vmem:[%s311 + $0x3d8] sm:$0xff]
      %v436 = vld [vmem:[%s311 + $0x3e0] sm:$0xff]
      %v437 = vld [vmem:[%s311 + $0x3e8] sm:$0xff]
      %v438 = vld [vmem:[%s311 + $0x3f0] sm:$0xff]
      %v439 = vld [vmem:[%s311 + $0x3f8] sm:$0xff]
      %v441 = vshrl.u32 %v179, 16
      %v443 = vshll.u32 %v179, 16
      %v445 = vrot.slane %v443, 1
      %v446 = vor.u32 %v441, %v445
      %v448 = vshrl.u32 %v180, 16
      %v450 = vshll.u32 %v180, 16
      %v452 = vrot.slane %v450, 1
      %v453 = vor.u32 %v448, %v452
      %v455 = vshrl.u32 %v181, 16
      %v457 = vshll.u32 %v181, 16
      %v459 = vrot.slane %v457, 1
      %v460 = vor.u32 %v455, %v459
      %v462 = vshrl.u32 %v182, 16
      %v464 = vshll.u32 %v182, 16
      %v466 = vrot.slane %v464, 1
      %v467 = vor.u32 %v462, %v466
      %v600 = vunpack.c.l.b16 %v312
      %v601 = vunpack.c.h.b16 %v312
      %v602 = vunpack.c.l.b16 %v313
      %v603 = vunpack.c.h.b16 %v313
      %v604 = vunpack.c.l.b16 %v314
      %v605 = vunpack.c.h.b16 %v314
      %v606 = vunpack.c.l.b16 %v315
      %v607 = vunpack.c.h.b16 %v315
      %v608 = vunpack.c.l.b16 %v316
      %v609 = vunpack.c.h.b16 %v316
      %v610 = vunpack.c.l.b16 %v317
      %v611 = vunpack.c.h.b16 %v317
      %v612 = vunpack.c.l.b16 %v318
      %v613 = vunpack.c.h.b16 %v318
      %v614 = vunpack.c.l.b16 %v319
      %v615 = vunpack.c.h.b16 %v319
      %v616 = vunpack.c.l.b16 %v320
      %v617 = vunpack.c.h.b16 %v320
      %v618 = vunpack.c.l.b16 %v321
      %v619 = vunpack.c.h.b16 %v321
      %v620 = vunpack.c.l.b16 %v322
      %v621 = vunpack.c.h.b16 %v322
      %v622 = vunpack.c.l.b16 %v323
      %v623 = vunpack.c.h.b16 %v323
      %v624 = vunpack.c.l.b16 %v324
      %v625 = vunpack.c.h.b16 %v324
      %v626 = vunpack.c.l.b16 %v325
      %v627 = vunpack.c.h.b16 %v325
      %v628 = vunpack.c.l.b16 %v326
      %v629 = vunpack.c.h.b16 %v326
      %v630 = vunpack.c.l.b16 %v327
      %v631 = vunpack.c.h.b16 %v327
      %v632 = vunpack.c.l.b16 %v328
      %v633 = vunpack.c.h.b16 %v328
      %v634 = vunpack.c.l.b16 %v329
      %v635 = vunpack.c.h.b16 %v329
      %v636 = vunpack.c.l.b16 %v330
      %v637 = vunpack.c.h.b16 %v330
      %v638 = vunpack.c.l.b16 %v331
      %v639 = vunpack.c.h.b16 %v331
      %v640 = vunpack.c.l.b16 %v332
      %v641 = vunpack.c.h.b16 %v332
      %v642 = vunpack.c.l.b16 %v333
      %v643 = vunpack.c.h.b16 %v333
      %v644 = vunpack.c.l.b16 %v334
      %v645 = vunpack.c.h.b16 %v334
      %v646 = vunpack.c.l.b16 %v335
      %v647 = vunpack.c.h.b16 %v335
      %v648 = vunpack.c.l.b16 %v336
      %v649 = vunpack.c.h.b16 %v336
      %v650 = vunpack.c.l.b16 %v337
      %v651 = vunpack.c.h.b16 %v337
      %v652 = vunpack.c.l.b16 %v338
      %v653 = vunpack.c.h.b16 %v338
      %v654 = vunpack.c.l.b16 %v339
      %v655 = vunpack.c.h.b16 %v339
      %v656 = vunpack.c.l.b16 %v340
      %v657 = vunpack.c.h.b16 %v340
      %v658 = vunpack.c.l.b16 %v341
      %v659 = vunpack.c.h.b16 %v341
      %v660 = vunpack.c.l.b16 %v342
      %v661 = vunpack.c.h.b16 %v342
      %v662 = vunpack.c.l.b16 %v343
      %v663 = vunpack.c.h.b16 %v343
      %v664 = vunpack.c.l.b16 %v344
      %v665 = vunpack.c.h.b16 %v344
      %v666 = vunpack.c.l.b16 %v345
      %v667 = vunpack.c.h.b16 %v345
      %v668 = vunpack.c.l.b16 %v346
      %v669 = vunpack.c.h.b16 %v346
      %v670 = vunpack.c.l.b16 %v347
      %v671 = vunpack.c.h.b16 %v347
      %v672 = vunpack.c.l.b16 %v348
      %v673 = vunpack.c.h.b16 %v348
      %v674 = vunpack.c.l.b16 %v349
      %v675 = vunpack.c.h.b16 %v349
      %v676 = vunpack.c.l.b16 %v350
      %v677 = vunpack.c.h.b16 %v350
      %v678 = vunpack.c.l.b16 %v351
      %v679 = vunpack.c.h.b16 %v351
      %v680 = vunpack.c.l.b16 %v352
      %v681 = vunpack.c.h.b16 %v352
      %v682 = vunpack.c.l.b16 %v353
      %v683 = vunpack.c.h.b16 %v353
      %v684 = vunpack.c.l.b16 %v354
      %v685 = vunpack.c.h.b16 %v354
      %v686 = vunpack.c.l.b16 %v355
      %v687 = vunpack.c.h.b16 %v355
      %v688 = vunpack.c.l.b16 %v356
      %v689 = vunpack.c.h.b16 %v356
      %v690 = vunpack.c.l.b16 %v357
      %v691 = vunpack.c.h.b16 %v357
      %v692 = vunpack.c.l.b16 %v358
      %v693 = vunpack.c.h.b16 %v358
      %v694 = vunpack.c.l.b16 %v359
      %v695 = vunpack.c.h.b16 %v359
      %v696 = vunpack.c.l.b16 %v360
      %v697 = vunpack.c.h.b16 %v360
      %v698 = vunpack.c.l.b16 %v361
      %v699 = vunpack.c.h.b16 %v361
      %v700 = vunpack.c.l.b16 %v362
      %v701 = vunpack.c.h.b16 %v362
      %v702 = vunpack.c.l.b16 %v363
      %v703 = vunpack.c.h.b16 %v363
      %v704 = vunpack.c.l.b16 %v364
      %v705 = vunpack.c.h.b16 %v364
      %v706 = vunpack.c.l.b16 %v365
      %v707 = vunpack.c.h.b16 %v365
      %v708 = vunpack.c.l.b16 %v366
      %v709 = vunpack.c.h.b16 %v366
      %v710 = vunpack.c.l.b16 %v367
      %v711 = vunpack.c.h.b16 %v367
      %v712 = vunpack.c.l.b16 %v368
      %v713 = vunpack.c.h.b16 %v368
      %v714 = vunpack.c.l.b16 %v369
      %v715 = vunpack.c.h.b16 %v369
      %v716 = vunpack.c.l.b16 %v370
      %v717 = vunpack.c.h.b16 %v370
      %v718 = vunpack.c.l.b16 %v371
      %v719 = vunpack.c.h.b16 %v371
      %v720 = vunpack.c.l.b16 %v372
      %v721 = vunpack.c.h.b16 %v372
      %v722 = vunpack.c.l.b16 %v373
      %v723 = vunpack.c.h.b16 %v373
      %v724 = vunpack.c.l.b16 %v374
      %v725 = vunpack.c.h.b16 %v374
      %v726 = vunpack.c.l.b16 %v375
      %v727 = vunpack.c.h.b16 %v375
      %v728 = vunpack.c.l.b16 %v376
      %v729 = vunpack.c.h.b16 %v376
      %v730 = vunpack.c.l.b16 %v377
      %v731 = vunpack.c.h.b16 %v377
      %v732 = vunpack.c.l.b16 %v378
      %v733 = vunpack.c.h.b16 %v378
      %v734 = vunpack.c.l.b16 %v379
      %v735 = vunpack.c.h.b16 %v379
      %v736 = vunpack.c.l.b16 %v380
      %v737 = vunpack.c.h.b16 %v380
      %v738 = vunpack.c.l.b16 %v381
      %v739 = vunpack.c.h.b16 %v381
      %v740 = vunpack.c.l.b16 %v382
      %v741 = vunpack.c.h.b16 %v382
      %v742 = vunpack.c.l.b16 %v383
      %v743 = vunpack.c.h.b16 %v383
      %v744 = vunpack.c.l.b16 %v384
      %v745 = vunpack.c.h.b16 %v384
      %v746 = vunpack.c.l.b16 %v385
      %v747 = vunpack.c.h.b16 %v385
      %v748 = vunpack.c.l.b16 %v386
      %v749 = vunpack.c.h.b16 %v386
      %v750 = vunpack.c.l.b16 %v387
      %v751 = vunpack.c.h.b16 %v387
      %v752 = vunpack.c.l.b16 %v388
      %v753 = vunpack.c.h.b16 %v388
      %v754 = vunpack.c.l.b16 %v389
      %v755 = vunpack.c.h.b16 %v389
      %v756 = vunpack.c.l.b16 %v390
      %v757 = vunpack.c.h.b16 %v390
      %v758 = vunpack.c.l.b16 %v391
      %v759 = vunpack.c.h.b16 %v391
      %v760 = vunpack.c.l.b16 %v392
      %v761 = vunpack.c.h.b16 %v392
      %v762 = vunpack.c.l.b16 %v393
      %v763 = vunpack.c.h.b16 %v393
      %v764 = vunpack.c.l.b16 %v394
      %v765 = vunpack.c.h.b16 %v394
      %v766 = vunpack.c.l.b16 %v395
      %v767 = vunpack.c.h.b16 %v395
      %v768 = vunpack.c.l.b16 %v396
      %v769 = vunpack.c.h.b16 %v396
      %v770 = vunpack.c.l.b16 %v397
      %v771 = vunpack.c.h.b16 %v397
      %v772 = vunpack.c.l.b16 %v398
      %v773 = vunpack.c.h.b16 %v398
      %v774 = vunpack.c.l.b16 %v399
      %v775 = vunpack.c.h.b16 %v399
      %v776 = vunpack.c.l.b16 %v400
      %v777 = vunpack.c.h.b16 %v400
      %v778 = vunpack.c.l.b16 %v401
      %v779 = vunpack.c.h.b16 %v401
      %v780 = vunpack.c.l.b16 %v402
      %v781 = vunpack.c.h.b16 %v402
      %v782 = vunpack.c.l.b16 %v403
      %v783 = vunpack.c.h.b16 %v403
      %v784 = vunpack.c.l.b16 %v404
      %v785 = vunpack.c.h.b16 %v404
      %v786 = vunpack.c.l.b16 %v405
      %v787 = vunpack.c.h.b16 %v405
      %v788 = vunpack.c.l.b16 %v406
      %v789 = vunpack.c.h.b16 %v406
      %v790 = vunpack.c.l.b16 %v407
      %v791 = vunpack.c.h.b16 %v407
      %v792 = vunpack.c.l.b16 %v408
      %v793 = vunpack.c.h.b16 %v408
      %v794 = vunpack.c.l.b16 %v409
      %v795 = vunpack.c.h.b16 %v409
      %v796 = vunpack.c.l.b16 %v410
      %v797 = vunpack.c.h.b16 %v410
      %v798 = vunpack.c.l.b16 %v411
      %v799 = vunpack.c.h.b16 %v411
      %v800 = vunpack.c.l.b16 %v412
      %v801 = vunpack.c.h.b16 %v412
      %v802 = vunpack.c.l.b16 %v413
      %v803 = vunpack.c.h.b16 %v413
      %v804 = vunpack.c.l.b16 %v414
      %v805 = vunpack.c.h.b16 %v414
      %v806 = vunpack.c.l.b16 %v415
      %v807 = vunpack.c.h.b16 %v415
      %v808 = vunpack.c.l.b16 %v416
      %v809 = vunpack.c.h.b16 %v416
      %v810 = vunpack.c.l.b16 %v417
      %v811 = vunpack.c.h.b16 %v417
      %v812 = vunpack.c.l.b16 %v418
      %v813 = vunpack.c.h.b16 %v418
      %v814 = vunpack.c.l.b16 %v419
      %v815 = vunpack.c.h.b16 %v419
      %v816 = vunpack.c.l.b16 %v420
      %v817 = vunpack.c.h.b16 %v420
      %v818 = vunpack.c.l.b16 %v421
      %v819 = vunpack.c.h.b16 %v421
      %v820 = vunpack.c.l.b16 %v422
      %v821 = vunpack.c.h.b16 %v422
      %v822 = vunpack.c.l.b16 %v423
      %v823 = vunpack.c.h.b16 %v423
      %v824 = vunpack.c.l.b16 %v424
      %v825 = vunpack.c.h.b16 %v424
      %v826 = vunpack.c.l.b16 %v425
      %v827 = vunpack.c.h.b16 %v425
      %v828 = vunpack.c.l.b16 %v426
      %v829 = vunpack.c.h.b16 %v426
      %v830 = vunpack.c.l.b16 %v427
      %v831 = vunpack.c.h.b16 %v427
      %v832 = vunpack.c.l.b16 %v428
      %v833 = vunpack.c.h.b16 %v428
      %v834 = vunpack.c.l.b16 %v429
      %v835 = vunpack.c.h.b16 %v429
      %v836 = vunpack.c.l.b16 %v430
      %v837 = vunpack.c.h.b16 %v430
      %v838 = vunpack.c.l.b16 %v431
      %v839 = vunpack.c.h.b16 %v431
      %v840 = vunpack.c.l.b16 %v432
      %v841 = vunpack.c.h.b16 %v432
      %v842 = vunpack.c.l.b16 %v433
      %v843 = vunpack.c.h.b16 %v433
      %v844 = vunpack.c.l.b16 %v434
      %v845 = vunpack.c.h.b16 %v434
      %v846 = vunpack.c.l.b16 %v435
      %v847 = vunpack.c.h.b16 %v435
      %v848 = vunpack.c.l.b16 %v436
      %v849 = vunpack.c.h.b16 %v436
      %v850 = vunpack.c.l.b16 %v437
      %v851 = vunpack.c.h.b16 %v437
      %v852 = vunpack.c.l.b16 %v438
      %v853 = vunpack.c.h.b16 %v438
      %v854 = vunpack.c.l.b16 %v439
      %v855 = vunpack.c.h.b16 %v439
      %v856 = vpack.c.b16 %v604, %v600
      %v857 = vpack.c.b16 %v605, %v601
      %v858 = vpack.c.b16 %v606, %v602
      %v859 = vpack.c.b16 %v607, %v603
      %v860 = vpack.c.b16 %v612, %v608
      %v861 = vpack.c.b16 %v613, %v609
      %v862 = vpack.c.b16 %v614, %v610
      %v863 = vpack.c.b16 %v615, %v611
      %v864 = vpack.c.b16 %v620, %v616
      %v865 = vpack.c.b16 %v621, %v617
      %v866 = vpack.c.b16 %v622, %v618
      %v867 = vpack.c.b16 %v623, %v619
      %v868 = vpack.c.b16 %v628, %v624
      %v869 = vpack.c.b16 %v629, %v625
      %v870 = vpack.c.b16 %v630, %v626
      %v871 = vpack.c.b16 %v631, %v627
      %v872 = vpack.c.b16 %v636, %v632
      %v873 = vpack.c.b16 %v637, %v633
      %v874 = vpack.c.b16 %v638, %v634
      %v875 = vpack.c.b16 %v639, %v635
      %v876 = vpack.c.b16 %v644, %v640
      %v877 = vpack.c.b16 %v645, %v641
      %v878 = vpack.c.b16 %v646, %v642
      %v879 = vpack.c.b16 %v647, %v643
      %v880 = vpack.c.b16 %v652, %v648
      %v881 = vpack.c.b16 %v653, %v649
      %v882 = vpack.c.b16 %v654, %v650
      %v883 = vpack.c.b16 %v655, %v651
      %v884 = vpack.c.b16 %v660, %v656
      %v885 = vpack.c.b16 %v661, %v657
      %v886 = vpack.c.b16 %v662, %v658
      %v887 = vpack.c.b16 %v663, %v659
      %v888 = vpack.c.b16 %v668, %v664
      %v889 = vpack.c.b16 %v669, %v665
      %v890 = vpack.c.b16 %v670, %v666
      %v891 = vpack.c.b16 %v671, %v667
      %v892 = vpack.c.b16 %v676, %v672
      %v893 = vpack.c.b16 %v677, %v673
      %v894 = vpack.c.b16 %v678, %v674
      %v895 = vpack.c.b16 %v679, %v675
      %v896 = vpack.c.b16 %v684, %v680
      %v897 = vpack.c.b16 %v685, %v681
      %v898 = vpack.c.b16 %v686, %v682
      %v899 = vpack.c.b16 %v687, %v683
      %v900 = vpack.c.b16 %v692, %v688
      %v901 = vpack.c.b16 %v693, %v689
      %v902 = vpack.c.b16 %v694, %v690
      %v903 = vpack.c.b16 %v695, %v691
      %v904 = vpack.c.b16 %v700, %v696
      %v905 = vpack.c.b16 %v701, %v697
      %v906 = vpack.c.b16 %v702, %v698
      %v907 = vpack.c.b16 %v703, %v699
      %v908 = vpack.c.b16 %v708, %v704
      %v909 = vpack.c.b16 %v709, %v705
      %v910 = vpack.c.b16 %v710, %v706
      %v911 = vpack.c.b16 %v711, %v707
      %v912 = vpack.c.b16 %v716, %v712
      %v913 = vpack.c.b16 %v717, %v713
      %v914 = vpack.c.b16 %v718, %v714
      %v915 = vpack.c.b16 %v719, %v715
      %v916 = vpack.c.b16 %v724, %v720
      %v917 = vpack.c.b16 %v725, %v721
      %v918 = vpack.c.b16 %v726, %v722
      %v919 = vpack.c.b16 %v727, %v723
      %v920 = vpack.c.b16 %v732, %v728
      %v921 = vpack.c.b16 %v733, %v729
      %v922 = vpack.c.b16 %v734, %v730
      %v923 = vpack.c.b16 %v735, %v731
      %v924 = vpack.c.b16 %v740, %v736
      %v925 = vpack.c.b16 %v741, %v737
      %v926 = vpack.c.b16 %v742, %v738
      %v927 = vpack.c.b16 %v743, %v739
      %v928 = vpack.c.b16 %v748, %v744
      %v929 = vpack.c.b16 %v749, %v745
      %v930 = vpack.c.b16 %v750, %v746
      %v931 = vpack.c.b16 %v751, %v747
      %v932 = vpack.c.b16 %v756, %v752
      %v933 = vpack.c.b16 %v757, %v753
      %v934 = vpack.c.b16 %v758, %v754
      %v935 = vpack.c.b16 %v759, %v755
      %v936 = vpack.c.b16 %v764, %v760
      %v937 = vpack.c.b16 %v765, %v761
      %v938 = vpack.c.b16 %v766, %v762
      %v939 = vpack.c.b16 %v767, %v763
      %v940 = vpack.c.b16 %v772, %v768
      %v941 = vpack.c.b16 %v773, %v769
      %v942 = vpack.c.b16 %v774, %v770
      %v943 = vpack.c.b16 %v775, %v771
      %v944 = vpack.c.b16 %v780, %v776
      %v945 = vpack.c.b16 %v781, %v777
      %v946 = vpack.c.b16 %v782, %v778
      %v947 = vpack.c.b16 %v783, %v779
      %v948 = vpack.c.b16 %v788, %v784
      %v949 = vpack.c.b16 %v789, %v785
      %v950 = vpack.c.b16 %v790, %v786
      %v951 = vpack.c.b16 %v791, %v787
      %v952 = vpack.c.b16 %v796, %v792
      %v953 = vpack.c.b16 %v797, %v793
      %v954 = vpack.c.b16 %v798, %v794
      %v955 = vpack.c.b16 %v799, %v795
      %v956 = vpack.c.b16 %v804, %v800
      %v957 = vpack.c.b16 %v805, %v801
      %v958 = vpack.c.b16 %v806, %v802
      %v959 = vpack.c.b16 %v807, %v803
      %v960 = vpack.c.b16 %v812, %v808
      %v961 = vpack.c.b16 %v813, %v809
      %v962 = vpack.c.b16 %v814, %v810
      %v963 = vpack.c.b16 %v815, %v811
      %v964 = vpack.c.b16 %v820, %v816
      %v965 = vpack.c.b16 %v821, %v817
      %v966 = vpack.c.b16 %v822, %v818
      %v967 = vpack.c.b16 %v823, %v819
      %v968 = vpack.c.b16 %v828, %v824
      %v969 = vpack.c.b16 %v829, %v825
      %v970 = vpack.c.b16 %v830, %v826
      %v971 = vpack.c.b16 %v831, %v827
      %v972 = vpack.c.b16 %v836, %v832
      %v973 = vpack.c.b16 %v837, %v833
      %v974 = vpack.c.b16 %v838, %v834
      %v975 = vpack.c.b16 %v839, %v835
      %v976 = vpack.c.b16 %v844, %v840
      %v977 = vpack.c.b16 %v845, %v841
      %v978 = vpack.c.b16 %v846, %v842
      %v979 = vpack.c.b16 %v847, %v843
      %v980 = vpack.c.b16 %v852, %v848
      %v981 = vpack.c.b16 %v853, %v849
      %v982 = vpack.c.b16 %v854, %v850
      %v983 = vpack.c.b16 %v855, %v851
      %1112 = vmatprep.subr.bf16.mxu0 %v857
      %1113 = vmatpush1.bf16.msra.mxu0 %v856
      %1114 = vmatprep.subr.bf16.mxu0 %v861
      %1115 = vmatpush1.bf16.msra.mxu0 %v860
      %1116 = vmatprep.subr.bf16.mxu0 %v865
      %1117 = vmatpush1.bf16.msra.mxu0 %v864
      %1118 = vmatprep.subr.bf16.mxu0 %v869
      %1119 = vmatpush1.bf16.msra.mxu0 %v868
      %1120 = vmatprep.subr.bf16.mxu0 %v873
      %1121 = vmatpush1.bf16.msra.mxu0 %v872
      %1122 = vmatprep.subr.bf16.mxu0 %v877
      %1123 = vmatpush1.bf16.msra.mxu0 %v876
      %1124 = vmatprep.subr.bf16.mxu0 %v881
      %1125 = vmatpush1.bf16.msra.mxu0 %v880
      %1126 = vmatprep.subr.bf16.mxu0 %v885
      %1127 = vmatpush1.bf16.msra.mxu0 %v884
      %1128 = vmatprep.subr.bf16.mxu0 %v889
      %1129 = vmatpush1.bf16.msra.mxu0 %v888
      %1130 = vmatprep.subr.bf16.mxu0 %v893
      %1131 = vmatpush1.bf16.msra.mxu0 %v892
      %1132 = vmatprep.subr.bf16.mxu0 %v897
      %1133 = vmatpush1.bf16.msra.mxu0 %v896
      %1134 = vmatprep.subr.bf16.mxu0 %v901
      %1135 = vmatpush1.bf16.msra.mxu0 %v900
      %1136 = vmatprep.subr.bf16.mxu0 %v905
      %1137 = vmatpush1.bf16.msra.mxu0 %v904
      %1138 = vmatprep.subr.bf16.mxu0 %v909
      %1139 = vmatpush1.bf16.msra.mxu0 %v908
      %1140 = vmatprep.subr.bf16.mxu0 %v913
      %1141 = vmatpush1.bf16.msra.mxu0 %v912
      %1142 = vmatprep.subr.bf16.mxu0 %v917
      %1143 = vmatpush1.bf16.msra.mxu0 %v916
      %1144 = vmatprep.mubr.bf16.mxu0 %v453
      %1145 = vmatmul.mubr.bf16.gmra.mrb[0].mxu0 %v446
      %v1146 = vpop.f32.mrb[0].mxu0
      %v1147 = vadd.f32 0.0, %v1146
      %v1148 = vpop.f32.mrb[0].mxu0
      %v1149 = vadd.f32 0.0, %v1148
      %v1150 = vpop.f32.mrb[0].mxu0
      %v1151 = vadd.f32 0.0, %v1150
      %v1152 = vpop.f32.mrb[0].mxu0
      %v1153 = vadd.f32 0.0, %v1152
      %1154 = vdwg.mxu0
      %1155 = vmatprep.subr.bf16.mxu0 %v921
      %1156 = vmatpush1.bf16.msra.mxu0 %v920
      %1157 = vmatprep.subr.bf16.mxu0 %v925
      %1158 = vmatpush1.bf16.msra.mxu0 %v924
      %1159 = vmatprep.subr.bf16.mxu0 %v929
      %1160 = vmatpush1.bf16.msra.mxu0 %v928
      %1161 = vmatprep.subr.bf16.mxu0 %v933
      %1162 = vmatpush1.bf16.msra.mxu0 %v932
      %1163 = vmatprep.subr.bf16.mxu0 %v937
      %1164 = vmatpush1.bf16.msra.mxu0 %v936
      %1165 = vmatprep.subr.bf16.mxu0 %v941
      %1166 = vmatpush1.bf16.msra.mxu0 %v940
      %1167 = vmatprep.subr.bf16.mxu0 %v945
      %1168 = vmatpush1.bf16.msra.mxu0 %v944
      %1169 = vmatprep.subr.bf16.mxu0 %v949
      %1170 = vmatpush1.bf16.msra.mxu0 %v948
      %1171 = vmatprep.subr.bf16.mxu0 %v953
      %1172 = vmatpush1.bf16.msra.mxu0 %v952
      %1173 = vmatprep.subr.bf16.mxu0 %v957
      %1174 = vmatpush1.bf16.msra.mxu0 %v956
      %1175 = vmatprep.subr.bf16.mxu0 %v961
      %1176 = vmatpush1.bf16.msra.mxu0 %v960
      %1177 = vmatprep.subr.bf16.mxu0 %v965
      %1178 = vmatpush1.bf16.msra.mxu0 %v964
      %1179 = vmatprep.subr.bf16.mxu0 %v969
      %1180 = vmatpush1.bf16.msra.mxu0 %v968
      %1181 = vmatprep.subr.bf16.mxu0 %v973
      %1182 = vmatpush1.bf16.msra.mxu0 %v972
      %1183 = vmatprep.subr.bf16.mxu0 %v977
      %1184 = vmatpush1.bf16.msra.mxu0 %v976
      %1185 = vmatprep.subr.bf16.mxu0 %v981
      %1186 = vmatpush1.bf16.msra.mxu0 %v980
      %1187 = vmatprep.mubr.bf16.mxu0 %v467
      %1188 = vmatmul.mubr.bf16.gmra.mrb[0].mxu0 %v460
      %v1189 = vpop.f32.mrb[0].mxu0
      %v1190 = vadd.f32 %v1147, %v1189
      %v1191 = vpop.f32.mrb[0].mxu0
      %v1192 = vadd.f32 %v1149, %v1191
      %v1193 = vpop.f32.mrb[0].mxu0
      %v1194 = vadd.f32 %v1151, %v1193
      %v1195 = vpop.f32.mrb[0].mxu0
      %v1196 = vadd.f32 %v1153, %v1195
      %1197 = vdwg.mxu0
      %1198 = vmatprep.subr.bf16.mxu0 %v859
      %1199 = vmatpush1.bf16.msra.mxu0 %v858
      %1200 = vmatprep.subr.bf16.mxu0 %v863
      %1201 = vmatpush1.bf16.msra.mxu0 %v862
      %1202 = vmatprep.subr.bf16.mxu0 %v867
      %1203 = vmatpush1.bf16.msra.mxu0 %v866
      %1204 = vmatprep.subr.bf16.mxu0 %v871
      %1205 = vmatpush1.bf16.msra.mxu0 %v870
      %1206 = vmatprep.subr.bf16.mxu0 %v875
      %1207 = vmatpush1.bf16.msra.mxu0 %v874
      %1208 = vmatprep.subr.bf16.mxu0 %v879
      %1209 = vmatpush1.bf16.msra.mxu0 %v878
      %1210 = vmatprep.subr.bf16.mxu0 %v883
      %1211 = vmatpush1.bf16.msra.mxu0 %v882
      %1212 = vmatprep.subr.bf16.mxu0 %v887
      %1213 = vmatpush1.bf16.msra.mxu0 %v886
      %1214 = vmatprep.subr.bf16.mxu0 %v891
      %1215 = vmatpush1.bf16.msra.mxu0 %v890
      %1216 = vmatprep.subr.bf16.mxu0 %v895
      %1217 = vmatpush1.bf16.msra.mxu0 %v894
      %1218 = vmatprep.subr.bf16.mxu0 %v899
      %1219 = vmatpush1.bf16.msra.mxu0 %v898
      %1220 = vmatprep.subr.bf16.mxu0 %v903
      %1221 = vmatpush1.bf16.msra.mxu0 %v902
      %1222 = vmatprep.subr.bf16.mxu0 %v907
      %1223 = vmatpush1.bf16.msra.mxu0 %v906
      %1224 = vmatprep.subr.bf16.mxu0 %v911
      %1225 = vmatpush1.bf16.msra.mxu0 %v910
      %1226 = vmatprep.subr.bf16.mxu0 %v915
      %1227 = vmatpush1.bf16.msra.mxu0 %v914
      %1228 = vmatprep.subr.bf16.mxu0 %v919
      %1229 = vmatpush1.bf16.msra.mxu0 %v918
      %1230 = vmatprep.mubr.bf16.mxu0 %v453
      %1231 = vmatmul.mubr.bf16.gmra.mrb[0].mxu0 %v446
      %v1232 = vpop.f32.mrb[0].mxu0
      %v1233 = vadd.f32 0.0, %v1232
      %v1234 = vpop.f32.mrb[0].mxu0
      %v1235 = vadd.f32 0.0, %v1234
      %v1236 = vpop.f32.mrb[0].mxu0
      %v1237 = vadd.f32 0.0, %v1236
      %v1238 = vpop.f32.mrb[0].mxu0
      %v1239 = vadd.f32 0.0, %v1238
      %1240 = vdwg.mxu0
      %1241 = vmatprep.subr.bf16.mxu0 %v923
      %1242 = vmatpush1.bf16.msra.mxu0 %v922
      %1243 = vmatprep.subr.bf16.mxu0 %v927
      %1244 = vmatpush1.bf16.msra.mxu0 %v926
      %1245 = vmatprep.subr.bf16.mxu0 %v931
      %1246 = vmatpush1.bf16.msra.mxu0 %v930
      %1247 = vmatprep.subr.bf16.mxu0 %v935
      %1248 = vmatpush1.bf16.msra.mxu0 %v934
      %1249 = vmatprep.subr.bf16.mxu0 %v939
      %1250 = vmatpush1.bf16.msra.mxu0 %v938
      %1251 = vmatprep.subr.bf16.mxu0 %v943
      %1252 = vmatpush1.bf16.msra.mxu0 %v942
      %1253 = vmatprep.subr.bf16.mxu0 %v947
      %1254 = vmatpush1.bf16.msra.mxu0 %v946
      %1255 = vmatprep.subr.bf16.mxu0 %v951
      %1256 = vmatpush1.bf16.msra.mxu0 %v950
      %1257 = vmatprep.subr.bf16.mxu0 %v955
      %1258 = vmatpush1.bf16.msra.mxu0 %v954
      %1259 = vmatprep.subr.bf16.mxu0 %v959
      %1260 = vmatpush1.bf16.msra.mxu0 %v958
      %1261 = vmatprep.subr.bf16.mxu0 %v963
      %1262 = vmatpush1.bf16.msra.mxu0 %v962
      %1263 = vmatprep.subr.bf16.mxu0 %v967
      %1264 = vmatpush1.bf16.msra.mxu0 %v966
      %1265 = vmatprep.subr.bf16.mxu0 %v971
      %1266 = vmatpush1.bf16.msra.mxu0 %v970
      %1267 = vmatprep.subr.bf16.mxu0 %v975
      %1268 = vmatpush1.bf16.msra.mxu0 %v974
      %1269 = vmatprep.subr.bf16.mxu0 %v979
      %1270 = vmatpush1.bf16.msra.mxu0 %v978
      %1271 = vmatprep.subr.bf16.mxu0 %v983
      %1272 = vmatpush1.bf16.msra.mxu0 %v982
      %1273 = vmatprep.mubr.bf16.mxu0 %v467
      %1274 = vmatmul.mubr.bf16.gmra.mrb[0].mxu0 %v460
      %v1275 = vpop.f32.mrb[0].mxu0
      %v1276 = vadd.f32 %v1233, %v1275
      %v1277 = vpop.f32.mrb[0].mxu0
      %v1278 = vadd.f32 %v1235, %v1277
      %v1279 = vpop.f32.mrb[0].mxu0
      %v1280 = vadd.f32 %v1237, %v1279
      %v1281 = vpop.f32.mrb[0].mxu0
      %v1282 = vadd.f32 %v1239, %v1281
      %1283 = vdwg.mxu0
      %v1412 = vunpack.c.l.b16 %v183
      %v1413 = vunpack.c.h.b16 %v183
      %v1414 = vunpack.c.l.b16 %v184
      %v1415 = vunpack.c.h.b16 %v184
      %v1416 = vunpack.c.l.b16 %v185
      %v1417 = vunpack.c.h.b16 %v185
      %v1418 = vunpack.c.l.b16 %v186
      %v1419 = vunpack.c.h.b16 %v186
      %v1420 = vunpack.c.l.b16 %v187
      %v1421 = vunpack.c.h.b16 %v187
      %v1422 = vunpack.c.l.b16 %v188
      %v1423 = vunpack.c.h.b16 %v188
      %v1424 = vunpack.c.l.b16 %v189
      %v1425 = vunpack.c.h.b16 %v189
      %v1426 = vunpack.c.l.b16 %v190
      %v1427 = vunpack.c.h.b16 %v190
      %v1428 = vunpack.c.l.b16 %v191
      %v1429 = vunpack.c.h.b16 %v191
      %v1430 = vunpack.c.l.b16 %v192
      %v1431 = vunpack.c.h.b16 %v192
      %v1432 = vunpack.c.l.b16 %v193
      %v1433 = vunpack.c.h.b16 %v193
      %v1434 = vunpack.c.l.b16 %v194
      %v1435 = vunpack.c.h.b16 %v194
      %v1436 = vunpack.c.l.b16 %v195
      %v1437 = vunpack.c.h.b16 %v195
      %v1438 = vunpack.c.l.b16 %v196
      %v1439 = vunpack.c.h.b16 %v196
      %v1440 = vunpack.c.l.b16 %v197
      %v1441 = vunpack.c.h.b16 %v197
      %v1442 = vunpack.c.l.b16 %v198
      %v1443 = vunpack.c.h.b16 %v198
      %v1444 = vunpack.c.l.b16 %v199
      %v1445 = vunpack.c.h.b16 %v199
      %v1446 = vunpack.c.l.b16 %v200
      %v1447 = vunpack.c.h.b16 %v200
      %v1448 = vunpack.c.l.b16 %v201
      %v1449 = vunpack.c.h.b16 %v201
      %v1450 = vunpack.c.l.b16 %v202
      %v1451 = vunpack.c.h.b16 %v202
      %v1452 = vunpack.c.l.b16 %v203
      %v1453 = vunpack.c.h.b16 %v203
      %v1454 = vunpack.c.l.b16 %v204
      %v1455 = vunpack.c.h.b16 %v204
      %v1456 = vunpack.c.l.b16 %v205
      %v1457 = vunpack.c.h.b16 %v205
      %v1458 = vunpack.c.l.b16 %v206
      %v1459 = vunpack.c.h.b16 %v206
      %v1460 = vunpack.c.l.b16 %v207
      %v1461 = vunpack.c.h.b16 %v207
      %v1462 = vunpack.c.l.b16 %v208
      %v1463 = vunpack.c.h.b16 %v208
      %v1464 = vunpack.c.l.b16 %v209
      %v1465 = vunpack.c.h.b16 %v209
      %v1466 = vunpack.c.l.b16 %v210
      %v1467 = vunpack.c.h.b16 %v210
      %v1468 = vunpack.c.l.b16 %v211
      %v1469 = vunpack.c.h.b16 %v211
      %v1470 = vunpack.c.l.b16 %v212
      %v1471 = vunpack.c.h.b16 %v212
      %v1472 = vunpack.c.l.b16 %v213
      %v1473 = vunpack.c.h.b16 %v213
      %v1474 = vunpack.c.l.b16 %v214
      %v1475 = vunpack.c.h.b16 %v214
      %v1476 = vunpack.c.l.b16 %v215
      %v1477 = vunpack.c.h.b16 %v215
      %v1478 = vunpack.c.l.b16 %v216
      %v1479 = vunpack.c.h.b16 %v216
      %v1480 = vunpack.c.l.b16 %v217
      %v1481 = vunpack.c.h.b16 %v217
      %v1482 = vunpack.c.l.b16 %v218
      %v1483 = vunpack.c.h.b16 %v218
      %v1484 = vunpack.c.l.b16 %v219
      %v1485 = vunpack.c.h.b16 %v219
      %v1486 = vunpack.c.l.b16 %v220
      %v1487 = vunpack.c.h.b16 %v220
      %v1488 = vunpack.c.l.b16 %v221
      %v1489 = vunpack.c.h.b16 %v221
      %v1490 = vunpack.c.l.b16 %v222
      %v1491 = vunpack.c.h.b16 %v222
      %v1492 = vunpack.c.l.b16 %v223
      %v1493 = vunpack.c.h.b16 %v223
      %v1494 = vunpack.c.l.b16 %v224
      %v1495 = vunpack.c.h.b16 %v224
      %v1496 = vunpack.c.l.b16 %v225
      %v1497 = vunpack.c.h.b16 %v225
      %v1498 = vunpack.c.l.b16 %v226
      %v1499 = vunpack.c.h.b16 %v226
      %v1500 = vunpack.c.l.b16 %v227
      %v1501 = vunpack.c.h.b16 %v227
      %v1502 = vunpack.c.l.b16 %v228
      %v1503 = vunpack.c.h.b16 %v228
      %v1504 = vunpack.c.l.b16 %v229
      %v1505 = vunpack.c.h.b16 %v229
      %v1506 = vunpack.c.l.b16 %v230
      %v1507 = vunpack.c.h.b16 %v230
      %v1508 = vunpack.c.l.b16 %v231
      %v1509 = vunpack.c.h.b16 %v231
      %v1510 = vunpack.c.l.b16 %v232
      %v1511 = vunpack.c.h.b16 %v232
      %v1512 = vunpack.c.l.b16 %v233
      %v1513 = vunpack.c.h.b16 %v233
      %v1514 = vunpack.c.l.b16 %v234
      %v1515 = vunpack.c.h.b16 %v234
      %v1516 = vunpack.c.l.b16 %v235
      %v1517 = vunpack.c.h.b16 %v235
      %v1518 = vunpack.c.l.b16 %v236
      %v1519 = vunpack.c.h.b16 %v236
      %v1520 = vunpack.c.l.b16 %v237
      %v1521 = vunpack.c.h.b16 %v237
      %v1522 = vunpack.c.l.b16 %v238
      %v1523 = vunpack.c.h.b16 %v238
      %v1524 = vunpack.c.l.b16 %v239
      %v1525 = vunpack.c.h.b16 %v239
      %v1526 = vunpack.c.l.b16 %v240
      %v1527 = vunpack.c.h.b16 %v240
      %v1528 = vunpack.c.l.b16 %v241
      %v1529 = vunpack.c.h.b16 %v241
      %v1530 = vunpack.c.l.b16 %v242
      %v1531 = vunpack.c.h.b16 %v242
      %v1532 = vunpack.c.l.b16 %v243
      %v1533 = vunpack.c.h.b16 %v243
      %v1534 = vunpack.c.l.b16 %v244
      %v1535 = vunpack.c.h.b16 %v244
      %v1536 = vunpack.c.l.b16 %v245
      %v1537 = vunpack.c.h.b16 %v245
      %v1538 = vunpack.c.l.b16 %v246
      %v1539 = vunpack.c.h.b16 %v246
      %v1540 = vunpack.c.l.b16 %v247
      %v1541 = vunpack.c.h.b16 %v247
      %v1542 = vunpack.c.l.b16 %v248
      %v1543 = vunpack.c.h.b16 %v248
      %v1544 = vunpack.c.l.b16 %v249
      %v1545 = vunpack.c.h.b16 %v249
      %v1546 = vunpack.c.l.b16 %v250
      %v1547 = vunpack.c.h.b16 %v250
      %v1548 = vunpack.c.l.b16 %v251
      %v1549 = vunpack.c.h.b16 %v251
      %v1550 = vunpack.c.l.b16 %v252
      %v1551 = vunpack.c.h.b16 %v252
      %v1552 = vunpack.c.l.b16 %v253
      %v1553 = vunpack.c.h.b16 %v253
      %v1554 = vunpack.c.l.b16 %v254
      %v1555 = vunpack.c.h.b16 %v254
      %v1556 = vunpack.c.l.b16 %v255
      %v1557 = vunpack.c.h.b16 %v255
      %v1558 = vunpack.c.l.b16 %v256
      %v1559 = vunpack.c.h.b16 %v256
      %v1560 = vunpack.c.l.b16 %v257
      %v1561 = vunpack.c.h.b16 %v257
      %v1562 = vunpack.c.l.b16 %v258
      %v1563 = vunpack.c.h.b16 %v258
      %v1564 = vunpack.c.l.b16 %v259
      %v1565 = vunpack.c.h.b16 %v259
      %v1566 = vunpack.c.l.b16 %v260
      %v1567 = vunpack.c.h.b16 %v260
      %v1568 = vunpack.c.l.b16 %v261
      %v1569 = vunpack.c.h.b16 %v261
      %v1570 = vunpack.c.l.b16 %v262
      %v1571 = vunpack.c.h.b16 %v262
      %v1572 = vunpack.c.l.b16 %v263
      %v1573 = vunpack.c.h.b16 %v263
      %v1574 = vunpack.c.l.b16 %v264
      %v1575 = vunpack.c.h.b16 %v264
      %v1576 = vunpack.c.l.b16 %v265
      %v1577 = vunpack.c.h.b16 %v265
      %v1578 = vunpack.c.l.b16 %v266
      %v1579 = vunpack.c.h.b16 %v266
      %v1580 = vunpack.c.l.b16 %v267
      %v1581 = vunpack.c.h.b16 %v267
      %v1582 = vunpack.c.l.b16 %v268
      %v1583 = vunpack.c.h.b16 %v268
      %v1584 = vunpack.c.l.b16 %v269
      %v1585 = vunpack.c.h.b16 %v269
      %v1586 = vunpack.c.l.b16 %v270
      %v1587 = vunpack.c.h.b16 %v270
      %v1588 = vunpack.c.l.b16 %v271
      %v1589 = vunpack.c.h.b16 %v271
      %v1590 = vunpack.c.l.b16 %v272
      %v1591 = vunpack.c.h.b16 %v272
      %v1592 = vunpack.c.l.b16 %v273
      %v1593 = vunpack.c.h.b16 %v273
      %v1594 = vunpack.c.l.b16 %v274
      %v1595 = vunpack.c.h.b16 %v274
      %v1596 = vunpack.c.l.b16 %v275
      %v1597 = vunpack.c.h.b16 %v275
      %v1598 = vunpack.c.l.b16 %v276
      %v1599 = vunpack.c.h.b16 %v276
      %v1600 = vunpack.c.l.b16 %v277
      %v1601 = vunpack.c.h.b16 %v277
      %v1602 = vunpack.c.l.b16 %v278
      %v1603 = vunpack.c.h.b16 %v278
      %v1604 = vunpack.c.l.b16 %v279
      %v1605 = vunpack.c.h.b16 %v279
      %v1606 = vunpack.c.l.b16 %v280
      %v1607 = vunpack.c.h.b16 %v280
      %v1608 = vunpack.c.l.b16 %v281
      %v1609 = vunpack.c.h.b16 %v281
      %v1610 = vunpack.c.l.b16 %v282
      %v1611 = vunpack.c.h.b16 %v282
      %v1612 = vunpack.c.l.b16 %v283
      %v1613 = vunpack.c.h.b16 %v283
      %v1614 = vunpack.c.l.b16 %v284
      %v1615 = vunpack.c.h.b16 %v284
      %v1616 = vunpack.c.l.b16 %v285
      %v1617 = vunpack.c.h.b16 %v285
      %v1618 = vunpack.c.l.b16 %v286
      %v1619 = vunpack.c.h.b16 %v286
      %v1620 = vunpack.c.l.b16 %v287
      %v1621 = vunpack.c.h.b16 %v287
      %v1622 = vunpack.c.l.b16 %v288
      %v1623 = vunpack.c.h.b16 %v288
      %v1624 = vunpack.c.l.b16 %v289
      %v1625 = vunpack.c.h.b16 %v289
      %v1626 = vunpack.c.l.b16 %v290
      %v1627 = vunpack.c.h.b16 %v290
      %v1628 = vunpack.c.l.b16 %v291
      %v1629 = vunpack.c.h.b16 %v291
      %v1630 = vunpack.c.l.b16 %v292
      %v1631 = vunpack.c.h.b16 %v292
      %v1632 = vunpack.c.l.b16 %v293
      %v1633 = vunpack.c.h.b16 %v293
      %v1634 = vunpack.c.l.b16 %v294
      %v1635 = vunpack.c.h.b16 %v294
      %v1636 = vunpack.c.l.b16 %v295
      %v1637 = vunpack.c.h.b16 %v295
      %v1638 = vunpack.c.l.b16 %v296
      %v1639 = vunpack.c.h.b16 %v296
      %v1640 = vunpack.c.l.b16 %v297
      %v1641 = vunpack.c.h.b16 %v297
      %v1642 = vunpack.c.l.b16 %v298
      %v1643 = vunpack.c.h.b16 %v298
      %v1644 = vunpack.c.l.b16 %v299
      %v1645 = vunpack.c.h.b16 %v299
      %v1646 = vunpack.c.l.b16 %v300
      %v1647 = vunpack.c.h.b16 %v300
      %v1648 = vunpack.c.l.b16 %v301
      %v1649 = vunpack.c.h.b16 %v301
      %v1650 = vunpack.c.l.b16 %v302
      %v1651 = vunpack.c.h.b16 %v302
      %v1652 = vunpack.c.l.b16 %v303
      %v1653 = vunpack.c.h.b16 %v303
      %v1654 = vunpack.c.l.b16 %v304
      %v1655 = vunpack.c.h.b16 %v304
      %v1656 = vunpack.c.l.b16 %v305
      %v1657 = vunpack.c.h.b16 %v305
      %v1658 = vunpack.c.l.b16 %v306
      %v1659 = vunpack.c.h.b16 %v306
      %v1660 = vunpack.c.l.b16 %v307
      %v1661 = vunpack.c.h.b16 %v307
      %v1662 = vunpack.c.l.b16 %v308
      %v1663 = vunpack.c.h.b16 %v308
      %v1664 = vunpack.c.l.b16 %v309
      %v1665 = vunpack.c.h.b16 %v309
      %v1666 = vunpack.c.l.b16 %v310
      %v1667 = vunpack.c.h.b16 %v310
      %v1668 = vpack.c.b16 %v1416, %v1412
      %v1669 = vpack.c.b16 %v1417, %v1413
      %v1670 = vpack.c.b16 %v1418, %v1414
      %v1671 = vpack.c.b16 %v1419, %v1415
      %v1672 = vpack.c.b16 %v1424, %v1420
      %v1673 = vpack.c.b16 %v1425, %v1421
      %v1674 = vpack.c.b16 %v1426, %v1422
      %v1675 = vpack.c.b16 %v1427, %v1423
      %v1676 = vpack.c.b16 %v1432, %v1428
      %v1677 = vpack.c.b16 %v1433, %v1429
      %v1678 = vpack.c.b16 %v1434, %v1430
      %v1679 = vpack.c.b16 %v1435, %v1431
      %v1680 = vpack.c.b16 %v1440, %v1436
      %v1681 = vpack.c.b16 %v1441, %v1437
      %v1682 = vpack.c.b16 %v1442, %v1438
      %v1683 = vpack.c.b16 %v1443, %v1439
      %v1684 = vpack.c.b16 %v1448, %v1444
      %v1685 = vpack.c.b16 %v1449, %v1445
      %v1686 = vpack.c.b16 %v1450, %v1446
      %v1687 = vpack.c.b16 %v1451, %v1447
      %v1688 = vpack.c.b16 %v1456, %v1452
      %v1689 = vpack.c.b16 %v1457, %v1453
      %v1690 = vpack.c.b16 %v1458, %v1454
      %v1691 = vpack.c.b16 %v1459, %v1455
      %v1692 = vpack.c.b16 %v1464, %v1460
      %v1693 = vpack.c.b16 %v1465, %v1461
      %v1694 = vpack.c.b16 %v1466, %v1462
      %v1695 = vpack.c.b16 %v1467, %v1463
      %v1696 = vpack.c.b16 %v1472, %v1468
      %v1697 = vpack.c.b16 %v1473, %v1469
      %v1698 = vpack.c.b16 %v1474, %v1470
      %v1699 = vpack.c.b16 %v1475, %v1471
      %v1700 = vpack.c.b16 %v1480, %v1476
      %v1701 = vpack.c.b16 %v1481, %v1477
      %v1702 = vpack.c.b16 %v1482, %v1478
      %v1703 = vpack.c.b16 %v1483, %v1479
      %v1704 = vpack.c.b16 %v1488, %v1484
      %v1705 = vpack.c.b16 %v1489, %v1485
      %v1706 = vpack.c.b16 %v1490, %v1486
      %v1707 = vpack.c.b16 %v1491, %v1487
      %v1708 = vpack.c.b16 %v1496, %v1492
      %v1709 = vpack.c.b16 %v1497, %v1493
      %v1710 = vpack.c.b16 %v1498, %v1494
      %v1711 = vpack.c.b16 %v1499, %v1495
      %v1712 = vpack.c.b16 %v1504, %v1500
      %v1713 = vpack.c.b16 %v1505, %v1501
      %v1714 = vpack.c.b16 %v1506, %v1502
      %v1715 = vpack.c.b16 %v1507, %v1503
      %v1716 = vpack.c.b16 %v1512, %v1508
      %v1717 = vpack.c.b16 %v1513, %v1509
      %v1718 = vpack.c.b16 %v1514, %v1510
      %v1719 = vpack.c.b16 %v1515, %v1511
      %v1720 = vpack.c.b16 %v1520, %v1516
      %v1721 = vpack.c.b16 %v1521, %v1517
      %v1722 = vpack.c.b16 %v1522, %v1518
      %v1723 = vpack.c.b16 %v1523, %v1519
      %v1724 = vpack.c.b16 %v1528, %v1524
      %v1725 = vpack.c.b16 %v1529, %v1525
      %v1726 = vpack.c.b16 %v1530, %v1526
      %v1727 = vpack.c.b16 %v1531, %v1527
      %v1728 = vpack.c.b16 %v1536, %v1532
      %v1729 = vpack.c.b16 %v1537, %v1533
      %v1730 = vpack.c.b16 %v1538, %v1534
      %v1731 = vpack.c.b16 %v1539, %v1535
      %v1732 = vpack.c.b16 %v1544, %v1540
      %v1733 = vpack.c.b16 %v1545, %v1541
      %v1734 = vpack.c.b16 %v1546, %v1542
      %v1735 = vpack.c.b16 %v1547, %v1543
      %v1736 = vpack.c.b16 %v1552, %v1548
      %v1737 = vpack.c.b16 %v1553, %v1549
      %v1738 = vpack.c.b16 %v1554, %v1550
      %v1739 = vpack.c.b16 %v1555, %v1551
      %v1740 = vpack.c.b16 %v1560, %v1556
      %v1741 = vpack.c.b16 %v1561, %v1557
      %v1742 = vpack.c.b16 %v1562, %v1558
      %v1743 = vpack.c.b16 %v1563, %v1559
      %v1744 = vpack.c.b16 %v1568, %v1564
      %v1745 = vpack.c.b16 %v1569, %v1565
      %v1746 = vpack.c.b16 %v1570, %v1566
      %v1747 = vpack.c.b16 %v1571, %v1567
      %v1748 = vpack.c.b16 %v1576, %v1572
      %v1749 = vpack.c.b16 %v1577, %v1573
      %v1750 = vpack.c.b16 %v1578, %v1574
      %v1751 = vpack.c.b16 %v1579, %v1575
      %v1752 = vpack.c.b16 %v1584, %v1580
      %v1753 = vpack.c.b16 %v1585, %v1581
      %v1754 = vpack.c.b16 %v1586, %v1582
      %v1755 = vpack.c.b16 %v1587, %v1583
      %v1756 = vpack.c.b16 %v1592, %v1588
      %v1757 = vpack.c.b16 %v1593, %v1589
      %v1758 = vpack.c.b16 %v1594, %v1590
      %v1759 = vpack.c.b16 %v1595, %v1591
      %v1760 = vpack.c.b16 %v1600, %v1596
      %v1761 = vpack.c.b16 %v1601, %v1597
      %v1762 = vpack.c.b16 %v1602, %v1598
      %v1763 = vpack.c.b16 %v1603, %v1599
      %v1764 = vpack.c.b16 %v1608, %v1604
      %v1765 = vpack.c.b16 %v1609, %v1605
      %v1766 = vpack.c.b16 %v1610, %v1606
      %v1767 = vpack.c.b16 %v1611, %v1607
      %v1768 = vpack.c.b16 %v1616, %v1612
      %v1769 = vpack.c.b16 %v1617, %v1613
      %v1770 = vpack.c.b16 %v1618, %v1614
      %v1771 = vpack.c.b16 %v1619, %v1615
      %v1772 = vpack.c.b16 %v1624, %v1620
      %v1773 = vpack.c.b16 %v1625, %v1621
      %v1774 = vpack.c.b16 %v1626, %v1622
      %v1775 = vpack.c.b16 %v1627, %v1623
      %v1776 = vpack.c.b16 %v1632, %v1628
      %v1777 = vpack.c.b16 %v1633, %v1629
      %v1778 = vpack.c.b16 %v1634, %v1630
      %v1779 = vpack.c.b16 %v1635, %v1631
      %v1780 = vpack.c.b16 %v1640, %v1636
      %v1781 = vpack.c.b16 %v1641, %v1637
      %v1782 = vpack.c.b16 %v1642, %v1638
      %v1783 = vpack.c.b16 %v1643, %v1639
      %v1784 = vpack.c.b16 %v1648, %v1644
      %v1785 = vpack.c.b16 %v1649, %v1645
      %v1786 = vpack.c.b16 %v1650, %v1646
      %v1787 = vpack.c.b16 %v1651, %v1647
      %v1788 = vpack.c.b16 %v1656, %v1652
      %v1789 = vpack.c.b16 %v1657, %v1653
      %v1790 = vpack.c.b16 %v1658, %v1654
      %v1791 = vpack.c.b16 %v1659, %v1655
      %v1792 = vpack.c.b16 %v1664, %v1660
      %v1793 = vpack.c.b16 %v1665, %v1661
      %v1794 = vpack.c.b16 %v1666, %v1662
      %v1795 = vpack.c.b16 %v1667, %v1663
      %1924 = vmatprep.subr.bf16.mxu0 %v1669
      %1925 = vmatpush1.bf16.msra.mxu0 %v1668
      %1926 = vmatprep.subr.bf16.mxu0 %v1673
      %1927 = vmatpush1.bf16.msra.mxu0 %v1672
      %1928 = vmatprep.subr.bf16.mxu0 %v1677
      %1929 = vmatpush1.bf16.msra.mxu0 %v1676
      %1930 = vmatprep.subr.bf16.mxu0 %v1681
      %1931 = vmatpush1.bf16.msra.mxu0 %v1680
      %1932 = vmatprep.subr.bf16.mxu0 %v1685
      %1933 = vmatpush1.bf16.msra.mxu0 %v1684
      %1934 = vmatprep.subr.bf16.mxu0 %v1689
      %1935 = vmatpush1.bf16.msra.mxu0 %v1688
      %1936 = vmatprep.subr.bf16.mxu0 %v1693
      %1937 = vmatpush1.bf16.msra.mxu0 %v1692
      %1938 = vmatprep.subr.bf16.mxu0 %v1697
      %1939 = vmatpush1.bf16.msra.mxu0 %v1696
      %1940 = vmatprep.subr.bf16.mxu0 %v1701
      %1941 = vmatpush1.bf16.msra.mxu0 %v1700
      %1942 = vmatprep.subr.bf16.mxu0 %v1705
      %1943 = vmatpush1.bf16.msra.mxu0 %v1704
      %1944 = vmatprep.subr.bf16.mxu0 %v1709
      %1945 = vmatpush1.bf16.msra.mxu0 %v1708
      %1946 = vmatprep.subr.bf16.mxu0 %v1713
      %1947 = vmatpush1.bf16.msra.mxu0 %v1712
      %1948 = vmatprep.subr.bf16.mxu0 %v1717
      %1949 = vmatpush1.bf16.msra.mxu0 %v1716
      %1950 = vmatprep.subr.bf16.mxu0 %v1721
      %1951 = vmatpush1.bf16.msra.mxu0 %v1720
      %1952 = vmatprep.subr.bf16.mxu0 %v1725
      %1953 = vmatpush1.bf16.msra.mxu0 %v1724
      %1954 = vmatprep.subr.bf16.mxu0 %v1729
      %1955 = vmatpush1.bf16.msra.mxu0 %v1728
      %1956 = vmatprep.mubr.bf16.mxu0 %v180
      %1957 = vmatmul.mubr.bf16.gmra.mrb[0].mxu0 %v179
      %v1958 = vpop.f32.mrb[0].mxu0
      %v1959 = vadd.f32 %v1190, %v1958
      %v1960 = vpop.f32.mrb[0].mxu0
      %v1961 = vadd.f32 %v1192, %v1960
      %v1962 = vpop.f32.mrb[0].mxu0
      %v1963 = vadd.f32 %v1194, %v1962
      %v1964 = vpop.f32.mrb[0].mxu0
      %v1965 = vadd.f32 %v1196, %v1964
      %1966 = vdwg.mxu0
      %1967 = vmatprep.subr.bf16.mxu0 %v1733
      %1968 = vmatpush1.bf16.msra.mxu0 %v1732
      %1969 = vmatprep.subr.bf16.mxu0 %v1737
      %1970 = vmatpush1.bf16.msra.mxu0 %v1736
      %1971 = vmatprep.subr.bf16.mxu0 %v1741
      %1972 = vmatpush1.bf16.msra.mxu0 %v1740
      %1973 = vmatprep.subr.bf16.mxu0 %v1745
      %1974 = vmatpush1.bf16.msra.mxu0 %v1744
      %1975 = vmatprep.subr.bf16.mxu0 %v1749
      %1976 = vmatpush1.bf16.msra.mxu0 %v1748
      %1977 = vmatprep.subr.bf16.mxu0 %v1753
      %1978 = vmatpush1.bf16.msra.mxu0 %v1752
      %1979 = vmatprep.subr.bf16.mxu0 %v1757
      %1980 = vmatpush1.bf16.msra.mxu0 %v1756
      %1981 = vmatprep.subr.bf16.mxu0 %v1761
      %1982 = vmatpush1.bf16.msra.mxu0 %v1760
      %1983 = vmatprep.subr.bf16.mxu0 %v1765
      %1984 = vmatpush1.bf16.msra.mxu0 %v1764
      %1985 = vmatprep.subr.bf16.mxu0 %v1769
      %1986 = vmatpush1.bf16.msra.mxu0 %v1768
      %1987 = vmatprep.subr.bf16.mxu0 %v1773
      %1988 = vmatpush1.bf16.msra.mxu0 %v1772
      %1989 = vmatprep.subr.bf16.mxu0 %v1777
      %1990 = vmatpush1.bf16.msra.mxu0 %v1776
      %1991 = vmatprep.subr.bf16.mxu0 %v1781
      %1992 = vmatpush1.bf16.msra.mxu0 %v1780
      %1993 = vmatprep.subr.bf16.mxu0 %v1785
      %1994 = vmatpush1.bf16.msra.mxu0 %v1784
      %1995 = vmatprep.subr.bf16.mxu0 %v1789
      %1996 = vmatpush1.bf16.msra.mxu0 %v1788
      %1997 = vmatprep.subr.bf16.mxu0 %v1793
      %1998 = vmatpush1.bf16.msra.mxu0 %v1792
      %1999 = vmatprep.mubr.bf16.mxu0 %v182
      %2000 = vmatmul.mubr.bf16.gmra.mrb[0].mxu0 %v181
      %v2001 = vpop.f32.mrb[0].mxu0
      %v2002 = vadd.f32 %v1959, %v2001
      %v2003 = vpop.f32.mrb[0].mxu0
      %v2004 = vadd.f32 %v1961, %v2003
      %v2005 = vpop.f32.mrb[0].mxu0
      %v2006 = vadd.f32 %v1963, %v2005
      %v2007 = vpop.f32.mrb[0].mxu0
      %v2008 = vadd.f32 %v1965, %v2007
      %2009 = vdwg.mxu0
      %2010 = vmatprep.subr.bf16.mxu0 %v1671
      %2011 = vmatpush1.bf16.msra.mxu0 %v1670
      %2012 = vmatprep.subr.bf16.mxu0 %v1675
      %2013 = vmatpush1.bf16.msra.mxu0 %v1674
      %2014 = vmatprep.subr.bf16.mxu0 %v1679
      %2015 = vmatpush1.bf16.msra.mxu0 %v1678
      %2016 = vmatprep.subr.bf16.mxu0 %v1683
      %2017 = vmatpush1.bf16.msra.mxu0 %v1682
      %2018 = vmatprep.subr.bf16.mxu0 %v1687
      %2019 = vmatpush1.bf16.msra.mxu0 %v1686
      %2020 = vmatprep.subr.bf16.mxu0 %v1691
      %2021 = vmatpush1.bf16.msra.mxu0 %v1690
      %2022 = vmatprep.subr.bf16.mxu0 %v1695
      %2023 = vmatpush1.bf16.msra.mxu0 %v1694
      %2024 = vmatprep.subr.bf16.mxu0 %v1699
      %2025 = vmatpush1.bf16.msra.mxu0 %v1698
      %2026 = vmatprep.subr.bf16.mxu0 %v1703
      %2027 = vmatpush1.bf16.msra.mxu0 %v1702
      %2028 = vmatprep.subr.bf16.mxu0 %v1707
      %2029 = vmatpush1.bf16.msra.mxu0 %v1706
      %2030 = vmatprep.subr.bf16.mxu0 %v1711
      %2031 = vmatpush1.bf16.msra.mxu0 %v1710
      %2032 = vmatprep.subr.bf16.mxu0 %v1715
      %2033 = vmatpush1.bf16.msra.mxu0 %v1714
      %2034 = vmatprep.subr.bf16.mxu0 %v1719
      %2035 = vmatpush1.bf16.msra.mxu0 %v1718
      %2036 = vmatprep.subr.bf16.mxu0 %v1723
      %2037 = vmatpush1.bf16.msra.mxu0 %v1722
      %2038 = vmatprep.subr.bf16.mxu0 %v1727
      %2039 = vmatpush1.bf16.msra.mxu0 %v1726
      %2040 = vmatprep.subr.bf16.mxu0 %v1731
      %2041 = vmatpush1.bf16.msra.mxu0 %v1730
      %2042 = vmatprep.mubr.bf16.mxu0 %v180
      %2043 = vmatmul.mubr.bf16.gmra.mrb[0].mxu0 %v179
      %v2044 = vpop.f32.mrb[0].mxu0
      %v2045 = vadd.f32 %v1276, %v2044
      %v2046 = vpop.f32.mrb[0].mxu0
      %v2047 = vadd.f32 %v1278, %v2046
      %v2048 = vpop.f32.mrb[0].mxu0
      %v2049 = vadd.f32 %v1280, %v2048
      %v2050 = vpop.f32.mrb[0].mxu0
      %v2051 = vadd.f32 %v1282, %v2050
      %2052 = vdwg.mxu0
      %2053 = vmatprep.subr.bf16.mxu0 %v1735
      %2054 = vmatpush1.bf16.msra.mxu0 %v1734
      %2055 = vmatprep.subr.bf16.mxu0 %v1739
      %2056 = vmatpush1.bf16.msra.mxu0 %v1738
      %2057 = vmatprep.subr.bf16.mxu0 %v1743
      %2058 = vmatpush1.bf16.msra.mxu0 %v1742
      %2059 = vmatprep.subr.bf16.mxu0 %v1747
      %2060 = vmatpush1.bf16.msra.mxu0 %v1746
      %2061 = vmatprep.subr.bf16.mxu0 %v1751
      %2062 = vmatpush1.bf16.msra.mxu0 %v1750
      %2063 = vmatprep.subr.bf16.mxu0 %v1755
      %2064 = vmatpush1.bf16.msra.mxu0 %v1754
      %2065 = vmatprep.subr.bf16.mxu0 %v1759
      %2066 = vmatpush1.bf16.msra.mxu0 %v1758
      %2067 = vmatprep.subr.bf16.mxu0 %v1763
      %2068 = vmatpush1.bf16.msra.mxu0 %v1762
      %2069 = vmatprep.subr.bf16.mxu0 %v1767
      %2070 = vmatpush1.bf16.msra.mxu0 %v1766
      %2071 = vmatprep.subr.bf16.mxu0 %v1771
      %2072 = vmatpush1.bf16.msra.mxu0 %v1770
      %2073 = vmatprep.subr.bf16.mxu0 %v1775
      %2074 = vmatpush1.bf16.msra.mxu0 %v1774
      %2075 = vmatprep.subr.bf16.mxu0 %v1779
      %2076 = vmatpush1.bf16.msra.mxu0 %v1778
      %2077 = vmatprep.subr.bf16.mxu0 %v1783
      %2078 = vmatpush1.bf16.msra.mxu0 %v1782
      %2079 = vmatprep.subr.bf16.mxu0 %v1787
      %2080 = vmatpush1.bf16.msra.mxu0 %v1786
      %2081 = vmatprep.subr.bf16.mxu0 %v1791
      %2082 = vmatpush1.bf16.msra.mxu0 %v1790
      %2083 = vmatprep.subr.bf16.mxu0 %v1795
      %2084 = vmatpush1.bf16.msra.mxu0 %v1794
      %2085 = vmatprep.mubr.bf16.mxu0 %v182
      %2086 = vmatmul.mubr.bf16.gmra.mrb[0].mxu0 %v181
      %v2087 = vpop.f32.mrb[0].mxu0
      %v2088 = vadd.f32 %v2045, %v2087
      %v2089 = vpop.f32.mrb[0].mxu0
      %v2090 = vadd.f32 %v2047, %v2089
      %v2091 = vpop.f32.mrb[0].mxu0
      %v2092 = vadd.f32 %v2049, %v2091
      %v2093 = vpop.f32.mrb[0].mxu0
      %v2094 = vadd.f32 %v2051, %v2093
      %2095 = vdwg.mxu0
      %s2096 = scalar_lea.vmem %s1, 2048
      %v2097 = vld [vmem:[%s2096] sm:$0xff]
      %v2098 = vld [vmem:[%s2096 + $0x8] sm:$0xff]
      %v2099 = vld [vmem:[%s2096 + $0x10] sm:$0xff]
      %v2100 = vld [vmem:[%s2096 + $0x18] sm:$0xff]
      %v2101 = vld [vmem:[%s2096 + $0x20] sm:$0xff]
      %v2102 = vld [vmem:[%s2096 + $0x28] sm:$0xff]
      %v2103 = vld [vmem:[%s2096 + $0x30] sm:$0xff]
      %v2104 = vld [vmem:[%s2096 + $0x38] sm:$0xff]
      %v2105 = vld [vmem:[%s2096 + $0x40] sm:$0xff]
      %v2106 = vld [vmem:[%s2096 + $0x48] sm:$0xff]
      %v2107 = vld [vmem:[%s2096 + $0x50] sm:$0xff]
      %v2108 = vld [vmem:[%s2096 + $0x58] sm:$0xff]
      %v2109 = vld [vmem:[%s2096 + $0x60] sm:$0xff]
      %v2110 = vld [vmem:[%s2096 + $0x68] sm:$0xff]
      %v2111 = vld [vmem:[%s2096 + $0x70] sm:$0xff]
      %v2112 = vld [vmem:[%s2096 + $0x78] sm:$0xff]
      %v2113 = vld [vmem:[%s2096 + $0x80] sm:$0xff]
      %v2114 = vld [vmem:[%s2096 + $0x88] sm:$0xff]
      %v2115 = vld [vmem:[%s2096 + $0x90] sm:$0xff]
      %v2116 = vld [vmem:[%s2096 + $0x98] sm:$0xff]
      %v2117 = vld [vmem:[%s2096 + $0xa0] sm:$0xff]
      %v2118 = vld [vmem:[%s2096 + $0xa8] sm:$0xff]
      %v2119 = vld [vmem:[%s2096 + $0xb0] sm:$0xff]
      %v2120 = vld [vmem:[%s2096 + $0xb8] sm:$0xff]
      %v2121 = vld [vmem:[%s2096 + $0xc0] sm:$0xff]
      %v2122 = vld [vmem:[%s2096 + $0xc8] sm:$0xff]
      %v2123 = vld [vmem:[%s2096 + $0xd0] sm:$0xff]
      %v2124 = vld [vmem:[%s2096 + $0xd8] sm:$0xff]
      %v2125 = vld [vmem:[%s2096 + $0xe0] sm:$0xff]
      %v2126 = vld [vmem:[%s2096 + $0xe8] sm:$0xff]
      %v2127 = vld [vmem:[%s2096 + $0xf0] sm:$0xff]
      %v2128 = vld [vmem:[%s2096 + $0xf8] sm:$0xff]
      %v2129 = vld [vmem:[%s2096 + $0x100] sm:$0xff]
      %v2130 = vld [vmem:[%s2096 + $0x108] sm:$0xff]
      %v2131 = vld [vmem:[%s2096 + $0x110] sm:$0xff]
      %v2132 = vld [vmem:[%s2096 + $0x118] sm:$0xff]
      %v2133 = vld [vmem:[%s2096 + $0x120] sm:$0xff]
      %v2134 = vld [vmem:[%s2096 + $0x128] sm:$0xff]
      %v2135 = vld [vmem:[%s2096 + $0x130] sm:$0xff]
      %v2136 = vld [vmem:[%s2096 + $0x138] sm:$0xff]
      %v2137 = vld [vmem:[%s2096 + $0x140] sm:$0xff]
      %v2138 = vld [vmem:[%s2096 + $0x148] sm:$0xff]
      %v2139 = vld [vmem:[%s2096 + $0x150] sm:$0xff]
      %v2140 = vld [vmem:[%s2096 + $0x158] sm:$0xff]
      %v2141 = vld [vmem:[%s2096 + $0x160] sm:$0xff]
      %v2142 = vld [vmem:[%s2096 + $0x168] sm:$0xff]
      %v2143 = vld [vmem:[%s2096 + $0x170] sm:$0xff]
      %v2144 = vld [vmem:[%s2096 + $0x178] sm:$0xff]
      %v2145 = vld [vmem:[%s2096 + $0x180] sm:$0xff]
      %v2146 = vld [vmem:[%s2096 + $0x188] sm:$0xff]
      %v2147 = vld [vmem:[%s2096 + $0x190] sm:$0xff]
      %v2148 = vld [vmem:[%s2096 + $0x198] sm:$0xff]
      %v2149 = vld [vmem:[%s2096 + $0x1a0] sm:$0xff]
      %v2150 = vld [vmem:[%s2096 + $0x1a8] sm:$0xff]
      %v2151 = vld [vmem:[%s2096 + $0x1b0] sm:$0xff]
      %v2152 = vld [vmem:[%s2096 + $0x1b8] sm:$0xff]
      %v2153 = vld [vmem:[%s2096 + $0x1c0] sm:$0xff]
      %v2154 = vld [vmem:[%s2096 + $0x1c8] sm:$0xff]
      %v2155 = vld [vmem:[%s2096 + $0x1d0] sm:$0xff]
      %v2156 = vld [vmem:[%s2096 + $0x1d8] sm:$0xff]
      %v2157 = vld [vmem:[%s2096 + $0x1e0] sm:$0xff]
      %v2158 = vld [vmem:[%s2096 + $0x1e8] sm:$0xff]
      %v2159 = vld [vmem:[%s2096 + $0x1f0] sm:$0xff]
      %v2160 = vld [vmem:[%s2096 + $0x1f8] sm:$0xff]
      %v2161 = vld [vmem:[%s2096 + $0x200] sm:$0xff]
      %v2162 = vld [vmem:[%s2096 + $0x208] sm:$0xff]
      %v2163 = vld [vmem:[%s2096 + $0x210] sm:$0xff]
      %v2164 = vld [vmem:[%s2096 + $0x218] sm:$0xff]
      %v2165 = vld [vmem:[%s2096 + $0x220] sm:$0xff]
      %v2166 = vld [vmem:[%s2096 + $0x228] sm:$0xff]
      %v2167 = vld [vmem:[%s2096 + $0x230] sm:$0xff]
      %v2168 = vld [vmem:[%s2096 + $0x238] sm:$0xff]
      %v2169 = vld [vmem:[%s2096 + $0x240] sm:$0xff]
      %v2170 = vld [vmem:[%s2096 + $0x248] sm:$0xff]
      %v2171 = vld [vmem:[%s2096 + $0x250] sm:$0xff]
      %v2172 = vld [vmem:[%s2096 + $0x258] sm:$0xff]
      %v2173 = vld [vmem:[%s2096 + $0x260] sm:$0xff]
      %v2174 = vld [vmem:[%s2096 + $0x268] sm:$0xff]
      %v2175 = vld [vmem:[%s2096 + $0x270] sm:$0xff]
      %v2176 = vld [vmem:[%s2096 + $0x278] sm:$0xff]
      %v2177 = vld [vmem:[%s2096 + $0x280] sm:$0xff]
      %v2178 = vld [vmem:[%s2096 + $0x288] sm:$0xff]
      %v2179 = vld [vmem:[%s2096 + $0x290] sm:$0xff]
      %v2180 = vld [vmem:[%s2096 + $0x298] sm:$0xff]
      %v2181 = vld [vmem:[%s2096 + $0x2a0] sm:$0xff]
      %v2182 = vld [vmem:[%s2096 + $0x2a8] sm:$0xff]
      %v2183 = vld [vmem:[%s2096 + $0x2b0] sm:$0xff]
      %v2184 = vld [vmem:[%s2096 + $0x2b8] sm:$0xff]
      %v2185 = vld [vmem:[%s2096 + $0x2c0] sm:$0xff]
      %v2186 = vld [vmem:[%s2096 + $0x2c8] sm:$0xff]
      %v2187 = vld [vmem:[%s2096 + $0x2d0] sm:$0xff]
      %v2188 = vld [vmem:[%s2096 + $0x2d8] sm:$0xff]
      %v2189 = vld [vmem:[%s2096 + $0x2e0] sm:$0xff]
      %v2190 = vld [vmem:[%s2096 + $0x2e8] sm:$0xff]
      %v2191 = vld [vmem:[%s2096 + $0x2f0] sm:$0xff]
      %v2192 = vld [vmem:[%s2096 + $0x2f8] sm:$0xff]
      %v2193 = vld [vmem:[%s2096 + $0x300] sm:$0xff]
      %v2194 = vld [vmem:[%s2096 + $0x308] sm:$0xff]
      %v2195 = vld [vmem:[%s2096 + $0x310] sm:$0xff]
      %v2196 = vld [vmem:[%s2096 + $0x318] sm:$0xff]
      %v2197 = vld [vmem:[%s2096 + $0x320] sm:$0xff]
      %v2198 = vld [vmem:[%s2096 + $0x328] sm:$0xff]
      %v2199 = vld [vmem:[%s2096 + $0x330] sm:$0xff]
      %v2200 = vld [vmem:[%s2096 + $0x338] sm:$0xff]
      %v2201 = vld [vmem:[%s2096 + $0x340] sm:$0xff]
      %v2202 = vld [vmem:[%s2096 + $0x348] sm:$0xff]
      %v2203 = vld [vmem:[%s2096 + $0x350] sm:$0xff]
      %v2204 = vld [vmem:[%s2096 + $0x358] sm:$0xff]
      %v2205 = vld [vmem:[%s2096 + $0x360] sm:$0xff]
      %v2206 = vld [vmem:[%s2096 + $0x368] sm:$0xff]
      %v2207 = vld [vmem:[%s2096 + $0x370] sm:$0xff]
      %v2208 = vld [vmem:[%s2096 + $0x378] sm:$0xff]
      %v2209 = vld [vmem:[%s2096 + $0x380] sm:$0xff]
      %v2210 = vld [vmem:[%s2096 + $0x388] sm:$0xff]
      %v2211 = vld [vmem:[%s2096 + $0x390] sm:$0xff]
      %v2212 = vld [vmem:[%s2096 + $0x398] sm:$0xff]
      %v2213 = vld [vmem:[%s2096 + $0x3a0] sm:$0xff]
      %v2214 = vld [vmem:[%s2096 + $0x3a8] sm:$0xff]
      %v2215 = vld [vmem:[%s2096 + $0x3b0] sm:$0xff]
      %v2216 = vld [vmem:[%s2096 + $0x3b8] sm:$0xff]
      %v2217 = vld [vmem:[%s2096 + $0x3c0] sm:$0xff]
      %v2218 = vld [vmem:[%s2096 + $0x3c8] sm:$0xff]
      %v2219 = vld [vmem:[%s2096 + $0x3d0] sm:$0xff]
      %v2220 = vld [vmem:[%s2096 + $0x3d8] sm:$0xff]
      %v2221 = vld [vmem:[%s2096 + $0x3e0] sm:$0xff]
      %v2222 = vld [vmem:[%s2096 + $0x3e8] sm:$0xff]
      %v2223 = vld [vmem:[%s2096 + $0x3f0] sm:$0xff]
      %v2224 = vld [vmem:[%s2096 + $0x3f8] sm:$0xff]
      %v2229 = vrot.slane %v179, 1
      %v2230 = vrot.slane %v180, 1
      %v2231 = vrot.slane %v181, 1
      %v2232 = vrot.slane %v182, 1
      %v2365 = vunpack.c.l.b16 %v2097
      %v2366 = vunpack.c.h.b16 %v2097
      %v2367 = vunpack.c.l.b16 %v2098
      %v2368 = vunpack.c.h.b16 %v2098
      %v2369 = vunpack.c.l.b16 %v2099
      %v2370 = vunpack.c.h.b16 %v2099
      %v2371 = vunpack.c.l.b16 %v2100
      %v2372 = vunpack.c.h.b16 %v2100
      %v2373 = vunpack.c.l.b16 %v2101
      %v2374 = vunpack.c.h.b16 %v2101
      %v2375 = vunpack.c.l.b16 %v2102
      %v2376 = vunpack.c.h.b16 %v2102
      %v2377 = vunpack.c.l.b16 %v2103
      %v2378 = vunpack.c.h.b16 %v2103
      %v2379 = vunpack.c.l.b16 %v2104
      %v2380 = vunpack.c.h.b16 %v2104
      %v2381 = vunpack.c.l.b16 %v2105
      %v2382 = vunpack.c.h.b16 %v2105
      %v2383 = vunpack.c.l.b16 %v2106
      %v2384 = vunpack.c.h.b16 %v2106
      %v2385 = vunpack.c.l.b16 %v2107
      %v2386 = vunpack.c.h.b16 %v2107
      %v2387 = vunpack.c.l.b16 %v2108
      %v2388 = vunpack.c.h.b16 %v2108
      %v2389 = vunpack.c.l.b16 %v2109
      %v2390 = vunpack.c.h.b16 %v2109
      %v2391 = vunpack.c.l.b16 %v2110
      %v2392 = vunpack.c.h.b16 %v2110
      %v2393 = vunpack.c.l.b16 %v2111
      %v2394 = vunpack.c.h.b16 %v2111
      %v2395 = vunpack.c.l.b16 %v2112
      %v2396 = vunpack.c.h.b16 %v2112
      %v2397 = vunpack.c.l.b16 %v2113
      %v2398 = vunpack.c.h.b16 %v2113
      %v2399 = vunpack.c.l.b16 %v2114
      %v2400 = vunpack.c.h.b16 %v2114
      %v2401 = vunpack.c.l.b16 %v2115
      %v2402 = vunpack.c.h.b16 %v2115
      %v2403 = vunpack.c.l.b16 %v2116
      %v2404 = vunpack.c.h.b16 %v2116
      %v2405 = vunpack.c.l.b16 %v2117
      %v2406 = vunpack.c.h.b16 %v2117
      %v2407 = vunpack.c.l.b16 %v2118
      %v2408 = vunpack.c.h.b16 %v2118
      %v2409 = vunpack.c.l.b16 %v2119
      %v2410 = vunpack.c.h.b16 %v2119
      %v2411 = vunpack.c.l.b16 %v2120
      %v2412 = vunpack.c.h.b16 %v2120
      %v2413 = vunpack.c.l.b16 %v2121
      %v2414 = vunpack.c.h.b16 %v2121
      %v2415 = vunpack.c.l.b16 %v2122
      %v2416 = vunpack.c.h.b16 %v2122
      %v2417 = vunpack.c.l.b16 %v2123
      %v2418 = vunpack.c.h.b16 %v2123
      %v2419 = vunpack.c.l.b16 %v2124
      %v2420 = vunpack.c.h.b16 %v2124
      %v2421 = vunpack.c.l.b16 %v2125
      %v2422 = vunpack.c.h.b16 %v2125
      %v2423 = vunpack.c.l.b16 %v2126
      %v2424 = vunpack.c.h.b16 %v2126
      %v2425 = vunpack.c.l.b16 %v2127
      %v2426 = vunpack.c.h.b16 %v2127
      %v2427 = vunpack.c.l.b16 %v2128
      %v2428 = vunpack.c.h.b16 %v2128
      %v2429 = vunpack.c.l.b16 %v2129
      %v2430 = vunpack.c.h.b16 %v2129
      %v2431 = vunpack.c.l.b16 %v2130
      %v2432 = vunpack.c.h.b16 %v2130
      %v2433 = vunpack.c.l.b16 %v2131
      %v2434 = vunpack.c.h.b16 %v2131
      %v2435 = vunpack.c.l.b16 %v2132
      %v2436 = vunpack.c.h.b16 %v2132
      %v2437 = vunpack.c.l.b16 %v2133
      %v2438 = vunpack.c.h.b16 %v2133
      %v2439 = vunpack.c.l.b16 %v2134
      %v2440 = vunpack.c.h.b16 %v2134
      %v2441 = vunpack.c.l.b16 %v2135
      %v2442 = vunpack.c.h.b16 %v2135
      %v2443 = vunpack.c.l.b16 %v2136
      %v2444 = vunpack.c.h.b16 %v2136
      %v2445 = vunpack.c.l.b16 %v2137
      %v2446 = vunpack.c.h.b16 %v2137
      %v2447 = vunpack.c.l.b16 %v2138
      %v2448 = vunpack.c.h.b16 %v2138
      %v2449 = vunpack.c.l.b16 %v2139
      %v2450 = vunpack.c.h.b16 %v2139
      %v2451 = vunpack.c.l.b16 %v2140
      %v2452 = vunpack.c.h.b16 %v2140
      %v2453 = vunpack.c.l.b16 %v2141
      %v2454 = vunpack.c.h.b16 %v2141
      %v2455 = vunpack.c.l.b16 %v2142
      %v2456 = vunpack.c.h.b16 %v2142
      %v2457 = vunpack.c.l.b16 %v2143
      %v2458 = vunpack.c.h.b16 %v2143
      %v2459 = vunpack.c.l.b16 %v2144
      %v2460 = vunpack.c.h.b16 %v2144
      %v2461 = vunpack.c.l.b16 %v2145
      %v2462 = vunpack.c.h.b16 %v2145
      %v2463 = vunpack.c.l.b16 %v2146
      %v2464 = vunpack.c.h.b16 %v2146
      %v2465 = vunpack.c.l.b16 %v2147
      %v2466 = vunpack.c.h.b16 %v2147
      %v2467 = vunpack.c.l.b16 %v2148
      %v2468 = vunpack.c.h.b16 %v2148
      %v2469 = vunpack.c.l.b16 %v2149
      %v2470 = vunpack.c.h.b16 %v2149
      %v2471 = vunpack.c.l.b16 %v2150
      %v2472 = vunpack.c.h.b16 %v2150
      %v2473 = vunpack.c.l.b16 %v2151
      %v2474 = vunpack.c.h.b16 %v2151
      %v2475 = vunpack.c.l.b16 %v2152
      %v2476 = vunpack.c.h.b16 %v2152
      %v2477 = vunpack.c.l.b16 %v2153
      %v2478 = vunpack.c.h.b16 %v2153
      %v2479 = vunpack.c.l.b16 %v2154
      %v2480 = vunpack.c.h.b16 %v2154
      %v2481 = vunpack.c.l.b16 %v2155
      %v2482 = vunpack.c.h.b16 %v2155
      %v2483 = vunpack.c.l.b16 %v2156
      %v2484 = vunpack.c.h.b16 %v2156
      %v2485 = vunpack.c.l.b16 %v2157
      %v2486 = vunpack.c.h.b16 %v2157
      %v2487 = vunpack.c.l.b16 %v2158
      %v2488 = vunpack.c.h.b16 %v2158
      %v2489 = vunpack.c.l.b16 %v2159
      %v2490 = vunpack.c.h.b16 %v2159
      %v2491 = vunpack.c.l.b16 %v2160
      %v2492 = vunpack.c.h.b16 %v2160
      %v2493 = vunpack.c.l.b16 %v2161
      %v2494 = vunpack.c.h.b16 %v2161
      %v2495 = vunpack.c.l.b16 %v2162
      %v2496 = vunpack.c.h.b16 %v2162
      %v2497 = vunpack.c.l.b16 %v2163
      %v2498 = vunpack.c.h.b16 %v2163
      %v2499 = vunpack.c.l.b16 %v2164
      %v2500 = vunpack.c.h.b16 %v2164
      %v2501 = vunpack.c.l.b16 %v2165
      %v2502 = vunpack.c.h.b16 %v2165
      %v2503 = vunpack.c.l.b16 %v2166
      %v2504 = vunpack.c.h.b16 %v2166
      %v2505 = vunpack.c.l.b16 %v2167
      %v2506 = vunpack.c.h.b16 %v2167
      %v2507 = vunpack.c.l.b16 %v2168
      %v2508 = vunpack.c.h.b16 %v2168
      %v2509 = vunpack.c.l.b16 %v2169
      %v2510 = vunpack.c.h.b16 %v2169
      %v2511 = vunpack.c.l.b16 %v2170
      %v2512 = vunpack.c.h.b16 %v2170
      %v2513 = vunpack.c.l.b16 %v2171
      %v2514 = vunpack.c.h.b16 %v2171
      %v2515 = vunpack.c.l.b16 %v2172
      %v2516 = vunpack.c.h.b16 %v2172
      %v2517 = vunpack.c.l.b16 %v2173
      %v2518 = vunpack.c.h.b16 %v2173
      %v2519 = vunpack.c.l.b16 %v2174
      %v2520 = vunpack.c.h.b16 %v2174
      %v2521 = vunpack.c.l.b16 %v2175
      %v2522 = vunpack.c.h.b16 %v2175
      %v2523 = vunpack.c.l.b16 %v2176
      %v2524 = vunpack.c.h.b16 %v2176
      %v2525 = vunpack.c.l.b16 %v2177
      %v2526 = vunpack.c.h.b16 %v2177
      %v2527 = vunpack.c.l.b16 %v2178
      %v2528 = vunpack.c.h.b16 %v2178
      %v2529 = vunpack.c.l.b16 %v2179
      %v2530 = vunpack.c.h.b16 %v2179
      %v2531 = vunpack.c.l.b16 %v2180
      %v2532 = vunpack.c.h.b16 %v2180
      %v2533 = vunpack.c.l.b16 %v2181
      %v2534 = vunpack.c.h.b16 %v2181
      %v2535 = vunpack.c.l.b16 %v2182
      %v2536 = vunpack.c.h.b16 %v2182
      %v2537 = vunpack.c.l.b16 %v2183
      %v2538 = vunpack.c.h.b16 %v2183
      %v2539 = vunpack.c.l.b16 %v2184
      %v2540 = vunpack.c.h.b16 %v2184
      %v2541 = vunpack.c.l.b16 %v2185
      %v2542 = vunpack.c.h.b16 %v2185
      %v2543 = vunpack.c.l.b16 %v2186
      %v2544 = vunpack.c.h.b16 %v2186
      %v2545 = vunpack.c.l.b16 %v2187
      %v2546 = vunpack.c.h.b16 %v2187
      %v2547 = vunpack.c.l.b16 %v2188
      %v2548 = vunpack.c.h.b16 %v2188
      %v2549 = vunpack.c.l.b16 %v2189
      %v2550 = vunpack.c.h.b16 %v2189
      %v2551 = vunpack.c.l.b16 %v2190
      %v2552 = vunpack.c.h.b16 %v2190
      %v2553 = vunpack.c.l.b16 %v2191
      %v2554 = vunpack.c.h.b16 %v2191
      %v2555 = vunpack.c.l.b16 %v2192
      %v2556 = vunpack.c.h.b16 %v2192
      %v2557 = vunpack.c.l.b16 %v2193
      %v2558 = vunpack.c.h.b16 %v2193
      %v2559 = vunpack.c.l.b16 %v2194
      %v2560 = vunpack.c.h.b16 %v2194
      %v2561 = vunpack.c.l.b16 %v2195
      %v2562 = vunpack.c.h.b16 %v2195
      %v2563 = vunpack.c.l.b16 %v2196
      %v2564 = vunpack.c.h.b16 %v2196
      %v2565 = vunpack.c.l.b16 %v2197
      %v2566 = vunpack.c.h.b16 %v2197
      %v2567 = vunpack.c.l.b16 %v2198
      %v2568 = vunpack.c.h.b16 %v2198
      %v2569 = vunpack.c.l.b16 %v2199
      %v2570 = vunpack.c.h.b16 %v2199
      %v2571 = vunpack.c.l.b16 %v2200
      %v2572 = vunpack.c.h.b16 %v2200
      %v2573 = vunpack.c.l.b16 %v2201
      %v2574 = vunpack.c.h.b16 %v2201
      %v2575 = vunpack.c.l.b16 %v2202
      %v2576 = vunpack.c.h.b16 %v2202
      %v2577 = vunpack.c.l.b16 %v2203
      %v2578 = vunpack.c.h.b16 %v2203
      %v2579 = vunpack.c.l.b16 %v2204
      %v2580 = vunpack.c.h.b16 %v2204
      %v2581 = vunpack.c.l.b16 %v2205
      %v2582 = vunpack.c.h.b16 %v2205
      %v2583 = vunpack.c.l.b16 %v2206
      %v2584 = vunpack.c.h.b16 %v2206
      %v2585 = vunpack.c.l.b16 %v2207
      %v2586 = vunpack.c.h.b16 %v2207
      %v2587 = vunpack.c.l.b16 %v2208
      %v2588 = vunpack.c.h.b16 %v2208
      %v2589 = vunpack.c.l.b16 %v2209
      %v2590 = vunpack.c.h.b16 %v2209
      %v2591 = vunpack.c.l.b16 %v2210
      %v2592 = vunpack.c.h.b16 %v2210
      %v2593 = vunpack.c.l.b16 %v2211
      %v2594 = vunpack.c.h.b16 %v2211
      %v2595 = vunpack.c.l.b16 %v2212
      %v2596 = vunpack.c.h.b16 %v2212
      %v2597 = vunpack.c.l.b16 %v2213
      %v2598 = vunpack.c.h.b16 %v2213
      %v2599 = vunpack.c.l.b16 %v2214
      %v2600 = vunpack.c.h.b16 %v2214
      %v2601 = vunpack.c.l.b16 %v2215
      %v2602 = vunpack.c.h.b16 %v2215
      %v2603 = vunpack.c.l.b16 %v2216
      %v2604 = vunpack.c.h.b16 %v2216
      %v2605 = vunpack.c.l.b16 %v2217
      %v2606 = vunpack.c.h.b16 %v2217
      %v2607 = vunpack.c.l.b16 %v2218
      %v2608 = vunpack.c.h.b16 %v2218
      %v2609 = vunpack.c.l.b16 %v2219
      %v2610 = vunpack.c.h.b16 %v2219
      %v2611 = vunpack.c.l.b16 %v2220
      %v2612 = vunpack.c.h.b16 %v2220
      %v2613 = vunpack.c.l.b16 %v2221
      %v2614 = vunpack.c.h.b16 %v2221
      %v2615 = vunpack.c.l.b16 %v2222
      %v2616 = vunpack.c.h.b16 %v2222
      %v2617 = vunpack.c.l.b16 %v2223
      %v2618 = vunpack.c.h.b16 %v2223
      %v2619 = vunpack.c.l.b16 %v2224
      %v2620 = vunpack.c.h.b16 %v2224
      %v2621 = vpack.c.b16 %v2369, %v2365
      %v2622 = vpack.c.b16 %v2370, %v2366
      %v2623 = vpack.c.b16 %v2371, %v2367
      %v2624 = vpack.c.b16 %v2372, %v2368
      %v2625 = vpack.c.b16 %v2377, %v2373
      %v2626 = vpack.c.b16 %v2378, %v2374
      %v2627 = vpack.c.b16 %v2379, %v2375
      %v2628 = vpack.c.b16 %v2380, %v2376
      %v2629 = vpack.c.b16 %v2385, %v2381
      %v2630 = vpack.c.b16 %v2386, %v2382
      %v2631 = vpack.c.b16 %v2387, %v2383
      %v2632 = vpack.c.b16 %v2388, %v2384
      %v2633 = vpack.c.b16 %v2393, %v2389
      %v2634 = vpack.c.b16 %v2394, %v2390
      %v2635 = vpack.c.b16 %v2395, %v2391
      %v2636 = vpack.c.b16 %v2396, %v2392
      %v2637 = vpack.c.b16 %v2401, %v2397
      %v2638 = vpack.c.b16 %v2402, %v2398
      %v2639 = vpack.c.b16 %v2403, %v2399
      %v2640 = vpack.c.b16 %v2404, %v2400
      %v2641 = vpack.c.b16 %v2409, %v2405
      %v2642 = vpack.c.b16 %v2410, %v2406
      %v2643 = vpack.c.b16 %v2411, %v2407
      %v2644 = vpack.c.b16 %v2412, %v2408
      %v2645 = vpack.c.b16 %v2417, %v2413
      %v2646 = vpack.c.b16 %v2418, %v2414
      %v2647 = vpack.c.b16 %v2419, %v2415
      %v2648 = vpack.c.b16 %v2420, %v2416
      %v2649 = vpack.c.b16 %v2425, %v2421
      %v2650 = vpack.c.b16 %v2426, %v2422
      %v2651 = vpack.c.b16 %v2427, %v2423
      %v2652 = vpack.c.b16 %v2428, %v2424
      %v2653 = vpack.c.b16 %v2433, %v2429
      %v2654 = vpack.c.b16 %v2434, %v2430
      %v2655 = vpack.c.b16 %v2435, %v2431
      %v2656 = vpack.c.b16 %v2436, %v2432
      %v2657 = vpack.c.b16 %v2441, %v2437
      %v2658 = vpack.c.b16 %v2442, %v2438
      %v2659 = vpack.c.b16 %v2443, %v2439
      %v2660 = vpack.c.b16 %v2444, %v2440
      %v2661 = vpack.c.b16 %v2449, %v2445
      %v2662 = vpack.c.b16 %v2450, %v2446
      %v2663 = vpack.c.b16 %v2451, %v2447
      %v2664 = vpack.c.b16 %v2452, %v2448
      %v2665 = vpack.c.b16 %v2457, %v2453
      %v2666 = vpack.c.b16 %v2458, %v2454
      %v2667 = vpack.c.b16 %v2459, %v2455
      %v2668 = vpack.c.b16 %v2460, %v2456
      %v2669 = vpack.c.b16 %v2465, %v2461
      %v2670 = vpack.c.b16 %v2466, %v2462
      %v2671 = vpack.c.b16 %v2467, %v2463
      %v2672 = vpack.c.b16 %v2468, %v2464
      %v2673 = vpack.c.b16 %v2473, %v2469
      %v2674 = vpack.c.b16 %v2474, %v2470
      %v2675 = vpack.c.b16 %v2475, %v2471
      %v2676 = vpack.c.b16 %v2476, %v2472
      %v2677 = vpack.c.b16 %v2481, %v2477
      %v2678 = vpack.c.b16 %v2482, %v2478
      %v2679 = vpack.c.b16 %v2483, %v2479
      %v2680 = vpack.c.b16 %v2484, %v2480
      %v2681 = vpack.c.b16 %v2489, %v2485
      %v2682 = vpack.c.b16 %v2490, %v2486
      %v2683 = vpack.c.b16 %v2491, %v2487
      %v2684 = vpack.c.b16 %v2492, %v2488
      %v2685 = vpack.c.b16 %v2497, %v2493
      %v2686 = vpack.c.b16 %v2498, %v2494
      %v2687 = vpack.c.b16 %v2499, %v2495
      %v2688 = vpack.c.b16 %v2500, %v2496
      %v2689 = vpack.c.b16 %v2505, %v2501
      %v2690 = vpack.c.b16 %v2506, %v2502
      %v2691 = vpack.c.b16 %v2507, %v2503
      %v2692 = vpack.c.b16 %v2508, %v2504
      %v2693 = vpack.c.b16 %v2513, %v2509
      %v2694 = vpack.c.b16 %v2514, %v2510
      %v2695 = vpack.c.b16 %v2515, %v2511
      %v2696 = vpack.c.b16 %v2516, %v2512
      %v2697 = vpack.c.b16 %v2521, %v2517
      %v2698 = vpack.c.b16 %v2522, %v2518
      %v2699 = vpack.c.b16 %v2523, %v2519
      %v2700 = vpack.c.b16 %v2524, %v2520
      %v2701 = vpack.c.b16 %v2529, %v2525
      %v2702 = vpack.c.b16 %v2530, %v2526
      %v2703 = vpack.c.b16 %v2531, %v2527
      %v2704 = vpack.c.b16 %v2532, %v2528
      %v2705 = vpack.c.b16 %v2537, %v2533
      %v2706 = vpack.c.b16 %v2538, %v2534
      %v2707 = vpack.c.b16 %v2539, %v2535
      %v2708 = vpack.c.b16 %v2540, %v2536
      %v2709 = vpack.c.b16 %v2545, %v2541
      %v2710 = vpack.c.b16 %v2546, %v2542
      %v2711 = vpack.c.b16 %v2547, %v2543
      %v2712 = vpack.c.b16 %v2548, %v2544
      %v2713 = vpack.c.b16 %v2553, %v2549
      %v2714 = vpack.c.b16 %v2554, %v2550
      %v2715 = vpack.c.b16 %v2555, %v2551
      %v2716 = vpack.c.b16 %v2556, %v2552
      %v2717 = vpack.c.b16 %v2561, %v2557
      %v2718 = vpack.c.b16 %v2562, %v2558
      %v2719 = vpack.c.b16 %v2563, %v2559
      %v2720 = vpack.c.b16 %v2564, %v2560
      %v2721 = vpack.c.b16 %v2569, %v2565
      %v2722 = vpack.c.b16 %v2570, %v2566
      %v2723 = vpack.c.b16 %v2571, %v2567
      %v2724 = vpack.c.b16 %v2572, %v2568
      %v2725 = vpack.c.b16 %v2577, %v2573
      %v2726 = vpack.c.b16 %v2578, %v2574
      %v2727 = vpack.c.b16 %v2579, %v2575
      %v2728 = vpack.c.b16 %v2580, %v2576
      %v2729 = vpack.c.b16 %v2585, %v2581
      %v2730 = vpack.c.b16 %v2586, %v2582
      %v2731 = vpack.c.b16 %v2587, %v2583
      %v2732 = vpack.c.b16 %v2588, %v2584
      %v2733 = vpack.c.b16 %v2593, %v2589
      %v2734 = vpack.c.b16 %v2594, %v2590
      %v2735 = vpack.c.b16 %v2595, %v2591
      %v2736 = vpack.c.b16 %v2596, %v2592
      %v2737 = vpack.c.b16 %v2601, %v2597
      %v2738 = vpack.c.b16 %v2602, %v2598
      %v2739 = vpack.c.b16 %v2603, %v2599
      %v2740 = vpack.c.b16 %v2604, %v2600
      %v2741 = vpack.c.b16 %v2609, %v2605
      %v2742 = vpack.c.b16 %v2610, %v2606
      %v2743 = vpack.c.b16 %v2611, %v2607
      %v2744 = vpack.c.b16 %v2612, %v2608
      %v2745 = vpack.c.b16 %v2617, %v2613
      %v2746 = vpack.c.b16 %v2618, %v2614
      %v2747 = vpack.c.b16 %v2619, %v2615
      %v2748 = vpack.c.b16 %v2620, %v2616
      %2877 = vmatprep.subr.bf16.mxu0 %v2622
      %2878 = vmatpush1.bf16.msra.mxu0 %v2621
      %2879 = vmatprep.subr.bf16.mxu0 %v2626
      %2880 = vmatpush1.bf16.msra.mxu0 %v2625
      %2881 = vmatprep.subr.bf16.mxu0 %v2630
      %2882 = vmatpush1.bf16.msra.mxu0 %v2629
      %2883 = vmatprep.subr.bf16.mxu0 %v2634
      %2884 = vmatpush1.bf16.msra.mxu0 %v2633
      %2885 = vmatprep.subr.bf16.mxu0 %v2638
      %2886 = vmatpush1.bf16.msra.mxu0 %v2637
      %2887 = vmatprep.subr.bf16.mxu0 %v2642
      %2888 = vmatpush1.bf16.msra.mxu0 %v2641
      %2889 = vmatprep.subr.bf16.mxu0 %v2646
      %2890 = vmatpush1.bf16.msra.mxu0 %v2645
      %2891 = vmatprep.subr.bf16.mxu0 %v2650
      %2892 = vmatpush1.bf16.msra.mxu0 %v2649
      %2893 = vmatprep.subr.bf16.mxu0 %v2654
      %2894 = vmatpush1.bf16.msra.mxu0 %v2653
      %2895 = vmatprep.subr.bf16.mxu0 %v2658
      %2896 = vmatpush1.bf16.msra.mxu0 %v2657
      %2897 = vmatprep.subr.bf16.mxu0 %v2662
      %2898 = vmatpush1.bf16.msra.mxu0 %v2661
      %2899 = vmatprep.subr.bf16.mxu0 %v2666
      %2900 = vmatpush1.bf16.msra.mxu0 %v2665
      %2901 = vmatprep.subr.bf16.mxu0 %v2670
      %2902 = vmatpush1.bf16.msra.mxu0 %v2669
      %2903 = vmatprep.subr.bf16.mxu0 %v2674
      %2904 = vmatpush1.bf16.msra.mxu0 %v2673
      %2905 = vmatprep.subr.bf16.mxu0 %v2678
      %2906 = vmatpush1.bf16.msra.mxu0 %v2677
      %2907 = vmatprep.subr.bf16.mxu0 %v2682
      %2908 = vmatpush1.bf16.msra.mxu0 %v2681
      %2909 = vmatprep.mubr.bf16.mxu0 %v2230
      %2910 = vmatmul.mubr.bf16.gmra.mrb[0].mxu0 %v2229
      %v2911 = vpop.f32.mrb[0].mxu0
      %v2912 = vadd.f32 0.0, %v2911
      %v2913 = vpop.f32.mrb[0].mxu0
      %v2914 = vadd.f32 0.0, %v2913
      %v2915 = vpop.f32.mrb[0].mxu0
      %v2916 = vadd.f32 0.0, %v2915
      %v2917 = vpop.f32.mrb[0].mxu0
      %v2918 = vadd.f32 0.0, %v2917
      %2919 = vdwg.mxu0
      %2920 = vmatprep.subr.bf16.mxu0 %v2686
      %2921 = vmatpush1.bf16.msra.mxu0 %v2685
      %2922 = vmatprep.subr.bf16.mxu0 %v2690
      %2923 = vmatpush1.bf16.msra.mxu0 %v2689
      %2924 = vmatprep.subr.bf16.mxu0 %v2694
      %2925 = vmatpush1.bf16.msra.mxu0 %v2693
      %2926 = vmatprep.subr.bf16.mxu0 %v2698
      %2927 = vmatpush1.bf16.msra.mxu0 %v2697
      %2928 = vmatprep.subr.bf16.mxu0 %v2702
      %2929 = vmatpush1.bf16.msra.mxu0 %v2701
      %2930 = vmatprep.subr.bf16.mxu0 %v2706
      %2931 = vmatpush1.bf16.msra.mxu0 %v2705
      %2932 = vmatprep.subr.bf16.mxu0 %v2710
      %2933 = vmatpush1.bf16.msra.mxu0 %v2709
      %2934 = vmatprep.subr.bf16.mxu0 %v2714
      %2935 = vmatpush1.bf16.msra.mxu0 %v2713
      %2936 = vmatprep.subr.bf16.mxu0 %v2718
      %2937 = vmatpush1.bf16.msra.mxu0 %v2717
      %2938 = vmatprep.subr.bf16.mxu0 %v2722
      %2939 = vmatpush1.bf16.msra.mxu0 %v2721
      %2940 = vmatprep.subr.bf16.mxu0 %v2726
      %2941 = vmatpush1.bf16.msra.mxu0 %v2725
      %2942 = vmatprep.subr.bf16.mxu0 %v2730
      %2943 = vmatpush1.bf16.msra.mxu0 %v2729
      %2944 = vmatprep.subr.bf16.mxu0 %v2734
      %2945 = vmatpush1.bf16.msra.mxu0 %v2733
      %2946 = vmatprep.subr.bf16.mxu0 %v2738
      %2947 = vmatpush1.bf16.msra.mxu0 %v2737
      %2948 = vmatprep.subr.bf16.mxu0 %v2742
      %2949 = vmatpush1.bf16.msra.mxu0 %v2741
      %2950 = vmatprep.subr.bf16.mxu0 %v2746
      %2951 = vmatpush1.bf16.msra.mxu0 %v2745
      %2952 = vmatprep.mubr.bf16.mxu0 %v2232
      %2953 = vmatmul.mubr.bf16.gmra.mrb[0].mxu0 %v2231
      %v2954 = vpop.f32.mrb[0].mxu0
      %v2955 = vadd.f32 %v2912, %v2954
      %v2956 = vpop.f32.mrb[0].mxu0
      %v2957 = vadd.f32 %v2914, %v2956
      %v2958 = vpop.f32.mrb[0].mxu0
      %v2959 = vadd.f32 %v2916, %v2958
      %v2960 = vpop.f32.mrb[0].mxu0
      %v2961 = vadd.f32 %v2918, %v2960
      %2962 = vdwg.mxu0
      %2963 = vmatprep.subr.bf16.mxu0 %v2624
      %2964 = vmatpush1.bf16.msra.mxu0 %v2623
      %2965 = vmatprep.subr.bf16.mxu0 %v2628
      %2966 = vmatpush1.bf16.msra.mxu0 %v2627
      %2967 = vmatprep.subr.bf16.mxu0 %v2632
      %2968 = vmatpush1.bf16.msra.mxu0 %v2631
      %2969 = vmatprep.subr.bf16.mxu0 %v2636
      %2970 = vmatpush1.bf16.msra.mxu0 %v2635
      %2971 = vmatprep.subr.bf16.mxu0 %v2640
      %2972 = vmatpush1.bf16.msra.mxu0 %v2639
      %2973 = vmatprep.subr.bf16.mxu0 %v2644
      %2974 = vmatpush1.bf16.msra.mxu0 %v2643
      %2975 = vmatprep.subr.bf16.mxu0 %v2648
      %2976 = vmatpush1.bf16.msra.mxu0 %v2647
      %2977 = vmatprep.subr.bf16.mxu0 %v2652
      %2978 = vmatpush1.bf16.msra.mxu0 %v2651
      %2979 = vmatprep.subr.bf16.mxu0 %v2656
      %2980 = vmatpush1.bf16.msra.mxu0 %v2655
      %2981 = vmatprep.subr.bf16.mxu0 %v2660
      %2982 = vmatpush1.bf16.msra.mxu0 %v2659
      %2983 = vmatprep.subr.bf16.mxu0 %v2664
      %2984 = vmatpush1.bf16.msra.mxu0 %v2663
      %2985 = vmatprep.subr.bf16.mxu0 %v2668
      %2986 = vmatpush1.bf16.msra.mxu0 %v2667
      %2987 = vmatprep.subr.bf16.mxu0 %v2672
      %2988 = vmatpush1.bf16.msra.mxu0 %v2671
      %2989 = vmatprep.subr.bf16.mxu0 %v2676
      %2990 = vmatpush1.bf16.msra.mxu0 %v2675
      %2991 = vmatprep.subr.bf16.mxu0 %v2680
      %2992 = vmatpush1.bf16.msra.mxu0 %v2679
      %2993 = vmatprep.subr.bf16.mxu0 %v2684
      %2994 = vmatpush1.bf16.msra.mxu0 %v2683
      %2995 = vmatprep.mubr.bf16.mxu0 %v2230
      %2996 = vmatmul.mubr.bf16.gmra.mrb[0].mxu0 %v2229
      %v2997 = vpop.f32.mrb[0].mxu0
      %v2998 = vadd.f32 0.0, %v2997
      %v2999 = vpop.f32.mrb[0].mxu0
      %v3000 = vadd.f32 0.0, %v2999
      %v3001 = vpop.f32.mrb[0].mxu0
      %v3002 = vadd.f32 0.0, %v3001
      %v3003 = vpop.f32.mrb[0].mxu0
      %v3004 = vadd.f32 0.0, %v3003
      %3005 = vdwg.mxu0
      %3006 = vmatprep.subr.bf16.mxu0 %v2688
      %3007 = vmatpush1.bf16.msra.mxu0 %v2687
      %3008 = vmatprep.subr.bf16.mxu0 %v2692
      %3009 = vmatpush1.bf16.msra.mxu0 %v2691
      %3010 = vmatprep.subr.bf16.mxu0 %v2696
      %3011 = vmatpush1.bf16.msra.mxu0 %v2695
      %3012 = vmatprep.subr.bf16.mxu0 %v2700
      %3013 = vmatpush1.bf16.msra.mxu0 %v2699
      %3014 = vmatprep.subr.bf16.mxu0 %v2704
      %3015 = vmatpush1.bf16.msra.mxu0 %v2703
      %3016 = vmatprep.subr.bf16.mxu0 %v2708
      %3017 = vmatpush1.bf16.msra.mxu0 %v2707
      %3018 = vmatprep.subr.bf16.mxu0 %v2712
      %3019 = vmatpush1.bf16.msra.mxu0 %v2711
      %3020 = vmatprep.subr.bf16.mxu0 %v2716
      %3021 = vmatpush1.bf16.msra.mxu0 %v2715
      %3022 = vmatprep.subr.bf16.mxu0 %v2720
      %3023 = vmatpush1.bf16.msra.mxu0 %v2719
      %3024 = vmatprep.subr.bf16.mxu0 %v2724
      %3025 = vmatpush1.bf16.msra.mxu0 %v2723
      %3026 = vmatprep.subr.bf16.mxu0 %v2728
      %3027 = vmatpush1.bf16.msra.mxu0 %v2727
      %3028 = vmatprep.subr.bf16.mxu0 %v2732
      %3029 = vmatpush1.bf16.msra.mxu0 %v2731
      %3030 = vmatprep.subr.bf16.mxu0 %v2736
      %3031 = vmatpush1.bf16.msra.mxu0 %v2735
      %3032 = vmatprep.subr.bf16.mxu0 %v2740
      %3033 = vmatpush1.bf16.msra.mxu0 %v2739
      %3034 = vmatprep.subr.bf16.mxu0 %v2744
      %3035 = vmatpush1.bf16.msra.mxu0 %v2743
      %3036 = vmatprep.subr.bf16.mxu0 %v2748
      %3037 = vmatpush1.bf16.msra.mxu0 %v2747
      %3038 = vmatprep.mubr.bf16.mxu0 %v2232
      %3039 = vmatmul.mubr.bf16.gmra.mrb[0].mxu0 %v2231
      %v3040 = vpop.f32.mrb[0].mxu0
      %v3041 = vadd.f32 %v2998, %v3040
      %v3042 = vpop.f32.mrb[0].mxu0
      %v3043 = vadd.f32 %v3000, %v3042
      %v3044 = vpop.f32.mrb[0].mxu0
      %v3045 = vadd.f32 %v3002, %v3044
      %v3046 = vpop.f32.mrb[0].mxu0
      %v3047 = vadd.f32 %v3004, %v3046
      %3048 = vdwg.mxu0
      %v3049 = vadd.f32 %v2002, %v2955
      %v3050 = vadd.f32 %v2004, %v2957
      %v3051 = vadd.f32 %v2088, %v3041
      %v3052 = vadd.f32 %v2090, %v3043
      %v3053 = vadd.f32 %v2006, %v2959
      %v3054 = vadd.f32 %v2008, %v2961
      %v3055 = vadd.f32 %v2092, %v3045
      %v3056 = vadd.f32 %v2094, %v3047
      %v3057 = vld [vmem:[%s2] sm:$0xf]
      %v3059 = vlaneseq
      %v3060 = vshrl.u32 %v3059, 7
      %v3061 = vsub.s32 0, %v3060
      %v3062 = vrot.slane %v3057, %v3061
      %v3063 = vlaneseq
      %v3064 = vshrl.u32 %v3063, 7
      %v3065 = vsub.s32 1, %v3064
      %v3066 = vrot.slane %v3057, %v3065
      %v3067 = vlaneseq
      %v3068 = vshrl.u32 %v3067, 7
      %v3069 = vsub.s32 2, %v3068
      %v3070 = vrot.slane %v3057, %v3069
      %v3071 = vlaneseq
      %v3072 = vshrl.u32 %v3071, 7
      %v3073 = vsub.s32 3, %v3072
      %v3074 = vrot.slane %v3057, %v3073
      %v3079 = vadd.f32 %v3049, %v3062
      %v3080 = vadd.f32 %v3050, %v3066
      %v3081 = vadd.f32 %v3051, %v3070
      %v3082 = vadd.f32 %v3052, %v3074
      %v3083 = vadd.f32 %v3053, %v3062
      %v3084 = vadd.f32 %v3054, %v3066
      %v3085 = vadd.f32 %v3055, %v3070
      %v3086 = vadd.f32 %v3056, %v3074
      %3093 = vrot.lane.b32.xlu0 %v3080, 32
      %v3094 = vpop.permute.xlu0 %3093
      %3095 = vrot.lane.b32.xlu0 %v3081, 32
      %v3096 = vpop.permute.xlu0 %3095
      %3097 = vrot.lane.b32.xlu0 %v3082, 32
      %v3098 = vpop.permute.xlu0 %3097
      %3099 = vrot.lane.b32.xlu0 %v3084, 32
      %v3100 = vpop.permute.xlu0 %3099
      %3101 = vrot.lane.b32.xlu0 %v3085, 32
      %v3102 = vpop.permute.xlu0 %3101
      %3103 = vrot.lane.b32.xlu0 %v3086, 32
      %v3104 = vpop.permute.xlu0 %3103
      %vm3105 = vcmask 261120
      %v3106 = vsel %vm3105, %v3094, %v3096
      %v3107 = vsel %vm3105, %v3096, %v3098
      %v3108 = vsel %vm3105, %v3100, %v3102
      %v3109 = vsel %vm3105, %v3102, %v3104
      %v3114 = vmax.f32 %v3079, %v3106
      %v3115 = vmax.f32 %v3080, %v3107
      %v3116 = vmax.f32 %v3083, %v3108
      %v3117 = vmax.f32 %v3084, %v3109
      %v3118 = vlaneseq
      %v3119 = vshrl.u32 %v3118, 7
      %v3120 = vlaneseq
      %v3121 = vand.u32 %v3120, 127
      %v3122 = vmul.u32 %v3119, 2
      %vm3123 = vcmp.eq.s32.totalorder %v3121, %v3122
      %v3124 = vsel %vm3123, 1, 0
      %v3125 = vcvt.s32.f32 %v3124
      %v3126 = vadd.s32 %v3122, 1
      %vm3127 = vcmp.eq.s32.totalorder %v3121, %v3126
      %v3128 = vsel %vm3127, 1, 0
      %v3129 = vcvt.s32.f32 %v3128
      %vm3130 = vcmask 113664
      %v3132 = vsel %vm3130, %v3125, 0
      %vm3134 = vcmask 1045504
      %v3136 = vsel %vm3134, %v3116, 0
      %v3139 = vsel %vm3134, %v3117, 0
      %3141 = vmatprep.subr.mxu0 %v3115
      %3142 = vmatpush1.msra.mxu0 %v3114
      %3143 = vmatprep.subr.mxu0 %v3139
      %3144 = vmatpush1.msra.mxu0 %v3136
      %3145 = vmatprep.subr.mxu0 0.0
      %3146 = vmatpush1.msra.mxu0 0.0
      %3147 = vmatprep.subr.mxu0 0.0
      %3148 = vmatpush1.msra.mxu0 0.0
      %3149 = vmatprep.subr.mxu0 0.0
      %3150 = vmatpush1.msra.mxu0 0.0
      %3151 = vmatprep.subr.mxu0 0.0
      %3152 = vmatpush1.msra.mxu0 0.0
      %3153 = vmatprep.subr.mxu0 0.0
      %3154 = vmatpush1.msra.mxu0 0.0
      %3155 = vmatprep.subr.mxu0 0.0
      %3156 = vmatpush1.msra.mxu0 0.0
      %3157 = vmatprep.subr.mxu0 0.0
      %3158 = vmatpush1.msra.mxu0 0.0
      %3159 = vmatprep.subr.mxu0 0.0
      %3160 = vmatpush1.msra.mxu0 0.0
      %3161 = vmatprep.subr.mxu0 0.0
      %3162 = vmatpush1.msra.mxu0 0.0
      %3163 = vmatprep.subr.mxu0 0.0
      %3164 = vmatpush1.msra.mxu0 0.0
      %3165 = vmatprep.subr.mxu0 0.0
      %3166 = vmatpush1.msra.mxu0 0.0
      %3167 = vmatprep.subr.mxu0 0.0
      %3168 = vmatpush1.msra.mxu0 0.0
      %3169 = vmatprep.subr.mxu0 0.0
      %3170 = vmatpush1.msra.mxu0 0.0
      %3171 = vmatprep.subr.mxu0 0.0
      %3172 = vmatpush1.msra.mxu0 0.0
      %3173 = vmatprep.subr.mxu0 0.0
      %3174 = vmatpush1.msra.mxu0 0.0
      %3175 = vmatprep.subr.mxu0 0.0
      %3176 = vmatpush1.msra.mxu0 0.0
      %3177 = vmatprep.subr.mxu0 0.0
      %3178 = vmatpush1.msra.mxu0 0.0
      %3179 = vmatprep.subr.mxu0 0.0
      %3180 = vmatpush1.msra.mxu0 0.0
      %3181 = vmatprep.subr.mxu0 0.0
      %3182 = vmatpush1.msra.mxu0 0.0
      %3183 = vmatprep.subr.mxu0 0.0
      %3184 = vmatpush1.msra.mxu0 0.0
      %3185 = vmatprep.subr.mxu0 0.0
      %3186 = vmatpush1.msra.mxu0 0.0
      %3187 = vmatprep.subr.mxu0 0.0
      %3188 = vmatpush1.msra.mxu0 0.0
      %3189 = vmatprep.subr.mxu0 0.0
      %3190 = vmatpush1.msra.mxu0 0.0
      %3191 = vmatprep.subr.mxu0 0.0
      %3192 = vmatpush1.msra.mxu0 0.0
      %3193 = vmatprep.subr.mxu0 0.0
      %3194 = vmatpush1.msra.mxu0 0.0
      %3195 = vmatprep.subr.mxu0 0.0
      %3196 = vmatpush1.msra.mxu0 0.0
      %3197 = vmatprep.subr.mxu0 0.0
      %3198 = vmatpush1.msra.mxu0 0.0
      %3199 = vmatprep.subr.mxu0 0.0
      %3200 = vmatpush1.msra.mxu0 0.0
      %3201 = vmatprep.subr.mxu0 0.0
      %3202 = vmatpush1.msra.mxu0 0.0
      %3203 = vmatprep.subr.mxu0 0.0
      %3204 = vmatpush1.msra.mxu0 0.0
      %3205 = vmatprep.mubr.f32.mxu0 0.0
      %3206 = vmatmul.mubr.f32.gmra.mrb[0].mxu0 %v3132
      %v3207 = vpop.f32.mrb[0].mxu0
      %v3208 = vadd.f32 0.0, %v3207
      %v3209 = vpop.f32.mrb[0].mxu0
      %v3210 = vadd.f32 0.0, %v3209
      %3211 = vdwg.mxu0
      %v3213 = vsel %vm3130, %v3129, 0
      %3215 = vmatprep.subr.mxu0 %v3115
      %3216 = vmatpush1.msra.mxu0 %v3114
      %3217 = vmatprep.subr.mxu0 %v3139
      %3218 = vmatpush1.msra.mxu0 %v3136
      %3219 = vmatprep.subr.mxu0 0.0
      %3220 = vmatpush1.msra.mxu0 0.0
      %3221 = vmatprep.subr.mxu0 0.0
      %3222 = vmatpush1.msra.mxu0 0.0
      %3223 = vmatprep.subr.mxu0 0.0
      %3224 = vmatpush1.msra.mxu0 0.0
      %3225 = vmatprep.subr.mxu0 0.0
      %3226 = vmatpush1.msra.mxu0 0.0
      %3227 = vmatprep.subr.mxu0 0.0
      %3228 = vmatpush1.msra.mxu0 0.0
      %3229 = vmatprep.subr.mxu0 0.0
      %3230 = vmatpush1.msra.mxu0 0.0
      %3231 = vmatprep.subr.mxu0 0.0
      %3232 = vmatpush1.msra.mxu0 0.0
      %3233 = vmatprep.subr.mxu0 0.0
      %3234 = vmatpush1.msra.mxu0 0.0
      %3235 = vmatprep.subr.mxu0 0.0
      %3236 = vmatpush1.msra.mxu0 0.0
      %3237 = vmatprep.subr.mxu0 0.0
      %3238 = vmatpush1.msra.mxu0 0.0
      %3239 = vmatprep.subr.mxu0 0.0
      %3240 = vmatpush1.msra.mxu0 0.0
      %3241 = vmatprep.subr.mxu0 0.0
      %3242 = vmatpush1.msra.mxu0 0.0
      %3243 = vmatprep.subr.mxu0 0.0
      %3244 = vmatpush1.msra.mxu0 0.0
      %3245 = vmatprep.subr.mxu0 0.0
      %3246 = vmatpush1.msra.mxu0 0.0
      %3247 = vmatprep.subr.mxu0 0.0
      %3248 = vmatpush1.msra.mxu0 0.0
      %3249 = vmatprep.subr.mxu0 0.0
      %3250 = vmatpush1.msra.mxu0 0.0
      %3251 = vmatprep.subr.mxu0 0.0
      %3252 = vmatpush1.msra.mxu0 0.0
      %3253 = vmatprep.subr.mxu0 0.0
      %3254 = vmatpush1.msra.mxu0 0.0
      %3255 = vmatprep.subr.mxu0 0.0
      %3256 = vmatpush1.msra.mxu0 0.0
      %3257 = vmatprep.subr.mxu0 0.0
      %3258 = vmatpush1.msra.mxu0 0.0
      %3259 = vmatprep.subr.mxu0 0.0
      %3260 = vmatpush1.msra.mxu0 0.0
      %3261 = vmatprep.subr.mxu0 0.0
      %3262 = vmatpush1.msra.mxu0 0.0
      %3263 = vmatprep.subr.mxu0 0.0
      %3264 = vmatpush1.msra.mxu0 0.0
      %3265 = vmatprep.subr.mxu0 0.0
      %3266 = vmatpush1.msra.mxu0 0.0
      %3267 = vmatprep.subr.mxu0 0.0
      %3268 = vmatpush1.msra.mxu0 0.0
      %3269 = vmatprep.subr.mxu0 0.0
      %3270 = vmatpush1.msra.mxu0 0.0
      %3271 = vmatprep.subr.mxu0 0.0
      %3272 = vmatpush1.msra.mxu0 0.0
      %3273 = vmatprep.subr.mxu0 0.0
      %3274 = vmatpush1.msra.mxu0 0.0
      %3275 = vmatprep.subr.mxu0 0.0
      %3276 = vmatpush1.msra.mxu0 0.0
      %3277 = vmatprep.subr.mxu0 0.0
      %3278 = vmatpush1.msra.mxu0 0.0
      %3279 = vmatprep.mubr.f32.mxu0 0.0
      %3280 = vmatmul.mubr.f32.gmra.mrb[0].mxu0 %v3213
      %v3281 = vpop.f32.mrb[0].mxu0
      %v3282 = vadd.f32 0.0, %v3281
      %v3283 = vpop.f32.mrb[0].mxu0
      %v3284 = vadd.f32 0.0, %v3283
      %3285 = vdwg.mxu0
      %v3286 = vmax.f32 %v3208, %v3282
      %v3287 = vmax.f32 %v3210, %v3284
      %v3288 = vmax.f32 %v3286, 0.0
      %v3289 = vmax.f32 %v3287, 0.0
      %3290 = vst [vmem:[%s170] sm:$0x7f] %v3288
      %vm3291 = vcmask 784384
      %3292 = vst.msk [vmem:[%s170 + $0x8] sm:$0x7f] %vm3291, %v3289
      %p3293 = scmp.lt.s32.totalorder %s14, 1
      %s3294 = scalar_select %p3293, %s14, 1
      %s3295 = smul.addr %s3294, 2
      %s3296 = smul.addr %s3295, 8
      %s3297 = scalar_lea.vmem %s3, %s3296
      // Predicated region
      $region33: #{cnn_mnist_forward.5} parent=31 // pred_check
        %p3298 = pneg %p100
      $region34: #{cnn_mnist_forward.5} parent=31 // pred_check_branch
        %3300 = sbr.rel (%p3298) target = $region36
      $region35: #{cnn_mnist_forward.5} parent=31 // pred_region
        _
      $region36: #{cnn_mnist_forward.5} parent=31 // pred_fallthru
        _
    $region32: #{cnn_mnist_forward.5} parent=5 // pred_fallthru
      _
    %p3301 = scmp.le.s32.totalorder 2, %s9
    // Predicated region
    $region37: #{cnn_mnist_forward.5} parent=5 // pred_check
      %p3302 = pneg %p3301
    $region38: #{cnn_mnist_forward.5} parent=5 // pred_check_branch
      %3304 = sbr.rel (%p3302) target = $region40
    $region39: #{cnn_mnist_forward.5} parent=5 // pred_region
      %s3305 = ssub.s32 %s9, 2
      // Predicated region
      $region41: #{cnn_mnist_forward.5} parent=39 // pred_check
        %p3306 = pneg %p106
      $region42: #{cnn_mnist_forward.5} parent=39 // pred_check_branch
        %3308 = sbr.rel (%p3306) target = $region44
      $region43: #{cnn_mnist_forward.5} parent=39 // pred_region
        %p3309 = scmp.lt.s32.totalorder %s15, 1
        %s3310 = scalar_select %p3309, %s15, 1
        %s3311 = smul.addr %s3310, 2
        %s3312 = smul.addr %s3311, 8
        %s3313 = scalar_lea.vmem %s3, %s3312
      $region44: #{cnn_mnist_forward.5} parent=39 // pred_fallthru
        _
    $region40: #{cnn_mnist_forward.5} parent=5 // pred_fallthru
      _
  $region6: #{cnn_mnist_forward.5} parent=0 // loop_footer
    %s13 = sadd.s32 1, %s9
  $region7: #{cnn_mnist_forward.5} parent=0 // loop_footer_branch
    %8 = sbr.rel target = $region3
  $region8: #{cnn_mnist_forward.5} parent=0 // loop_exit
    _

</llo_original>
